<compile_context>
chip_gen: v7x
topology: tpu7x:2x2x1
jax: 0.10.0
libtpu: 0.0.40
codegen_flags: <defaults>
</compile_context>

<pallas_src>
import functools

import jax
import jax.numpy as jnp
import numpy as np
from jax.experimental import pallas as pl
from jax.experimental.pallas import tpu as pltpu


def _round_up(x, m):
    return (x + m - 1) // m * m


# ----------------------------------------------------------------------------
# Pallas kernel: y = act(max_i(x_i @ w) + b), grid-tiled over rows (M).
# ----------------------------------------------------------------------------
def _fused_matmul_kernel(*refs, n_in, act):
    x_refs = refs[:n_in]
    w_ref, b_ref, o_ref = refs[n_in], refs[n_in + 1], refs[n_in + 2]
    w = w_ref[...]                                                   # resident bf16
    acc = jnp.dot(x_refs[0][...], w, preferred_element_type=jnp.float32)
    for xr in x_refs[1:]:                                            # fused 2x2 maxpool
        acc = jnp.maximum(acc, jnp.dot(xr[...], w, preferred_element_type=jnp.float32))
    y = acc + b_ref[...]                                             # f32 epilogue
    if act == "relu":
        y = jnp.maximum(y, 0.0)
    elif act == "sigmoid":
        y = jax.nn.sigmoid(y)
    o_ref[...] = y.astype(o_ref.dtype)


def fused_matmul(xs, w2d, b, *, act, out_dtype, tm_max=512):
    """act(max_i(xs[i] @ w2d) + b), lane-dense padded, M-tiled and pipelined.

    xs: list of identically shaped (M, K) arrays. w2d: (K, Cout). b: (Cout,).
    Returns (M, Cout) in out_dtype (padding sliced off).
    """
    n_in = len(xs)
    M, K = xs[0].shape
    Cout = w2d.shape[1]
    Kp = _round_up(K, 128)                    # lane-dense contraction
    Cp = _round_up(Cout, 128)                 # lane-dense (unmasked) stores
    TM = min(tm_max, _round_up(M, 16))        # sublane-aligned M tile
    Mp = _round_up(M, TM)

    xs_p = [jnp.pad(x.astype(jnp.bfloat16), ((0, Mp - M), (0, Kp - K))) for x in xs]
    w_p = jnp.pad(w2d.astype(jnp.bfloat16), ((0, Kp - K), (0, Cp - Cout)))
    b_p = jnp.pad(b.astype(jnp.float32), (0, Cp - Cout)).reshape(1, Cp)

    kernel = functools.partial(_fused_matmul_kernel, n_in=n_in, act=act)
    out = pl.pallas_call(
        kernel,
        out_shape=jax.ShapeDtypeStruct((Mp, Cp), out_dtype),
        grid=(Mp // TM,),
        in_specs=(
            [pl.BlockSpec((TM, Kp), lambda i: (i, 0)) for _ in range(n_in)]
            + [pl.BlockSpec((Kp, Cp), lambda i: (0, 0)),   # weights: VMEM-resident
               pl.BlockSpec((1, Cp), lambda i: (0, 0))]    # bias:    VMEM-resident
        ),
        out_specs=pl.BlockSpec((TM, Cp), lambda i: (i, 0)),
        compiler_params=pltpu.CompilerParams(
            dimension_semantics=("parallel",),             # shards M tiles on v7x
            vmem_limit_bytes=32 * 1024 * 1024,
        ),
    )(*xs_p, w_p, b_p)
    return out[:M, :Cout]


# ----------------------------------------------------------------------------
# JAX-side glue: im2col, interleave, conv layers built on the fused kernel
# ----------------------------------------------------------------------------
def _im2col_nhwk(x, KH, KW, pad):
    """(N,H,W,C) -> ((N,Ho,Wo,KH*KW*C), Ho, Wo); tap order (kh, kw, cin)."""
    N, H, W, C = x.shape
    xp = jnp.pad(x, ((0, 0), (pad, pad), (pad, pad), (0, 0)))
    Ho = H + 2 * pad - KH + 1
    Wo = W + 2 * pad - KW + 1
    patches = []
    for kh in range(KH):
        for kw in range(KW):
            patches.append(xp[:, kh:kh + Ho, kw:kw + Wo, :])
    return jnp.concatenate(patches, axis=-1), Ho, Wo


def _interleave(a, b, axis):
    """Interleave a0,b0,a1,b1,...,a_last along `axis`; a has one more entry than b."""
    pad = [(0, 0)] * a.ndim
    pad[axis] = (0, 1)
    b_p = jnp.pad(b, pad)
    st = jnp.stack([a, b_p], axis=axis + 1)
    shp = list(a.shape)
    shp[axis] = 2 * a.shape[axis]
    out = st.reshape(shp)
    return jax.lax.slice_in_dim(out, 0, a.shape[axis] + b.shape[axis], axis=axis)


def conv_relu_pool(x, w, b):
    """Conv2d(k3, padding='same') + ReLU + MaxPool2x2, fused into one kernel call."""
    Cout, Cin, KH, KW = w.shape
    N = x.shape[0]
    cols, Ho, Wo = _im2col_nhwk(x, KH, KW, 1)
    Hp, Wp = Ho // 2, Wo // 2                      # floor, like PyTorch MaxPool2d
    cols = cols[:, : 2 * Hp, : 2 * Wp, :]
    K = KH * KW * Cin
    corners = [cols[:, dy::2, dx::2, :].reshape(N * Hp * Wp, K)
               for dy in (0, 1) for dx in (0, 1)]
    w2d = jnp.transpose(w, (2, 3, 1, 0)).reshape(K, Cout)
    y = fused_matmul(corners, w2d, b, act="relu", out_dtype=jnp.bfloat16)
    return y.reshape(N, Hp, Wp, Cout)


def conv_act(x, w, b, *, pad, act, out_dtype):
    """Plain stride-1 conv (PyTorch weight layout (Cout,Cin,KH,KW)) + activation."""
    Cout, Cin, KH, KW = w.shape
    N = x.shape[0]
    cols, Ho, Wo = _im2col_nhwk(x, KH, KW, pad)
    K = KH * KW * Cin
    w2d = jnp.transpose(w, (2, 3, 1, 0)).reshape(K, Cout)
    y = fused_matmul([cols.reshape(N * Ho * Wo, K)], w2d, b, act=act,
                     out_dtype=out_dtype)
    return y.reshape(N, Ho, Wo, Cout)


def conv_transpose2d_s2_relu(x, w_t, b):
    """ConvTranspose2d(k=3, stride=2, padding=0) + ReLU via packed sub-pixel matmul.

    One 2x2-patch im2col of the un-dilated input against a (4*Cin, 4*Cout) weight;
    output group g=(rh,rw) is the (row,col) parity of the output pixel.  Tap (a,b)
    of group (rh,rw) carries w_t[:, :, 2-2a-rh, 2-2b-rw] (zero if out of range).
    """
    Cin, Cout, KH, KW = w_t.shape
    assert (KH, KW) == (3, 3)
    N, H, W, _ = x.shape
    cols, H1, W1 = _im2col_nhwk(x, 2, 2, 1)        # (N, H+1, W+1, 4*Cin)
    K = 4 * Cin

    kblocks = []
    for a in (0, 1):
        for bb in (0, 1):
            gblocks = []
            for rh in (0, 1):
                for rw in (0, 1):
                    ky, kx = 2 - 2 * a - rh, 2 - 2 * bb - rw
                    if 0 <= ky <= 2 and 0 <= kx <= 2:
                        gblocks.append(w_t[:, :, ky, kx])
                    else:
                        gblocks.append(jnp.zeros((Cin, Cout), w_t.dtype))
            kblocks.append(jnp.concatenate(gblocks, axis=1))     # (Cin, 4*Cout)
    w_big = jnp.concatenate(kblocks, axis=0)                     # (4*Cin, 4*Cout)
    b_big = jnp.concatenate([b] * 4, axis=0)

    y = fused_matmul([cols.reshape(N * H1 * W1, K)], w_big, b_big,
                     act="relu", out_dtype=jnp.bfloat16)
    y = y.reshape(N, H1, W1, 4, Cout)
    ee = y[:, :, :, 0, :]          # even rows, even cols : (N, H+1, W+1, C)
    eo = y[:, :, 1:, 1, :]         # even rows, odd cols  : (N, H+1, W,   C)
    oe = y[:, 1:, :, 2, :]         # odd rows,  even cols : (N, H,   W+1, C)
    oo = y[:, 1:, 1:, 3, :]        # odd rows,  odd cols  : (N, H,   W,   C)
    top = _interleave(ee, eo, axis=2)      # (N, H+1, 2W+1, C)
    bot = _interleave(oe, oo, axis=2)      # (N, H,   2W+1, C)
    return _interleave(top, bot, axis=1)   # (N, 2H+1, 2W+1, C)


# ----------------------------------------------------------------------------
# Parameters (deterministic, PyTorch-shaped)
# ----------------------------------------------------------------------------
def _init_conv(key, cout, cin, kh, kw):
    fan_in = cin * kh * kw
    bound = 1.0 / np.sqrt(fan_in)
    k1, k2 = jax.random.split(key)
    w = jax.random.uniform(k1, (cout, cin, kh, kw), jnp.float32, -bound, bound)
    b = jax.random.uniform(k2, (cout,), jnp.float32, -bound, bound)
    return w, b


def _init_convT(key, cin, cout, kh, kw):
    fan_in = cout * kh * kw
    bound = 1.0 / np.sqrt(fan_in)
    k1, k2 = jax.random.split(key)
    w = jax.random.uniform(k1, (cin, cout, kh, kw), jnp.float32, -bound, bound)
    b = jax.random.uniform(k2, (cout,), jnp.float32, -bound, bound)
    return w, b


def init_params(key):
    ks = jax.random.split(key, 7)
    p = {}
    p["e1_w"], p["e1_b"] = _init_conv(ks[0], 32, 3, 3, 3)
    p["e2_w"], p["e2_b"] = _init_conv(ks[1], 64, 32, 3, 3)
    p["e3_w"], p["e3_b"] = _init_conv(ks[2], 128, 64, 3, 3)
    p["d1_w"], p["d1_b"] = _init_convT(ks[3], 128, 128, 3, 3)
    p["d2_w"], p["d2_b"] = _init_convT(ks[4], 128, 64, 3, 3)
    p["d3_w"], p["d3_b"] = _init_convT(ks[5], 64, 32, 3, 3)
    p["d4_w"], p["d4_b"] = _init_convT(ks[6], 32, 3, 3, 3)
    return p


# ----------------------------------------------------------------------------
# Forward pass (matches autoencoders.forward)
# ----------------------------------------------------------------------------
def autoencoder_forward(images_nchw, params):
    x = jnp.transpose(images_nchw, (0, 2, 3, 1)).astype(jnp.bfloat16)  # NCHW -> NHWC
    # Encoder: [Conv(3x3,'same') + ReLU + MaxPool2x2] x3, each one fused kernel.
    x = conv_relu_pool(x, params["e1_w"], params["e1_b"])
    x = conv_relu_pool(x, params["e2_w"], params["e2_b"])
    x = conv_relu_pool(x, params["e3_w"], params["e3_b"])
    # Decoder: three stride-2 ConvTranspose+ReLU (sub-pixel, one kernel each) ...
    x = conv_transpose2d_s2_relu(x, params["d1_w"], params["d1_b"])
    x = conv_transpose2d_s2_relu(x, params["d2_w"], params["d2_b"])
    x = conv_transpose2d_s2_relu(x, params["d3_w"], params["d3_b"])
    # ... then ConvTranspose2d(32->3, k3, s1, p1)+Sigmoid == conv with flipped
    # kernel, swapped channels, pad = K-1-p = 1.
    w_conv = jnp.transpose(params["d4_w"][:, :, ::-1, ::-1], (1, 0, 2, 3))
    x = conv_act(x, w_conv, params["d4_b"], pad=1, act="sigmoid",
                 out_dtype=jnp.float32)
    return jnp.transpose(x, (0, 3, 1, 2))  # NHWC -> NCHW


if __name__ == "__main__":
    key = jax.random.PRNGKey(0)
    k_params, k_img = jax.random.split(key)
    params = init_params(k_params)
    # Small RGB images (batch=2, 3 channels, 16x16), NCHW like the PyTorch module.
    images = jax.random.uniform(k_img, (2, 3, 16, 16), jnp.float32)

    out = jax.jit(autoencoder_forward)(images, params)
    out = jax.block_until_ready(out)

    # Shape trace for 16x16 input: encoder -> (2,128,2,2); decoder -> (2,3,23,23).
    assert out.shape == (2, 3, 23, 23), out.shape
    assert bool(jnp.all((out >= 0.0) & (out <= 1.0)))  # sigmoid output range
    print("KERNEL_OK")
</pallas_src>

<mosaic_0001>
module attributes {stable_mosaic.version = 11 : i64} {
  func.func @_fused_matmul_kernel(%arg0: i32, %arg1: memref<128x128xbf16, #tpu.memory_space<vmem>>, %arg2: memref<128x128xbf16, #tpu.memory_space<vmem>>, %arg3: memref<128x128xbf16, #tpu.memory_space<vmem>>, %arg4: memref<128x128xbf16, #tpu.memory_space<vmem>>, %arg5: memref<128x128xbf16, #tpu.memory_space<vmem>>, %arg6: memref<1x128xf32, #tpu.memory_space<vmem>>, %arg7: memref<128x128xbf16, #tpu.memory_space<vmem>>) attributes {dimension_semantics = [#tpu.dimension_semantics<parallel>], iteration_bounds = array<i64: 1>, scalar_prefetch = 0 : i64, scratch_operands = 0 : i64, tpu.core_type = #tpu.core_type<tc>, window_params = [{transform_indices = @transform_0, window_bounds = array<i64: 128, 128>}, {transform_indices = @transform_1, window_bounds = array<i64: 128, 128>}, {transform_indices = @transform_2, window_bounds = array<i64: 128, 128>}, {transform_indices = @transform_3, window_bounds = array<i64: 128, 128>}, {pipeline_mode = #tpu.pipeline_mode<synchronous>, transform_indices = @transform_4, window_bounds = array<i64: 128, 128>}, {pipeline_mode = #tpu.pipeline_mode<synchronous>, transform_indices = @transform_5, window_bounds = array<i64: 1, 128>}, {transform_indices = @transform_6, window_bounds = array<i64: 128, 128>}]} {
    %c0 = arith.constant 0 : index
    %c0_0 = arith.constant 0 : index
    %0 = vector.load %arg5[%c0, %c0_0] : memref<128x128xbf16, #tpu.memory_space<vmem>>, vector<128x128xbf16>
    %c0_1 = arith.constant 0 : index
    %c0_2 = arith.constant 0 : index
    %1 = vector.load %arg1[%c0_1, %c0_2] : memref<128x128xbf16, #tpu.memory_space<vmem>>, vector<128x128xbf16>
    %cst = arith.constant dense<0.000000e+00> : vector<128x128xf32>
    %2 = tpu.matmul %1, %0, %cst {dimension_numbers = #tpu.dot_dimension_numbers<[1], [0], [0], [1], [0, 0, 1, 1], [], []>} : vector<128x128xbf16>, vector<128x128xbf16>, vector<128x128xf32> -> vector<128x128xf32>
    %c0_3 = arith.constant 0 : index
    %c0_4 = arith.constant 0 : index
    %3 = vector.load %arg2[%c0_3, %c0_4] : memref<128x128xbf16, #tpu.memory_space<vmem>>, vector<128x128xbf16>
    %cst_5 = arith.constant dense<0.000000e+00> : vector<128x128xf32>
    %4 = tpu.matmul %3, %0, %cst_5 {dimension_numbers = #tpu.dot_dimension_numbers<[1], [0], [0], [1], [0, 0, 1, 1], [], []>} : vector<128x128xbf16>, vector<128x128xbf16>, vector<128x128xf32> -> vector<128x128xf32>
    %5 = arith.maximumf %2, %4 : vector<128x128xf32>
    %c0_6 = arith.constant 0 : index
    %c0_7 = arith.constant 0 : index
    %6 = vector.load %arg3[%c0_6, %c0_7] : memref<128x128xbf16, #tpu.memory_space<vmem>>, vector<128x128xbf16>
    %cst_8 = arith.constant dense<0.000000e+00> : vector<128x128xf32>
    %7 = tpu.matmul %6, %0, %cst_8 {dimension_numbers = #tpu.dot_dimension_numbers<[1], [0], [0], [1], [0, 0, 1, 1], [], []>} : vector<128x128xbf16>, vector<128x128xbf16>, vector<128x128xf32> -> vector<128x128xf32>
    %8 = arith.maximumf %5, %7 : vector<128x128xf32>
    %c0_9 = arith.constant 0 : index
    %c0_10 = arith.constant 0 : index
    %9 = vector.load %arg4[%c0_9, %c0_10] : memref<128x128xbf16, #tpu.memory_space<vmem>>, vector<128x128xbf16>
    %cst_11 = arith.constant dense<0.000000e+00> : vector<128x128xf32>
    %10 = tpu.matmul %9, %0, %cst_11 {dimension_numbers = #tpu.dot_dimension_numbers<[1], [0], [0], [1], [0, 0, 1, 1], [], []>} : vector<128x128xbf16>, vector<128x128xbf16>, vector<128x128xf32> -> vector<128x128xf32>
    %11 = arith.maximumf %8, %10 : vector<128x128xf32>
    %c0_12 = arith.constant 0 : index
    %c0_13 = arith.constant 0 : index
    %12 = vector.load %arg6[%c0_12, %c0_13] : memref<1x128xf32, #tpu.memory_space<vmem>>, vector<1x128xf32>
    %13 = vector.broadcast %12 : vector<1x128xf32> to vector<128x128xf32>
    %14 = arith.addf %11, %13 : vector<128x128xf32>
    %cst_14 = arith.constant 0.000000e+00 : f32
    %15 = vector.broadcast %cst_14 : f32 to vector<128x128xf32>
    %16 = arith.maximumf %14, %15 : vector<128x128xf32>
    %17 = arith.truncf %16 : vector<128x128xf32> to vector<128x128xbf16>
    %c0_15 = arith.constant 0 : index
    %c0_16 = arith.constant 0 : index
    %18 = vector.load %arg7[%c0_15, %c0_16] : memref<128x128xbf16, #tpu.memory_space<vmem>>, vector<128x128xbf16>
    tpu.vector_store %arg7[%c0_15, %c0_16], %17 {strides = array<i32>} : memref<128x128xbf16, #tpu.memory_space<vmem>>, vector<128x128xbf16>,
    return
  }
  func.func @transform_0(%arg0: i32) -> (i32, i32) {
    %c0_i32 = arith.constant 0 : i32
    %c0_i32_0 = arith.constant 0 : i32
    return %arg0, %c0_i32 : i32, i32
  }
  func.func @transform_1(%arg0: i32) -> (i32, i32) {
    %c0_i32 = arith.constant 0 : i32
    %c0_i32_0 = arith.constant 0 : i32
    return %arg0, %c0_i32 : i32, i32
  }
  func.func @transform_2(%arg0: i32) -> (i32, i32) {
    %c0_i32 = arith.constant 0 : i32
    %c0_i32_0 = arith.constant 0 : i32
    return %arg0, %c0_i32 : i32, i32
  }
  func.func @transform_3(%arg0: i32) -> (i32, i32) {
    %c0_i32 = arith.constant 0 : i32
    %c0_i32_0 = arith.constant 0 : i32
    return %arg0, %c0_i32 : i32, i32
  }
  func.func @transform_4(%arg0: i32) -> (i32, i32) {
    %c0_i32 = arith.constant 0 : i32
    %c0_i32_0 = arith.constant 0 : i32
    %c0_i32_1 = arith.constant 0 : i32
    return %c0_i32, %c0_i32_0 : i32, i32
  }
  func.func @transform_5(%arg0: i32) -> (i32, i32) {
    %c0_i32 = arith.constant 0 : i32
    %c0_i32_0 = arith.constant 0 : i32
    %c0_i32_1 = arith.constant 0 : i32
    return %c0_i32, %c0_i32_0 : i32, i32
  }
  func.func @transform_6(%arg0: i32) -> (i32, i32) {
    %c0_i32 = arith.constant 0 : i32
    %c0_i32_0 = arith.constant 0 : i32
    return %arg0, %c0_i32 : i32, i32
  }
}

module attributes {stable_mosaic.version = 11 : i64} {
  func.func @_fused_matmul_kernel(%arg0: i32, %arg1: memref<32x384xbf16, #tpu.memory_space<vmem>>, %arg2: memref<32x384xbf16, #tpu.memory_space<vmem>>, %arg3: memref<32x384xbf16, #tpu.memory_space<vmem>>, %arg4: memref<32x384xbf16, #tpu.memory_space<vmem>>, %arg5: memref<384x128xbf16, #tpu.memory_space<vmem>>, %arg6: memref<1x128xf32, #tpu.memory_space<vmem>>, %arg7: memref<32x128xbf16, #tpu.memory_space<vmem>>) attributes {dimension_semantics = [#tpu.dimension_semantics<parallel>], iteration_bounds = array<i64: 1>, scalar_prefetch = 0 : i64, scratch_operands = 0 : i64, tpu.core_type = #tpu.core_type<tc>, window_params = [{transform_indices = @transform_0, window_bounds = array<i64: 32, 384>}, {transform_indices = @transform_1, window_bounds = array<i64: 32, 384>}, {transform_indices = @transform_2, window_bounds = array<i64: 32, 384>}, {transform_indices = @transform_3, window_bounds = array<i64: 32, 384>}, {pipeline_mode = #tpu.pipeline_mode<synchronous>, transform_indices = @transform_4, window_bounds = array<i64: 384, 128>}, {pipeline_mode = #tpu.pipeline_mode<synchronous>, transform_indices = @transform_5, window_bounds = array<i64: 1, 128>}, {transform_indices = @transform_6, window_bounds = array<i64: 32, 128>}]} {
    %c0 = arith.constant 0 : index
    %c0_0 = arith.constant 0 : index
    %0 = vector.load %arg5[%c0, %c0_0] : memref<384x128xbf16, #tpu.memory_space<vmem>>, vector<384x128xbf16>
    %c0_1 = arith.constant 0 : index
    %c0_2 = arith.constant 0 : index
    %1 = vector.load %arg1[%c0_1, %c0_2] : memref<32x384xbf16, #tpu.memory_space<vmem>>, vector<32x384xbf16>
    %cst = arith.constant dense<0.000000e+00> : vector<32x128xf32>
    %2 = tpu.matmul %1, %0, %cst {dimension_numbers = #tpu.dot_dimension_numbers<[1], [0], [0], [1], [0, 0, 1, 1], [], []>} : vector<32x384xbf16>, vector<384x128xbf16>, vector<32x128xf32> -> vector<32x128xf32>
    %c0_3 = arith.constant 0 : index
    %c0_4 = arith.constant 0 : index
    %3 = vector.load %arg2[%c0_3, %c0_4] : memref<32x384xbf16, #tpu.memory_space<vmem>>, vector<32x384xbf16>
    %cst_5 = arith.constant dense<0.000000e+00> : vector<32x128xf32>
    %4 = tpu.matmul %3, %0, %cst_5 {dimension_numbers = #tpu.dot_dimension_numbers<[1], [0], [0], [1], [0, 0, 1, 1], [], []>} : vector<32x384xbf16>, vector<384x128xbf16>, vector<32x128xf32> -> vector<32x128xf32>
    %5 = arith.maximumf %2, %4 : vector<32x128xf32>
    %c0_6 = arith.constant 0 : index
    %c0_7 = arith.constant 0 : index
    %6 = vector.load %arg3[%c0_6, %c0_7] : memref<32x384xbf16, #tpu.memory_space<vmem>>, vector<32x384xbf16>
    %cst_8 = arith.constant dense<0.000000e+00> : vector<32x128xf32>
    %7 = tpu.matmul %6, %0, %cst_8 {dimension_numbers = #tpu.dot_dimension_numbers<[1], [0], [0], [1], [0, 0, 1, 1], [], []>} : vector<32x384xbf16>, vector<384x128xbf16>, vector<32x128xf32> -> vector<32x128xf32>
    %8 = arith.maximumf %5, %7 : vector<32x128xf32>
    %c0_9 = arith.constant 0 : index
    %c0_10 = arith.constant 0 : index
    %9 = vector.load %arg4[%c0_9, %c0_10] : memref<32x384xbf16, #tpu.memory_space<vmem>>, vector<32x384xbf16>
    %cst_11 = arith.constant dense<0.000000e+00> : vector<32x128xf32>
    %10 = tpu.matmul %9, %0, %cst_11 {dimension_numbers = #tpu.dot_dimension_numbers<[1], [0], [0], [1], [0, 0, 1, 1], [], []>} : vector<32x384xbf16>, vector<384x128xbf16>, vector<32x128xf32> -> vector<32x128xf32>
    %11 = arith.maximumf %8, %10 : vector<32x128xf32>
    %c0_12 = arith.constant 0 : index
    %c0_13 = arith.constant 0 : index
    %12 = vector.load %arg6[%c0_12, %c0_13] : memref<1x128xf32, #tpu.memory_space<vmem>>, vector<1x128xf32>
    %13 = vector.broadcast %12 : vector<1x128xf32> to vector<32x128xf32>
    %14 = arith.addf %11, %13 : vector<32x128xf32>
    %cst_14 = arith.constant 0.000000e+00 : f32
    %15 = vector.broadcast %cst_14 : f32 to vector<32x128xf32>
    %16 = arith.maximumf %14, %15 : vector<32x128xf32>
    %17 = arith.truncf %16 : vector<32x128xf32> to vector<32x128xbf16>
    %c0_15 = arith.constant 0 : index
    %c0_16 = arith.constant 0 : index
    %18 = vector.load %arg7[%c0_15, %c0_16] : memref<32x128xbf16, #tpu.memory_space<vmem>>, vector<32x128xbf16>
    tpu.vector_store %arg7[%c0_15, %c0_16], %17 {strides = array<i32>} : memref<32x128xbf16, #tpu.memory_space<vmem>>, vector<32x128xbf16>,
    return
  }
  func.func @transform_0(%arg0: i32) -> (i32, i32) {
    %c0_i32 = arith.constant 0 : i32
    %c0_i32_0 = arith.constant 0 : i32
    return %arg0, %c0_i32 : i32, i32
  }
  func.func @transform_1(%arg0: i32) -> (i32, i32) {
    %c0_i32 = arith.constant 0 : i32
    %c0_i32_0 = arith.constant 0 : i32
    return %arg0, %c0_i32 : i32, i32
  }
  func.func @transform_2(%arg0: i32) -> (i32, i32) {
    %c0_i32 = arith.constant 0 : i32
    %c0_i32_0 = arith.constant 0 : i32
    return %arg0, %c0_i32 : i32, i32
  }
  func.func @transform_3(%arg0: i32) -> (i32, i32) {
    %c0_i32 = arith.constant 0 : i32
    %c0_i32_0 = arith.constant 0 : i32
    return %arg0, %c0_i32 : i32, i32
  }
  func.func @transform_4(%arg0: i32) -> (i32, i32) {
    %c0_i32 = arith.constant 0 : i32
    %c0_i32_0 = arith.constant 0 : i32
    %c0_i32_1 = arith.constant 0 : i32
    return %c0_i32, %c0_i32_0 : i32, i32
  }
  func.func @transform_5(%arg0: i32) -> (i32, i32) {
    %c0_i32 = arith.constant 0 : i32
    %c0_i32_0 = arith.constant 0 : i32
    %c0_i32_1 = arith.constant 0 : i32
    return %c0_i32, %c0_i32_0 : i32, i32
  }
  func.func @transform_6(%arg0: i32) -> (i32, i32) {
    %c0_i32 = arith.constant 0 : i32
    %c0_i32_0 = arith.constant 0 : i32
    return %arg0, %c0_i32 : i32, i32
  }
}

module attributes {stable_mosaic.version = 11 : i64} {
  func.func @_fused_matmul_kernel(%arg0: i32, %arg1: memref<16x640xbf16, #tpu.memory_space<vmem>>, %arg2: memref<16x640xbf16, #tpu.memory_space<vmem>>, %arg3: memref<16x640xbf16, #tpu.memory_space<vmem>>, %arg4: memref<16x640xbf16, #tpu.memory_space<vmem>>, %arg5: memref<640x128xbf16, #tpu.memory_space<vmem>>, %arg6: memref<1x128xf32, #tpu.memory_space<vmem>>, %arg7: memref<16x128xbf16, #tpu.memory_space<vmem>>) attributes {dimension_semantics = [#tpu.dimension_semantics<parallel>], iteration_bounds = array<i64: 1>, scalar_prefetch = 0 : i64, scratch_operands = 0 : i64, tpu.core_type = #tpu.core_type<tc>, window_params = [{transform_indices = @transform_0, window_bounds = array<i64: 16, 640>}, {transform_indices = @transform_1, window_bounds = array<i64: 16, 640>}, {transform_indices = @transform_2, window_bounds = array<i64: 16, 640>}, {transform_indices = @transform_3, window_bounds = array<i64: 16, 640>}, {pipeline_mode = #tpu.pipeline_mode<synchronous>, transform_indices = @transform_4, window_bounds = array<i64: 640, 128>}, {pipeline_mode = #tpu.pipeline_mode<synchronous>, transform_indices = @transform_5, window_bounds = array<i64: 1, 128>}, {transform_indices = @transform_6, window_bounds = array<i64: 16, 128>}]} {
    %c0 = arith.constant 0 : index
    %c0_0 = arith.constant 0 : index
    %0 = vector.load %arg5[%c0, %c0_0] : memref<640x128xbf16, #tpu.memory_space<vmem>>, vector<640x128xbf16>
    %c0_1 = arith.constant 0 : index
    %c0_2 = arith.constant 0 : index
    %1 = vector.load %arg1[%c0_1, %c0_2] : memref<16x640xbf16, #tpu.memory_space<vmem>>, vector<16x640xbf16>
    %cst = arith.constant dense<0.000000e+00> : vector<16x128xf32>
    %2 = tpu.matmul %1, %0, %cst {dimension_numbers = #tpu.dot_dimension_numbers<[1], [0], [0], [1], [0, 0, 1, 1], [], []>} : vector<16x640xbf16>, vector<640x128xbf16>, vector<16x128xf32> -> vector<16x128xf32>
    %c0_3 = arith.constant 0 : index
    %c0_4 = arith.constant 0 : index
    %3 = vector.load %arg2[%c0_3, %c0_4] : memref<16x640xbf16, #tpu.memory_space<vmem>>, vector<16x640xbf16>
    %cst_5 = arith.constant dense<0.000000e+00> : vector<16x128xf32>
    %4 = tpu.matmul %3, %0, %cst_5 {dimension_numbers = #tpu.dot_dimension_numbers<[1], [0], [0], [1], [0, 0, 1, 1], [], []>} : vector<16x640xbf16>, vector<640x128xbf16>, vector<16x128xf32> -> vector<16x128xf32>
    %5 = arith.maximumf %2, %4 : vector<16x128xf32>
    %c0_6 = arith.constant 0 : index
    %c0_7 = arith.constant 0 : index
    %6 = vector.load %arg3[%c0_6, %c0_7] : memref<16x640xbf16, #tpu.memory_space<vmem>>, vector<16x640xbf16>
    %cst_8 = arith.constant dense<0.000000e+00> : vector<16x128xf32>
    %7 = tpu.matmul %6, %0, %cst_8 {dimension_numbers = #tpu.dot_dimension_numbers<[1], [0], [0], [1], [0, 0, 1, 1], [], []>} : vector<16x640xbf16>, vector<640x128xbf16>, vector<16x128xf32> -> vector<16x128xf32>
    %8 = arith.maximumf %5, %7 : vector<16x128xf32>
    %c0_9 = arith.constant 0 : index
    %c0_10 = arith.constant 0 : index
    %9 = vector.load %arg4[%c0_9, %c0_10] : memref<16x640xbf16, #tpu.memory_space<vmem>>, vector<16x640xbf16>
    %cst_11 = arith.constant dense<0.000000e+00> : vector<16x128xf32>
    %10 = tpu.matmul %9, %0, %cst_11 {dimension_numbers = #tpu.dot_dimension_numbers<[1], [0], [0], [1], [0, 0, 1, 1], [], []>} : vector<16x640xbf16>, vector<640x128xbf16>, vector<16x128xf32> -> vector<16x128xf32>
    %11 = arith.maximumf %8, %10 : vector<16x128xf32>
    %c0_12 = arith.constant 0 : index
    %c0_13 = arith.constant 0 : index
    %12 = vector.load %arg6[%c0_12, %c0_13] : memref<1x128xf32, #tpu.memory_space<vmem>>, vector<1x128xf32>
    %13 = vector.broadcast %12 : vector<1x128xf32> to vector<16x128xf32>
    %14 = arith.addf %11, %13 : vector<16x128xf32>
    %cst_14 = arith.constant 0.000000e+00 : f32
    %15 = vector.broadcast %cst_14 : f32 to vector<16x128xf32>
    %16 = arith.maximumf %14, %15 : vector<16x128xf32>
    %17 = arith.truncf %16 : vector<16x128xf32> to vector<16x128xbf16>
    %c0_15 = arith.constant 0 : index
    %c0_16 = arith.constant 0 : index
    %18 = vector.load %arg7[%c0_15, %c0_16] : memref<16x128xbf16, #tpu.memory_space<vmem>>, vector<16x128xbf16>
    tpu.vector_store %arg7[%c0_15, %c0_16], %17 {strides = array<i32>} : memref<16x128xbf16, #tpu.memory_space<vmem>>, vector<16x128xbf16>,
    return
  }
  func.func @transform_0(%arg0: i32) -> (i32, i32) {
    %c0_i32 = arith.constant 0 : i32
    %c0_i32_0 = arith.constant 0 : i32
    return %arg0, %c0_i32 : i32, i32
  }
  func.func @transform_1(%arg0: i32) -> (i32, i32) {
    %c0_i32 = arith.constant 0 : i32
    %c0_i32_0 = arith.constant 0 : i32
    return %arg0, %c0_i32 : i32, i32
  }
  func.func @transform_2(%arg0: i32) -> (i32, i32) {
    %c0_i32 = arith.constant 0 : i32
    %c0_i32_0 = arith.constant 0 : i32
    return %arg0, %c0_i32 : i32, i32
  }
  func.func @transform_3(%arg0: i32) -> (i32, i32) {
    %c0_i32 = arith.constant 0 : i32
    %c0_i32_0 = arith.constant 0 : i32
    return %arg0, %c0_i32 : i32, i32
  }
  func.func @transform_4(%arg0: i32) -> (i32, i32) {
    %c0_i32 = arith.constant 0 : i32
    %c0_i32_0 = arith.constant 0 : i32
    %c0_i32_1 = arith.constant 0 : i32
    return %c0_i32, %c0_i32_0 : i32, i32
  }
  func.func @transform_5(%arg0: i32) -> (i32, i32) {
    %c0_i32 = arith.constant 0 : i32
    %c0_i32_0 = arith.constant 0 : i32
    %c0_i32_1 = arith.constant 0 : i32
    return %c0_i32, %c0_i32_0 : i32, i32
  }
  func.func @transform_6(%arg0: i32) -> (i32, i32) {
    %c0_i32 = arith.constant 0 : i32
    %c0_i32_0 = arith.constant 0 : i32
    return %arg0, %c0_i32 : i32, i32
  }
}

module attributes {stable_mosaic.version = 11 : i64} {
  func.func @_fused_matmul_kernel(%arg0: i32, %arg1: memref<32x512xbf16, #tpu.memory_space<vmem>>, %arg2: memref<512x512xbf16, #tpu.memory_space<vmem>>, %arg3: memref<1x512xf32, #tpu.memory_space<vmem>>, %arg4: memref<32x512xbf16, #tpu.memory_space<vmem>>) attributes {dimension_semantics = [#tpu.dimension_semantics<parallel>], iteration_bounds = array<i64: 1>, scalar_prefetch = 0 : i64, scratch_operands = 0 : i64, tpu.core_type = #tpu.core_type<tc>, window_params = [{transform_indices = @transform_0, window_bounds = array<i64: 32, 512>}, {pipeline_mode = #tpu.pipeline_mode<synchronous>, transform_indices = @transform_1, window_bounds = array<i64: 512, 512>}, {pipeline_mode = #tpu.pipeline_mode<synchronous>, transform_indices = @transform_2, window_bounds = array<i64: 1, 512>}, {transform_indices = @transform_3, window_bounds = array<i64: 32, 512>}]} {
    %c0 = arith.constant 0 : index
    %c0_0 = arith.constant 0 : index
    %0 = vector.load %arg2[%c0, %c0_0] : memref<512x512xbf16, #tpu.memory_space<vmem>>, vector<512x512xbf16>
    %c0_1 = arith.constant 0 : index
    %c0_2 = arith.constant 0 : index
    %1 = vector.load %arg1[%c0_1, %c0_2] : memref<32x512xbf16, #tpu.memory_space<vmem>>, vector<32x512xbf16>
    %cst = arith.constant dense<0.000000e+00> : vector<32x512xf32>
    %2 = tpu.matmul %1, %0, %cst {dimension_numbers = #tpu.dot_dimension_numbers<[1], [0], [0], [1], [0, 0, 1, 1], [], []>} : vector<32x512xbf16>, vector<512x512xbf16>, vector<32x512xf32> -> vector<32x512xf32>
    %c0_3 = arith.constant 0 : index
    %c0_4 = arith.constant 0 : index
    %3 = vector.load %arg3[%c0_3, %c0_4] : memref<1x512xf32, #tpu.memory_space<vmem>>, vector<1x512xf32>
    %4 = vector.broadcast %3 : vector<1x512xf32> to vector<32x512xf32>
    %5 = arith.addf %2, %4 : vector<32x512xf32>
    %cst_5 = arith.constant 0.000000e+00 : f32
    %6 = vector.broadcast %cst_5 : f32 to vector<32x512xf32>
    %7 = arith.maximumf %5, %6 : vector<32x512xf32>
    %8 = arith.truncf %7 : vector<32x512xf32> to vector<32x512xbf16>
    %c0_6 = arith.constant 0 : index
    %c0_7 = arith.constant 0 : index
    %9 = vector.load %arg4[%c0_6, %c0_7] : memref<32x512xbf16, #tpu.memory_space<vmem>>, vector<32x512xbf16>
    tpu.vector_store %arg4[%c0_6, %c0_7], %8 {strides = array<i32>} : memref<32x512xbf16, #tpu.memory_space<vmem>>, vector<32x512xbf16>,
    return
  }
  func.func @transform_0(%arg0: i32) -> (i32, i32) {
    %c0_i32 = arith.constant 0 : i32
    %c0_i32_0 = arith.constant 0 : i32
    return %arg0, %c0_i32 : i32, i32
  }
  func.func @transform_1(%arg0: i32) -> (i32, i32) {
    %c0_i32 = arith.constant 0 : i32
    %c0_i32_0 = arith.constant 0 : i32
    %c0_i32_1 = arith.constant 0 : i32
    return %c0_i32, %c0_i32_0 : i32, i32
  }
  func.func @transform_2(%arg0: i32) -> (i32, i32) {
    %c0_i32 = arith.constant 0 : i32
    %c0_i32_0 = arith.constant 0 : i32
    %c0_i32_1 = arith.constant 0 : i32
    return %c0_i32, %c0_i32_0 : i32, i32
  }
  func.func @transform_3(%arg0: i32) -> (i32, i32) {
    %c0_i32 = arith.constant 0 : i32
    %c0_i32_0 = arith.constant 0 : i32
    return %arg0, %c0_i32 : i32, i32
  }
}

module attributes {stable_mosaic.version = 11 : i64} {
  func.func @_fused_matmul_kernel(%arg0: i32, %arg1: memref<80x512xbf16, #tpu.memory_space<vmem>>, %arg2: memref<512x256xbf16, #tpu.memory_space<vmem>>, %arg3: memref<1x256xf32, #tpu.memory_space<vmem>>, %arg4: memref<80x256xbf16, #tpu.memory_space<vmem>>) attributes {dimension_semantics = [#tpu.dimension_semantics<parallel>], iteration_bounds = array<i64: 1>, scalar_prefetch = 0 : i64, scratch_operands = 0 : i64, tpu.core_type = #tpu.core_type<tc>, window_params = [{transform_indices = @transform_0, window_bounds = array<i64: 80, 512>}, {pipeline_mode = #tpu.pipeline_mode<synchronous>, transform_indices = @transform_1, window_bounds = array<i64: 512, 256>}, {pipeline_mode = #tpu.pipeline_mode<synchronous>, transform_indices = @transform_2, window_bounds = array<i64: 1, 256>}, {transform_indices = @transform_3, window_bounds = array<i64: 80, 256>}]} {
    %c0 = arith.constant 0 : index
    %c0_0 = arith.constant 0 : index
    %0 = vector.load %arg2[%c0, %c0_0] : memref<512x256xbf16, #tpu.memory_space<vmem>>, vector<512x256xbf16>
    %c0_1 = arith.constant 0 : index
    %c0_2 = arith.constant 0 : index
    %1 = vector.load %arg1[%c0_1, %c0_2] : memref<80x512xbf16, #tpu.memory_space<vmem>>, vector<80x512xbf16>
    %cst = arith.constant dense<0.000000e+00> : vector<80x256xf32>
    %2 = tpu.matmul %1, %0, %cst {dimension_numbers = #tpu.dot_dimension_numbers<[1], [0], [0], [1], [0, 0, 1, 1], [], []>} : vector<80x512xbf16>, vector<512x256xbf16>, vector<80x256xf32> -> vector<80x256xf32>
    %c0_3 = arith.constant 0 : index
    %c0_4 = arith.constant 0 : index
    %3 = vector.load %arg3[%c0_3, %c0_4] : memref<1x256xf32, #tpu.memory_space<vmem>>, vector<1x256xf32>
    %4 = vector.broadcast %3 : vector<1x256xf32> to vector<80x256xf32>
    %5 = arith.addf %2, %4 : vector<80x256xf32>
    %cst_5 = arith.constant 0.000000e+00 : f32
    %6 = vector.broadcast %cst_5 : f32 to vector<80x256xf32>
    %7 = arith.maximumf %5, %6 : vector<80x256xf32>
    %8 = arith.truncf %7 : vector<80x256xf32> to vector<80x256xbf16>
    %c0_6 = arith.constant 0 : index
    %c0_7 = arith.constant 0 : index
    %9 = vector.load %arg4[%c0_6, %c0_7] : memref<80x256xbf16, #tpu.memory_space<vmem>>, vector<80x256xbf16>
    tpu.vector_store %arg4[%c0_6, %c0_7], %8 {strides = array<i32>} : memref<80x256xbf16, #tpu.memory_space<vmem>>, vector<80x256xbf16>,
    return
  }
  func.func @transform_0(%arg0: i32) -> (i32, i32) {
    %c0_i32 = arith.constant 0 : i32
    %c0_i32_0 = arith.constant 0 : i32
    return %arg0, %c0_i32 : i32, i32
  }
  func.func @transform_1(%arg0: i32) -> (i32, i32) {
    %c0_i32 = arith.constant 0 : i32
    %c0_i32_0 = arith.constant 0 : i32
    %c0_i32_1 = arith.constant 0 : i32
    return %c0_i32, %c0_i32_0 : i32, i32
  }
  func.func @transform_2(%arg0: i32) -> (i32, i32) {
    %c0_i32 = arith.constant 0 : i32
    %c0_i32_0 = arith.constant 0 : i32
    %c0_i32_1 = arith.constant 0 : i32
    return %c0_i32, %c0_i32_0 : i32, i32
  }
  func.func @transform_3(%arg0: i32) -> (i32, i32) {
    %c0_i32 = arith.constant 0 : i32
    %c0_i32_0 = arith.constant 0 : i32
    return %arg0, %c0_i32 : i32, i32
  }
}

module attributes {stable_mosaic.version = 11 : i64} {
  func.func @_fused_matmul_kernel(%arg0: i32, %arg1: memref<288x256xbf16, #tpu.memory_space<vmem>>, %arg2: memref<256x128xbf16, #tpu.memory_space<vmem>>, %arg3: memref<1x128xf32, #tpu.memory_space<vmem>>, %arg4: memref<288x128xbf16, #tpu.memory_space<vmem>>) attributes {dimension_semantics = [#tpu.dimension_semantics<parallel>], iteration_bounds = array<i64: 1>, scalar_prefetch = 0 : i64, scratch_operands = 0 : i64, tpu.core_type = #tpu.core_type<tc>, window_params = [{transform_indices = @transform_0, window_bounds = array<i64: 288, 256>}, {pipeline_mode = #tpu.pipeline_mode<synchronous>, transform_indices = @transform_1, window_bounds = array<i64: 256, 128>}, {pipeline_mode = #tpu.pipeline_mode<synchronous>, transform_indices = @transform_2, window_bounds = array<i64: 1, 128>}, {transform_indices = @transform_3, window_bounds = array<i64: 288, 128>}]} {
    %c0 = arith.constant 0 : index
    %c0_0 = arith.constant 0 : index
    %0 = vector.load %arg2[%c0, %c0_0] : memref<256x128xbf16, #tpu.memory_space<vmem>>, vector<256x128xbf16>
    %c0_1 = arith.constant 0 : index
    %c0_2 = arith.constant 0 : index
    %1 = vector.load %arg1[%c0_1, %c0_2] : memref<288x256xbf16, #tpu.memory_space<vmem>>, vector<288x256xbf16>
    %cst = arith.constant dense<0.000000e+00> : vector<288x128xf32>
    %2 = tpu.matmul %1, %0, %cst {dimension_numbers = #tpu.dot_dimension_numbers<[1], [0], [0], [1], [0, 0, 1, 1], [], []>} : vector<288x256xbf16>, vector<256x128xbf16>, vector<288x128xf32> -> vector<288x128xf32>
    %c0_3 = arith.constant 0 : index
    %c0_4 = arith.constant 0 : index
    %3 = vector.load %arg3[%c0_3, %c0_4] : memref<1x128xf32, #tpu.memory_space<vmem>>, vector<1x128xf32>
    %4 = vector.broadcast %3 : vector<1x128xf32> to vector<288x128xf32>
    %5 = arith.addf %2, %4 : vector<288x128xf32>
    %cst_5 = arith.constant 0.000000e+00 : f32
    %6 = vector.broadcast %cst_5 : f32 to vector<288x128xf32>
    %7 = arith.maximumf %5, %6 : vector<288x128xf32>
    %8 = arith.truncf %7 : vector<288x128xf32> to vector<288x128xbf16>
    %c0_6 = arith.constant 0 : index
    %c0_7 = arith.constant 0 : index
    %9 = vector.load %arg4[%c0_6, %c0_7] : memref<288x128xbf16, #tpu.memory_space<vmem>>, vector<288x128xbf16>
    tpu.vector_store %arg4[%c0_6, %c0_7], %8 {strides = array<i32>} : memref<288x128xbf16, #tpu.memory_space<vmem>>, vector<288x128xbf16>,
    return
  }
  func.func @transform_0(%arg0: i32) -> (i32, i32) {
    %c0_i32 = arith.constant 0 : i32
    %c0_i32_0 = arith.constant 0 : i32
    return %arg0, %c0_i32 : i32, i32
  }
  func.func @transform_1(%arg0: i32) -> (i32, i32) {
    %c0_i32 = arith.constant 0 : i32
    %c0_i32_0 = arith.constant 0 : i32
    %c0_i32_1 = arith.constant 0 : i32
    return %c0_i32, %c0_i32_0 : i32, i32
  }
  func.func @transform_2(%arg0: i32) -> (i32, i32) {
    %c0_i32 = arith.constant 0 : i32
    %c0_i32_0 = arith.constant 0 : i32
    %c0_i32_1 = arith.constant 0 : i32
    return %c0_i32, %c0_i32_0 : i32, i32
  }
  func.func @transform_3(%arg0: i32) -> (i32, i32) {
    %c0_i32 = arith.constant 0 : i32
    %c0_i32_0 = arith.constant 0 : i32
    return %arg0, %c0_i32 : i32, i32
  }
}

module attributes {stable_mosaic.version = 11 : i64} {
  func.func @_fused_matmul_kernel(%arg0: i32, %arg1: memref<512x384xbf16, #tpu.memory_space<vmem>>, %arg2: memref<384x128xbf16, #tpu.memory_space<vmem>>, %arg3: memref<1x128xf32, #tpu.memory_space<vmem>>, %arg4: memref<512x128xf32, #tpu.memory_space<vmem>>) attributes {dimension_semantics = [#tpu.dimension_semantics<parallel>], iteration_bounds = array<i64: 3>, scalar_prefetch = 0 : i64, scratch_operands = 0 : i64, tpu.core_type = #tpu.core_type<tc>, window_params = [{transform_indices = @transform_0, window_bounds = array<i64: 512, 384>}, {pipeline_mode = #tpu.pipeline_mode<synchronous>, transform_indices = @transform_1, window_bounds = array<i64: 384, 128>}, {pipeline_mode = #tpu.pipeline_mode<synchronous>, transform_indices = @transform_2, window_bounds = array<i64: 1, 128>}, {transform_indices = @transform_3, window_bounds = array<i64: 512, 128>}]} {
    %c0 = arith.constant 0 : index
    %c0_0 = arith.constant 0 : index
    %0 = vector.load %arg2[%c0, %c0_0] : memref<384x128xbf16, #tpu.memory_space<vmem>>, vector<384x128xbf16>
    %c0_1 = arith.constant 0 : index
    %c0_2 = arith.constant 0 : index
    %1 = vector.load %arg1[%c0_1, %c0_2] : memref<512x384xbf16, #tpu.memory_space<vmem>>, vector<512x384xbf16>
    %cst = arith.constant dense<0.000000e+00> : vector<512x128xf32>
    %2 = tpu.matmul %1, %0, %cst {dimension_numbers = #tpu.dot_dimension_numbers<[1], [0], [0], [1], [0, 0, 1, 1], [], []>} : vector<512x384xbf16>, vector<384x128xbf16>, vector<512x128xf32> -> vector<512x128xf32>
    %c0_3 = arith.constant 0 : index
    %c0_4 = arith.constant 0 : index
    %3 = vector.load %arg3[%c0_3, %c0_4] : memref<1x128xf32, #tpu.memory_space<vmem>>, vector<1x128xf32>
    %4 = vector.broadcast %3 : vector<1x128xf32> to vector<512x128xf32>
    %5 = arith.addf %2, %4 : vector<512x128xf32>
    %6 = arith.negf %5 : vector<512x128xf32>
    %7 = math.exp %6 : vector<512x128xf32>
    %cst_5 = arith.constant 1.000000e+00 : f32
    %8 = vector.broadcast %cst_5 : f32 to vector<512x128xf32>
    %9 = arith.addf %8, %7 : vector<512x128xf32>
    %10 = arith.divf %8, %9 : vector<512x128xf32>
    %c0_6 = arith.constant 0 : index
    %c0_7 = arith.constant 0 : index
    %11 = vector.load %arg4[%c0_6, %c0_7] : memref<512x128xf32, #tpu.memory_space<vmem>>, vector<512x128xf32>
    tpu.vector_store %arg4[%c0_6, %c0_7], %10 {strides = array<i32>} : memref<512x128xf32, #tpu.memory_space<vmem>>, vector<512x128xf32>,
    return
  }
  func.func @transform_0(%arg0: i32) -> (i32, i32) {
    %c0_i32 = arith.constant 0 : i32
    %c0_i32_0 = arith.constant 0 : i32
    return %arg0, %c0_i32 : i32, i32
  }
  func.func @transform_1(%arg0: i32) -> (i32, i32) {
    %c0_i32 = arith.constant 0 : i32
    %c0_i32_0 = arith.constant 0 : i32
    %c0_i32_1 = arith.constant 0 : i32
    return %c0_i32, %c0_i32_0 : i32, i32
  }
  func.func @transform_2(%arg0: i32) -> (i32, i32) {
    %c0_i32 = arith.constant 0 : i32
    %c0_i32_0 = arith.constant 0 : i32
    %c0_i32_1 = arith.constant 0 : i32
    return %c0_i32, %c0_i32_0 : i32, i32
  }
  func.func @transform_3(%arg0: i32) -> (i32, i32) {
    %c0_i32 = arith.constant 0 : i32
    %c0_i32_0 = arith.constant 0 : i32
    return %arg0, %c0_i32 : i32, i32
  }
}

</mosaic_0001>

<llo_original>
// kernel: autoencoder_forward.7
$region0: #{autoencoder_forward.7}
  #allocation0 [shape = 'u32[]', space=smem, size = 0x4, offset = 0x4, fixed_abs, tag = 'smem constant byte address 0x4 - core index']
  #allocation1 [shape = 'u32[144,128]{1,0:T(1,128)}', space=vmem, size = 0x12000, scoped, tag = 'internal scratch']
  %s0 = inlined_call_operand.vmem [shape: bf16[128,128], index: 0, kind: input, shape index: {}]
  %s1 = inlined_call_operand.vmem [shape: bf16[128,128], index: 1, kind: input, shape index: {}]
  %s2 = inlined_call_operand.vmem [shape: bf16[128,128], index: 2, kind: input, shape index: {}]
  %s3 = inlined_call_operand.vmem [shape: bf16[128,128], index: 3, kind: input, shape index: {}]
  %s4 = inlined_call_operand.vmem [shape: bf16[128,128], index: 4, kind: input, shape index: {}]
  %s5 = inlined_call_operand.vmem [shape: f32[1,128], index: 5, kind: input, shape index: {}]
  %s6 = inlined_call_operand.vmem [shape: bf16[128,128], index: 6, kind: output, shape index: {}]
  %s7 = sld [smem:[#allocation0]]
  $region34: #{autoencoder_forward.7} parent=0
    _
  %s9 = ssub.s32 1, %s7
  %s10 = scalar_select 0, %s9, %s7
  // Predicated region
  $region2: #{autoencoder_forward.7} parent=0 // pred_check
    _
  $region3: #{autoencoder_forward.7} parent=0 // pred_check_branch
    %12 = sbr.rel (0) target = $region5
  $region4: #{autoencoder_forward.7} parent=0 // pred_region
    _
  $region5: #{autoencoder_forward.7} parent=0 // pred_fallthru
    _
  // Predicated region
  $region6: #{autoencoder_forward.7} parent=0 // pred_check
    _
  $region7: #{autoencoder_forward.7} parent=0 // pred_check_branch
    %14 = sbr.rel (0) target = $region9
  $region8: #{autoencoder_forward.7} parent=0 // pred_region
    _
  $region9: #{autoencoder_forward.7} parent=0 // pred_fallthru
    _
  // Predicated region
  $region10: #{autoencoder_forward.7} parent=0 // pred_check
    _
  $region11: #{autoencoder_forward.7} parent=0 // pred_check_branch
    %16 = sbr.rel (0) target = $region13
  $region12: #{autoencoder_forward.7} parent=0 // pred_region
    _
  $region13: #{autoencoder_forward.7} parent=0 // pred_fallthru
    _
  // Predicated region
  $region14: #{autoencoder_forward.7} parent=0 // pred_check
    _
  $region15: #{autoencoder_forward.7} parent=0 // pred_check_branch
    %18 = sbr.rel (0) target = $region17
  $region16: #{autoencoder_forward.7} parent=0 // pred_region
    _
  $region17: #{autoencoder_forward.7} parent=0 // pred_fallthru
    _
  // Predicated region
  $region18: #{autoencoder_forward.7} parent=0 // pred_check
    _
  $region19: #{autoencoder_forward.7} parent=0 // pred_check_branch
    %20 = sbr.rel (0) target = $region21
  $region20: #{autoencoder_forward.7} parent=0 // pred_region
    _
  $region21: #{autoencoder_forward.7} parent=0 // pred_fallthru
    _
  // Predicated region
  $region22: #{autoencoder_forward.7} parent=0 // pred_check
    _
  $region23: #{autoencoder_forward.7} parent=0 // pred_check_branch
    %22 = sbr.rel (0) target = $region25
  $region24: #{autoencoder_forward.7} parent=0 // pred_region
    _
  $region25: #{autoencoder_forward.7} parent=0 // pred_fallthru
    _
  %v24 = vld [vmem:[%s4] sm:$0xf]
  %v25 = vld [vmem:[%s4 + $0x4] sm:$0xf]
  %v26 = vld [vmem:[%s4 + $0x8] sm:$0xf]
  %v27 = vld [vmem:[%s4 + $0xc] sm:$0xf]
  %v28 = vld [vmem:[%s4 + $0x10] sm:$0xf]
  %v29 = vld [vmem:[%s4 + $0x14] sm:$0xf]
  %v30 = vld [vmem:[%s4 + $0x18] sm:$0xf]
  %v31 = vld [vmem:[%s4 + $0x1c] sm:$0xf]
  %v32 = vld [vmem:[%s4 + $0x20] sm:$0xf]
  %v33 = vld [vmem:[%s4 + $0x24] sm:$0xf]
  %v34 = vld [vmem:[%s4 + $0x28] sm:$0xf]
  %v35 = vld [vmem:[%s4 + $0x2c] sm:$0xf]
  %v36 = vld [vmem:[%s4 + $0x30] sm:$0xf]
  %v37 = vld [vmem:[%s4 + $0x34] sm:$0xf]
  %v38 = vld [vmem:[%s4 + $0x38] sm:$0xf]
  %v39 = vld [vmem:[%s4 + $0x3c] sm:$0xf]
  %v40 = vld [vmem:[%s0] sm:$0xf]
  %v41 = vld [vmem:[%s0 + $0x4] sm:$0xf]
  %v42 = vld [vmem:[%s0 + $0x8] sm:$0xf]
  %v43 = vld [vmem:[%s0 + $0xc] sm:$0xf]
  %v44 = vld [vmem:[%s0 + $0x10] sm:$0xf]
  %v45 = vld [vmem:[%s0 + $0x14] sm:$0xf]
  %v46 = vld [vmem:[%s0 + $0x18] sm:$0xf]
  %v47 = vld [vmem:[%s0 + $0x1c] sm:$0xf]
  %v48 = vld [vmem:[%s0 + $0x20] sm:$0xf]
  %v49 = vld [vmem:[%s0 + $0x24] sm:$0xf]
  %v50 = vld [vmem:[%s0 + $0x28] sm:$0xf]
  %v51 = vld [vmem:[%s0 + $0x2c] sm:$0xf]
  %v52 = vld [vmem:[%s0 + $0x30] sm:$0xf]
  %v53 = vld [vmem:[%s0 + $0x34] sm:$0xf]
  %v54 = vld [vmem:[%s0 + $0x38] sm:$0xf]
  %v55 = vld [vmem:[%s0 + $0x3c] sm:$0xf]
  %v72 = vunpack.c.l.b16 %v40
  %v73 = vunpack.c.l.b16 %v41
  %v74 = vunpack.c.l.b16 %v42
  %v75 = vunpack.c.l.b16 %v43
  %v76 = vunpack.c.l.b16 %v44
  %v77 = vunpack.c.l.b16 %v45
  %v78 = vunpack.c.l.b16 %v46
  %v79 = vunpack.c.l.b16 %v47
  %v80 = vunpack.c.l.b16 %v48
  %v81 = vunpack.c.l.b16 %v49
  %v82 = vunpack.c.l.b16 %v50
  %v83 = vunpack.c.l.b16 %v51
  %v84 = vunpack.c.l.b16 %v52
  %v85 = vunpack.c.l.b16 %v53
  %v86 = vunpack.c.l.b16 %v54
  %v87 = vunpack.c.l.b16 %v55
  %v88 = vpack.c.b16 %v73, %v72
  %v89 = vpack.c.b16 %v75, %v74
  %v90 = vpack.c.b16 %v77, %v76
  %v91 = vpack.c.b16 %v79, %v78
  %v92 = vpack.c.b16 %v81, %v80
  %v93 = vpack.c.b16 %v83, %v82
  %v94 = vpack.c.b16 %v85, %v84
  %v95 = vpack.c.b16 %v87, %v86
  %v120 = vunpack.c.l.b16 %v24
  %v121 = vunpack.c.l.b16 %v25
  %v122 = vunpack.c.l.b16 %v26
  %v123 = vunpack.c.l.b16 %v27
  %v124 = vunpack.c.l.b16 %v28
  %v125 = vunpack.c.l.b16 %v29
  %v126 = vunpack.c.l.b16 %v30
  %v127 = vunpack.c.l.b16 %v31
  %v128 = vunpack.c.l.b16 %v32
  %v129 = vunpack.c.l.b16 %v33
  %v130 = vunpack.c.l.b16 %v34
  %v131 = vunpack.c.l.b16 %v35
  %v132 = vunpack.c.l.b16 %v36
  %v133 = vunpack.c.l.b16 %v37
  %v134 = vunpack.c.l.b16 %v38
  %v135 = vunpack.c.l.b16 %v39
  %v136 = vpack.c.b16 %v121, %v120
  %v137 = vpack.c.b16 %v123, %v122
  %v138 = vpack.c.b16 %v125, %v124
  %v139 = vpack.c.b16 %v127, %v126
  %v140 = vpack.c.b16 %v129, %v128
  %v141 = vpack.c.b16 %v131, %v130
  %v142 = vpack.c.b16 %v133, %v132
  %v143 = vpack.c.b16 %v135, %v134
  %152 = vmatprep.subr.bf16.mxu0 0
  %153 = vmatpush1.bf16.msra.mxu0 %v136
  %154 = vmatprep.subr.bf16.mxu0 0
  %155 = vmatpush1.bf16.msra.mxu0 %v137
  %156 = vmatprep.subr.bf16.mxu0 0
  %157 = vmatpush1.bf16.msra.mxu0 %v138
  %158 = vmatprep.subr.bf16.mxu0 0
  %159 = vmatpush1.bf16.msra.mxu0 %v139
  %160 = vmatprep.subr.bf16.mxu0 0
  %161 = vmatpush1.bf16.msra.mxu0 %v140
  %162 = vmatprep.subr.bf16.mxu0 0
  %163 = vmatpush1.bf16.msra.mxu0 %v141
  %164 = vmatprep.subr.bf16.mxu0 0
  %165 = vmatpush1.bf16.msra.mxu0 %v142
  %166 = vmatprep.subr.bf16.mxu0 0
  %167 = vmatpush1.bf16.msra.mxu0 %v143
  %168 = vmatprep.subr.bf16.mxu0 0
  %169 = vmatpush1.bf16.msra.mxu0 0
  %170 = vmatprep.subr.bf16.mxu0 0
  %171 = vmatpush1.bf16.msra.mxu0 0
  %172 = vmatprep.subr.bf16.mxu0 0
  %173 = vmatpush1.bf16.msra.mxu0 0
  %174 = vmatprep.subr.bf16.mxu0 0
  %175 = vmatpush1.bf16.msra.mxu0 0
  %176 = vmatprep.subr.bf16.mxu0 0
  %177 = vmatpush1.bf16.msra.mxu0 0
  %178 = vmatprep.subr.bf16.mxu0 0
  %179 = vmatpush1.bf16.msra.mxu0 0
  %180 = vmatprep.subr.bf16.mxu0 0
  %181 = vmatpush1.bf16.msra.mxu0 0
  %182 = vmatprep.subr.bf16.mxu0 0
  %183 = vmatpush1.bf16.msra.mxu0 0
  %184 = vmatprep.mubr.bf16.mxu0 0
  %185 = vmatmul.mubr.bf16.gmra.mrb[0].mxu0 %v88
  %v186 = vpop.f32.mrb[0].mxu0
  %v187 = vadd.f32 0.0, %v186
  %v188 = vpop.f32.mrb[0].mxu0
  %v189 = vpop.f32.mrb[0].mxu0
  %v190 = vadd.f32 0.0, %v189
  %v191 = vpop.f32.mrb[0].mxu0
  %192 = vmatprep.mubr.bf16.mxu0 0
  %193 = vmatmul.mubr.bf16.gmra.mrb[0].mxu0 %v89
  %v194 = vpop.f32.mrb[0].mxu0
  %v195 = vadd.f32 0.0, %v194
  %v196 = vpop.f32.mrb[0].mxu0
  %v197 = vpop.f32.mrb[0].mxu0
  %v198 = vadd.f32 0.0, %v197
  %v199 = vpop.f32.mrb[0].mxu0
  %200 = vmatprep.mubr.bf16.mxu0 0
  %201 = vmatmul.mubr.bf16.gmra.mrb[0].mxu0 %v90
  %v202 = vpop.f32.mrb[0].mxu0
  %v203 = vadd.f32 0.0, %v202
  %v204 = vpop.f32.mrb[0].mxu0
  %v205 = vpop.f32.mrb[0].mxu0
  %v206 = vadd.f32 0.0, %v205
  %v207 = vpop.f32.mrb[0].mxu0
  %208 = vmatprep.mubr.bf16.mxu0 0
  %209 = vmatmul.mubr.bf16.gmra.mrb[0].mxu0 %v91
  %v210 = vpop.f32.mrb[0].mxu0
  %v211 = vadd.f32 0.0, %v210
  %v212 = vpop.f32.mrb[0].mxu0
  %v213 = vpop.f32.mrb[0].mxu0
  %v214 = vadd.f32 0.0, %v213
  %v215 = vpop.f32.mrb[0].mxu0
  %216 = vmatprep.mubr.bf16.mxu0 0
  %217 = vmatmul.mubr.bf16.gmra.mrb[0].mxu0 %v92
  %v218 = vpop.f32.mrb[0].mxu0
  %v219 = vadd.f32 0.0, %v218
  %v220 = vpop.f32.mrb[0].mxu0
  %v221 = vpop.f32.mrb[0].mxu0
  %v222 = vadd.f32 0.0, %v221
  %v223 = vpop.f32.mrb[0].mxu0
  %224 = vmatprep.mubr.bf16.mxu0 0
  %225 = vmatmul.mubr.bf16.gmra.mrb[0].mxu0 %v93
  %v226 = vpop.f32.mrb[0].mxu0
  %v227 = vadd.f32 0.0, %v226
  %v228 = vpop.f32.mrb[0].mxu0
  %v229 = vpop.f32.mrb[0].mxu0
  %v230 = vadd.f32 0.0, %v229
  %v231 = vpop.f32.mrb[0].mxu0
  %232 = vmatprep.mubr.bf16.mxu0 0
  %233 = vmatmul.mubr.bf16.gmra.mrb[0].mxu0 %v94
  %v234 = vpop.f32.mrb[0].mxu0
  %v235 = vadd.f32 0.0, %v234
  %v236 = vpop.f32.mrb[0].mxu0
  %v237 = vpop.f32.mrb[0].mxu0
  %v238 = vadd.f32 0.0, %v237
  %v239 = vpop.f32.mrb[0].mxu0
  %240 = vmatprep.mubr.bf16.mxu0 0
  %241 = vmatmul.mubr.bf16.gmra.mrb[0].mxu0 %v95
  %v242 = vpop.f32.mrb[0].mxu0
  %v243 = vadd.f32 0.0, %v242
  %v244 = vpop.f32.mrb[0].mxu0
  %v245 = vpop.f32.mrb[0].mxu0
  %v246 = vadd.f32 0.0, %v245
  %v247 = vpop.f32.mrb[0].mxu0
  %248 = vdwg.mxu0
  %v249 = vld [vmem:[%s1] sm:$0xf]
  %v250 = vld [vmem:[%s1 + $0x4] sm:$0xf]
  %v251 = vld [vmem:[%s1 + $0x8] sm:$0xf]
  %v252 = vld [vmem:[%s1 + $0xc] sm:$0xf]
  %v253 = vld [vmem:[%s1 + $0x10] sm:$0xf]
  %v254 = vld [vmem:[%s1 + $0x14] sm:$0xf]
  %v255 = vld [vmem:[%s1 + $0x18] sm:$0xf]
  %v256 = vld [vmem:[%s1 + $0x1c] sm:$0xf]
  %v257 = vld [vmem:[%s1 + $0x20] sm:$0xf]
  %v258 = vld [vmem:[%s1 + $0x24] sm:$0xf]
  %v259 = vld [vmem:[%s1 + $0x28] sm:$0xf]
  %v260 = vld [vmem:[%s1 + $0x2c] sm:$0xf]
  %v261 = vld [vmem:[%s1 + $0x30] sm:$0xf]
  %v262 = vld [vmem:[%s1 + $0x34] sm:$0xf]
  %v263 = vld [vmem:[%s1 + $0x38] sm:$0xf]
  %v264 = vld [vmem:[%s1 + $0x3c] sm:$0xf]
  %v281 = vunpack.c.l.b16 %v249
  %v282 = vunpack.c.l.b16 %v250
  %v283 = vunpack.c.l.b16 %v251
  %v284 = vunpack.c.l.b16 %v252
  %v285 = vunpack.c.l.b16 %v253
  %v286 = vunpack.c.l.b16 %v254
  %v287 = vunpack.c.l.b16 %v255
  %v288 = vunpack.c.l.b16 %v256
  %v289 = vunpack.c.l.b16 %v257
  %v290 = vunpack.c.l.b16 %v258
  %v291 = vunpack.c.l.b16 %v259
  %v292 = vunpack.c.l.b16 %v260
  %v293 = vunpack.c.l.b16 %v261
  %v294 = vunpack.c.l.b16 %v262
  %v295 = vunpack.c.l.b16 %v263
  %v296 = vunpack.c.l.b16 %v264
  %v297 = vpack.c.b16 %v282, %v281
  %v298 = vpack.c.b16 %v284, %v283
  %v299 = vpack.c.b16 %v286, %v285
  %v300 = vpack.c.b16 %v288, %v287
  %v301 = vpack.c.b16 %v290, %v289
  %v302 = vpack.c.b16 %v292, %v291
  %v303 = vpack.c.b16 %v294, %v293
  %v304 = vpack.c.b16 %v296, %v295
  %313 = vmatprep.subr.bf16.mxu0 0
  %314 = vmatpush1.bf16.msra.mxu0 %v136
  %315 = vmatprep.subr.bf16.mxu0 0
  %316 = vmatpush1.bf16.msra.mxu0 %v137
  %317 = vmatprep.subr.bf16.mxu0 0
  %318 = vmatpush1.bf16.msra.mxu0 %v138
  %319 = vmatprep.subr.bf16.mxu0 0
  %320 = vmatpush1.bf16.msra.mxu0 %v139
  %321 = vmatprep.subr.bf16.mxu0 0
  %322 = vmatpush1.bf16.msra.mxu0 %v140
  %323 = vmatprep.subr.bf16.mxu0 0
  %324 = vmatpush1.bf16.msra.mxu0 %v141
  %325 = vmatprep.subr.bf16.mxu0 0
  %326 = vmatpush1.bf16.msra.mxu0 %v142
  %327 = vmatprep.subr.bf16.mxu0 0
  %328 = vmatpush1.bf16.msra.mxu0 %v143
  %329 = vmatprep.subr.bf16.mxu0 0
  %330 = vmatpush1.bf16.msra.mxu0 0
  %331 = vmatprep.subr.bf16.mxu0 0
  %332 = vmatpush1.bf16.msra.mxu0 0
  %333 = vmatprep.subr.bf16.mxu0 0
  %334 = vmatpush1.bf16.msra.mxu0 0
  %335 = vmatprep.subr.bf16.mxu0 0
  %336 = vmatpush1.bf16.msra.mxu0 0
  %337 = vmatprep.subr.bf16.mxu0 0
  %338 = vmatpush1.bf16.msra.mxu0 0
  %339 = vmatprep.subr.bf16.mxu0 0
  %340 = vmatpush1.bf16.msra.mxu0 0
  %341 = vmatprep.subr.bf16.mxu0 0
  %342 = vmatpush1.bf16.msra.mxu0 0
  %343 = vmatprep.subr.bf16.mxu0 0
  %344 = vmatpush1.bf16.msra.mxu0 0
  %345 = vmatprep.mubr.bf16.mxu0 0
  %346 = vmatmul.mubr.bf16.gmra.mrb[0].mxu0 %v297
  %v347 = vpop.f32.mrb[0].mxu0
  %v348 = vadd.f32 0.0, %v347
  %v349 = vpop.f32.mrb[0].mxu0
  %v350 = vpop.f32.mrb[0].mxu0
  %v351 = vadd.f32 0.0, %v350
  %v352 = vpop.f32.mrb[0].mxu0
  %353 = vmatprep.mubr.bf16.mxu0 0
  %354 = vmatmul.mubr.bf16.gmra.mrb[0].mxu0 %v298
  %v355 = vpop.f32.mrb[0].mxu0
  %v356 = vadd.f32 0.0, %v355
  %v357 = vpop.f32.mrb[0].mxu0
  %v358 = vpop.f32.mrb[0].mxu0
  %v359 = vadd.f32 0.0, %v358
  %v360 = vpop.f32.mrb[0].mxu0
  %361 = vmatprep.mubr.bf16.mxu0 0
  %362 = vmatmul.mubr.bf16.gmra.mrb[0].mxu0 %v299
  %v363 = vpop.f32.mrb[0].mxu0
  %v364 = vadd.f32 0.0, %v363
  %v365 = vpop.f32.mrb[0].mxu0
  %v366 = vpop.f32.mrb[0].mxu0
  %v367 = vadd.f32 0.0, %v366
  %v368 = vpop.f32.mrb[0].mxu0
  %369 = vmatprep.mubr.bf16.mxu0 0
  %370 = vmatmul.mubr.bf16.gmra.mrb[0].mxu0 %v300
  %v371 = vpop.f32.mrb[0].mxu0
  %v372 = vadd.f32 0.0, %v371
  %v373 = vpop.f32.mrb[0].mxu0
  %v374 = vpop.f32.mrb[0].mxu0
  %v375 = vadd.f32 0.0, %v374
  %v376 = vpop.f32.mrb[0].mxu0
  %377 = vmatprep.mubr.bf16.mxu0 0
  %378 = vmatmul.mubr.bf16.gmra.mrb[0].mxu0 %v301
  %v379 = vpop.f32.mrb[0].mxu0
  %v380 = vadd.f32 0.0, %v379
  %v381 = vpop.f32.mrb[0].mxu0
  %v382 = vpop.f32.mrb[0].mxu0
  %v383 = vadd.f32 0.0, %v382
  %v384 = vpop.f32.mrb[0].mxu0
  %385 = vmatprep.mubr.bf16.mxu0 0
  %386 = vmatmul.mubr.bf16.gmra.mrb[0].mxu0 %v302
  %v387 = vpop.f32.mrb[0].mxu0
  %v388 = vadd.f32 0.0, %v387
  %v389 = vpop.f32.mrb[0].mxu0
  %v390 = vpop.f32.mrb[0].mxu0
  %v391 = vadd.f32 0.0, %v390
  %v392 = vpop.f32.mrb[0].mxu0
  %393 = vmatprep.mubr.bf16.mxu0 0
  %394 = vmatmul.mubr.bf16.gmra.mrb[0].mxu0 %v303
  %v395 = vpop.f32.mrb[0].mxu0
  %v396 = vadd.f32 0.0, %v395
  %v397 = vpop.f32.mrb[0].mxu0
  %v398 = vpop.f32.mrb[0].mxu0
  %v399 = vadd.f32 0.0, %v398
  %v400 = vpop.f32.mrb[0].mxu0
  %401 = vmatprep.mubr.bf16.mxu0 0
  %402 = vmatmul.mubr.bf16.gmra.mrb[0].mxu0 %v304
  %v403 = vpop.f32.mrb[0].mxu0
  %v404 = vadd.f32 0.0, %v403
  %v405 = vpop.f32.mrb[0].mxu0
  %v406 = vpop.f32.mrb[0].mxu0
  %v407 = vadd.f32 0.0, %v406
  %v408 = vpop.f32.mrb[0].mxu0
  %409 = vdwg.mxu0
  %v410 = vmax.f32 %v187, %v348
  %v411 = vmax.f32 %v190, %v351
  %v412 = vmax.f32 %v195, %v356
  %v413 = vmax.f32 %v198, %v359
  %v414 = vmax.f32 %v203, %v364
  %v415 = vmax.f32 %v206, %v367
  %v416 = vmax.f32 %v211, %v372
  %v417 = vmax.f32 %v214, %v375
  %v418 = vmax.f32 %v219, %v380
  %v419 = vmax.f32 %v222, %v383
  %v420 = vmax.f32 %v227, %v388
  %v421 = vmax.f32 %v230, %v391
  %v422 = vmax.f32 %v235, %v396
  %v423 = vmax.f32 %v238, %v399
  %v424 = vmax.f32 %v243, %v404
  %v425 = vmax.f32 %v246, %v407
  %v426 = vld [vmem:[%s2] sm:$0xf]
  %v427 = vld [vmem:[%s2 + $0x4] sm:$0xf]
  %v428 = vld [vmem:[%s2 + $0x8] sm:$0xf]
  %v429 = vld [vmem:[%s2 + $0xc] sm:$0xf]
  %v430 = vld [vmem:[%s2 + $0x10] sm:$0xf]
  %v431 = vld [vmem:[%s2 + $0x14] sm:$0xf]
  %v432 = vld [vmem:[%s2 + $0x18] sm:$0xf]
  %v433 = vld [vmem:[%s2 + $0x1c] sm:$0xf]
  %v434 = vld [vmem:[%s2 + $0x20] sm:$0xf]
  %v435 = vld [vmem:[%s2 + $0x24] sm:$0xf]
  %v436 = vld [vmem:[%s2 + $0x28] sm:$0xf]
  %v437 = vld [vmem:[%s2 + $0x2c] sm:$0xf]
  %v438 = vld [vmem:[%s2 + $0x30] sm:$0xf]
  %v439 = vld [vmem:[%s2 + $0x34] sm:$0xf]
  %v440 = vld [vmem:[%s2 + $0x38] sm:$0xf]
  %v441 = vld [vmem:[%s2 + $0x3c] sm:$0xf]
  %v458 = vunpack.c.l.b16 %v426
  %v459 = vunpack.c.l.b16 %v427
  %v460 = vunpack.c.l.b16 %v428
  %v461 = vunpack.c.l.b16 %v429
  %v462 = vunpack.c.l.b16 %v430
  %v463 = vunpack.c.l.b16 %v431
  %v464 = vunpack.c.l.b16 %v432
  %v465 = vunpack.c.l.b16 %v433
  %v466 = vunpack.c.l.b16 %v434
  %v467 = vunpack.c.l.b16 %v435
  %v468 = vunpack.c.l.b16 %v436
  %v469 = vunpack.c.l.b16 %v437
  %v470 = vunpack.c.l.b16 %v438
  %v471 = vunpack.c.l.b16 %v439
  %v472 = vunpack.c.l.b16 %v440
  %v473 = vunpack.c.l.b16 %v441
  %v474 = vpack.c.b16 %v459, %v458
  %v475 = vpack.c.b16 %v461, %v460
  %v476 = vpack.c.b16 %v463, %v462
  %v477 = vpack.c.b16 %v465, %v464
  %v478 = vpack.c.b16 %v467, %v466
  %v479 = vpack.c.b16 %v469, %v468
  %v480 = vpack.c.b16 %v471, %v470
  %v481 = vpack.c.b16 %v473, %v472
  %490 = vmatprep.subr.bf16.mxu0 0
  %491 = vmatpush1.bf16.msra.mxu0 %v136
  %492 = vmatprep.subr.bf16.mxu0 0
  %493 = vmatpush1.bf16.msra.mxu0 %v137
  %494 = vmatprep.subr.bf16.mxu0 0
  %495 = vmatpush1.bf16.msra.mxu0 %v138
  %496 = vmatprep.subr.bf16.mxu0 0
  %497 = vmatpush1.bf16.msra.mxu0 %v139
  %498 = vmatprep.subr.bf16.mxu0 0
  %499 = vmatpush1.bf16.msra.mxu0 %v140
  %500 = vmatprep.subr.bf16.mxu0 0
  %501 = vmatpush1.bf16.msra.mxu0 %v141
  %502 = vmatprep.subr.bf16.mxu0 0
  %503 = vmatpush1.bf16.msra.mxu0 %v142
  %504 = vmatprep.subr.bf16.mxu0 0
  %505 = vmatpush1.bf16.msra.mxu0 %v143
  %506 = vmatprep.subr.bf16.mxu0 0
  %507 = vmatpush1.bf16.msra.mxu0 0
  %508 = vmatprep.subr.bf16.mxu0 0
  %509 = vmatpush1.bf16.msra.mxu0 0
  %510 = vmatprep.subr.bf16.mxu0 0
  %511 = vmatpush1.bf16.msra.mxu0 0
  %512 = vmatprep.subr.bf16.mxu0 0
  %513 = vmatpush1.bf16.msra.mxu0 0
  %514 = vmatprep.subr.bf16.mxu0 0
  %515 = vmatpush1.bf16.msra.mxu0 0
  %516 = vmatprep.subr.bf16.mxu0 0
  %517 = vmatpush1.bf16.msra.mxu0 0
  %518 = vmatprep.subr.bf16.mxu0 0
  %519 = vmatpush1.bf16.msra.mxu0 0
  %520 = vmatprep.subr.bf16.mxu0 0
  %521 = vmatpush1.bf16.msra.mxu0 0
  %522 = vmatprep.mubr.bf16.mxu0 0
  %523 = vmatmul.mubr.bf16.gmra.mrb[0].mxu0 %v474
  %v524 = vpop.f32.mrb[0].mxu0
  %v525 = vadd.f32 0.0, %v524
  %v526 = vpop.f32.mrb[0].mxu0
  %v527 = vpop.f32.mrb[0].mxu0
  %v528 = vadd.f32 0.0, %v527
  %v529 = vpop.f32.mrb[0].mxu0
  %530 = vmatprep.mubr.bf16.mxu0 0
  %531 = vmatmul.mubr.bf16.gmra.mrb[0].mxu0 %v475
  %v532 = vpop.f32.mrb[0].mxu0
  %v533 = vadd.f32 0.0, %v532
  %v534 = vpop.f32.mrb[0].mxu0
  %v535 = vpop.f32.mrb[0].mxu0
  %v536 = vadd.f32 0.0, %v535
  %v537 = vpop.f32.mrb[0].mxu0
  %538 = vmatprep.mubr.bf16.mxu0 0
  %539 = vmatmul.mubr.bf16.gmra.mrb[0].mxu0 %v476
  %v540 = vpop.f32.mrb[0].mxu0
  %v541 = vadd.f32 0.0, %v540
  %v542 = vpop.f32.mrb[0].mxu0
  %v543 = vpop.f32.mrb[0].mxu0
  %v544 = vadd.f32 0.0, %v543
  %v545 = vpop.f32.mrb[0].mxu0
  %546 = vmatprep.mubr.bf16.mxu0 0
  %547 = vmatmul.mubr.bf16.gmra.mrb[0].mxu0 %v477
  %v548 = vpop.f32.mrb[0].mxu0
  %v549 = vadd.f32 0.0, %v548
  %v550 = vpop.f32.mrb[0].mxu0
  %v551 = vpop.f32.mrb[0].mxu0
  %v552 = vadd.f32 0.0, %v551
  %v553 = vpop.f32.mrb[0].mxu0
  %554 = vmatprep.mubr.bf16.mxu0 0
  %555 = vmatmul.mubr.bf16.gmra.mrb[0].mxu0 %v478
  %v556 = vpop.f32.mrb[0].mxu0
  %v557 = vadd.f32 0.0, %v556
  %v558 = vpop.f32.mrb[0].mxu0
  %v559 = vpop.f32.mrb[0].mxu0
  %v560 = vadd.f32 0.0, %v559
  %v561 = vpop.f32.mrb[0].mxu0
  %562 = vmatprep.mubr.bf16.mxu0 0
  %563 = vmatmul.mubr.bf16.gmra.mrb[0].mxu0 %v479
  %v564 = vpop.f32.mrb[0].mxu0
  %v565 = vadd.f32 0.0, %v564
  %v566 = vpop.f32.mrb[0].mxu0
  %v567 = vpop.f32.mrb[0].mxu0
  %v568 = vadd.f32 0.0, %v567
  %v569 = vpop.f32.mrb[0].mxu0
  %570 = vmatprep.mubr.bf16.mxu0 0
  %571 = vmatmul.mubr.bf16.gmra.mrb[0].mxu0 %v480
  %v572 = vpop.f32.mrb[0].mxu0
  %v573 = vadd.f32 0.0, %v572
  %v574 = vpop.f32.mrb[0].mxu0
  %v575 = vpop.f32.mrb[0].mxu0
  %v576 = vadd.f32 0.0, %v575
  %v577 = vpop.f32.mrb[0].mxu0
  %578 = vmatprep.mubr.bf16.mxu0 0
  %579 = vmatmul.mubr.bf16.gmra.mrb[0].mxu0 %v481
  %v580 = vpop.f32.mrb[0].mxu0
  %v581 = vadd.f32 0.0, %v580
  %v582 = vpop.f32.mrb[0].mxu0
  %v583 = vpop.f32.mrb[0].mxu0
  %v584 = vadd.f32 0.0, %v583
  %v585 = vpop.f32.mrb[0].mxu0
  %586 = vdwg.mxu0
  %v587 = vmax.f32 %v410, %v525
  %v588 = vmax.f32 %v411, %v528
  %v589 = vmax.f32 %v412, %v533
  %v590 = vmax.f32 %v413, %v536
  %v591 = vmax.f32 %v414, %v541
  %v592 = vmax.f32 %v415, %v544
  %v593 = vmax.f32 %v416, %v549
  %v594 = vmax.f32 %v417, %v552
  %v595 = vmax.f32 %v418, %v557
  %v596 = vmax.f32 %v419, %v560
  %v597 = vmax.f32 %v420, %v565
  %v598 = vmax.f32 %v421, %v568
  %v599 = vmax.f32 %v422, %v573
  %v600 = vmax.f32 %v423, %v576
  %v601 = vmax.f32 %v424, %v581
  %v602 = vmax.f32 %v425, %v584
  %v603 = vld [vmem:[%s3] sm:$0xf]
  %v604 = vld [vmem:[%s3 + $0x4] sm:$0xf]
  %v605 = vld [vmem:[%s3 + $0x8] sm:$0xf]
  %v606 = vld [vmem:[%s3 + $0xc] sm:$0xf]
  %v607 = vld [vmem:[%s3 + $0x10] sm:$0xf]
  %v608 = vld [vmem:[%s3 + $0x14] sm:$0xf]
  %v609 = vld [vmem:[%s3 + $0x18] sm:$0xf]
  %v610 = vld [vmem:[%s3 + $0x1c] sm:$0xf]
  %v611 = vld [vmem:[%s3 + $0x20] sm:$0xf]
  %v612 = vld [vmem:[%s3 + $0x24] sm:$0xf]
  %v613 = vld [vmem:[%s3 + $0x28] sm:$0xf]
  %v614 = vld [vmem:[%s3 + $0x2c] sm:$0xf]
  %v615 = vld [vmem:[%s3 + $0x30] sm:$0xf]
  %v616 = vld [vmem:[%s3 + $0x34] sm:$0xf]
  %v617 = vld [vmem:[%s3 + $0x38] sm:$0xf]
  %v618 = vld [vmem:[%s3 + $0x3c] sm:$0xf]
  %v635 = vunpack.c.l.b16 %v603
  %v636 = vunpack.c.l.b16 %v604
  %v637 = vunpack.c.l.b16 %v605
  %v638 = vunpack.c.l.b16 %v606
  %v639 = vunpack.c.l.b16 %v607
  %v640 = vunpack.c.l.b16 %v608
  %v641 = vunpack.c.l.b16 %v609
  %v642 = vunpack.c.l.b16 %v610
  %v643 = vunpack.c.l.b16 %v611
  %v644 = vunpack.c.l.b16 %v612
  %v645 = vunpack.c.l.b16 %v613
  %v646 = vunpack.c.l.b16 %v614
  %v647 = vunpack.c.l.b16 %v615
  %v648 = vunpack.c.l.b16 %v616
  %v649 = vunpack.c.l.b16 %v617
  %v650 = vunpack.c.l.b16 %v618
  %v651 = vpack.c.b16 %v636, %v635
  %v652 = vpack.c.b16 %v638, %v637
  %v653 = vpack.c.b16 %v640, %v639
  %v654 = vpack.c.b16 %v642, %v641
  %v655 = vpack.c.b16 %v644, %v643
  %v656 = vpack.c.b16 %v646, %v645
  %v657 = vpack.c.b16 %v648, %v647
  %v658 = vpack.c.b16 %v650, %v649
  %667 = vmatprep.subr.bf16.mxu0 0
  %668 = vmatpush1.bf16.msra.mxu0 %v136
  %669 = vmatprep.subr.bf16.mxu0 0
  %670 = vmatpush1.bf16.msra.mxu0 %v137
  %671 = vmatprep.subr.bf16.mxu0 0
  %672 = vmatpush1.bf16.msra.mxu0 %v138
  %673 = vmatprep.subr.bf16.mxu0 0
  %674 = vmatpush1.bf16.msra.mxu0 %v139
  %675 = vmatprep.subr.bf16.mxu0 0
  %676 = vmatpush1.bf16.msra.mxu0 %v140
  %677 = vmatprep.subr.bf16.mxu0 0
  %678 = vmatpush1.bf16.msra.mxu0 %v141
  %679 = vmatprep.subr.bf16.mxu0 0
  %680 = vmatpush1.bf16.msra.mxu0 %v142
  %681 = vmatprep.subr.bf16.mxu0 0
  %682 = vmatpush1.bf16.msra.mxu0 %v143
  %683 = vmatprep.subr.bf16.mxu0 0
  %684 = vmatpush1.bf16.msra.mxu0 0
  %685 = vmatprep.subr.bf16.mxu0 0
  %686 = vmatpush1.bf16.msra.mxu0 0
  %687 = vmatprep.subr.bf16.mxu0 0
  %688 = vmatpush1.bf16.msra.mxu0 0
  %689 = vmatprep.subr.bf16.mxu0 0
  %690 = vmatpush1.bf16.msra.mxu0 0
  %691 = vmatprep.subr.bf16.mxu0 0
  %692 = vmatpush1.bf16.msra.mxu0 0
  %693 = vmatprep.subr.bf16.mxu0 0
  %694 = vmatpush1.bf16.msra.mxu0 0
  %695 = vmatprep.subr.bf16.mxu0 0
  %696 = vmatpush1.bf16.msra.mxu0 0
  %697 = vmatprep.subr.bf16.mxu0 0
  %698 = vmatpush1.bf16.msra.mxu0 0
  %699 = vmatprep.mubr.bf16.mxu0 0
  %700 = vmatmul.mubr.bf16.gmra.mrb[0].mxu0 %v651
  %v701 = vpop.f32.mrb[0].mxu0
  %v702 = vadd.f32 0.0, %v701
  %v703 = vpop.f32.mrb[0].mxu0
  %v704 = vpop.f32.mrb[0].mxu0
  %v705 = vadd.f32 0.0, %v704
  %v706 = vpop.f32.mrb[0].mxu0
  %707 = vmatprep.mubr.bf16.mxu0 0
  %708 = vmatmul.mubr.bf16.gmra.mrb[0].mxu0 %v652
  %v709 = vpop.f32.mrb[0].mxu0
  %v710 = vadd.f32 0.0, %v709
  %v711 = vpop.f32.mrb[0].mxu0
  %v712 = vpop.f32.mrb[0].mxu0
  %v713 = vadd.f32 0.0, %v712
  %v714 = vpop.f32.mrb[0].mxu0
  %715 = vmatprep.mubr.bf16.mxu0 0
  %716 = vmatmul.mubr.bf16.gmra.mrb[0].mxu0 %v653
  %v717 = vpop.f32.mrb[0].mxu0
  %v718 = vadd.f32 0.0, %v717
  %v719 = vpop.f32.mrb[0].mxu0
  %v720 = vpop.f32.mrb[0].mxu0
  %v721 = vadd.f32 0.0, %v720
  %v722 = vpop.f32.mrb[0].mxu0
  %723 = vmatprep.mubr.bf16.mxu0 0
  %724 = vmatmul.mubr.bf16.gmra.mrb[0].mxu0 %v654
  %v725 = vpop.f32.mrb[0].mxu0
  %v726 = vadd.f32 0.0, %v725
  %v727 = vpop.f32.mrb[0].mxu0
  %v728 = vpop.f32.mrb[0].mxu0
  %v729 = vadd.f32 0.0, %v728
  %v730 = vpop.f32.mrb[0].mxu0
  %731 = vmatprep.mubr.bf16.mxu0 0
  %732 = vmatmul.mubr.bf16.gmra.mrb[0].mxu0 %v655
  %v733 = vpop.f32.mrb[0].mxu0
  %v734 = vadd.f32 0.0, %v733
  %v735 = vpop.f32.mrb[0].mxu0
  %v736 = vpop.f32.mrb[0].mxu0
  %v737 = vadd.f32 0.0, %v736
  %v738 = vpop.f32.mrb[0].mxu0
  %739 = vmatprep.mubr.bf16.mxu0 0
  %740 = vmatmul.mubr.bf16.gmra.mrb[0].mxu0 %v656
  %v741 = vpop.f32.mrb[0].mxu0
  %v742 = vadd.f32 0.0, %v741
  %v743 = vpop.f32.mrb[0].mxu0
  %v744 = vpop.f32.mrb[0].mxu0
  %v745 = vadd.f32 0.0, %v744
  %v746 = vpop.f32.mrb[0].mxu0
  %747 = vmatprep.mubr.bf16.mxu0 0
  %748 = vmatmul.mubr.bf16.gmra.mrb[0].mxu0 %v657
  %v749 = vpop.f32.mrb[0].mxu0
  %v750 = vadd.f32 0.0, %v749
  %v751 = vpop.f32.mrb[0].mxu0
  %v752 = vpop.f32.mrb[0].mxu0
  %v753 = vadd.f32 0.0, %v752
  %v754 = vpop.f32.mrb[0].mxu0
  %755 = vmatprep.mubr.bf16.mxu0 0
  %756 = vmatmul.mubr.bf16.gmra.mrb[0].mxu0 %v658
  %v757 = vpop.f32.mrb[0].mxu0
  %v758 = vadd.f32 0.0, %v757
  %v759 = vpop.f32.mrb[0].mxu0
  %v760 = vpop.f32.mrb[0].mxu0
  %v761 = vadd.f32 0.0, %v760
  %v762 = vpop.f32.mrb[0].mxu0
  %763 = vdwg.mxu0
  %v764 = vmax.f32 %v587, %v702
  %v765 = vmax.f32 %v588, %v705
  %v766 = vmax.f32 %v589, %v710
  %v767 = vmax.f32 %v590, %v713
  %v768 = vmax.f32 %v591, %v718
  %v769 = vmax.f32 %v592, %v721
  %v770 = vmax.f32 %v593, %v726
  %v771 = vmax.f32 %v594, %v729
  %v772 = vmax.f32 %v595, %v734
  %v773 = vmax.f32 %v596, %v737
  %v774 = vmax.f32 %v597, %v742
  %v775 = vmax.f32 %v598, %v745
  %v776 = vmax.f32 %v599, %v750
  %v777 = vmax.f32 %v600, %v753
  %v778 = vmax.f32 %v601, %v758
  %v779 = vmax.f32 %v602, %v761
  %v780 = vld [vmem:[%s5] sm:$0x1]
  %v782 = vlaneseq
  %v783 = vshrl.u32 %v782, 7
  %v784 = vsub.s32 0, %v783
  %v785 = vrot.slane %v780, %v784
  %v787 = vadd.f32 %v764, %v785
  %v788 = vadd.f32 %v765, %v785
  %v789 = vadd.f32 %v766, %v785
  %v790 = vadd.f32 %v767, %v785
  %v791 = vadd.f32 %v768, %v785
  %v792 = vadd.f32 %v769, %v785
  %v793 = vadd.f32 %v770, %v785
  %v794 = vadd.f32 %v771, %v785
  %v795 = vadd.f32 %v772, %v785
  %v796 = vadd.f32 %v773, %v785
  %v797 = vadd.f32 %v774, %v785
  %v798 = vadd.f32 %v775, %v785
  %v799 = vadd.f32 %v776, %v785
  %v800 = vadd.f32 %v777, %v785
  %v801 = vadd.f32 %v778, %v785
  %v802 = vadd.f32 %v779, %v785
  %v803 = vmax.f32 %v787, 0.0
  %v804 = vmax.f32 %v788, 0.0
  %v805 = vmax.f32 %v789, 0.0
  %v806 = vmax.f32 %v790, 0.0
  %v807 = vmax.f32 %v791, 0.0
  %v808 = vmax.f32 %v792, 0.0
  %v809 = vmax.f32 %v793, 0.0
  %v810 = vmax.f32 %v794, 0.0
  %v811 = vmax.f32 %v795, 0.0
  %v812 = vmax.f32 %v796, 0.0
  %v813 = vmax.f32 %v797, 0.0
  %v814 = vmax.f32 %v798, 0.0
  %v815 = vmax.f32 %v799, 0.0
  %v816 = vmax.f32 %v800, 0.0
  %v817 = vmax.f32 %v801, 0.0
  %v818 = vmax.f32 %v802, 0.0
  %v819 = vpack.c.bf16 %v804, %v803
  %v820 = vpack.c.bf16 %v806, %v805
  %v821 = vpack.c.bf16 %v808, %v807
  %v822 = vpack.c.bf16 %v810, %v809
  %v823 = vpack.c.bf16 %v812, %v811
  %v824 = vpack.c.bf16 %v814, %v813
  %v825 = vpack.c.bf16 %v816, %v815
  %v826 = vpack.c.bf16 %v818, %v817
  %v835 = vunpack.c.l.b16 %v819
  %v836 = vunpack.c.h.b16 %v819
  %v837 = vunpack.c.l.b16 %v820
  %v838 = vunpack.c.h.b16 %v820
  %v839 = vunpack.c.l.b16 %v821
  %v840 = vunpack.c.h.b16 %v821
  %v841 = vunpack.c.l.b16 %v822
  %v842 = vunpack.c.h.b16 %v822
  %v843 = vunpack.c.l.b16 %v823
  %v844 = vunpack.c.h.b16 %v823
  %v845 = vunpack.c.l.b16 %v824
  %v846 = vunpack.c.h.b16 %v824
  %v847 = vunpack.c.l.b16 %v825
  %v848 = vunpack.c.h.b16 %v825
  %v849 = vunpack.c.l.b16 %v826
  %v850 = vunpack.c.h.b16 %v826
  %v851 = vpack.c.b16 %v835, %v835
  %v852 = vpack.c.b16 %v836, %v836
  %v853 = vpack.c.b16 %v837, %v837
  %v854 = vpack.c.b16 %v838, %v838
  %v855 = vpack.c.b16 %v839, %v839
  %v856 = vpack.c.b16 %v840, %v840
  %v857 = vpack.c.b16 %v841, %v841
  %v858 = vpack.c.b16 %v842, %v842
  %v859 = vpack.c.b16 %v843, %v843
  %v860 = vpack.c.b16 %v844, %v844
  %v861 = vpack.c.b16 %v845, %v845
  %v862 = vpack.c.b16 %v846, %v846
  %v863 = vpack.c.b16 %v847, %v847
  %v864 = vpack.c.b16 %v848, %v848
  %v865 = vpack.c.b16 %v849, %v849
  %v866 = vpack.c.b16 %v850, %v850
  %883 = vst [vmem:[%s6] sm:$0xf] %v851
  %884 = vst [vmem:[%s6 + $0x4] sm:$0xf] %v852
  %885 = vst [vmem:[%s6 + $0x8] sm:$0xf] %v853
  %886 = vst [vmem:[%s6 + $0xc] sm:$0xf] %v854
  %887 = vst [vmem:[%s6 + $0x10] sm:$0xf] %v855
  %888 = vst [vmem:[%s6 + $0x14] sm:$0xf] %v856
  %889 = vst [vmem:[%s6 + $0x18] sm:$0xf] %v857
  %890 = vst [vmem:[%s6 + $0x1c] sm:$0xf] %v858
  %891 = vst [vmem:[%s6 + $0x20] sm:$0xf] %v859
  %892 = vst [vmem:[%s6 + $0x24] sm:$0xf] %v860
  %893 = vst [vmem:[%s6 + $0x28] sm:$0xf] %v861
  %894 = vst [vmem:[%s6 + $0x2c] sm:$0xf] %v862
  %895 = vst [vmem:[%s6 + $0x30] sm:$0xf] %v863
  %896 = vst [vmem:[%s6 + $0x34] sm:$0xf] %v864
  %897 = vst [vmem:[%s6 + $0x38] sm:$0xf] %v865
  %898 = vst [vmem:[%s6 + $0x3c] sm:$0xf] %v866
  // Predicated region
  $region26: #{autoencoder_forward.7} parent=0 // pred_check
    _
  $region27: #{autoencoder_forward.7} parent=0 // pred_check_branch
    %900 = sbr.rel (0) target = $region29
  $region28: #{autoencoder_forward.7} parent=0 // pred_region
    _
  $region29: #{autoencoder_forward.7} parent=0 // pred_fallthru
    _
  // Predicated region
  $region30: #{autoencoder_forward.7} parent=0 // pred_check
    _
  $region31: #{autoencoder_forward.7} parent=0 // pred_check_branch
    %902 = sbr.rel (0) target = $region33
  $region32: #{autoencoder_forward.7} parent=0 // pred_region
    _
  $region33: #{autoencoder_forward.7} parent=0 // pred_fallthru
    _

// kernel: autoencoder_forward.8
$region0: #{autoencoder_forward.8}
  #allocation0 [shape = 'u32[]', space=smem, size = 0x4, offset = 0x4, fixed_abs, tag = 'smem constant byte address 0x4 - core index']
  #allocation1 [shape = 'u32[144,128]{1,0:T(1,128)}', space=vmem, size = 0x12000, scoped, tag = 'internal scratch']
  %s0 = inlined_call_operand.vmem [shape: bf16[32,384], index: 0, kind: input, shape index: {}]
  %s1 = inlined_call_operand.vmem [shape: bf16[32,384], index: 1, kind: input, shape index: {}]
  %s2 = inlined_call_operand.vmem [shape: bf16[32,384], index: 2, kind: input, shape index: {}]
  %s3 = inlined_call_operand.vmem [shape: bf16[32,384], index: 3, kind: input, shape index: {}]
  %s4 = inlined_call_operand.vmem [shape: bf16[384,128], index: 4, kind: input, shape index: {}]
  %s5 = inlined_call_operand.vmem [shape: f32[1,128], index: 5, kind: input, shape index: {}]
  %s6 = inlined_call_operand.vmem [shape: bf16[32,128], index: 6, kind: output, shape index: {}]
  %s7 = sld [smem:[#allocation0]]
  $region34: #{autoencoder_forward.8} parent=0
    _
  %s9 = ssub.s32 1, %s7
  %s10 = scalar_select 0, %s9, %s7
  // Predicated region
  $region2: #{autoencoder_forward.8} parent=0 // pred_check
    _
  $region3: #{autoencoder_forward.8} parent=0 // pred_check_branch
    %12 = sbr.rel (0) target = $region5
  $region4: #{autoencoder_forward.8} parent=0 // pred_region
    _
  $region5: #{autoencoder_forward.8} parent=0 // pred_fallthru
    _
  // Predicated region
  $region6: #{autoencoder_forward.8} parent=0 // pred_check
    _
  $region7: #{autoencoder_forward.8} parent=0 // pred_check_branch
    %14 = sbr.rel (0) target = $region9
  $region8: #{autoencoder_forward.8} parent=0 // pred_region
    _
  $region9: #{autoencoder_forward.8} parent=0 // pred_fallthru
    _
  // Predicated region
  $region10: #{autoencoder_forward.8} parent=0 // pred_check
    _
  $region11: #{autoencoder_forward.8} parent=0 // pred_check_branch
    %16 = sbr.rel (0) target = $region13
  $region12: #{autoencoder_forward.8} parent=0 // pred_region
    _
  $region13: #{autoencoder_forward.8} parent=0 // pred_fallthru
    _
  // Predicated region
  $region14: #{autoencoder_forward.8} parent=0 // pred_check
    _
  $region15: #{autoencoder_forward.8} parent=0 // pred_check_branch
    %18 = sbr.rel (0) target = $region17
  $region16: #{autoencoder_forward.8} parent=0 // pred_region
    _
  $region17: #{autoencoder_forward.8} parent=0 // pred_fallthru
    _
  // Predicated region
  $region18: #{autoencoder_forward.8} parent=0 // pred_check
    _
  $region19: #{autoencoder_forward.8} parent=0 // pred_check_branch
    %20 = sbr.rel (0) target = $region21
  $region20: #{autoencoder_forward.8} parent=0 // pred_region
    _
  $region21: #{autoencoder_forward.8} parent=0 // pred_fallthru
    _
  // Predicated region
  $region22: #{autoencoder_forward.8} parent=0 // pred_check
    _
  $region23: #{autoencoder_forward.8} parent=0 // pred_check_branch
    %22 = sbr.rel (0) target = $region25
  $region24: #{autoencoder_forward.8} parent=0 // pred_region
    _
  $region25: #{autoencoder_forward.8} parent=0 // pred_fallthru
    _
  %v24 = vld [vmem:[%s4] sm:$0xf]
  %v25 = vld [vmem:[%s4 + $0x4] sm:$0xf]
  %v26 = vld [vmem:[%s4 + $0x8] sm:$0xf]
  %v27 = vld [vmem:[%s4 + $0xc] sm:$0xf]
  %v28 = vld [vmem:[%s4 + $0x10] sm:$0xf]
  %v29 = vld [vmem:[%s4 + $0x14] sm:$0xf]
  %v30 = vld [vmem:[%s4 + $0x18] sm:$0xf]
  %v31 = vld [vmem:[%s4 + $0x1c] sm:$0xf]
  %v32 = vld [vmem:[%s4 + $0x20] sm:$0xf]
  %v33 = vld [vmem:[%s4 + $0x24] sm:$0xf]
  %v34 = vld [vmem:[%s4 + $0x28] sm:$0xf]
  %v35 = vld [vmem:[%s4 + $0x2c] sm:$0xf]
  %v36 = vld [vmem:[%s4 + $0x30] sm:$0xf]
  %v37 = vld [vmem:[%s4 + $0x34] sm:$0xf]
  %v38 = vld [vmem:[%s4 + $0x38] sm:$0xf]
  %v39 = vld [vmem:[%s4 + $0x3c] sm:$0xf]
  %v40 = vld [vmem:[%s4 + $0x40] sm:$0xf]
  %v41 = vld [vmem:[%s4 + $0x44] sm:$0xf]
  %v42 = vld [vmem:[%s4 + $0x48] sm:$0xf]
  %v43 = vld [vmem:[%s4 + $0x4c] sm:$0xf]
  %v44 = vld [vmem:[%s4 + $0x50] sm:$0xf]
  %v45 = vld [vmem:[%s4 + $0x54] sm:$0xf]
  %v46 = vld [vmem:[%s4 + $0x58] sm:$0xf]
  %v47 = vld [vmem:[%s4 + $0x5c] sm:$0xf]
  %v48 = vld [vmem:[%s4 + $0x60] sm:$0xf]
  %v49 = vld [vmem:[%s4 + $0x64] sm:$0xf]
  %v50 = vld [vmem:[%s4 + $0x68] sm:$0xf]
  %v51 = vld [vmem:[%s4 + $0x6c] sm:$0xf]
  %v52 = vld [vmem:[%s4 + $0x70] sm:$0xf]
  %v53 = vld [vmem:[%s4 + $0x74] sm:$0xf]
  %v54 = vld [vmem:[%s4 + $0x78] sm:$0xf]
  %v55 = vld [vmem:[%s4 + $0x7c] sm:$0xf]
  %v56 = vld [vmem:[%s4 + $0x80] sm:$0xf]
  %v57 = vld [vmem:[%s4 + $0x84] sm:$0xf]
  %v58 = vld [vmem:[%s4 + $0x88] sm:$0xf]
  %v59 = vld [vmem:[%s4 + $0x8c] sm:$0xf]
  %v60 = vld [vmem:[%s4 + $0x90] sm:$0xf]
  %v61 = vld [vmem:[%s4 + $0x94] sm:$0xf]
  %v62 = vld [vmem:[%s4 + $0x98] sm:$0xf]
  %v63 = vld [vmem:[%s4 + $0x9c] sm:$0xf]
  %v64 = vld [vmem:[%s4 + $0xa0] sm:$0xf]
  %v65 = vld [vmem:[%s4 + $0xa4] sm:$0xf]
  %v66 = vld [vmem:[%s4 + $0xa8] sm:$0xf]
  %v67 = vld [vmem:[%s4 + $0xac] sm:$0xf]
  %v68 = vld [vmem:[%s4 + $0xb0] sm:$0xf]
  %v69 = vld [vmem:[%s4 + $0xb4] sm:$0xf]
  %v70 = vld [vmem:[%s4 + $0xb8] sm:$0xf]
  %v71 = vld [vmem:[%s4 + $0xbc] sm:$0xf]
  %v72 = vld [vmem:[%s0] sm:$0xff]
  %v73 = vld [vmem:[%s0 + $0x8] sm:$0xf]
  %v74 = vld [vmem:[%s0 + $0xc] sm:$0xff]
  %v75 = vld [vmem:[%s0 + $0x14] sm:$0xf]
  %v76 = vld [vmem:[%s0 + $0x18] sm:$0xff]
  %v77 = vld [vmem:[%s0 + $0x20] sm:$0xf]
  %v78 = vld [vmem:[%s0 + $0x24] sm:$0xff]
  %v79 = vld [vmem:[%s0 + $0x2c] sm:$0xf]
  %v88 = vunpack.c.l.b16 %v72
  %v89 = vunpack.c.h.b16 %v72
  %v90 = vunpack.c.l.b16 %v73
  %v91 = vunpack.c.l.b16 %v74
  %v92 = vunpack.c.h.b16 %v74
  %v93 = vunpack.c.l.b16 %v75
  %v94 = vunpack.c.l.b16 %v76
  %v95 = vunpack.c.h.b16 %v76
  %v96 = vunpack.c.l.b16 %v77
  %v97 = vunpack.c.l.b16 %v78
  %v98 = vunpack.c.h.b16 %v78
  %v99 = vunpack.c.l.b16 %v79
  %v100 = vpack.c.b16 %v91, %v88
  %v101 = vpack.c.b16 %v92, %v89
  %v102 = vpack.c.b16 %v93, %v90
  %v103 = vpack.c.b16 %v97, %v94
  %v104 = vpack.c.b16 %v98, %v95
  %v105 = vpack.c.b16 %v99, %v96
  %v160 = vunpack.c.l.b16 %v24
  %v161 = vunpack.c.l.b16 %v25
  %v162 = vunpack.c.l.b16 %v26
  %v163 = vunpack.c.l.b16 %v27
  %v164 = vunpack.c.l.b16 %v28
  %v165 = vunpack.c.l.b16 %v29
  %v166 = vunpack.c.l.b16 %v30
  %v167 = vunpack.c.l.b16 %v31
  %v168 = vunpack.c.l.b16 %v32
  %v169 = vunpack.c.l.b16 %v33
  %v170 = vunpack.c.l.b16 %v34
  %v171 = vunpack.c.l.b16 %v35
  %v172 = vunpack.c.l.b16 %v36
  %v173 = vunpack.c.l.b16 %v37
  %v174 = vunpack.c.l.b16 %v38
  %v175 = vunpack.c.l.b16 %v39
  %v176 = vunpack.c.l.b16 %v40
  %v177 = vunpack.c.l.b16 %v41
  %v178 = vunpack.c.l.b16 %v42
  %v179 = vunpack.c.l.b16 %v43
  %v180 = vunpack.c.l.b16 %v44
  %v181 = vunpack.c.l.b16 %v45
  %v182 = vunpack.c.l.b16 %v46
  %v183 = vunpack.c.l.b16 %v47
  %v184 = vunpack.c.l.b16 %v48
  %v185 = vunpack.c.l.b16 %v49
  %v186 = vunpack.c.l.b16 %v50
  %v187 = vunpack.c.l.b16 %v51
  %v188 = vunpack.c.l.b16 %v52
  %v189 = vunpack.c.l.b16 %v53
  %v190 = vunpack.c.l.b16 %v54
  %v191 = vunpack.c.l.b16 %v55
  %v192 = vunpack.c.l.b16 %v56
  %v193 = vunpack.c.l.b16 %v57
  %v194 = vunpack.c.l.b16 %v58
  %v195 = vunpack.c.l.b16 %v59
  %v196 = vunpack.c.l.b16 %v60
  %v197 = vunpack.c.l.b16 %v61
  %v198 = vunpack.c.l.b16 %v62
  %v199 = vunpack.c.l.b16 %v63
  %v200 = vunpack.c.l.b16 %v64
  %v201 = vunpack.c.l.b16 %v65
  %v202 = vunpack.c.l.b16 %v66
  %v203 = vunpack.c.l.b16 %v67
  %v204 = vunpack.c.l.b16 %v68
  %v205 = vunpack.c.l.b16 %v69
  %v206 = vunpack.c.l.b16 %v70
  %v207 = vunpack.c.l.b16 %v71
  %v208 = vpack.c.b16 %v161, %v160
  %v209 = vpack.c.b16 %v163, %v162
  %v210 = vpack.c.b16 %v165, %v164
  %v211 = vpack.c.b16 %v167, %v166
  %v212 = vpack.c.b16 %v169, %v168
  %v213 = vpack.c.b16 %v171, %v170
  %v214 = vpack.c.b16 %v173, %v172
  %v215 = vpack.c.b16 %v175, %v174
  %v216 = vpack.c.b16 %v177, %v176
  %v217 = vpack.c.b16 %v179, %v178
  %v218 = vpack.c.b16 %v181, %v180
  %v219 = vpack.c.b16 %v183, %v182
  %v220 = vpack.c.b16 %v185, %v184
  %v221 = vpack.c.b16 %v187, %v186
  %v222 = vpack.c.b16 %v189, %v188
  %v223 = vpack.c.b16 %v191, %v190
  %v224 = vpack.c.b16 %v193, %v192
  %v225 = vpack.c.b16 %v195, %v194
  %v226 = vpack.c.b16 %v197, %v196
  %v227 = vpack.c.b16 %v199, %v198
  %v228 = vpack.c.b16 %v201, %v200
  %v229 = vpack.c.b16 %v203, %v202
  %v230 = vpack.c.b16 %v205, %v204
  %v231 = vpack.c.b16 %v207, %v206
  %256 = vmatprep.subr.bf16.mxu0 0
  %257 = vmatpush1.bf16.msra.mxu0 %v208
  %258 = vmatprep.subr.bf16.mxu0 0
  %259 = vmatpush1.bf16.msra.mxu0 %v209
  %260 = vmatprep.subr.bf16.mxu0 0
  %261 = vmatpush1.bf16.msra.mxu0 %v210
  %262 = vmatprep.subr.bf16.mxu0 0
  %263 = vmatpush1.bf16.msra.mxu0 %v211
  %264 = vmatprep.subr.bf16.mxu0 0
  %265 = vmatpush1.bf16.msra.mxu0 %v212
  %266 = vmatprep.subr.bf16.mxu0 0
  %267 = vmatpush1.bf16.msra.mxu0 %v213
  %268 = vmatprep.subr.bf16.mxu0 0
  %269 = vmatpush1.bf16.msra.mxu0 %v214
  %270 = vmatprep.subr.bf16.mxu0 0
  %271 = vmatpush1.bf16.msra.mxu0 %v215
  %272 = vmatprep.subr.bf16.mxu0 0
  %273 = vmatpush1.bf16.msra.mxu0 %v216
  %274 = vmatprep.subr.bf16.mxu0 0
  %275 = vmatpush1.bf16.msra.mxu0 %v217
  %276 = vmatprep.subr.bf16.mxu0 0
  %277 = vmatpush1.bf16.msra.mxu0 %v218
  %278 = vmatprep.subr.bf16.mxu0 0
  %279 = vmatpush1.bf16.msra.mxu0 %v219
  %280 = vmatprep.subr.bf16.mxu0 0
  %281 = vmatpush1.bf16.msra.mxu0 %v220
  %282 = vmatprep.subr.bf16.mxu0 0
  %283 = vmatpush1.bf16.msra.mxu0 %v221
  %284 = vmatprep.subr.bf16.mxu0 0
  %285 = vmatpush1.bf16.msra.mxu0 %v222
  %286 = vmatprep.subr.bf16.mxu0 0
  %287 = vmatpush1.bf16.msra.mxu0 %v223
  %288 = vmatprep.mubr.bf16.mxu0 %v101
  %289 = vmatmul.mubr.bf16.gmra.mrb[0].mxu0 %v100
  %v290 = vpop.f32.mrb[0].mxu0
  %v291 = vadd.f32 0.0, %v290
  %v292 = vpop.f32.mrb[0].mxu0
  %v293 = vpop.f32.mrb[0].mxu0
  %v294 = vadd.f32 0.0, %v293
  %v295 = vpop.f32.mrb[0].mxu0
  %296 = vmatprep.mubr.bf16.mxu0 %v104
  %297 = vmatmul.mubr.bf16.gmra.mrb[0].mxu0 %v103
  %v298 = vpop.f32.mrb[0].mxu0
  %v299 = vadd.f32 0.0, %v298
  %v300 = vpop.f32.mrb[0].mxu0
  %v301 = vpop.f32.mrb[0].mxu0
  %v302 = vadd.f32 0.0, %v301
  %v303 = vpop.f32.mrb[0].mxu0
  %304 = vdwg.mxu0
  %305 = vmatprep.subr.bf16.mxu0 0
  %306 = vmatpush1.bf16.msra.mxu0 %v224
  %307 = vmatprep.subr.bf16.mxu0 0
  %308 = vmatpush1.bf16.msra.mxu0 %v225
  %309 = vmatprep.subr.bf16.mxu0 0
  %310 = vmatpush1.bf16.msra.mxu0 %v226
  %311 = vmatprep.subr.bf16.mxu0 0
  %312 = vmatpush1.bf16.msra.mxu0 %v227
  %313 = vmatprep.subr.bf16.mxu0 0
  %314 = vmatpush1.bf16.msra.mxu0 %v228
  %315 = vmatprep.subr.bf16.mxu0 0
  %316 = vmatpush1.bf16.msra.mxu0 %v229
  %317 = vmatprep.subr.bf16.mxu0 0
  %318 = vmatpush1.bf16.msra.mxu0 %v230
  %319 = vmatprep.subr.bf16.mxu0 0
  %320 = vmatpush1.bf16.msra.mxu0 %v231
  %321 = vmatprep.subr.bf16.mxu0 0
  %322 = vmatpush1.bf16.msra.mxu0 0
  %323 = vmatprep.subr.bf16.mxu0 0
  %324 = vmatpush1.bf16.msra.mxu0 0
  %325 = vmatprep.subr.bf16.mxu0 0
  %326 = vmatpush1.bf16.msra.mxu0 0
  %327 = vmatprep.subr.bf16.mxu0 0
  %328 = vmatpush1.bf16.msra.mxu0 0
  %329 = vmatprep.subr.bf16.mxu0 0
  %330 = vmatpush1.bf16.msra.mxu0 0
  %331 = vmatprep.subr.bf16.mxu0 0
  %332 = vmatpush1.bf16.msra.mxu0 0
  %333 = vmatprep.subr.bf16.mxu0 0
  %334 = vmatpush1.bf16.msra.mxu0 0
  %335 = vmatprep.subr.bf16.mxu0 0
  %336 = vmatpush1.bf16.msra.mxu0 0
  %337 = vmatprep.mubr.bf16.mxu0 0
  %338 = vmatmul.mubr.bf16.gmra.mrb[0].mxu0 %v102
  %v339 = vpop.f32.mrb[0].mxu0
  %v340 = vadd.f32 %v291, %v339
  %v341 = vpop.f32.mrb[0].mxu0
  %v342 = vpop.f32.mrb[0].mxu0
  %v343 = vadd.f32 %v294, %v342
  %v344 = vpop.f32.mrb[0].mxu0
  %345 = vmatprep.mubr.bf16.mxu0 0
  %346 = vmatmul.mubr.bf16.gmra.mrb[0].mxu0 %v105
  %v347 = vpop.f32.mrb[0].mxu0
  %v348 = vadd.f32 %v299, %v347
  %v349 = vpop.f32.mrb[0].mxu0
  %v350 = vpop.f32.mrb[0].mxu0
  %v351 = vadd.f32 %v302, %v350
  %v352 = vpop.f32.mrb[0].mxu0
  %353 = vdwg.mxu0
  %v354 = vld [vmem:[%s1] sm:$0xff]
  %v355 = vld [vmem:[%s1 + $0x8] sm:$0xf]
  %v356 = vld [vmem:[%s1 + $0xc] sm:$0xff]
  %v357 = vld [vmem:[%s1 + $0x14] sm:$0xf]
  %v358 = vld [vmem:[%s1 + $0x18] sm:$0xff]
  %v359 = vld [vmem:[%s1 + $0x20] sm:$0xf]
  %v360 = vld [vmem:[%s1 + $0x24] sm:$0xff]
  %v361 = vld [vmem:[%s1 + $0x2c] sm:$0xf]
  %v370 = vunpack.c.l.b16 %v354
  %v371 = vunpack.c.h.b16 %v354
  %v372 = vunpack.c.l.b16 %v355
  %v373 = vunpack.c.l.b16 %v356
  %v374 = vunpack.c.h.b16 %v356
  %v375 = vunpack.c.l.b16 %v357
  %v376 = vunpack.c.l.b16 %v358
  %v377 = vunpack.c.h.b16 %v358
  %v378 = vunpack.c.l.b16 %v359
  %v379 = vunpack.c.l.b16 %v360
  %v380 = vunpack.c.h.b16 %v360
  %v381 = vunpack.c.l.b16 %v361
  %v382 = vpack.c.b16 %v373, %v370
  %v383 = vpack.c.b16 %v374, %v371
  %v384 = vpack.c.b16 %v375, %v372
  %v385 = vpack.c.b16 %v379, %v376
  %v386 = vpack.c.b16 %v380, %v377
  %v387 = vpack.c.b16 %v381, %v378
  %394 = vmatprep.subr.bf16.mxu0 0
  %395 = vmatpush1.bf16.msra.mxu0 %v208
  %396 = vmatprep.subr.bf16.mxu0 0
  %397 = vmatpush1.bf16.msra.mxu0 %v209
  %398 = vmatprep.subr.bf16.mxu0 0
  %399 = vmatpush1.bf16.msra.mxu0 %v210
  %400 = vmatprep.subr.bf16.mxu0 0
  %401 = vmatpush1.bf16.msra.mxu0 %v211
  %402 = vmatprep.subr.bf16.mxu0 0
  %403 = vmatpush1.bf16.msra.mxu0 %v212
  %404 = vmatprep.subr.bf16.mxu0 0
  %405 = vmatpush1.bf16.msra.mxu0 %v213
  %406 = vmatprep.subr.bf16.mxu0 0
  %407 = vmatpush1.bf16.msra.mxu0 %v214
  %408 = vmatprep.subr.bf16.mxu0 0
  %409 = vmatpush1.bf16.msra.mxu0 %v215
  %410 = vmatprep.subr.bf16.mxu0 0
  %411 = vmatpush1.bf16.msra.mxu0 %v216
  %412 = vmatprep.subr.bf16.mxu0 0
  %413 = vmatpush1.bf16.msra.mxu0 %v217
  %414 = vmatprep.subr.bf16.mxu0 0
  %415 = vmatpush1.bf16.msra.mxu0 %v218
  %416 = vmatprep.subr.bf16.mxu0 0
  %417 = vmatpush1.bf16.msra.mxu0 %v219
  %418 = vmatprep.subr.bf16.mxu0 0
  %419 = vmatpush1.bf16.msra.mxu0 %v220
  %420 = vmatprep.subr.bf16.mxu0 0
  %421 = vmatpush1.bf16.msra.mxu0 %v221
  %422 = vmatprep.subr.bf16.mxu0 0
  %423 = vmatpush1.bf16.msra.mxu0 %v222
  %424 = vmatprep.subr.bf16.mxu0 0
  %425 = vmatpush1.bf16.msra.mxu0 %v223
  %426 = vmatprep.mubr.bf16.mxu0 %v383
  %427 = vmatmul.mubr.bf16.gmra.mrb[0].mxu0 %v382
  %v428 = vpop.f32.mrb[0].mxu0
  %v429 = vadd.f32 0.0, %v428
  %v430 = vpop.f32.mrb[0].mxu0
  %v431 = vpop.f32.mrb[0].mxu0
  %v432 = vadd.f32 0.0, %v431
  %v433 = vpop.f32.mrb[0].mxu0
  %434 = vmatprep.mubr.bf16.mxu0 %v386
  %435 = vmatmul.mubr.bf16.gmra.mrb[0].mxu0 %v385
  %v436 = vpop.f32.mrb[0].mxu0
  %v437 = vadd.f32 0.0, %v436
  %v438 = vpop.f32.mrb[0].mxu0
  %v439 = vpop.f32.mrb[0].mxu0
  %v440 = vadd.f32 0.0, %v439
  %v441 = vpop.f32.mrb[0].mxu0
  %442 = vdwg.mxu0
  %443 = vmatprep.subr.bf16.mxu0 0
  %444 = vmatpush1.bf16.msra.mxu0 %v224
  %445 = vmatprep.subr.bf16.mxu0 0
  %446 = vmatpush1.bf16.msra.mxu0 %v225
  %447 = vmatprep.subr.bf16.mxu0 0
  %448 = vmatpush1.bf16.msra.mxu0 %v226
  %449 = vmatprep.subr.bf16.mxu0 0
  %450 = vmatpush1.bf16.msra.mxu0 %v227
  %451 = vmatprep.subr.bf16.mxu0 0
  %452 = vmatpush1.bf16.msra.mxu0 %v228
  %453 = vmatprep.subr.bf16.mxu0 0
  %454 = vmatpush1.bf16.msra.mxu0 %v229
  %455 = vmatprep.subr.bf16.mxu0 0
  %456 = vmatpush1.bf16.msra.mxu0 %v230
  %457 = vmatprep.subr.bf16.mxu0 0
  %458 = vmatpush1.bf16.msra.mxu0 %v231
  %459 = vmatprep.subr.bf16.mxu0 0
  %460 = vmatpush1.bf16.msra.mxu0 0
  %461 = vmatprep.subr.bf16.mxu0 0
  %462 = vmatpush1.bf16.msra.mxu0 0
  %463 = vmatprep.subr.bf16.mxu0 0
  %464 = vmatpush1.bf16.msra.mxu0 0
  %465 = vmatprep.subr.bf16.mxu0 0
  %466 = vmatpush1.bf16.msra.mxu0 0
  %467 = vmatprep.subr.bf16.mxu0 0
  %468 = vmatpush1.bf16.msra.mxu0 0
  %469 = vmatprep.subr.bf16.mxu0 0
  %470 = vmatpush1.bf16.msra.mxu0 0
  %471 = vmatprep.subr.bf16.mxu0 0
  %472 = vmatpush1.bf16.msra.mxu0 0
  %473 = vmatprep.subr.bf16.mxu0 0
  %474 = vmatpush1.bf16.msra.mxu0 0
  %475 = vmatprep.mubr.bf16.mxu0 0
  %476 = vmatmul.mubr.bf16.gmra.mrb[0].mxu0 %v384
  %v477 = vpop.f32.mrb[0].mxu0
  %v478 = vadd.f32 %v429, %v477
  %v479 = vpop.f32.mrb[0].mxu0
  %v480 = vpop.f32.mrb[0].mxu0
  %v481 = vadd.f32 %v432, %v480
  %v482 = vpop.f32.mrb[0].mxu0
  %483 = vmatprep.mubr.bf16.mxu0 0
  %484 = vmatmul.mubr.bf16.gmra.mrb[0].mxu0 %v387
  %v485 = vpop.f32.mrb[0].mxu0
  %v486 = vadd.f32 %v437, %v485
  %v487 = vpop.f32.mrb[0].mxu0
  %v488 = vpop.f32.mrb[0].mxu0
  %v489 = vadd.f32 %v440, %v488
  %v490 = vpop.f32.mrb[0].mxu0
  %491 = vdwg.mxu0
  %v492 = vmax.f32 %v340, %v478
  %v493 = vmax.f32 %v343, %v481
  %v494 = vmax.f32 %v348, %v486
  %v495 = vmax.f32 %v351, %v489
  %v496 = vld [vmem:[%s2] sm:$0xff]
  %v497 = vld [vmem:[%s2 + $0x8] sm:$0xf]
  %v498 = vld [vmem:[%s2 + $0xc] sm:$0xff]
  %v499 = vld [vmem:[%s2 + $0x14] sm:$0xf]
  %v500 = vld [vmem:[%s2 + $0x18] sm:$0xff]
  %v501 = vld [vmem:[%s2 + $0x20] sm:$0xf]
  %v502 = vld [vmem:[%s2 + $0x24] sm:$0xff]
  %v503 = vld [vmem:[%s2 + $0x2c] sm:$0xf]
  %v512 = vunpack.c.l.b16 %v496
  %v513 = vunpack.c.h.b16 %v496
  %v514 = vunpack.c.l.b16 %v497
  %v515 = vunpack.c.l.b16 %v498
  %v516 = vunpack.c.h.b16 %v498
  %v517 = vunpack.c.l.b16 %v499
  %v518 = vunpack.c.l.b16 %v500
  %v519 = vunpack.c.h.b16 %v500
  %v520 = vunpack.c.l.b16 %v501
  %v521 = vunpack.c.l.b16 %v502
  %v522 = vunpack.c.h.b16 %v502
  %v523 = vunpack.c.l.b16 %v503
  %v524 = vpack.c.b16 %v515, %v512
  %v525 = vpack.c.b16 %v516, %v513
  %v526 = vpack.c.b16 %v517, %v514
  %v527 = vpack.c.b16 %v521, %v518
  %v528 = vpack.c.b16 %v522, %v519
  %v529 = vpack.c.b16 %v523, %v520
  %536 = vmatprep.subr.bf16.mxu0 0
  %537 = vmatpush1.bf16.msra.mxu0 %v208
  %538 = vmatprep.subr.bf16.mxu0 0
  %539 = vmatpush1.bf16.msra.mxu0 %v209
  %540 = vmatprep.subr.bf16.mxu0 0
  %541 = vmatpush1.bf16.msra.mxu0 %v210
  %542 = vmatprep.subr.bf16.mxu0 0
  %543 = vmatpush1.bf16.msra.mxu0 %v211
  %544 = vmatprep.subr.bf16.mxu0 0
  %545 = vmatpush1.bf16.msra.mxu0 %v212
  %546 = vmatprep.subr.bf16.mxu0 0
  %547 = vmatpush1.bf16.msra.mxu0 %v213
  %548 = vmatprep.subr.bf16.mxu0 0
  %549 = vmatpush1.bf16.msra.mxu0 %v214
  %550 = vmatprep.subr.bf16.mxu0 0
  %551 = vmatpush1.bf16.msra.mxu0 %v215
  %552 = vmatprep.subr.bf16.mxu0 0
  %553 = vmatpush1.bf16.msra.mxu0 %v216
  %554 = vmatprep.subr.bf16.mxu0 0
  %555 = vmatpush1.bf16.msra.mxu0 %v217
  %556 = vmatprep.subr.bf16.mxu0 0
  %557 = vmatpush1.bf16.msra.mxu0 %v218
  %558 = vmatprep.subr.bf16.mxu0 0
  %559 = vmatpush1.bf16.msra.mxu0 %v219
  %560 = vmatprep.subr.bf16.mxu0 0
  %561 = vmatpush1.bf16.msra.mxu0 %v220
  %562 = vmatprep.subr.bf16.mxu0 0
  %563 = vmatpush1.bf16.msra.mxu0 %v221
  %564 = vmatprep.subr.bf16.mxu0 0
  %565 = vmatpush1.bf16.msra.mxu0 %v222
  %566 = vmatprep.subr.bf16.mxu0 0
  %567 = vmatpush1.bf16.msra.mxu0 %v223
  %568 = vmatprep.mubr.bf16.mxu0 %v525
  %569 = vmatmul.mubr.bf16.gmra.mrb[0].mxu0 %v524
  %v570 = vpop.f32.mrb[0].mxu0
  %v571 = vadd.f32 0.0, %v570
  %v572 = vpop.f32.mrb[0].mxu0
  %v573 = vpop.f32.mrb[0].mxu0
  %v574 = vadd.f32 0.0, %v573
  %v575 = vpop.f32.mrb[0].mxu0
  %576 = vmatprep.mubr.bf16.mxu0 %v528
  %577 = vmatmul.mubr.bf16.gmra.mrb[0].mxu0 %v527
  %v578 = vpop.f32.mrb[0].mxu0
  %v579 = vadd.f32 0.0, %v578
  %v580 = vpop.f32.mrb[0].mxu0
  %v581 = vpop.f32.mrb[0].mxu0
  %v582 = vadd.f32 0.0, %v581
  %v583 = vpop.f32.mrb[0].mxu0
  %584 = vdwg.mxu0
  %585 = vmatprep.subr.bf16.mxu0 0
  %586 = vmatpush1.bf16.msra.mxu0 %v224
  %587 = vmatprep.subr.bf16.mxu0 0
  %588 = vmatpush1.bf16.msra.mxu0 %v225
  %589 = vmatprep.subr.bf16.mxu0 0
  %590 = vmatpush1.bf16.msra.mxu0 %v226
  %591 = vmatprep.subr.bf16.mxu0 0
  %592 = vmatpush1.bf16.msra.mxu0 %v227
  %593 = vmatprep.subr.bf16.mxu0 0
  %594 = vmatpush1.bf16.msra.mxu0 %v228
  %595 = vmatprep.subr.bf16.mxu0 0
  %596 = vmatpush1.bf16.msra.mxu0 %v229
  %597 = vmatprep.subr.bf16.mxu0 0
  %598 = vmatpush1.bf16.msra.mxu0 %v230
  %599 = vmatprep.subr.bf16.mxu0 0
  %600 = vmatpush1.bf16.msra.mxu0 %v231
  %601 = vmatprep.subr.bf16.mxu0 0
  %602 = vmatpush1.bf16.msra.mxu0 0
  %603 = vmatprep.subr.bf16.mxu0 0
  %604 = vmatpush1.bf16.msra.mxu0 0
  %605 = vmatprep.subr.bf16.mxu0 0
  %606 = vmatpush1.bf16.msra.mxu0 0
  %607 = vmatprep.subr.bf16.mxu0 0
  %608 = vmatpush1.bf16.msra.mxu0 0
  %609 = vmatprep.subr.bf16.mxu0 0
  %610 = vmatpush1.bf16.msra.mxu0 0
  %611 = vmatprep.subr.bf16.mxu0 0
  %612 = vmatpush1.bf16.msra.mxu0 0
  %613 = vmatprep.subr.bf16.mxu0 0
  %614 = vmatpush1.bf16.msra.mxu0 0
  %615 = vmatprep.subr.bf16.mxu0 0
  %616 = vmatpush1.bf16.msra.mxu0 0
  %617 = vmatprep.mubr.bf16.mxu0 0
  %618 = vmatmul.mubr.bf16.gmra.mrb[0].mxu0 %v526
  %v619 = vpop.f32.mrb[0].mxu0
  %v620 = vadd.f32 %v571, %v619
  %v621 = vpop.f32.mrb[0].mxu0
  %v622 = vpop.f32.mrb[0].mxu0
  %v623 = vadd.f32 %v574, %v622
  %v624 = vpop.f32.mrb[0].mxu0
  %625 = vmatprep.mubr.bf16.mxu0 0
  %626 = vmatmul.mubr.bf16.gmra.mrb[0].mxu0 %v529
  %v627 = vpop.f32.mrb[0].mxu0
  %v628 = vadd.f32 %v579, %v627
  %v629 = vpop.f32.mrb[0].mxu0
  %v630 = vpop.f32.mrb[0].mxu0
  %v631 = vadd.f32 %v582, %v630
  %v632 = vpop.f32.mrb[0].mxu0
  %633 = vdwg.mxu0
  %v634 = vmax.f32 %v492, %v620
  %v635 = vmax.f32 %v493, %v623
  %v636 = vmax.f32 %v494, %v628
  %v637 = vmax.f32 %v495, %v631
  %v638 = vld [vmem:[%s3] sm:$0xff]
  %v639 = vld [vmem:[%s3 + $0x8] sm:$0xf]
  %v640 = vld [vmem:[%s3 + $0xc] sm:$0xff]
  %v641 = vld [vmem:[%s3 + $0x14] sm:$0xf]
  %v642 = vld [vmem:[%s3 + $0x18] sm:$0xff]
  %v643 = vld [vmem:[%s3 + $0x20] sm:$0xf]
  %v644 = vld [vmem:[%s3 + $0x24] sm:$0xff]
  %v645 = vld [vmem:[%s3 + $0x2c] sm:$0xf]
  %v654 = vunpack.c.l.b16 %v638
  %v655 = vunpack.c.h.b16 %v638
  %v656 = vunpack.c.l.b16 %v639
  %v657 = vunpack.c.l.b16 %v640
  %v658 = vunpack.c.h.b16 %v640
  %v659 = vunpack.c.l.b16 %v641
  %v660 = vunpack.c.l.b16 %v642
  %v661 = vunpack.c.h.b16 %v642
  %v662 = vunpack.c.l.b16 %v643
  %v663 = vunpack.c.l.b16 %v644
  %v664 = vunpack.c.h.b16 %v644
  %v665 = vunpack.c.l.b16 %v645
  %v666 = vpack.c.b16 %v657, %v654
  %v667 = vpack.c.b16 %v658, %v655
  %v668 = vpack.c.b16 %v659, %v656
  %v669 = vpack.c.b16 %v663, %v660
  %v670 = vpack.c.b16 %v664, %v661
  %v671 = vpack.c.b16 %v665, %v662
  %678 = vmatprep.subr.bf16.mxu0 0
  %679 = vmatpush1.bf16.msra.mxu0 %v208
  %680 = vmatprep.subr.bf16.mxu0 0
  %681 = vmatpush1.bf16.msra.mxu0 %v209
  %682 = vmatprep.subr.bf16.mxu0 0
  %683 = vmatpush1.bf16.msra.mxu0 %v210
  %684 = vmatprep.subr.bf16.mxu0 0
  %685 = vmatpush1.bf16.msra.mxu0 %v211
  %686 = vmatprep.subr.bf16.mxu0 0
  %687 = vmatpush1.bf16.msra.mxu0 %v212
  %688 = vmatprep.subr.bf16.mxu0 0
  %689 = vmatpush1.bf16.msra.mxu0 %v213
  %690 = vmatprep.subr.bf16.mxu0 0
  %691 = vmatpush1.bf16.msra.mxu0 %v214
  %692 = vmatprep.subr.bf16.mxu0 0
  %693 = vmatpush1.bf16.msra.mxu0 %v215
  %694 = vmatprep.subr.bf16.mxu0 0
  %695 = vmatpush1.bf16.msra.mxu0 %v216
  %696 = vmatprep.subr.bf16.mxu0 0
  %697 = vmatpush1.bf16.msra.mxu0 %v217
  %698 = vmatprep.subr.bf16.mxu0 0
  %699 = vmatpush1.bf16.msra.mxu0 %v218
  %700 = vmatprep.subr.bf16.mxu0 0
  %701 = vmatpush1.bf16.msra.mxu0 %v219
  %702 = vmatprep.subr.bf16.mxu0 0
  %703 = vmatpush1.bf16.msra.mxu0 %v220
  %704 = vmatprep.subr.bf16.mxu0 0
  %705 = vmatpush1.bf16.msra.mxu0 %v221
  %706 = vmatprep.subr.bf16.mxu0 0
  %707 = vmatpush1.bf16.msra.mxu0 %v222
  %708 = vmatprep.subr.bf16.mxu0 0
  %709 = vmatpush1.bf16.msra.mxu0 %v223
  %710 = vmatprep.mubr.bf16.mxu0 %v667
  %711 = vmatmul.mubr.bf16.gmra.mrb[0].mxu0 %v666
  %v712 = vpop.f32.mrb[0].mxu0
  %v713 = vadd.f32 0.0, %v712
  %v714 = vpop.f32.mrb[0].mxu0
  %v715 = vpop.f32.mrb[0].mxu0
  %v716 = vadd.f32 0.0, %v715
  %v717 = vpop.f32.mrb[0].mxu0
  %718 = vmatprep.mubr.bf16.mxu0 %v670
  %719 = vmatmul.mubr.bf16.gmra.mrb[0].mxu0 %v669
  %v720 = vpop.f32.mrb[0].mxu0
  %v721 = vadd.f32 0.0, %v720
  %v722 = vpop.f32.mrb[0].mxu0
  %v723 = vpop.f32.mrb[0].mxu0
  %v724 = vadd.f32 0.0, %v723
  %v725 = vpop.f32.mrb[0].mxu0
  %726 = vdwg.mxu0
  %727 = vmatprep.subr.bf16.mxu0 0
  %728 = vmatpush1.bf16.msra.mxu0 %v224
  %729 = vmatprep.subr.bf16.mxu0 0
  %730 = vmatpush1.bf16.msra.mxu0 %v225
  %731 = vmatprep.subr.bf16.mxu0 0
  %732 = vmatpush1.bf16.msra.mxu0 %v226
  %733 = vmatprep.subr.bf16.mxu0 0
  %734 = vmatpush1.bf16.msra.mxu0 %v227
  %735 = vmatprep.subr.bf16.mxu0 0
  %736 = vmatpush1.bf16.msra.mxu0 %v228
  %737 = vmatprep.subr.bf16.mxu0 0
  %738 = vmatpush1.bf16.msra.mxu0 %v229
  %739 = vmatprep.subr.bf16.mxu0 0
  %740 = vmatpush1.bf16.msra.mxu0 %v230
  %741 = vmatprep.subr.bf16.mxu0 0
  %742 = vmatpush1.bf16.msra.mxu0 %v231
  %743 = vmatprep.subr.bf16.mxu0 0
  %744 = vmatpush1.bf16.msra.mxu0 0
  %745 = vmatprep.subr.bf16.mxu0 0
  %746 = vmatpush1.bf16.msra.mxu0 0
  %747 = vmatprep.subr.bf16.mxu0 0
  %748 = vmatpush1.bf16.msra.mxu0 0
  %749 = vmatprep.subr.bf16.mxu0 0
  %750 = vmatpush1.bf16.msra.mxu0 0
  %751 = vmatprep.subr.bf16.mxu0 0
  %752 = vmatpush1.bf16.msra.mxu0 0
  %753 = vmatprep.subr.bf16.mxu0 0
  %754 = vmatpush1.bf16.msra.mxu0 0
  %755 = vmatprep.subr.bf16.mxu0 0
  %756 = vmatpush1.bf16.msra.mxu0 0
  %757 = vmatprep.subr.bf16.mxu0 0
  %758 = vmatpush1.bf16.msra.mxu0 0
  %759 = vmatprep.mubr.bf16.mxu0 0
  %760 = vmatmul.mubr.bf16.gmra.mrb[0].mxu0 %v668
  %v761 = vpop.f32.mrb[0].mxu0
  %v762 = vadd.f32 %v713, %v761
  %v763 = vpop.f32.mrb[0].mxu0
  %v764 = vpop.f32.mrb[0].mxu0
  %v765 = vadd.f32 %v716, %v764
  %v766 = vpop.f32.mrb[0].mxu0
  %767 = vmatprep.mubr.bf16.mxu0 0
  %768 = vmatmul.mubr.bf16.gmra.mrb[0].mxu0 %v671
  %v769 = vpop.f32.mrb[0].mxu0
  %v770 = vadd.f32 %v721, %v769
  %v771 = vpop.f32.mrb[0].mxu0
  %v772 = vpop.f32.mrb[0].mxu0
  %v773 = vadd.f32 %v724, %v772
  %v774 = vpop.f32.mrb[0].mxu0
  %775 = vdwg.mxu0
  %v776 = vmax.f32 %v634, %v762
  %v777 = vmax.f32 %v635, %v765
  %v778 = vmax.f32 %v636, %v770
  %v779 = vmax.f32 %v637, %v773
  %v780 = vld [vmem:[%s5] sm:$0x1]
  %v782 = vlaneseq
  %v783 = vshrl.u32 %v782, 7
  %v784 = vsub.s32 0, %v783
  %v785 = vrot.slane %v780, %v784
  %v787 = vadd.f32 %v776, %v785
  %v788 = vadd.f32 %v777, %v785
  %v789 = vadd.f32 %v778, %v785
  %v790 = vadd.f32 %v779, %v785
  %v791 = vmax.f32 %v787, 0.0
  %v792 = vmax.f32 %v788, 0.0
  %v793 = vmax.f32 %v789, 0.0
  %v794 = vmax.f32 %v790, 0.0
  %v795 = vpack.c.bf16 %v792, %v791
  %v796 = vpack.c.bf16 %v794, %v793
  %v799 = vunpack.c.l.b16 %v795
  %v800 = vunpack.c.h.b16 %v795
  %v801 = vunpack.c.l.b16 %v796
  %v802 = vunpack.c.h.b16 %v796
  %v803 = vpack.c.b16 %v799, %v799
  %v804 = vpack.c.b16 %v800, %v800
  %v805 = vpack.c.b16 %v801, %v801
  %v806 = vpack.c.b16 %v802, %v802
  %811 = vst [vmem:[%s6] sm:$0xf] %v803
  %812 = vst [vmem:[%s6 + $0x4] sm:$0xf] %v804
  %813 = vst [vmem:[%s6 + $0x8] sm:$0xf] %v805
  %814 = vst [vmem:[%s6 + $0xc] sm:$0xf] %v806
  // Predicated region
  $region26: #{autoencoder_forward.8} parent=0 // pred_check
    _
  $region27: #{autoencoder_forward.8} parent=0 // pred_check_branch
    %816 = sbr.rel (0) target = $region29
  $region28: #{autoencoder_forward.8} parent=0 // pred_region
    _
  $region29: #{autoencoder_forward.8} parent=0 // pred_fallthru
    _
  // Predicated region
  $region30: #{autoencoder_forward.8} parent=0 // pred_check
    _
  $region31: #{autoencoder_forward.8} parent=0 // pred_check_branch
    %818 = sbr.rel (0) target = $region33
  $region32: #{autoencoder_forward.8} parent=0 // pred_region
    _
  $region33: #{autoencoder_forward.8} parent=0 // pred_fallthru
    _

// kernel: autoencoder_forward.9
$region0: #{autoencoder_forward.9}
  #allocation0 [shape = 'u32[]', space=smem, size = 0x4, offset = 0x4, fixed_abs, tag = 'smem constant byte address 0x4 - core index']
  #allocation1 [shape = 'u32[144,128]{1,0:T(1,128)}', space=vmem, size = 0x12000, scoped, tag = 'internal scratch']
  %s0 = inlined_call_operand.vmem [shape: bf16[16,640], index: 0, kind: input, shape index: {}]
  %s1 = inlined_call_operand.vmem [shape: bf16[16,640], index: 1, kind: input, shape index: {}]
  %s2 = inlined_call_operand.vmem [shape: bf16[16,640], index: 2, kind: input, shape index: {}]
  %s3 = inlined_call_operand.vmem [shape: bf16[16,640], index: 3, kind: input, shape index: {}]
  %s4 = inlined_call_operand.vmem [shape: bf16[640,128], index: 4, kind: input, shape index: {}]
  %s5 = inlined_call_operand.vmem [shape: f32[1,128], index: 5, kind: input, shape index: {}]
  %s6 = inlined_call_operand.vmem [shape: bf16[16,128], index: 6, kind: output, shape index: {}]
  %s7 = sld [smem:[#allocation0]]
  $region34: #{autoencoder_forward.9} parent=0
    _
  %s9 = ssub.s32 1, %s7
  %s10 = scalar_select 0, %s9, %s7
  // Predicated region
  $region2: #{autoencoder_forward.9} parent=0 // pred_check
    _
  $region3: #{autoencoder_forward.9} parent=0 // pred_check_branch
    %12 = sbr.rel (0) target = $region5
  $region4: #{autoencoder_forward.9} parent=0 // pred_region
    _
  $region5: #{autoencoder_forward.9} parent=0 // pred_fallthru
    _
  // Predicated region
  $region6: #{autoencoder_forward.9} parent=0 // pred_check
    _
  $region7: #{autoencoder_forward.9} parent=0 // pred_check_branch
    %14 = sbr.rel (0) target = $region9
  $region8: #{autoencoder_forward.9} parent=0 // pred_region
    _
  $region9: #{autoencoder_forward.9} parent=0 // pred_fallthru
    _
  // Predicated region
  $region10: #{autoencoder_forward.9} parent=0 // pred_check
    _
  $region11: #{autoencoder_forward.9} parent=0 // pred_check_branch
    %16 = sbr.rel (0) target = $region13
  $region12: #{autoencoder_forward.9} parent=0 // pred_region
    _
  $region13: #{autoencoder_forward.9} parent=0 // pred_fallthru
    _
  // Predicated region
  $region14: #{autoencoder_forward.9} parent=0 // pred_check
    _
  $region15: #{autoencoder_forward.9} parent=0 // pred_check_branch
    %18 = sbr.rel (0) target = $region17
  $region16: #{autoencoder_forward.9} parent=0 // pred_region
    _
  $region17: #{autoencoder_forward.9} parent=0 // pred_fallthru
    _
  // Predicated region
  $region18: #{autoencoder_forward.9} parent=0 // pred_check
    _
  $region19: #{autoencoder_forward.9} parent=0 // pred_check_branch
    %20 = sbr.rel (0) target = $region21
  $region20: #{autoencoder_forward.9} parent=0 // pred_region
    _
  $region21: #{autoencoder_forward.9} parent=0 // pred_fallthru
    _
  // Predicated region
  $region22: #{autoencoder_forward.9} parent=0 // pred_check
    _
  $region23: #{autoencoder_forward.9} parent=0 // pred_check_branch
    %22 = sbr.rel (0) target = $region25
  $region24: #{autoencoder_forward.9} parent=0 // pred_region
    _
  $region25: #{autoencoder_forward.9} parent=0 // pred_fallthru
    _
  %v24 = vld [vmem:[%s4] sm:$0xf]
  %v25 = vld [vmem:[%s4 + $0x4] sm:$0xf]
  %v26 = vld [vmem:[%s4 + $0x8] sm:$0xf]
  %v27 = vld [vmem:[%s4 + $0xc] sm:$0xf]
  %v28 = vld [vmem:[%s4 + $0x10] sm:$0xf]
  %v29 = vld [vmem:[%s4 + $0x14] sm:$0xf]
  %v30 = vld [vmem:[%s4 + $0x18] sm:$0xf]
  %v31 = vld [vmem:[%s4 + $0x1c] sm:$0xf]
  %v32 = vld [vmem:[%s4 + $0x20] sm:$0xf]
  %v33 = vld [vmem:[%s4 + $0x24] sm:$0xf]
  %v34 = vld [vmem:[%s4 + $0x28] sm:$0xf]
  %v35 = vld [vmem:[%s4 + $0x2c] sm:$0xf]
  %v36 = vld [vmem:[%s4 + $0x30] sm:$0xf]
  %v37 = vld [vmem:[%s4 + $0x34] sm:$0xf]
  %v38 = vld [vmem:[%s4 + $0x38] sm:$0xf]
  %v39 = vld [vmem:[%s4 + $0x3c] sm:$0xf]
  %v40 = vld [vmem:[%s4 + $0x40] sm:$0xf]
  %v41 = vld [vmem:[%s4 + $0x44] sm:$0xf]
  %v42 = vld [vmem:[%s4 + $0x48] sm:$0xf]
  %v43 = vld [vmem:[%s4 + $0x4c] sm:$0xf]
  %v44 = vld [vmem:[%s4 + $0x50] sm:$0xf]
  %v45 = vld [vmem:[%s4 + $0x54] sm:$0xf]
  %v46 = vld [vmem:[%s4 + $0x58] sm:$0xf]
  %v47 = vld [vmem:[%s4 + $0x5c] sm:$0xf]
  %v48 = vld [vmem:[%s4 + $0x60] sm:$0xf]
  %v49 = vld [vmem:[%s4 + $0x64] sm:$0xf]
  %v50 = vld [vmem:[%s4 + $0x68] sm:$0xf]
  %v51 = vld [vmem:[%s4 + $0x6c] sm:$0xf]
  %v52 = vld [vmem:[%s4 + $0x70] sm:$0xf]
  %v53 = vld [vmem:[%s4 + $0x74] sm:$0xf]
  %v54 = vld [vmem:[%s4 + $0x78] sm:$0xf]
  %v55 = vld [vmem:[%s4 + $0x7c] sm:$0xf]
  %v56 = vld [vmem:[%s4 + $0x80] sm:$0xf]
  %v57 = vld [vmem:[%s4 + $0x84] sm:$0xf]
  %v58 = vld [vmem:[%s4 + $0x88] sm:$0xf]
  %v59 = vld [vmem:[%s4 + $0x8c] sm:$0xf]
  %v60 = vld [vmem:[%s4 + $0x90] sm:$0xf]
  %v61 = vld [vmem:[%s4 + $0x94] sm:$0xf]
  %v62 = vld [vmem:[%s4 + $0x98] sm:$0xf]
  %v63 = vld [vmem:[%s4 + $0x9c] sm:$0xf]
  %v64 = vld [vmem:[%s4 + $0xa0] sm:$0xf]
  %v65 = vld [vmem:[%s4 + $0xa4] sm:$0xf]
  %v66 = vld [vmem:[%s4 + $0xa8] sm:$0xf]
  %v67 = vld [vmem:[%s4 + $0xac] sm:$0xf]
  %v68 = vld [vmem:[%s4 + $0xb0] sm:$0xf]
  %v69 = vld [vmem:[%s4 + $0xb4] sm:$0xf]
  %v70 = vld [vmem:[%s4 + $0xb8] sm:$0xf]
  %v71 = vld [vmem:[%s4 + $0xbc] sm:$0xf]
  %v72 = vld [vmem:[%s4 + $0xc0] sm:$0xf]
  %v73 = vld [vmem:[%s4 + $0xc4] sm:$0xf]
  %v74 = vld [vmem:[%s4 + $0xc8] sm:$0xf]
  %v75 = vld [vmem:[%s4 + $0xcc] sm:$0xf]
  %v76 = vld [vmem:[%s4 + $0xd0] sm:$0xf]
  %v77 = vld [vmem:[%s4 + $0xd4] sm:$0xf]
  %v78 = vld [vmem:[%s4 + $0xd8] sm:$0xf]
  %v79 = vld [vmem:[%s4 + $0xdc] sm:$0xf]
  %v80 = vld [vmem:[%s4 + $0xe0] sm:$0xf]
  %v81 = vld [vmem:[%s4 + $0xe4] sm:$0xf]
  %v82 = vld [vmem:[%s4 + $0xe8] sm:$0xf]
  %v83 = vld [vmem:[%s4 + $0xec] sm:$0xf]
  %v84 = vld [vmem:[%s4 + $0xf0] sm:$0xf]
  %v85 = vld [vmem:[%s4 + $0xf4] sm:$0xf]
  %v86 = vld [vmem:[%s4 + $0xf8] sm:$0xf]
  %v87 = vld [vmem:[%s4 + $0xfc] sm:$0xf]
  %v88 = vld [vmem:[%s4 + $0x100] sm:$0xf]
  %v89 = vld [vmem:[%s4 + $0x104] sm:$0xf]
  %v90 = vld [vmem:[%s4 + $0x108] sm:$0xf]
  %v91 = vld [vmem:[%s4 + $0x10c] sm:$0xf]
  %v92 = vld [vmem:[%s4 + $0x110] sm:$0xf]
  %v93 = vld [vmem:[%s4 + $0x114] sm:$0xf]
  %v94 = vld [vmem:[%s4 + $0x118] sm:$0xf]
  %v95 = vld [vmem:[%s4 + $0x11c] sm:$0xf]
  %v96 = vld [vmem:[%s4 + $0x120] sm:$0xf]
  %v97 = vld [vmem:[%s4 + $0x124] sm:$0xf]
  %v98 = vld [vmem:[%s4 + $0x128] sm:$0xf]
  %v99 = vld [vmem:[%s4 + $0x12c] sm:$0xf]
  %v100 = vld [vmem:[%s4 + $0x130] sm:$0xf]
  %v101 = vld [vmem:[%s4 + $0x134] sm:$0xf]
  %v102 = vld [vmem:[%s4 + $0x138] sm:$0xf]
  %v103 = vld [vmem:[%s4 + $0x13c] sm:$0xf]
  %v104 = vld [vmem:[%s0] sm:$0xff]
  %v105 = vld [vmem:[%s0 + $0x8] sm:$0xff]
  %v106 = vld [vmem:[%s0 + $0x10] sm:$0xf]
  %v107 = vld [vmem:[%s0 + $0x14] sm:$0xff]
  %v108 = vld [vmem:[%s0 + $0x1c] sm:$0xff]
  %v109 = vld [vmem:[%s0 + $0x24] sm:$0xf]
  %v116 = vunpack.c.l.b16 %v104
  %v117 = vunpack.c.h.b16 %v104
  %v118 = vunpack.c.l.b16 %v105
  %v119 = vunpack.c.h.b16 %v105
  %v120 = vunpack.c.l.b16 %v106
  %v121 = vunpack.c.l.b16 %v107
  %v122 = vunpack.c.h.b16 %v107
  %v123 = vunpack.c.l.b16 %v108
  %v124 = vunpack.c.h.b16 %v108
  %v125 = vunpack.c.l.b16 %v109
  %v126 = vpack.c.b16 %v121, %v116
  %v127 = vpack.c.b16 %v122, %v117
  %v128 = vpack.c.b16 %v123, %v118
  %v129 = vpack.c.b16 %v124, %v119
  %v130 = vpack.c.b16 %v125, %v120
  %v216 = vunpack.c.l.b16 %v24
  %v217 = vunpack.c.l.b16 %v25
  %v218 = vunpack.c.l.b16 %v26
  %v219 = vunpack.c.l.b16 %v27
  %v220 = vunpack.c.l.b16 %v28
  %v221 = vunpack.c.l.b16 %v29
  %v222 = vunpack.c.l.b16 %v30
  %v223 = vunpack.c.l.b16 %v31
  %v224 = vunpack.c.l.b16 %v32
  %v225 = vunpack.c.l.b16 %v33
  %v226 = vunpack.c.l.b16 %v34
  %v227 = vunpack.c.l.b16 %v35
  %v228 = vunpack.c.l.b16 %v36
  %v229 = vunpack.c.l.b16 %v37
  %v230 = vunpack.c.l.b16 %v38
  %v231 = vunpack.c.l.b16 %v39
  %v232 = vunpack.c.l.b16 %v40
  %v233 = vunpack.c.l.b16 %v41
  %v234 = vunpack.c.l.b16 %v42
  %v235 = vunpack.c.l.b16 %v43
  %v236 = vunpack.c.l.b16 %v44
  %v237 = vunpack.c.l.b16 %v45
  %v238 = vunpack.c.l.b16 %v46
  %v239 = vunpack.c.l.b16 %v47
  %v240 = vunpack.c.l.b16 %v48
  %v241 = vunpack.c.l.b16 %v49
  %v242 = vunpack.c.l.b16 %v50
  %v243 = vunpack.c.l.b16 %v51
  %v244 = vunpack.c.l.b16 %v52
  %v245 = vunpack.c.l.b16 %v53
  %v246 = vunpack.c.l.b16 %v54
  %v247 = vunpack.c.l.b16 %v55
  %v248 = vunpack.c.l.b16 %v56
  %v249 = vunpack.c.l.b16 %v57
  %v250 = vunpack.c.l.b16 %v58
  %v251 = vunpack.c.l.b16 %v59
  %v252 = vunpack.c.l.b16 %v60
  %v253 = vunpack.c.l.b16 %v61
  %v254 = vunpack.c.l.b16 %v62
  %v255 = vunpack.c.l.b16 %v63
  %v256 = vunpack.c.l.b16 %v64
  %v257 = vunpack.c.l.b16 %v65
  %v258 = vunpack.c.l.b16 %v66
  %v259 = vunpack.c.l.b16 %v67
  %v260 = vunpack.c.l.b16 %v68
  %v261 = vunpack.c.l.b16 %v69
  %v262 = vunpack.c.l.b16 %v70
  %v263 = vunpack.c.l.b16 %v71
  %v264 = vunpack.c.l.b16 %v72
  %v265 = vunpack.c.l.b16 %v73
  %v266 = vunpack.c.l.b16 %v74
  %v267 = vunpack.c.l.b16 %v75
  %v268 = vunpack.c.l.b16 %v76
  %v269 = vunpack.c.l.b16 %v77
  %v270 = vunpack.c.l.b16 %v78
  %v271 = vunpack.c.l.b16 %v79
  %v272 = vunpack.c.l.b16 %v80
  %v273 = vunpack.c.l.b16 %v81
  %v274 = vunpack.c.l.b16 %v82
  %v275 = vunpack.c.l.b16 %v83
  %v276 = vunpack.c.l.b16 %v84
  %v277 = vunpack.c.l.b16 %v85
  %v278 = vunpack.c.l.b16 %v86
  %v279 = vunpack.c.l.b16 %v87
  %v280 = vunpack.c.l.b16 %v88
  %v281 = vunpack.c.l.b16 %v89
  %v282 = vunpack.c.l.b16 %v90
  %v283 = vunpack.c.l.b16 %v91
  %v284 = vunpack.c.l.b16 %v92
  %v285 = vunpack.c.l.b16 %v93
  %v286 = vunpack.c.l.b16 %v94
  %v287 = vunpack.c.l.b16 %v95
  %v288 = vunpack.c.l.b16 %v96
  %v289 = vunpack.c.l.b16 %v97
  %v290 = vunpack.c.l.b16 %v98
  %v291 = vunpack.c.l.b16 %v99
  %v292 = vunpack.c.l.b16 %v100
  %v293 = vunpack.c.l.b16 %v101
  %v294 = vunpack.c.l.b16 %v102
  %v295 = vunpack.c.l.b16 %v103
  %v296 = vpack.c.b16 %v217, %v216
  %v297 = vpack.c.b16 %v219, %v218
  %v298 = vpack.c.b16 %v221, %v220
  %v299 = vpack.c.b16 %v223, %v222
  %v300 = vpack.c.b16 %v225, %v224
  %v301 = vpack.c.b16 %v227, %v226
  %v302 = vpack.c.b16 %v229, %v228
  %v303 = vpack.c.b16 %v231, %v230
  %v304 = vpack.c.b16 %v233, %v232
  %v305 = vpack.c.b16 %v235, %v234
  %v306 = vpack.c.b16 %v237, %v236
  %v307 = vpack.c.b16 %v239, %v238
  %v308 = vpack.c.b16 %v241, %v240
  %v309 = vpack.c.b16 %v243, %v242
  %v310 = vpack.c.b16 %v245, %v244
  %v311 = vpack.c.b16 %v247, %v246
  %v312 = vpack.c.b16 %v249, %v248
  %v313 = vpack.c.b16 %v251, %v250
  %v314 = vpack.c.b16 %v253, %v252
  %v315 = vpack.c.b16 %v255, %v254
  %v316 = vpack.c.b16 %v257, %v256
  %v317 = vpack.c.b16 %v259, %v258
  %v318 = vpack.c.b16 %v261, %v260
  %v319 = vpack.c.b16 %v263, %v262
  %v320 = vpack.c.b16 %v265, %v264
  %v321 = vpack.c.b16 %v267, %v266
  %v322 = vpack.c.b16 %v269, %v268
  %v323 = vpack.c.b16 %v271, %v270
  %v324 = vpack.c.b16 %v273, %v272
  %v325 = vpack.c.b16 %v275, %v274
  %v326 = vpack.c.b16 %v277, %v276
  %v327 = vpack.c.b16 %v279, %v278
  %v328 = vpack.c.b16 %v281, %v280
  %v329 = vpack.c.b16 %v283, %v282
  %v330 = vpack.c.b16 %v285, %v284
  %v331 = vpack.c.b16 %v287, %v286
  %v332 = vpack.c.b16 %v289, %v288
  %v333 = vpack.c.b16 %v291, %v290
  %v334 = vpack.c.b16 %v293, %v292
  %v335 = vpack.c.b16 %v295, %v294
  %376 = vmatprep.subr.bf16.mxu0 0
  %377 = vmatpush1.bf16.msra.mxu0 %v296
  %378 = vmatprep.subr.bf16.mxu0 0
  %379 = vmatpush1.bf16.msra.mxu0 %v297
  %380 = vmatprep.subr.bf16.mxu0 0
  %381 = vmatpush1.bf16.msra.mxu0 %v298
  %382 = vmatprep.subr.bf16.mxu0 0
  %383 = vmatpush1.bf16.msra.mxu0 %v299
  %384 = vmatprep.subr.bf16.mxu0 0
  %385 = vmatpush1.bf16.msra.mxu0 %v300
  %386 = vmatprep.subr.bf16.mxu0 0
  %387 = vmatpush1.bf16.msra.mxu0 %v301
  %388 = vmatprep.subr.bf16.mxu0 0
  %389 = vmatpush1.bf16.msra.mxu0 %v302
  %390 = vmatprep.subr.bf16.mxu0 0
  %391 = vmatpush1.bf16.msra.mxu0 %v303
  %392 = vmatprep.subr.bf16.mxu0 0
  %393 = vmatpush1.bf16.msra.mxu0 %v304
  %394 = vmatprep.subr.bf16.mxu0 0
  %395 = vmatpush1.bf16.msra.mxu0 %v305
  %396 = vmatprep.subr.bf16.mxu0 0
  %397 = vmatpush1.bf16.msra.mxu0 %v306
  %398 = vmatprep.subr.bf16.mxu0 0
  %399 = vmatpush1.bf16.msra.mxu0 %v307
  %400 = vmatprep.subr.bf16.mxu0 0
  %401 = vmatpush1.bf16.msra.mxu0 %v308
  %402 = vmatprep.subr.bf16.mxu0 0
  %403 = vmatpush1.bf16.msra.mxu0 %v309
  %404 = vmatprep.subr.bf16.mxu0 0
  %405 = vmatpush1.bf16.msra.mxu0 %v310
  %406 = vmatprep.subr.bf16.mxu0 0
  %407 = vmatpush1.bf16.msra.mxu0 %v311
  %408 = vmatprep.mubr.bf16.mxu0 %v127
  %409 = vmatmul.mubr.bf16.gmra.mrb[0].mxu0 %v126
  %v410 = vpop.f32.mrb[0].mxu0
  %v411 = vadd.f32 0.0, %v410
  %v412 = vpop.f32.mrb[0].mxu0
  %v413 = vpop.f32.mrb[0].mxu0
  %v414 = vadd.f32 0.0, %v413
  %v415 = vpop.f32.mrb[0].mxu0
  %416 = vdwg.mxu0
  %417 = vmatprep.subr.bf16.mxu0 0
  %418 = vmatpush1.bf16.msra.mxu0 %v312
  %419 = vmatprep.subr.bf16.mxu0 0
  %420 = vmatpush1.bf16.msra.mxu0 %v313
  %421 = vmatprep.subr.bf16.mxu0 0
  %422 = vmatpush1.bf16.msra.mxu0 %v314
  %423 = vmatprep.subr.bf16.mxu0 0
  %424 = vmatpush1.bf16.msra.mxu0 %v315
  %425 = vmatprep.subr.bf16.mxu0 0
  %426 = vmatpush1.bf16.msra.mxu0 %v316
  %427 = vmatprep.subr.bf16.mxu0 0
  %428 = vmatpush1.bf16.msra.mxu0 %v317
  %429 = vmatprep.subr.bf16.mxu0 0
  %430 = vmatpush1.bf16.msra.mxu0 %v318
  %431 = vmatprep.subr.bf16.mxu0 0
  %432 = vmatpush1.bf16.msra.mxu0 %v319
  %433 = vmatprep.subr.bf16.mxu0 0
  %434 = vmatpush1.bf16.msra.mxu0 %v320
  %435 = vmatprep.subr.bf16.mxu0 0
  %436 = vmatpush1.bf16.msra.mxu0 %v321
  %437 = vmatprep.subr.bf16.mxu0 0
  %438 = vmatpush1.bf16.msra.mxu0 %v322
  %439 = vmatprep.subr.bf16.mxu0 0
  %440 = vmatpush1.bf16.msra.mxu0 %v323
  %441 = vmatprep.subr.bf16.mxu0 0
  %442 = vmatpush1.bf16.msra.mxu0 %v324
  %443 = vmatprep.subr.bf16.mxu0 0
  %444 = vmatpush1.bf16.msra.mxu0 %v325
  %445 = vmatprep.subr.bf16.mxu0 0
  %446 = vmatpush1.bf16.msra.mxu0 %v326
  %447 = vmatprep.subr.bf16.mxu0 0
  %448 = vmatpush1.bf16.msra.mxu0 %v327
  %449 = vmatprep.mubr.bf16.mxu0 %v129
  %450 = vmatmul.mubr.bf16.gmra.mrb[0].mxu0 %v128
  %v451 = vpop.f32.mrb[0].mxu0
  %v452 = vadd.f32 %v411, %v451
  %v453 = vpop.f32.mrb[0].mxu0
  %v454 = vpop.f32.mrb[0].mxu0
  %v455 = vadd.f32 %v414, %v454
  %v456 = vpop.f32.mrb[0].mxu0
  %457 = vdwg.mxu0
  %458 = vmatprep.subr.bf16.mxu0 0
  %459 = vmatpush1.bf16.msra.mxu0 %v328
  %460 = vmatprep.subr.bf16.mxu0 0
  %461 = vmatpush1.bf16.msra.mxu0 %v329
  %462 = vmatprep.subr.bf16.mxu0 0
  %463 = vmatpush1.bf16.msra.mxu0 %v330
  %464 = vmatprep.subr.bf16.mxu0 0
  %465 = vmatpush1.bf16.msra.mxu0 %v331
  %466 = vmatprep.subr.bf16.mxu0 0
  %467 = vmatpush1.bf16.msra.mxu0 %v332
  %468 = vmatprep.subr.bf16.mxu0 0
  %469 = vmatpush1.bf16.msra.mxu0 %v333
  %470 = vmatprep.subr.bf16.mxu0 0
  %471 = vmatpush1.bf16.msra.mxu0 %v334
  %472 = vmatprep.subr.bf16.mxu0 0
  %473 = vmatpush1.bf16.msra.mxu0 %v335
  %474 = vmatprep.subr.bf16.mxu0 0
  %475 = vmatpush1.bf16.msra.mxu0 0
  %476 = vmatprep.subr.bf16.mxu0 0
  %477 = vmatpush1.bf16.msra.mxu0 0
  %478 = vmatprep.subr.bf16.mxu0 0
  %479 = vmatpush1.bf16.msra.mxu0 0
  %480 = vmatprep.subr.bf16.mxu0 0
  %481 = vmatpush1.bf16.msra.mxu0 0
  %482 = vmatprep.subr.bf16.mxu0 0
  %483 = vmatpush1.bf16.msra.mxu0 0
  %484 = vmatprep.subr.bf16.mxu0 0
  %485 = vmatpush1.bf16.msra.mxu0 0
  %486 = vmatprep.subr.bf16.mxu0 0
  %487 = vmatpush1.bf16.msra.mxu0 0
  %488 = vmatprep.subr.bf16.mxu0 0
  %489 = vmatpush1.bf16.msra.mxu0 0
  %490 = vmatprep.mubr.bf16.mxu0 0
  %491 = vmatmul.mubr.bf16.gmra.mrb[0].mxu0 %v130
  %v492 = vpop.f32.mrb[0].mxu0
  %v493 = vadd.f32 %v452, %v492
  %v494 = vpop.f32.mrb[0].mxu0
  %v495 = vpop.f32.mrb[0].mxu0
  %v496 = vadd.f32 %v455, %v495
  %v497 = vpop.f32.mrb[0].mxu0
  %498 = vdwg.mxu0
  %v499 = vld [vmem:[%s1] sm:$0xff]
  %v500 = vld [vmem:[%s1 + $0x8] sm:$0xff]
  %v501 = vld [vmem:[%s1 + $0x10] sm:$0xf]
  %v502 = vld [vmem:[%s1 + $0x14] sm:$0xff]
  %v503 = vld [vmem:[%s1 + $0x1c] sm:$0xff]
  %v504 = vld [vmem:[%s1 + $0x24] sm:$0xf]
  %v511 = vunpack.c.l.b16 %v499
  %v512 = vunpack.c.h.b16 %v499
  %v513 = vunpack.c.l.b16 %v500
  %v514 = vunpack.c.h.b16 %v500
  %v515 = vunpack.c.l.b16 %v501
  %v516 = vunpack.c.l.b16 %v502
  %v517 = vunpack.c.h.b16 %v502
  %v518 = vunpack.c.l.b16 %v503
  %v519 = vunpack.c.h.b16 %v503
  %v520 = vunpack.c.l.b16 %v504
  %v521 = vpack.c.b16 %v516, %v511
  %v522 = vpack.c.b16 %v517, %v512
  %v523 = vpack.c.b16 %v518, %v513
  %v524 = vpack.c.b16 %v519, %v514
  %v525 = vpack.c.b16 %v520, %v515
  %531 = vmatprep.subr.bf16.mxu0 0
  %532 = vmatpush1.bf16.msra.mxu0 %v296
  %533 = vmatprep.subr.bf16.mxu0 0
  %534 = vmatpush1.bf16.msra.mxu0 %v297
  %535 = vmatprep.subr.bf16.mxu0 0
  %536 = vmatpush1.bf16.msra.mxu0 %v298
  %537 = vmatprep.subr.bf16.mxu0 0
  %538 = vmatpush1.bf16.msra.mxu0 %v299
  %539 = vmatprep.subr.bf16.mxu0 0
  %540 = vmatpush1.bf16.msra.mxu0 %v300
  %541 = vmatprep.subr.bf16.mxu0 0
  %542 = vmatpush1.bf16.msra.mxu0 %v301
  %543 = vmatprep.subr.bf16.mxu0 0
  %544 = vmatpush1.bf16.msra.mxu0 %v302
  %545 = vmatprep.subr.bf16.mxu0 0
  %546 = vmatpush1.bf16.msra.mxu0 %v303
  %547 = vmatprep.subr.bf16.mxu0 0
  %548 = vmatpush1.bf16.msra.mxu0 %v304
  %549 = vmatprep.subr.bf16.mxu0 0
  %550 = vmatpush1.bf16.msra.mxu0 %v305
  %551 = vmatprep.subr.bf16.mxu0 0
  %552 = vmatpush1.bf16.msra.mxu0 %v306
  %553 = vmatprep.subr.bf16.mxu0 0
  %554 = vmatpush1.bf16.msra.mxu0 %v307
  %555 = vmatprep.subr.bf16.mxu0 0
  %556 = vmatpush1.bf16.msra.mxu0 %v308
  %557 = vmatprep.subr.bf16.mxu0 0
  %558 = vmatpush1.bf16.msra.mxu0 %v309
  %559 = vmatprep.subr.bf16.mxu0 0
  %560 = vmatpush1.bf16.msra.mxu0 %v310
  %561 = vmatprep.subr.bf16.mxu0 0
  %562 = vmatpush1.bf16.msra.mxu0 %v311
  %563 = vmatprep.mubr.bf16.mxu0 %v522
  %564 = vmatmul.mubr.bf16.gmra.mrb[0].mxu0 %v521
  %v565 = vpop.f32.mrb[0].mxu0
  %v566 = vadd.f32 0.0, %v565
  %v567 = vpop.f32.mrb[0].mxu0
  %v568 = vpop.f32.mrb[0].mxu0
  %v569 = vadd.f32 0.0, %v568
  %v570 = vpop.f32.mrb[0].mxu0
  %571 = vdwg.mxu0
  %572 = vmatprep.subr.bf16.mxu0 0
  %573 = vmatpush1.bf16.msra.mxu0 %v312
  %574 = vmatprep.subr.bf16.mxu0 0
  %575 = vmatpush1.bf16.msra.mxu0 %v313
  %576 = vmatprep.subr.bf16.mxu0 0
  %577 = vmatpush1.bf16.msra.mxu0 %v314
  %578 = vmatprep.subr.bf16.mxu0 0
  %579 = vmatpush1.bf16.msra.mxu0 %v315
  %580 = vmatprep.subr.bf16.mxu0 0
  %581 = vmatpush1.bf16.msra.mxu0 %v316
  %582 = vmatprep.subr.bf16.mxu0 0
  %583 = vmatpush1.bf16.msra.mxu0 %v317
  %584 = vmatprep.subr.bf16.mxu0 0
  %585 = vmatpush1.bf16.msra.mxu0 %v318
  %586 = vmatprep.subr.bf16.mxu0 0
  %587 = vmatpush1.bf16.msra.mxu0 %v319
  %588 = vmatprep.subr.bf16.mxu0 0
  %589 = vmatpush1.bf16.msra.mxu0 %v320
  %590 = vmatprep.subr.bf16.mxu0 0
  %591 = vmatpush1.bf16.msra.mxu0 %v321
  %592 = vmatprep.subr.bf16.mxu0 0
  %593 = vmatpush1.bf16.msra.mxu0 %v322
  %594 = vmatprep.subr.bf16.mxu0 0
  %595 = vmatpush1.bf16.msra.mxu0 %v323
  %596 = vmatprep.subr.bf16.mxu0 0
  %597 = vmatpush1.bf16.msra.mxu0 %v324
  %598 = vmatprep.subr.bf16.mxu0 0
  %599 = vmatpush1.bf16.msra.mxu0 %v325
  %600 = vmatprep.subr.bf16.mxu0 0
  %601 = vmatpush1.bf16.msra.mxu0 %v326
  %602 = vmatprep.subr.bf16.mxu0 0
  %603 = vmatpush1.bf16.msra.mxu0 %v327
  %604 = vmatprep.mubr.bf16.mxu0 %v524
  %605 = vmatmul.mubr.bf16.gmra.mrb[0].mxu0 %v523
  %v606 = vpop.f32.mrb[0].mxu0
  %v607 = vadd.f32 %v566, %v606
  %v608 = vpop.f32.mrb[0].mxu0
  %v609 = vpop.f32.mrb[0].mxu0
  %v610 = vadd.f32 %v569, %v609
  %v611 = vpop.f32.mrb[0].mxu0
  %612 = vdwg.mxu0
  %613 = vmatprep.subr.bf16.mxu0 0
  %614 = vmatpush1.bf16.msra.mxu0 %v328
  %615 = vmatprep.subr.bf16.mxu0 0
  %616 = vmatpush1.bf16.msra.mxu0 %v329
  %617 = vmatprep.subr.bf16.mxu0 0
  %618 = vmatpush1.bf16.msra.mxu0 %v330
  %619 = vmatprep.subr.bf16.mxu0 0
  %620 = vmatpush1.bf16.msra.mxu0 %v331
  %621 = vmatprep.subr.bf16.mxu0 0
  %622 = vmatpush1.bf16.msra.mxu0 %v332
  %623 = vmatprep.subr.bf16.mxu0 0
  %624 = vmatpush1.bf16.msra.mxu0 %v333
  %625 = vmatprep.subr.bf16.mxu0 0
  %626 = vmatpush1.bf16.msra.mxu0 %v334
  %627 = vmatprep.subr.bf16.mxu0 0
  %628 = vmatpush1.bf16.msra.mxu0 %v335
  %629 = vmatprep.subr.bf16.mxu0 0
  %630 = vmatpush1.bf16.msra.mxu0 0
  %631 = vmatprep.subr.bf16.mxu0 0
  %632 = vmatpush1.bf16.msra.mxu0 0
  %633 = vmatprep.subr.bf16.mxu0 0
  %634 = vmatpush1.bf16.msra.mxu0 0
  %635 = vmatprep.subr.bf16.mxu0 0
  %636 = vmatpush1.bf16.msra.mxu0 0
  %637 = vmatprep.subr.bf16.mxu0 0
  %638 = vmatpush1.bf16.msra.mxu0 0
  %639 = vmatprep.subr.bf16.mxu0 0
  %640 = vmatpush1.bf16.msra.mxu0 0
  %641 = vmatprep.subr.bf16.mxu0 0
  %642 = vmatpush1.bf16.msra.mxu0 0
  %643 = vmatprep.subr.bf16.mxu0 0
  %644 = vmatpush1.bf16.msra.mxu0 0
  %645 = vmatprep.mubr.bf16.mxu0 0
  %646 = vmatmul.mubr.bf16.gmra.mrb[0].mxu0 %v525
  %v647 = vpop.f32.mrb[0].mxu0
  %v648 = vadd.f32 %v607, %v647
  %v649 = vpop.f32.mrb[0].mxu0
  %v650 = vpop.f32.mrb[0].mxu0
  %v651 = vadd.f32 %v610, %v650
  %v652 = vpop.f32.mrb[0].mxu0
  %653 = vdwg.mxu0
  %v654 = vmax.f32 %v493, %v648
  %v655 = vmax.f32 %v496, %v651
  %v656 = vld [vmem:[%s2] sm:$0xff]
  %v657 = vld [vmem:[%s2 + $0x8] sm:$0xff]
  %v658 = vld [vmem:[%s2 + $0x10] sm:$0xf]
  %v659 = vld [vmem:[%s2 + $0x14] sm:$0xff]
  %v660 = vld [vmem:[%s2 + $0x1c] sm:$0xff]
  %v661 = vld [vmem:[%s2 + $0x24] sm:$0xf]
  %v668 = vunpack.c.l.b16 %v656
  %v669 = vunpack.c.h.b16 %v656
  %v670 = vunpack.c.l.b16 %v657
  %v671 = vunpack.c.h.b16 %v657
  %v672 = vunpack.c.l.b16 %v658
  %v673 = vunpack.c.l.b16 %v659
  %v674 = vunpack.c.h.b16 %v659
  %v675 = vunpack.c.l.b16 %v660
  %v676 = vunpack.c.h.b16 %v660
  %v677 = vunpack.c.l.b16 %v661
  %v678 = vpack.c.b16 %v673, %v668
  %v679 = vpack.c.b16 %v674, %v669
  %v680 = vpack.c.b16 %v675, %v670
  %v681 = vpack.c.b16 %v676, %v671
  %v682 = vpack.c.b16 %v677, %v672
  %688 = vmatprep.subr.bf16.mxu0 0
  %689 = vmatpush1.bf16.msra.mxu0 %v296
  %690 = vmatprep.subr.bf16.mxu0 0
  %691 = vmatpush1.bf16.msra.mxu0 %v297
  %692 = vmatprep.subr.bf16.mxu0 0
  %693 = vmatpush1.bf16.msra.mxu0 %v298
  %694 = vmatprep.subr.bf16.mxu0 0
  %695 = vmatpush1.bf16.msra.mxu0 %v299
  %696 = vmatprep.subr.bf16.mxu0 0
  %697 = vmatpush1.bf16.msra.mxu0 %v300
  %698 = vmatprep.subr.bf16.mxu0 0
  %699 = vmatpush1.bf16.msra.mxu0 %v301
  %700 = vmatprep.subr.bf16.mxu0 0
  %701 = vmatpush1.bf16.msra.mxu0 %v302
  %702 = vmatprep.subr.bf16.mxu0 0
  %703 = vmatpush1.bf16.msra.mxu0 %v303
  %704 = vmatprep.subr.bf16.mxu0 0
  %705 = vmatpush1.bf16.msra.mxu0 %v304
  %706 = vmatprep.subr.bf16.mxu0 0
  %707 = vmatpush1.bf16.msra.mxu0 %v305
  %708 = vmatprep.subr.bf16.mxu0 0
  %709 = vmatpush1.bf16.msra.mxu0 %v306
  %710 = vmatprep.subr.bf16.mxu0 0
  %711 = vmatpush1.bf16.msra.mxu0 %v307
  %712 = vmatprep.subr.bf16.mxu0 0
  %713 = vmatpush1.bf16.msra.mxu0 %v308
  %714 = vmatprep.subr.bf16.mxu0 0
  %715 = vmatpush1.bf16.msra.mxu0 %v309
  %716 = vmatprep.subr.bf16.mxu0 0
  %717 = vmatpush1.bf16.msra.mxu0 %v310
  %718 = vmatprep.subr.bf16.mxu0 0
  %719 = vmatpush1.bf16.msra.mxu0 %v311
  %720 = vmatprep.mubr.bf16.mxu0 %v679
  %721 = vmatmul.mubr.bf16.gmra.mrb[0].mxu0 %v678
  %v722 = vpop.f32.mrb[0].mxu0
  %v723 = vadd.f32 0.0, %v722
  %v724 = vpop.f32.mrb[0].mxu0
  %v725 = vpop.f32.mrb[0].mxu0
  %v726 = vadd.f32 0.0, %v725
  %v727 = vpop.f32.mrb[0].mxu0
  %728 = vdwg.mxu0
  %729 = vmatprep.subr.bf16.mxu0 0
  %730 = vmatpush1.bf16.msra.mxu0 %v312
  %731 = vmatprep.subr.bf16.mxu0 0
  %732 = vmatpush1.bf16.msra.mxu0 %v313
  %733 = vmatprep.subr.bf16.mxu0 0
  %734 = vmatpush1.bf16.msra.mxu0 %v314
  %735 = vmatprep.subr.bf16.mxu0 0
  %736 = vmatpush1.bf16.msra.mxu0 %v315
  %737 = vmatprep.subr.bf16.mxu0 0
  %738 = vmatpush1.bf16.msra.mxu0 %v316
  %739 = vmatprep.subr.bf16.mxu0 0
  %740 = vmatpush1.bf16.msra.mxu0 %v317
  %741 = vmatprep.subr.bf16.mxu0 0
  %742 = vmatpush1.bf16.msra.mxu0 %v318
  %743 = vmatprep.subr.bf16.mxu0 0
  %744 = vmatpush1.bf16.msra.mxu0 %v319
  %745 = vmatprep.subr.bf16.mxu0 0
  %746 = vmatpush1.bf16.msra.mxu0 %v320
  %747 = vmatprep.subr.bf16.mxu0 0
  %748 = vmatpush1.bf16.msra.mxu0 %v321
  %749 = vmatprep.subr.bf16.mxu0 0
  %750 = vmatpush1.bf16.msra.mxu0 %v322
  %751 = vmatprep.subr.bf16.mxu0 0
  %752 = vmatpush1.bf16.msra.mxu0 %v323
  %753 = vmatprep.subr.bf16.mxu0 0
  %754 = vmatpush1.bf16.msra.mxu0 %v324
  %755 = vmatprep.subr.bf16.mxu0 0
  %756 = vmatpush1.bf16.msra.mxu0 %v325
  %757 = vmatprep.subr.bf16.mxu0 0
  %758 = vmatpush1.bf16.msra.mxu0 %v326
  %759 = vmatprep.subr.bf16.mxu0 0
  %760 = vmatpush1.bf16.msra.mxu0 %v327
  %761 = vmatprep.mubr.bf16.mxu0 %v681
  %762 = vmatmul.mubr.bf16.gmra.mrb[0].mxu0 %v680
  %v763 = vpop.f32.mrb[0].mxu0
  %v764 = vadd.f32 %v723, %v763
  %v765 = vpop.f32.mrb[0].mxu0
  %v766 = vpop.f32.mrb[0].mxu0
  %v767 = vadd.f32 %v726, %v766
  %v768 = vpop.f32.mrb[0].mxu0
  %769 = vdwg.mxu0
  %770 = vmatprep.subr.bf16.mxu0 0
  %771 = vmatpush1.bf16.msra.mxu0 %v328
  %772 = vmatprep.subr.bf16.mxu0 0
  %773 = vmatpush1.bf16.msra.mxu0 %v329
  %774 = vmatprep.subr.bf16.mxu0 0
  %775 = vmatpush1.bf16.msra.mxu0 %v330
  %776 = vmatprep.subr.bf16.mxu0 0
  %777 = vmatpush1.bf16.msra.mxu0 %v331
  %778 = vmatprep.subr.bf16.mxu0 0
  %779 = vmatpush1.bf16.msra.mxu0 %v332
  %780 = vmatprep.subr.bf16.mxu0 0
  %781 = vmatpush1.bf16.msra.mxu0 %v333
  %782 = vmatprep.subr.bf16.mxu0 0
  %783 = vmatpush1.bf16.msra.mxu0 %v334
  %784 = vmatprep.subr.bf16.mxu0 0
  %785 = vmatpush1.bf16.msra.mxu0 %v335
  %786 = vmatprep.subr.bf16.mxu0 0
  %787 = vmatpush1.bf16.msra.mxu0 0
  %788 = vmatprep.subr.bf16.mxu0 0
  %789 = vmatpush1.bf16.msra.mxu0 0
  %790 = vmatprep.subr.bf16.mxu0 0
  %791 = vmatpush1.bf16.msra.mxu0 0
  %792 = vmatprep.subr.bf16.mxu0 0
  %793 = vmatpush1.bf16.msra.mxu0 0
  %794 = vmatprep.subr.bf16.mxu0 0
  %795 = vmatpush1.bf16.msra.mxu0 0
  %796 = vmatprep.subr.bf16.mxu0 0
  %797 = vmatpush1.bf16.msra.mxu0 0
  %798 = vmatprep.subr.bf16.mxu0 0
  %799 = vmatpush1.bf16.msra.mxu0 0
  %800 = vmatprep.subr.bf16.mxu0 0
  %801 = vmatpush1.bf16.msra.mxu0 0
  %802 = vmatprep.mubr.bf16.mxu0 0
  %803 = vmatmul.mubr.bf16.gmra.mrb[0].mxu0 %v682
  %v804 = vpop.f32.mrb[0].mxu0
  %v805 = vadd.f32 %v764, %v804
  %v806 = vpop.f32.mrb[0].mxu0
  %v807 = vpop.f32.mrb[0].mxu0
  %v808 = vadd.f32 %v767, %v807
  %v809 = vpop.f32.mrb[0].mxu0
  %810 = vdwg.mxu0
  %v811 = vmax.f32 %v654, %v805
  %v812 = vmax.f32 %v655, %v808
  %v813 = vld [vmem:[%s3] sm:$0xff]
  %v814 = vld [vmem:[%s3 + $0x8] sm:$0xff]
  %v815 = vld [vmem:[%s3 + $0x10] sm:$0xf]
  %v816 = vld [vmem:[%s3 + $0x14] sm:$0xff]
  %v817 = vld [vmem:[%s3 + $0x1c] sm:$0xff]
  %v818 = vld [vmem:[%s3 + $0x24] sm:$0xf]
  %v825 = vunpack.c.l.b16 %v813
  %v826 = vunpack.c.h.b16 %v813
  %v827 = vunpack.c.l.b16 %v814
  %v828 = vunpack.c.h.b16 %v814
  %v829 = vunpack.c.l.b16 %v815
  %v830 = vunpack.c.l.b16 %v816
  %v831 = vunpack.c.h.b16 %v816
  %v832 = vunpack.c.l.b16 %v817
  %v833 = vunpack.c.h.b16 %v817
  %v834 = vunpack.c.l.b16 %v818
  %v835 = vpack.c.b16 %v830, %v825
  %v836 = vpack.c.b16 %v831, %v826
  %v837 = vpack.c.b16 %v832, %v827
  %v838 = vpack.c.b16 %v833, %v828
  %v839 = vpack.c.b16 %v834, %v829
  %845 = vmatprep.subr.bf16.mxu0 0
  %846 = vmatpush1.bf16.msra.mxu0 %v296
  %847 = vmatprep.subr.bf16.mxu0 0
  %848 = vmatpush1.bf16.msra.mxu0 %v297
  %849 = vmatprep.subr.bf16.mxu0 0
  %850 = vmatpush1.bf16.msra.mxu0 %v298
  %851 = vmatprep.subr.bf16.mxu0 0
  %852 = vmatpush1.bf16.msra.mxu0 %v299
  %853 = vmatprep.subr.bf16.mxu0 0
  %854 = vmatpush1.bf16.msra.mxu0 %v300
  %855 = vmatprep.subr.bf16.mxu0 0
  %856 = vmatpush1.bf16.msra.mxu0 %v301
  %857 = vmatprep.subr.bf16.mxu0 0
  %858 = vmatpush1.bf16.msra.mxu0 %v302
  %859 = vmatprep.subr.bf16.mxu0 0
  %860 = vmatpush1.bf16.msra.mxu0 %v303
  %861 = vmatprep.subr.bf16.mxu0 0
  %862 = vmatpush1.bf16.msra.mxu0 %v304
  %863 = vmatprep.subr.bf16.mxu0 0
  %864 = vmatpush1.bf16.msra.mxu0 %v305
  %865 = vmatprep.subr.bf16.mxu0 0
  %866 = vmatpush1.bf16.msra.mxu0 %v306
  %867 = vmatprep.subr.bf16.mxu0 0
  %868 = vmatpush1.bf16.msra.mxu0 %v307
  %869 = vmatprep.subr.bf16.mxu0 0
  %870 = vmatpush1.bf16.msra.mxu0 %v308
  %871 = vmatprep.subr.bf16.mxu0 0
  %872 = vmatpush1.bf16.msra.mxu0 %v309
  %873 = vmatprep.subr.bf16.mxu0 0
  %874 = vmatpush1.bf16.msra.mxu0 %v310
  %875 = vmatprep.subr.bf16.mxu0 0
  %876 = vmatpush1.bf16.msra.mxu0 %v311
  %877 = vmatprep.mubr.bf16.mxu0 %v836
  %878 = vmatmul.mubr.bf16.gmra.mrb[0].mxu0 %v835
  %v879 = vpop.f32.mrb[0].mxu0
  %v880 = vadd.f32 0.0, %v879
  %v881 = vpop.f32.mrb[0].mxu0
  %v882 = vpop.f32.mrb[0].mxu0
  %v883 = vadd.f32 0.0, %v882
  %v884 = vpop.f32.mrb[0].mxu0
  %885 = vdwg.mxu0
  %886 = vmatprep.subr.bf16.mxu0 0
  %887 = vmatpush1.bf16.msra.mxu0 %v312
  %888 = vmatprep.subr.bf16.mxu0 0
  %889 = vmatpush1.bf16.msra.mxu0 %v313
  %890 = vmatprep.subr.bf16.mxu0 0
  %891 = vmatpush1.bf16.msra.mxu0 %v314
  %892 = vmatprep.subr.bf16.mxu0 0
  %893 = vmatpush1.bf16.msra.mxu0 %v315
  %894 = vmatprep.subr.bf16.mxu0 0
  %895 = vmatpush1.bf16.msra.mxu0 %v316
  %896 = vmatprep.subr.bf16.mxu0 0
  %897 = vmatpush1.bf16.msra.mxu0 %v317
  %898 = vmatprep.subr.bf16.mxu0 0
  %899 = vmatpush1.bf16.msra.mxu0 %v318
  %900 = vmatprep.subr.bf16.mxu0 0
  %901 = vmatpush1.bf16.msra.mxu0 %v319
  %902 = vmatprep.subr.bf16.mxu0 0
  %903 = vmatpush1.bf16.msra.mxu0 %v320
  %904 = vmatprep.subr.bf16.mxu0 0
  %905 = vmatpush1.bf16.msra.mxu0 %v321
  %906 = vmatprep.subr.bf16.mxu0 0
  %907 = vmatpush1.bf16.msra.mxu0 %v322
  %908 = vmatprep.subr.bf16.mxu0 0
  %909 = vmatpush1.bf16.msra.mxu0 %v323
  %910 = vmatprep.subr.bf16.mxu0 0
  %911 = vmatpush1.bf16.msra.mxu0 %v324
  %912 = vmatprep.subr.bf16.mxu0 0
  %913 = vmatpush1.bf16.msra.mxu0 %v325
  %914 = vmatprep.subr.bf16.mxu0 0
  %915 = vmatpush1.bf16.msra.mxu0 %v326
  %916 = vmatprep.subr.bf16.mxu0 0
  %917 = vmatpush1.bf16.msra.mxu0 %v327
  %918 = vmatprep.mubr.bf16.mxu0 %v838
  %919 = vmatmul.mubr.bf16.gmra.mrb[0].mxu0 %v837
  %v920 = vpop.f32.mrb[0].mxu0
  %v921 = vadd.f32 %v880, %v920
  %v922 = vpop.f32.mrb[0].mxu0
  %v923 = vpop.f32.mrb[0].mxu0
  %v924 = vadd.f32 %v883, %v923
  %v925 = vpop.f32.mrb[0].mxu0
  %926 = vdwg.mxu0
  %927 = vmatprep.subr.bf16.mxu0 0
  %928 = vmatpush1.bf16.msra.mxu0 %v328
  %929 = vmatprep.subr.bf16.mxu0 0
  %930 = vmatpush1.bf16.msra.mxu0 %v329
  %931 = vmatprep.subr.bf16.mxu0 0
  %932 = vmatpush1.bf16.msra.mxu0 %v330
  %933 = vmatprep.subr.bf16.mxu0 0
  %934 = vmatpush1.bf16.msra.mxu0 %v331
  %935 = vmatprep.subr.bf16.mxu0 0
  %936 = vmatpush1.bf16.msra.mxu0 %v332
  %937 = vmatprep.subr.bf16.mxu0 0
  %938 = vmatpush1.bf16.msra.mxu0 %v333
  %939 = vmatprep.subr.bf16.mxu0 0
  %940 = vmatpush1.bf16.msra.mxu0 %v334
  %941 = vmatprep.subr.bf16.mxu0 0
  %942 = vmatpush1.bf16.msra.mxu0 %v335
  %943 = vmatprep.subr.bf16.mxu0 0
  %944 = vmatpush1.bf16.msra.mxu0 0
  %945 = vmatprep.subr.bf16.mxu0 0
  %946 = vmatpush1.bf16.msra.mxu0 0
  %947 = vmatprep.subr.bf16.mxu0 0
  %948 = vmatpush1.bf16.msra.mxu0 0
  %949 = vmatprep.subr.bf16.mxu0 0
  %950 = vmatpush1.bf16.msra.mxu0 0
  %951 = vmatprep.subr.bf16.mxu0 0
  %952 = vmatpush1.bf16.msra.mxu0 0
  %953 = vmatprep.subr.bf16.mxu0 0
  %954 = vmatpush1.bf16.msra.mxu0 0
  %955 = vmatprep.subr.bf16.mxu0 0
  %956 = vmatpush1.bf16.msra.mxu0 0
  %957 = vmatprep.subr.bf16.mxu0 0
  %958 = vmatpush1.bf16.msra.mxu0 0
  %959 = vmatprep.mubr.bf16.mxu0 0
  %960 = vmatmul.mubr.bf16.gmra.mrb[0].mxu0 %v839
  %v961 = vpop.f32.mrb[0].mxu0
  %v962 = vadd.f32 %v921, %v961
  %v963 = vpop.f32.mrb[0].mxu0
  %v964 = vpop.f32.mrb[0].mxu0
  %v965 = vadd.f32 %v924, %v964
  %v966 = vpop.f32.mrb[0].mxu0
  %967 = vdwg.mxu0
  %v968 = vmax.f32 %v811, %v962
  %v969 = vmax.f32 %v812, %v965
  %v970 = vld [vmem:[%s5] sm:$0x1]
  %v972 = vlaneseq
  %v973 = vshrl.u32 %v972, 7
  %v974 = vsub.s32 0, %v973
  %v975 = vrot.slane %v970, %v974
  %v977 = vadd.f32 %v968, %v975
  %v978 = vadd.f32 %v969, %v975
  %v979 = vmax.f32 %v977, 0.0
  %v980 = vmax.f32 %v978, 0.0
  %v981 = vpack.c.bf16 %v980, %v979
  %v983 = vunpack.c.l.b16 %v981
  %v984 = vunpack.c.h.b16 %v981
  %v985 = vpack.c.b16 %v983, %v983
  %v986 = vpack.c.b16 %v984, %v984
  %989 = vst [vmem:[%s6] sm:$0xf] %v985
  %990 = vst [vmem:[%s6 + $0x4] sm:$0xf] %v986
  // Predicated region
  $region26: #{autoencoder_forward.9} parent=0 // pred_check
    _
  $region27: #{autoencoder_forward.9} parent=0 // pred_check_branch
    %992 = sbr.rel (0) target = $region29
  $region28: #{autoencoder_forward.9} parent=0 // pred_region
    _
  $region29: #{autoencoder_forward.9} parent=0 // pred_fallthru
    _
  // Predicated region
  $region30: #{autoencoder_forward.9} parent=0 // pred_check
    _
  $region31: #{autoencoder_forward.9} parent=0 // pred_check_branch
    %994 = sbr.rel (0) target = $region33
  $region32: #{autoencoder_forward.9} parent=0 // pred_region
    _
  $region33: #{autoencoder_forward.9} parent=0 // pred_fallthru
    _

// kernel: autoencoder_forward.10
$region0: #{autoencoder_forward.10}
  #allocation0 [shape = 'u32[]', space=smem, size = 0x4, offset = 0x4, fixed_abs, tag = 'smem constant byte address 0x4 - core index']
  #allocation1 [shape = 'u32[144,128]{1,0:T(1,128)}', space=vmem, size = 0x12000, scoped, tag = 'internal scratch']
  %s0 = inlined_call_operand.vmem [shape: bf16[32,512], index: 0, kind: input, shape index: {}]
  %s1 = inlined_call_operand.vmem [shape: bf16[512,512], index: 1, kind: input, shape index: {}]
  %s2 = inlined_call_operand.vmem [shape: f32[1,512], index: 2, kind: input, shape index: {}]
  %s3 = inlined_call_operand.vmem [shape: bf16[32,512], index: 3, kind: output, shape index: {}]
  %s4 = sld [smem:[#allocation0]]
  $region22: #{autoencoder_forward.10} parent=0
    _
  %s6 = ssub.s32 1, %s4
  %s7 = scalar_select 0, %s6, %s4
  // Predicated region
  $region2: #{autoencoder_forward.10} parent=0 // pred_check
    _
  $region3: #{autoencoder_forward.10} parent=0 // pred_check_branch
    %9 = sbr.rel (0) target = $region5
  $region4: #{autoencoder_forward.10} parent=0 // pred_region
    _
  $region5: #{autoencoder_forward.10} parent=0 // pred_fallthru
    _
  // Predicated region
  $region6: #{autoencoder_forward.10} parent=0 // pred_check
    _
  $region7: #{autoencoder_forward.10} parent=0 // pred_check_branch
    %11 = sbr.rel (0) target = $region9
  $region8: #{autoencoder_forward.10} parent=0 // pred_region
    _
  $region9: #{autoencoder_forward.10} parent=0 // pred_fallthru
    _
  // Predicated region
  $region10: #{autoencoder_forward.10} parent=0 // pred_check
    _
  $region11: #{autoencoder_forward.10} parent=0 // pred_check_branch
    %13 = sbr.rel (0) target = $region13
  $region12: #{autoencoder_forward.10} parent=0 // pred_region
    _
  $region13: #{autoencoder_forward.10} parent=0 // pred_fallthru
    _
  %v14 = vld [vmem:[%s1] sm:$0xff]
  %v15 = vld [vmem:[%s1 + $0x8] sm:$0xff]
  %v16 = vld [vmem:[%s1 + $0x10] sm:$0xff]
  %v17 = vld [vmem:[%s1 + $0x18] sm:$0xff]
  %v18 = vld [vmem:[%s1 + $0x20] sm:$0xff]
  %v19 = vld [vmem:[%s1 + $0x28] sm:$0xff]
  %v20 = vld [vmem:[%s1 + $0x30] sm:$0xff]
  %v21 = vld [vmem:[%s1 + $0x38] sm:$0xff]
  %v22 = vld [vmem:[%s1 + $0x40] sm:$0xff]
  %v23 = vld [vmem:[%s1 + $0x48] sm:$0xff]
  %v24 = vld [vmem:[%s1 + $0x50] sm:$0xff]
  %v25 = vld [vmem:[%s1 + $0x58] sm:$0xff]
  %v26 = vld [vmem:[%s1 + $0x60] sm:$0xff]
  %v27 = vld [vmem:[%s1 + $0x68] sm:$0xff]
  %v28 = vld [vmem:[%s1 + $0x70] sm:$0xff]
  %v29 = vld [vmem:[%s1 + $0x78] sm:$0xff]
  %v30 = vld [vmem:[%s1 + $0x80] sm:$0xff]
  %v31 = vld [vmem:[%s1 + $0x88] sm:$0xff]
  %v32 = vld [vmem:[%s1 + $0x90] sm:$0xff]
  %v33 = vld [vmem:[%s1 + $0x98] sm:$0xff]
  %v34 = vld [vmem:[%s1 + $0xa0] sm:$0xff]
  %v35 = vld [vmem:[%s1 + $0xa8] sm:$0xff]
  %v36 = vld [vmem:[%s1 + $0xb0] sm:$0xff]
  %v37 = vld [vmem:[%s1 + $0xb8] sm:$0xff]
  %v38 = vld [vmem:[%s1 + $0xc0] sm:$0xff]
  %v39 = vld [vmem:[%s1 + $0xc8] sm:$0xff]
  %v40 = vld [vmem:[%s1 + $0xd0] sm:$0xff]
  %v41 = vld [vmem:[%s1 + $0xd8] sm:$0xff]
  %v42 = vld [vmem:[%s1 + $0xe0] sm:$0xff]
  %v43 = vld [vmem:[%s1 + $0xe8] sm:$0xff]
  %v44 = vld [vmem:[%s1 + $0xf0] sm:$0xff]
  %v45 = vld [vmem:[%s1 + $0xf8] sm:$0xff]
  %v46 = vld [vmem:[%s1 + $0x100] sm:$0xff]
  %v47 = vld [vmem:[%s1 + $0x108] sm:$0xff]
  %v48 = vld [vmem:[%s1 + $0x110] sm:$0xff]
  %v49 = vld [vmem:[%s1 + $0x118] sm:$0xff]
  %v50 = vld [vmem:[%s1 + $0x120] sm:$0xff]
  %v51 = vld [vmem:[%s1 + $0x128] sm:$0xff]
  %v52 = vld [vmem:[%s1 + $0x130] sm:$0xff]
  %v53 = vld [vmem:[%s1 + $0x138] sm:$0xff]
  %v54 = vld [vmem:[%s1 + $0x140] sm:$0xff]
  %v55 = vld [vmem:[%s1 + $0x148] sm:$0xff]
  %v56 = vld [vmem:[%s1 + $0x150] sm:$0xff]
  %v57 = vld [vmem:[%s1 + $0x158] sm:$0xff]
  %v58 = vld [vmem:[%s1 + $0x160] sm:$0xff]
  %v59 = vld [vmem:[%s1 + $0x168] sm:$0xff]
  %v60 = vld [vmem:[%s1 + $0x170] sm:$0xff]
  %v61 = vld [vmem:[%s1 + $0x178] sm:$0xff]
  %v62 = vld [vmem:[%s1 + $0x180] sm:$0xff]
  %v63 = vld [vmem:[%s1 + $0x188] sm:$0xff]
  %v64 = vld [vmem:[%s1 + $0x190] sm:$0xff]
  %v65 = vld [vmem:[%s1 + $0x198] sm:$0xff]
  %v66 = vld [vmem:[%s1 + $0x1a0] sm:$0xff]
  %v67 = vld [vmem:[%s1 + $0x1a8] sm:$0xff]
  %v68 = vld [vmem:[%s1 + $0x1b0] sm:$0xff]
  %v69 = vld [vmem:[%s1 + $0x1b8] sm:$0xff]
  %v70 = vld [vmem:[%s1 + $0x1c0] sm:$0xff]
  %v71 = vld [vmem:[%s1 + $0x1c8] sm:$0xff]
  %v72 = vld [vmem:[%s1 + $0x1d0] sm:$0xff]
  %v73 = vld [vmem:[%s1 + $0x1d8] sm:$0xff]
  %v74 = vld [vmem:[%s1 + $0x1e0] sm:$0xff]
  %v75 = vld [vmem:[%s1 + $0x1e8] sm:$0xff]
  %v76 = vld [vmem:[%s1 + $0x1f0] sm:$0xff]
  %v77 = vld [vmem:[%s1 + $0x1f8] sm:$0xff]
  %v78 = vld [vmem:[%s1 + $0x200] sm:$0xff]
  %v79 = vld [vmem:[%s1 + $0x208] sm:$0xff]
  %v80 = vld [vmem:[%s1 + $0x210] sm:$0xff]
  %v81 = vld [vmem:[%s1 + $0x218] sm:$0xff]
  %v82 = vld [vmem:[%s1 + $0x220] sm:$0xff]
  %v83 = vld [vmem:[%s1 + $0x228] sm:$0xff]
  %v84 = vld [vmem:[%s1 + $0x230] sm:$0xff]
  %v85 = vld [vmem:[%s1 + $0x238] sm:$0xff]
  %v86 = vld [vmem:[%s1 + $0x240] sm:$0xff]
  %v87 = vld [vmem:[%s1 + $0x248] sm:$0xff]
  %v88 = vld [vmem:[%s1 + $0x250] sm:$0xff]
  %v89 = vld [vmem:[%s1 + $0x258] sm:$0xff]
  %v90 = vld [vmem:[%s1 + $0x260] sm:$0xff]
  %v91 = vld [vmem:[%s1 + $0x268] sm:$0xff]
  %v92 = vld [vmem:[%s1 + $0x270] sm:$0xff]
  %v93 = vld [vmem:[%s1 + $0x278] sm:$0xff]
  %v94 = vld [vmem:[%s1 + $0x280] sm:$0xff]
  %v95 = vld [vmem:[%s1 + $0x288] sm:$0xff]
  %v96 = vld [vmem:[%s1 + $0x290] sm:$0xff]
  %v97 = vld [vmem:[%s1 + $0x298] sm:$0xff]
  %v98 = vld [vmem:[%s1 + $0x2a0] sm:$0xff]
  %v99 = vld [vmem:[%s1 + $0x2a8] sm:$0xff]
  %v100 = vld [vmem:[%s1 + $0x2b0] sm:$0xff]
  %v101 = vld [vmem:[%s1 + $0x2b8] sm:$0xff]
  %v102 = vld [vmem:[%s1 + $0x2c0] sm:$0xff]
  %v103 = vld [vmem:[%s1 + $0x2c8] sm:$0xff]
  %v104 = vld [vmem:[%s1 + $0x2d0] sm:$0xff]
  %v105 = vld [vmem:[%s1 + $0x2d8] sm:$0xff]
  %v106 = vld [vmem:[%s1 + $0x2e0] sm:$0xff]
  %v107 = vld [vmem:[%s1 + $0x2e8] sm:$0xff]
  %v108 = vld [vmem:[%s1 + $0x2f0] sm:$0xff]
  %v109 = vld [vmem:[%s1 + $0x2f8] sm:$0xff]
  %v110 = vld [vmem:[%s1 + $0x300] sm:$0xff]
  %v111 = vld [vmem:[%s1 + $0x308] sm:$0xff]
  %v112 = vld [vmem:[%s1 + $0x310] sm:$0xff]
  %v113 = vld [vmem:[%s1 + $0x318] sm:$0xff]
  %v114 = vld [vmem:[%s1 + $0x320] sm:$0xff]
  %v115 = vld [vmem:[%s1 + $0x328] sm:$0xff]
  %v116 = vld [vmem:[%s1 + $0x330] sm:$0xff]
  %v117 = vld [vmem:[%s1 + $0x338] sm:$0xff]
  %v118 = vld [vmem:[%s1 + $0x340] sm:$0xff]
  %v119 = vld [vmem:[%s1 + $0x348] sm:$0xff]
  %v120 = vld [vmem:[%s1 + $0x350] sm:$0xff]
  %v121 = vld [vmem:[%s1 + $0x358] sm:$0xff]
  %v122 = vld [vmem:[%s1 + $0x360] sm:$0xff]
  %v123 = vld [vmem:[%s1 + $0x368] sm:$0xff]
  %v124 = vld [vmem:[%s1 + $0x370] sm:$0xff]
  %v125 = vld [vmem:[%s1 + $0x378] sm:$0xff]
  %v126 = vld [vmem:[%s1 + $0x380] sm:$0xff]
  %v127 = vld [vmem:[%s1 + $0x388] sm:$0xff]
  %v128 = vld [vmem:[%s1 + $0x390] sm:$0xff]
  %v129 = vld [vmem:[%s1 + $0x398] sm:$0xff]
  %v130 = vld [vmem:[%s1 + $0x3a0] sm:$0xff]
  %v131 = vld [vmem:[%s1 + $0x3a8] sm:$0xff]
  %v132 = vld [vmem:[%s1 + $0x3b0] sm:$0xff]
  %v133 = vld [vmem:[%s1 + $0x3b8] sm:$0xff]
  %v134 = vld [vmem:[%s1 + $0x3c0] sm:$0xff]
  %v135 = vld [vmem:[%s1 + $0x3c8] sm:$0xff]
  %v136 = vld [vmem:[%s1 + $0x3d0] sm:$0xff]
  %v137 = vld [vmem:[%s1 + $0x3d8] sm:$0xff]
  %v138 = vld [vmem:[%s1 + $0x3e0] sm:$0xff]
  %v139 = vld [vmem:[%s1 + $0x3e8] sm:$0xff]
  %v140 = vld [vmem:[%s1 + $0x3f0] sm:$0xff]
  %v141 = vld [vmem:[%s1 + $0x3f8] sm:$0xff]
  %v142 = vld [vmem:[%s0] sm:$0xff]
  %v143 = vld [vmem:[%s0 + $0x8] sm:$0xff]
  %v144 = vld [vmem:[%s0 + $0x10] sm:$0xff]
  %v145 = vld [vmem:[%s0 + $0x18] sm:$0xff]
  %v146 = vld [vmem:[%s0 + $0x20] sm:$0xff]
  %v147 = vld [vmem:[%s0 + $0x28] sm:$0xff]
  %v148 = vld [vmem:[%s0 + $0x30] sm:$0xff]
  %v149 = vld [vmem:[%s0 + $0x38] sm:$0xff]
  %v150 = vld [vmem:[%s2] sm:$0xf]
  %v152 = vlaneseq
  %v153 = vshrl.u32 %v152, 7
  %v154 = vsub.s32 0, %v153
  %v155 = vrot.slane %v150, %v154
  %v156 = vlaneseq
  %v157 = vshrl.u32 %v156, 7
  %v158 = vsub.s32 1, %v157
  %v159 = vrot.slane %v150, %v158
  %v160 = vlaneseq
  %v161 = vshrl.u32 %v160, 7
  %v162 = vsub.s32 2, %v161
  %v163 = vrot.slane %v150, %v162
  %v164 = vlaneseq
  %v165 = vshrl.u32 %v164, 7
  %v166 = vsub.s32 3, %v165
  %v167 = vrot.slane %v150, %v166
  %v180 = vunpack.c.l.b16 %v142
  %v181 = vunpack.c.h.b16 %v142
  %v182 = vunpack.c.l.b16 %v143
  %v183 = vunpack.c.h.b16 %v143
  %v184 = vunpack.c.l.b16 %v144
  %v185 = vunpack.c.h.b16 %v144
  %v186 = vunpack.c.l.b16 %v145
  %v187 = vunpack.c.h.b16 %v145
  %v188 = vunpack.c.l.b16 %v146
  %v189 = vunpack.c.h.b16 %v146
  %v190 = vunpack.c.l.b16 %v147
  %v191 = vunpack.c.h.b16 %v147
  %v192 = vunpack.c.l.b16 %v148
  %v193 = vunpack.c.h.b16 %v148
  %v194 = vunpack.c.l.b16 %v149
  %v195 = vunpack.c.h.b16 %v149
  %v196 = vpack.c.b16 %v184, %v180
  %v197 = vpack.c.b16 %v185, %v181
  %v198 = vpack.c.b16 %v186, %v182
  %v199 = vpack.c.b16 %v187, %v183
  %v200 = vpack.c.b16 %v192, %v188
  %v201 = vpack.c.b16 %v193, %v189
  %v202 = vpack.c.b16 %v194, %v190
  %v203 = vpack.c.b16 %v195, %v191
  %v340 = vunpack.c.l.b16 %v14
  %v341 = vunpack.c.h.b16 %v14
  %v342 = vunpack.c.l.b16 %v15
  %v343 = vunpack.c.h.b16 %v15
  %v344 = vunpack.c.l.b16 %v16
  %v345 = vunpack.c.h.b16 %v16
  %v346 = vunpack.c.l.b16 %v17
  %v347 = vunpack.c.h.b16 %v17
  %v348 = vunpack.c.l.b16 %v18
  %v349 = vunpack.c.h.b16 %v18
  %v350 = vunpack.c.l.b16 %v19
  %v351 = vunpack.c.h.b16 %v19
  %v352 = vunpack.c.l.b16 %v20
  %v353 = vunpack.c.h.b16 %v20
  %v354 = vunpack.c.l.b16 %v21
  %v355 = vunpack.c.h.b16 %v21
  %v356 = vunpack.c.l.b16 %v22
  %v357 = vunpack.c.h.b16 %v22
  %v358 = vunpack.c.l.b16 %v23
  %v359 = vunpack.c.h.b16 %v23
  %v360 = vunpack.c.l.b16 %v24
  %v361 = vunpack.c.h.b16 %v24
  %v362 = vunpack.c.l.b16 %v25
  %v363 = vunpack.c.h.b16 %v25
  %v364 = vunpack.c.l.b16 %v26
  %v365 = vunpack.c.h.b16 %v26
  %v366 = vunpack.c.l.b16 %v27
  %v367 = vunpack.c.h.b16 %v27
  %v368 = vunpack.c.l.b16 %v28
  %v369 = vunpack.c.h.b16 %v28
  %v370 = vunpack.c.l.b16 %v29
  %v371 = vunpack.c.h.b16 %v29
  %v372 = vunpack.c.l.b16 %v30
  %v373 = vunpack.c.h.b16 %v30
  %v374 = vunpack.c.l.b16 %v31
  %v375 = vunpack.c.h.b16 %v31
  %v376 = vunpack.c.l.b16 %v32
  %v377 = vunpack.c.h.b16 %v32
  %v378 = vunpack.c.l.b16 %v33
  %v379 = vunpack.c.h.b16 %v33
  %v380 = vunpack.c.l.b16 %v34
  %v381 = vunpack.c.h.b16 %v34
  %v382 = vunpack.c.l.b16 %v35
  %v383 = vunpack.c.h.b16 %v35
  %v384 = vunpack.c.l.b16 %v36
  %v385 = vunpack.c.h.b16 %v36
  %v386 = vunpack.c.l.b16 %v37
  %v387 = vunpack.c.h.b16 %v37
  %v388 = vunpack.c.l.b16 %v38
  %v389 = vunpack.c.h.b16 %v38
  %v390 = vunpack.c.l.b16 %v39
  %v391 = vunpack.c.h.b16 %v39
  %v392 = vunpack.c.l.b16 %v40
  %v393 = vunpack.c.h.b16 %v40
  %v394 = vunpack.c.l.b16 %v41
  %v395 = vunpack.c.h.b16 %v41
  %v396 = vunpack.c.l.b16 %v42
  %v397 = vunpack.c.h.b16 %v42
  %v398 = vunpack.c.l.b16 %v43
  %v399 = vunpack.c.h.b16 %v43
  %v400 = vunpack.c.l.b16 %v44
  %v401 = vunpack.c.h.b16 %v44
  %v402 = vunpack.c.l.b16 %v45
  %v403 = vunpack.c.h.b16 %v45
  %v404 = vunpack.c.l.b16 %v46
  %v405 = vunpack.c.h.b16 %v46
  %v406 = vunpack.c.l.b16 %v47
  %v407 = vunpack.c.h.b16 %v47
  %v408 = vunpack.c.l.b16 %v48
  %v409 = vunpack.c.h.b16 %v48
  %v410 = vunpack.c.l.b16 %v49
  %v411 = vunpack.c.h.b16 %v49
  %v412 = vunpack.c.l.b16 %v50
  %v413 = vunpack.c.h.b16 %v50
  %v414 = vunpack.c.l.b16 %v51
  %v415 = vunpack.c.h.b16 %v51
  %v416 = vunpack.c.l.b16 %v52
  %v417 = vunpack.c.h.b16 %v52
  %v418 = vunpack.c.l.b16 %v53
  %v419 = vunpack.c.h.b16 %v53
  %v420 = vunpack.c.l.b16 %v54
  %v421 = vunpack.c.h.b16 %v54
  %v422 = vunpack.c.l.b16 %v55
  %v423 = vunpack.c.h.b16 %v55
  %v424 = vunpack.c.l.b16 %v56
  %v425 = vunpack.c.h.b16 %v56
  %v426 = vunpack.c.l.b16 %v57
  %v427 = vunpack.c.h.b16 %v57
  %v428 = vunpack.c.l.b16 %v58
  %v429 = vunpack.c.h.b16 %v58
  %v430 = vunpack.c.l.b16 %v59
  %v431 = vunpack.c.h.b16 %v59
  %v432 = vunpack.c.l.b16 %v60
  %v433 = vunpack.c.h.b16 %v60
  %v434 = vunpack.c.l.b16 %v61
  %v435 = vunpack.c.h.b16 %v61
  %v436 = vunpack.c.l.b16 %v62
  %v437 = vunpack.c.h.b16 %v62
  %v438 = vunpack.c.l.b16 %v63
  %v439 = vunpack.c.h.b16 %v63
  %v440 = vunpack.c.l.b16 %v64
  %v441 = vunpack.c.h.b16 %v64
  %v442 = vunpack.c.l.b16 %v65
  %v443 = vunpack.c.h.b16 %v65
  %v444 = vunpack.c.l.b16 %v66
  %v445 = vunpack.c.h.b16 %v66
  %v446 = vunpack.c.l.b16 %v67
  %v447 = vunpack.c.h.b16 %v67
  %v448 = vunpack.c.l.b16 %v68
  %v449 = vunpack.c.h.b16 %v68
  %v450 = vunpack.c.l.b16 %v69
  %v451 = vunpack.c.h.b16 %v69
  %v452 = vunpack.c.l.b16 %v70
  %v453 = vunpack.c.h.b16 %v70
  %v454 = vunpack.c.l.b16 %v71
  %v455 = vunpack.c.h.b16 %v71
  %v456 = vunpack.c.l.b16 %v72
  %v457 = vunpack.c.h.b16 %v72
  %v458 = vunpack.c.l.b16 %v73
  %v459 = vunpack.c.h.b16 %v73
  %v460 = vunpack.c.l.b16 %v74
  %v461 = vunpack.c.h.b16 %v74
  %v462 = vunpack.c.l.b16 %v75
  %v463 = vunpack.c.h.b16 %v75
  %v464 = vunpack.c.l.b16 %v76
  %v465 = vunpack.c.h.b16 %v76
  %v466 = vunpack.c.l.b16 %v77
  %v467 = vunpack.c.h.b16 %v77
  %v468 = vunpack.c.l.b16 %v78
  %v469 = vunpack.c.h.b16 %v78
  %v470 = vunpack.c.l.b16 %v79
  %v471 = vunpack.c.h.b16 %v79
  %v472 = vunpack.c.l.b16 %v80
  %v473 = vunpack.c.h.b16 %v80
  %v474 = vunpack.c.l.b16 %v81
  %v475 = vunpack.c.h.b16 %v81
  %v476 = vunpack.c.l.b16 %v82
  %v477 = vunpack.c.h.b16 %v82
  %v478 = vunpack.c.l.b16 %v83
  %v479 = vunpack.c.h.b16 %v83
  %v480 = vunpack.c.l.b16 %v84
  %v481 = vunpack.c.h.b16 %v84
  %v482 = vunpack.c.l.b16 %v85
  %v483 = vunpack.c.h.b16 %v85
  %v484 = vunpack.c.l.b16 %v86
  %v485 = vunpack.c.h.b16 %v86
  %v486 = vunpack.c.l.b16 %v87
  %v487 = vunpack.c.h.b16 %v87
  %v488 = vunpack.c.l.b16 %v88
  %v489 = vunpack.c.h.b16 %v88
  %v490 = vunpack.c.l.b16 %v89
  %v491 = vunpack.c.h.b16 %v89
  %v492 = vunpack.c.l.b16 %v90
  %v493 = vunpack.c.h.b16 %v90
  %v494 = vunpack.c.l.b16 %v91
  %v495 = vunpack.c.h.b16 %v91
  %v496 = vunpack.c.l.b16 %v92
  %v497 = vunpack.c.h.b16 %v92
  %v498 = vunpack.c.l.b16 %v93
  %v499 = vunpack.c.h.b16 %v93
  %v500 = vunpack.c.l.b16 %v94
  %v501 = vunpack.c.h.b16 %v94
  %v502 = vunpack.c.l.b16 %v95
  %v503 = vunpack.c.h.b16 %v95
  %v504 = vunpack.c.l.b16 %v96
  %v505 = vunpack.c.h.b16 %v96
  %v506 = vunpack.c.l.b16 %v97
  %v507 = vunpack.c.h.b16 %v97
  %v508 = vunpack.c.l.b16 %v98
  %v509 = vunpack.c.h.b16 %v98
  %v510 = vunpack.c.l.b16 %v99
  %v511 = vunpack.c.h.b16 %v99
  %v512 = vunpack.c.l.b16 %v100
  %v513 = vunpack.c.h.b16 %v100
  %v514 = vunpack.c.l.b16 %v101
  %v515 = vunpack.c.h.b16 %v101
  %v516 = vunpack.c.l.b16 %v102
  %v517 = vunpack.c.h.b16 %v102
  %v518 = vunpack.c.l.b16 %v103
  %v519 = vunpack.c.h.b16 %v103
  %v520 = vunpack.c.l.b16 %v104
  %v521 = vunpack.c.h.b16 %v104
  %v522 = vunpack.c.l.b16 %v105
  %v523 = vunpack.c.h.b16 %v105
  %v524 = vunpack.c.l.b16 %v106
  %v525 = vunpack.c.h.b16 %v106
  %v526 = vunpack.c.l.b16 %v107
  %v527 = vunpack.c.h.b16 %v107
  %v528 = vunpack.c.l.b16 %v108
  %v529 = vunpack.c.h.b16 %v108
  %v530 = vunpack.c.l.b16 %v109
  %v531 = vunpack.c.h.b16 %v109
  %v532 = vunpack.c.l.b16 %v110
  %v533 = vunpack.c.h.b16 %v110
  %v534 = vunpack.c.l.b16 %v111
  %v535 = vunpack.c.h.b16 %v111
  %v536 = vunpack.c.l.b16 %v112
  %v537 = vunpack.c.h.b16 %v112
  %v538 = vunpack.c.l.b16 %v113
  %v539 = vunpack.c.h.b16 %v113
  %v540 = vunpack.c.l.b16 %v114
  %v541 = vunpack.c.h.b16 %v114
  %v542 = vunpack.c.l.b16 %v115
  %v543 = vunpack.c.h.b16 %v115
  %v544 = vunpack.c.l.b16 %v116
  %v545 = vunpack.c.h.b16 %v116
  %v546 = vunpack.c.l.b16 %v117
  %v547 = vunpack.c.h.b16 %v117
  %v548 = vunpack.c.l.b16 %v118
  %v549 = vunpack.c.h.b16 %v118
  %v550 = vunpack.c.l.b16 %v119
  %v551 = vunpack.c.h.b16 %v119
  %v552 = vunpack.c.l.b16 %v120
  %v553 = vunpack.c.h.b16 %v120
  %v554 = vunpack.c.l.b16 %v121
  %v555 = vunpack.c.h.b16 %v121
  %v556 = vunpack.c.l.b16 %v122
  %v557 = vunpack.c.h.b16 %v122
  %v558 = vunpack.c.l.b16 %v123
  %v559 = vunpack.c.h.b16 %v123
  %v560 = vunpack.c.l.b16 %v124
  %v561 = vunpack.c.h.b16 %v124
  %v562 = vunpack.c.l.b16 %v125
  %v563 = vunpack.c.h.b16 %v125
  %v564 = vunpack.c.l.b16 %v126
  %v565 = vunpack.c.h.b16 %v126
  %v566 = vunpack.c.l.b16 %v127
  %v567 = vunpack.c.h.b16 %v127
  %v568 = vunpack.c.l.b16 %v128
  %v569 = vunpack.c.h.b16 %v128
  %v570 = vunpack.c.l.b16 %v129
  %v571 = vunpack.c.h.b16 %v129
  %v572 = vunpack.c.l.b16 %v130
  %v573 = vunpack.c.h.b16 %v130
  %v574 = vunpack.c.l.b16 %v131
  %v575 = vunpack.c.h.b16 %v131
  %v576 = vunpack.c.l.b16 %v132
  %v577 = vunpack.c.h.b16 %v132
  %v578 = vunpack.c.l.b16 %v133
  %v579 = vunpack.c.h.b16 %v133
  %v580 = vunpack.c.l.b16 %v134
  %v581 = vunpack.c.h.b16 %v134
  %v582 = vunpack.c.l.b16 %v135
  %v583 = vunpack.c.h.b16 %v135
  %v584 = vunpack.c.l.b16 %v136
  %v585 = vunpack.c.h.b16 %v136
  %v586 = vunpack.c.l.b16 %v137
  %v587 = vunpack.c.h.b16 %v137
  %v588 = vunpack.c.l.b16 %v138
  %v589 = vunpack.c.h.b16 %v138
  %v590 = vunpack.c.l.b16 %v139
  %v591 = vunpack.c.h.b16 %v139
  %v592 = vunpack.c.l.b16 %v140
  %v593 = vunpack.c.h.b16 %v140
  %v594 = vunpack.c.l.b16 %v141
  %v595 = vunpack.c.h.b16 %v141
  %v596 = vpack.c.b16 %v344, %v340
  %v597 = vpack.c.b16 %v345, %v341
  %v598 = vpack.c.b16 %v346, %v342
  %v599 = vpack.c.b16 %v347, %v343
  %v600 = vpack.c.b16 %v352, %v348
  %v601 = vpack.c.b16 %v353, %v349
  %v602 = vpack.c.b16 %v354, %v350
  %v603 = vpack.c.b16 %v355, %v351
  %v604 = vpack.c.b16 %v360, %v356
  %v605 = vpack.c.b16 %v361, %v357
  %v606 = vpack.c.b16 %v362, %v358
  %v607 = vpack.c.b16 %v363, %v359
  %v608 = vpack.c.b16 %v368, %v364
  %v609 = vpack.c.b16 %v369, %v365
  %v610 = vpack.c.b16 %v370, %v366
  %v611 = vpack.c.b16 %v371, %v367
  %v612 = vpack.c.b16 %v376, %v372
  %v613 = vpack.c.b16 %v377, %v373
  %v614 = vpack.c.b16 %v378, %v374
  %v615 = vpack.c.b16 %v379, %v375
  %v616 = vpack.c.b16 %v384, %v380
  %v617 = vpack.c.b16 %v385, %v381
  %v618 = vpack.c.b16 %v386, %v382
  %v619 = vpack.c.b16 %v387, %v383
  %v620 = vpack.c.b16 %v392, %v388
  %v621 = vpack.c.b16 %v393, %v389
  %v622 = vpack.c.b16 %v394, %v390
  %v623 = vpack.c.b16 %v395, %v391
  %v624 = vpack.c.b16 %v400, %v396
  %v625 = vpack.c.b16 %v401, %v397
  %v626 = vpack.c.b16 %v402, %v398
  %v627 = vpack.c.b16 %v403, %v399
  %v628 = vpack.c.b16 %v408, %v404
  %v629 = vpack.c.b16 %v409, %v405
  %v630 = vpack.c.b16 %v410, %v406
  %v631 = vpack.c.b16 %v411, %v407
  %v632 = vpack.c.b16 %v416, %v412
  %v633 = vpack.c.b16 %v417, %v413
  %v634 = vpack.c.b16 %v418, %v414
  %v635 = vpack.c.b16 %v419, %v415
  %v636 = vpack.c.b16 %v424, %v420
  %v637 = vpack.c.b16 %v425, %v421
  %v638 = vpack.c.b16 %v426, %v422
  %v639 = vpack.c.b16 %v427, %v423
  %v640 = vpack.c.b16 %v432, %v428
  %v641 = vpack.c.b16 %v433, %v429
  %v642 = vpack.c.b16 %v434, %v430
  %v643 = vpack.c.b16 %v435, %v431
  %v644 = vpack.c.b16 %v440, %v436
  %v645 = vpack.c.b16 %v441, %v437
  %v646 = vpack.c.b16 %v442, %v438
  %v647 = vpack.c.b16 %v443, %v439
  %v648 = vpack.c.b16 %v448, %v444
  %v649 = vpack.c.b16 %v449, %v445
  %v650 = vpack.c.b16 %v450, %v446
  %v651 = vpack.c.b16 %v451, %v447
  %v652 = vpack.c.b16 %v456, %v452
  %v653 = vpack.c.b16 %v457, %v453
  %v654 = vpack.c.b16 %v458, %v454
  %v655 = vpack.c.b16 %v459, %v455
  %v656 = vpack.c.b16 %v464, %v460
  %v657 = vpack.c.b16 %v465, %v461
  %v658 = vpack.c.b16 %v466, %v462
  %v659 = vpack.c.b16 %v467, %v463
  %v660 = vpack.c.b16 %v472, %v468
  %v661 = vpack.c.b16 %v473, %v469
  %v662 = vpack.c.b16 %v474, %v470
  %v663 = vpack.c.b16 %v475, %v471
  %v664 = vpack.c.b16 %v480, %v476
  %v665 = vpack.c.b16 %v481, %v477
  %v666 = vpack.c.b16 %v482, %v478
  %v667 = vpack.c.b16 %v483, %v479
  %v668 = vpack.c.b16 %v488, %v484
  %v669 = vpack.c.b16 %v489, %v485
  %v670 = vpack.c.b16 %v490, %v486
  %v671 = vpack.c.b16 %v491, %v487
  %v672 = vpack.c.b16 %v496, %v492
  %v673 = vpack.c.b16 %v497, %v493
  %v674 = vpack.c.b16 %v498, %v494
  %v675 = vpack.c.b16 %v499, %v495
  %v676 = vpack.c.b16 %v504, %v500
  %v677 = vpack.c.b16 %v505, %v501
  %v678 = vpack.c.b16 %v506, %v502
  %v679 = vpack.c.b16 %v507, %v503
  %v680 = vpack.c.b16 %v512, %v508
  %v681 = vpack.c.b16 %v513, %v509
  %v682 = vpack.c.b16 %v514, %v510
  %v683 = vpack.c.b16 %v515, %v511
  %v684 = vpack.c.b16 %v520, %v516
  %v685 = vpack.c.b16 %v521, %v517
  %v686 = vpack.c.b16 %v522, %v518
  %v687 = vpack.c.b16 %v523, %v519
  %v688 = vpack.c.b16 %v528, %v524
  %v689 = vpack.c.b16 %v529, %v525
  %v690 = vpack.c.b16 %v530, %v526
  %v691 = vpack.c.b16 %v531, %v527
  %v692 = vpack.c.b16 %v536, %v532
  %v693 = vpack.c.b16 %v537, %v533
  %v694 = vpack.c.b16 %v538, %v534
  %v695 = vpack.c.b16 %v539, %v535
  %v696 = vpack.c.b16 %v544, %v540
  %v697 = vpack.c.b16 %v545, %v541
  %v698 = vpack.c.b16 %v546, %v542
  %v699 = vpack.c.b16 %v547, %v543
  %v700 = vpack.c.b16 %v552, %v548
  %v701 = vpack.c.b16 %v553, %v549
  %v702 = vpack.c.b16 %v554, %v550
  %v703 = vpack.c.b16 %v555, %v551
  %v704 = vpack.c.b16 %v560, %v556
  %v705 = vpack.c.b16 %v561, %v557
  %v706 = vpack.c.b16 %v562, %v558
  %v707 = vpack.c.b16 %v563, %v559
  %v708 = vpack.c.b16 %v568, %v564
  %v709 = vpack.c.b16 %v569, %v565
  %v710 = vpack.c.b16 %v570, %v566
  %v711 = vpack.c.b16 %v571, %v567
  %v712 = vpack.c.b16 %v576, %v572
  %v713 = vpack.c.b16 %v577, %v573
  %v714 = vpack.c.b16 %v578, %v574
  %v715 = vpack.c.b16 %v579, %v575
  %v716 = vpack.c.b16 %v584, %v580
  %v717 = vpack.c.b16 %v585, %v581
  %v718 = vpack.c.b16 %v586, %v582
  %v719 = vpack.c.b16 %v587, %v583
  %v720 = vpack.c.b16 %v592, %v588
  %v721 = vpack.c.b16 %v593, %v589
  %v722 = vpack.c.b16 %v594, %v590
  %v723 = vpack.c.b16 %v595, %v591
  %852 = vmatprep.subr.bf16.mxu0 %v597
  %853 = vmatpush1.bf16.msra.mxu0 %v596
  %854 = vmatprep.subr.bf16.mxu0 %v601
  %855 = vmatpush1.bf16.msra.mxu0 %v600
  %856 = vmatprep.subr.bf16.mxu0 %v605
  %857 = vmatpush1.bf16.msra.mxu0 %v604
  %858 = vmatprep.subr.bf16.mxu0 %v609
  %859 = vmatpush1.bf16.msra.mxu0 %v608
  %860 = vmatprep.subr.bf16.mxu0 %v613
  %861 = vmatpush1.bf16.msra.mxu0 %v612
  %862 = vmatprep.subr.bf16.mxu0 %v617
  %863 = vmatpush1.bf16.msra.mxu0 %v616
  %864 = vmatprep.subr.bf16.mxu0 %v621
  %865 = vmatpush1.bf16.msra.mxu0 %v620
  %866 = vmatprep.subr.bf16.mxu0 %v625
  %867 = vmatpush1.bf16.msra.mxu0 %v624
  %868 = vmatprep.subr.bf16.mxu0 %v629
  %869 = vmatpush1.bf16.msra.mxu0 %v628
  %870 = vmatprep.subr.bf16.mxu0 %v633
  %871 = vmatpush1.bf16.msra.mxu0 %v632
  %872 = vmatprep.subr.bf16.mxu0 %v637
  %873 = vmatpush1.bf16.msra.mxu0 %v636
  %874 = vmatprep.subr.bf16.mxu0 %v641
  %875 = vmatpush1.bf16.msra.mxu0 %v640
  %876 = vmatprep.subr.bf16.mxu0 %v645
  %877 = vmatpush1.bf16.msra.mxu0 %v644
  %878 = vmatprep.subr.bf16.mxu0 %v649
  %879 = vmatpush1.bf16.msra.mxu0 %v648
  %880 = vmatprep.subr.bf16.mxu0 %v653
  %881 = vmatpush1.bf16.msra.mxu0 %v652
  %882 = vmatprep.subr.bf16.mxu0 %v657
  %883 = vmatpush1.bf16.msra.mxu0 %v656
  %884 = vmatprep.mubr.bf16.mxu0 %v197
  %885 = vmatmul.mubr.bf16.gmra.mrb[0].mxu0 %v196
  %v886 = vpop.f32.mrb[0].mxu0
  %v887 = vadd.f32 %v155, %v886
  %v888 = vpop.f32.mrb[0].mxu0
  %v889 = vadd.f32 %v159, %v888
  %v890 = vpop.f32.mrb[0].mxu0
  %v891 = vadd.f32 %v155, %v890
  %v892 = vpop.f32.mrb[0].mxu0
  %v893 = vadd.f32 %v159, %v892
  %894 = vmatprep.mubr.bf16.mxu0 %v201
  %895 = vmatmul.mubr.bf16.gmra.mrb[0].mxu0 %v200
  %v896 = vpop.f32.mrb[0].mxu0
  %v897 = vadd.f32 %v155, %v896
  %v898 = vpop.f32.mrb[0].mxu0
  %v899 = vadd.f32 %v159, %v898
  %v900 = vpop.f32.mrb[0].mxu0
  %v901 = vadd.f32 %v155, %v900
  %v902 = vpop.f32.mrb[0].mxu0
  %v903 = vadd.f32 %v159, %v902
  %904 = vdwg.mxu0
  %905 = vmatprep.subr.bf16.mxu0 %v661
  %906 = vmatpush1.bf16.msra.mxu0 %v660
  %907 = vmatprep.subr.bf16.mxu0 %v665
  %908 = vmatpush1.bf16.msra.mxu0 %v664
  %909 = vmatprep.subr.bf16.mxu0 %v669
  %910 = vmatpush1.bf16.msra.mxu0 %v668
  %911 = vmatprep.subr.bf16.mxu0 %v673
  %912 = vmatpush1.bf16.msra.mxu0 %v672
  %913 = vmatprep.subr.bf16.mxu0 %v677
  %914 = vmatpush1.bf16.msra.mxu0 %v676
  %915 = vmatprep.subr.bf16.mxu0 %v681
  %916 = vmatpush1.bf16.msra.mxu0 %v680
  %917 = vmatprep.subr.bf16.mxu0 %v685
  %918 = vmatpush1.bf16.msra.mxu0 %v684
  %919 = vmatprep.subr.bf16.mxu0 %v689
  %920 = vmatpush1.bf16.msra.mxu0 %v688
  %921 = vmatprep.subr.bf16.mxu0 %v693
  %922 = vmatpush1.bf16.msra.mxu0 %v692
  %923 = vmatprep.subr.bf16.mxu0 %v697
  %924 = vmatpush1.bf16.msra.mxu0 %v696
  %925 = vmatprep.subr.bf16.mxu0 %v701
  %926 = vmatpush1.bf16.msra.mxu0 %v700
  %927 = vmatprep.subr.bf16.mxu0 %v705
  %928 = vmatpush1.bf16.msra.mxu0 %v704
  %929 = vmatprep.subr.bf16.mxu0 %v709
  %930 = vmatpush1.bf16.msra.mxu0 %v708
  %931 = vmatprep.subr.bf16.mxu0 %v713
  %932 = vmatpush1.bf16.msra.mxu0 %v712
  %933 = vmatprep.subr.bf16.mxu0 %v717
  %934 = vmatpush1.bf16.msra.mxu0 %v716
  %935 = vmatprep.subr.bf16.mxu0 %v721
  %936 = vmatpush1.bf16.msra.mxu0 %v720
  %937 = vmatprep.mubr.bf16.mxu0 %v199
  %938 = vmatmul.mubr.bf16.gmra.mrb[0].mxu0 %v198
  %v939 = vpop.f32.mrb[0].mxu0
  %v940 = vadd.f32 %v887, %v939
  %v941 = vpop.f32.mrb[0].mxu0
  %v942 = vadd.f32 %v889, %v941
  %v943 = vpop.f32.mrb[0].mxu0
  %v944 = vadd.f32 %v891, %v943
  %v945 = vpop.f32.mrb[0].mxu0
  %v946 = vadd.f32 %v893, %v945
  %947 = vmatprep.mubr.bf16.mxu0 %v203
  %948 = vmatmul.mubr.bf16.gmra.mrb[0].mxu0 %v202
  %v949 = vpop.f32.mrb[0].mxu0
  %v950 = vadd.f32 %v897, %v949
  %v951 = vpop.f32.mrb[0].mxu0
  %v952 = vadd.f32 %v899, %v951
  %v953 = vpop.f32.mrb[0].mxu0
  %v954 = vadd.f32 %v901, %v953
  %v955 = vpop.f32.mrb[0].mxu0
  %v956 = vadd.f32 %v903, %v955
  %957 = vdwg.mxu0
  %958 = vmatprep.subr.bf16.mxu0 %v599
  %959 = vmatpush1.bf16.msra.mxu0 %v598
  %960 = vmatprep.subr.bf16.mxu0 %v603
  %961 = vmatpush1.bf16.msra.mxu0 %v602
  %962 = vmatprep.subr.bf16.mxu0 %v607
  %963 = vmatpush1.bf16.msra.mxu0 %v606
  %964 = vmatprep.subr.bf16.mxu0 %v611
  %965 = vmatpush1.bf16.msra.mxu0 %v610
  %966 = vmatprep.subr.bf16.mxu0 %v615
  %967 = vmatpush1.bf16.msra.mxu0 %v614
  %968 = vmatprep.subr.bf16.mxu0 %v619
  %969 = vmatpush1.bf16.msra.mxu0 %v618
  %970 = vmatprep.subr.bf16.mxu0 %v623
  %971 = vmatpush1.bf16.msra.mxu0 %v622
  %972 = vmatprep.subr.bf16.mxu0 %v627
  %973 = vmatpush1.bf16.msra.mxu0 %v626
  %974 = vmatprep.subr.bf16.mxu0 %v631
  %975 = vmatpush1.bf16.msra.mxu0 %v630
  %976 = vmatprep.subr.bf16.mxu0 %v635
  %977 = vmatpush1.bf16.msra.mxu0 %v634
  %978 = vmatprep.subr.bf16.mxu0 %v639
  %979 = vmatpush1.bf16.msra.mxu0 %v638
  %980 = vmatprep.subr.bf16.mxu0 %v643
  %981 = vmatpush1.bf16.msra.mxu0 %v642
  %982 = vmatprep.subr.bf16.mxu0 %v647
  %983 = vmatpush1.bf16.msra.mxu0 %v646
  %984 = vmatprep.subr.bf16.mxu0 %v651
  %985 = vmatpush1.bf16.msra.mxu0 %v650
  %986 = vmatprep.subr.bf16.mxu0 %v655
  %987 = vmatpush1.bf16.msra.mxu0 %v654
  %988 = vmatprep.subr.bf16.mxu0 %v659
  %989 = vmatpush1.bf16.msra.mxu0 %v658
  %990 = vmatprep.mubr.bf16.mxu0 %v197
  %991 = vmatmul.mubr.bf16.gmra.mrb[0].mxu0 %v196
  %v992 = vpop.f32.mrb[0].mxu0
  %v993 = vadd.f32 %v163, %v992
  %v994 = vpop.f32.mrb[0].mxu0
  %v995 = vadd.f32 %v167, %v994
  %v996 = vpop.f32.mrb[0].mxu0
  %v997 = vadd.f32 %v163, %v996
  %v998 = vpop.f32.mrb[0].mxu0
  %v999 = vadd.f32 %v167, %v998
  %1000 = vmatprep.mubr.bf16.mxu0 %v201
  %1001 = vmatmul.mubr.bf16.gmra.mrb[0].mxu0 %v200
  %v1002 = vpop.f32.mrb[0].mxu0
  %v1003 = vadd.f32 %v163, %v1002
  %v1004 = vpop.f32.mrb[0].mxu0
  %v1005 = vadd.f32 %v167, %v1004
  %v1006 = vpop.f32.mrb[0].mxu0
  %v1007 = vadd.f32 %v163, %v1006
  %v1008 = vpop.f32.mrb[0].mxu0
  %v1009 = vadd.f32 %v167, %v1008
  %1010 = vdwg.mxu0
  %1011 = vmatprep.subr.bf16.mxu0 %v663
  %1012 = vmatpush1.bf16.msra.mxu0 %v662
  %1013 = vmatprep.subr.bf16.mxu0 %v667
  %1014 = vmatpush1.bf16.msra.mxu0 %v666
  %1015 = vmatprep.subr.bf16.mxu0 %v671
  %1016 = vmatpush1.bf16.msra.mxu0 %v670
  %1017 = vmatprep.subr.bf16.mxu0 %v675
  %1018 = vmatpush1.bf16.msra.mxu0 %v674
  %1019 = vmatprep.subr.bf16.mxu0 %v679
  %1020 = vmatpush1.bf16.msra.mxu0 %v678
  %1021 = vmatprep.subr.bf16.mxu0 %v683
  %1022 = vmatpush1.bf16.msra.mxu0 %v682
  %1023 = vmatprep.subr.bf16.mxu0 %v687
  %1024 = vmatpush1.bf16.msra.mxu0 %v686
  %1025 = vmatprep.subr.bf16.mxu0 %v691
  %1026 = vmatpush1.bf16.msra.mxu0 %v690
  %1027 = vmatprep.subr.bf16.mxu0 %v695
  %1028 = vmatpush1.bf16.msra.mxu0 %v694
  %1029 = vmatprep.subr.bf16.mxu0 %v699
  %1030 = vmatpush1.bf16.msra.mxu0 %v698
  %1031 = vmatprep.subr.bf16.mxu0 %v703
  %1032 = vmatpush1.bf16.msra.mxu0 %v702
  %1033 = vmatprep.subr.bf16.mxu0 %v707
  %1034 = vmatpush1.bf16.msra.mxu0 %v706
  %1035 = vmatprep.subr.bf16.mxu0 %v711
  %1036 = vmatpush1.bf16.msra.mxu0 %v710
  %1037 = vmatprep.subr.bf16.mxu0 %v715
  %1038 = vmatpush1.bf16.msra.mxu0 %v714
  %1039 = vmatprep.subr.bf16.mxu0 %v719
  %1040 = vmatpush1.bf16.msra.mxu0 %v718
  %1041 = vmatprep.subr.bf16.mxu0 %v723
  %1042 = vmatpush1.bf16.msra.mxu0 %v722
  %1043 = vmatprep.mubr.bf16.mxu0 %v199
  %1044 = vmatmul.mubr.bf16.gmra.mrb[0].mxu0 %v198
  %v1045 = vpop.f32.mrb[0].mxu0
  %v1046 = vadd.f32 %v993, %v1045
  %v1047 = vpop.f32.mrb[0].mxu0
  %v1048 = vadd.f32 %v995, %v1047
  %v1049 = vpop.f32.mrb[0].mxu0
  %v1050 = vadd.f32 %v997, %v1049
  %v1051 = vpop.f32.mrb[0].mxu0
  %v1052 = vadd.f32 %v999, %v1051
  %1053 = vmatprep.mubr.bf16.mxu0 %v203
  %1054 = vmatmul.mubr.bf16.gmra.mrb[0].mxu0 %v202
  %v1055 = vpop.f32.mrb[0].mxu0
  %v1056 = vadd.f32 %v1003, %v1055
  %v1057 = vpop.f32.mrb[0].mxu0
  %v1058 = vadd.f32 %v1005, %v1057
  %v1059 = vpop.f32.mrb[0].mxu0
  %v1060 = vadd.f32 %v1007, %v1059
  %v1061 = vpop.f32.mrb[0].mxu0
  %v1062 = vadd.f32 %v1009, %v1061
  %1063 = vdwg.mxu0
  %v1064 = vmax.f32 %v940, 0.0
  %v1065 = vmax.f32 %v942, 0.0
  %v1066 = vmax.f32 %v1046, 0.0
  %v1067 = vmax.f32 %v1048, 0.0
  %v1068 = vmax.f32 %v944, 0.0
  %v1069 = vmax.f32 %v946, 0.0
  %v1070 = vmax.f32 %v1050, 0.0
  %v1071 = vmax.f32 %v1052, 0.0
  %v1072 = vmax.f32 %v950, 0.0
  %v1073 = vmax.f32 %v952, 0.0
  %v1074 = vmax.f32 %v1056, 0.0
  %v1075 = vmax.f32 %v1058, 0.0
  %v1076 = vmax.f32 %v954, 0.0
  %v1077 = vmax.f32 %v956, 0.0
  %v1078 = vmax.f32 %v1060, 0.0
  %v1079 = vmax.f32 %v1062, 0.0
  %v1080 = vpack.c.bf16 %v1068, %v1064
  %v1081 = vpack.c.bf16 %v1069, %v1065
  %v1082 = vpack.c.bf16 %v1070, %v1066
  %v1083 = vpack.c.bf16 %v1071, %v1067
  %v1084 = vpack.c.bf16 %v1076, %v1072
  %v1085 = vpack.c.bf16 %v1077, %v1073
  %v1086 = vpack.c.bf16 %v1078, %v1074
  %v1087 = vpack.c.bf16 %v1079, %v1075
  %v1096 = vunpack.c.l.b16 %v1080
  %v1097 = vunpack.c.l.b16 %v1081
  %v1098 = vunpack.c.l.b16 %v1082
  %v1099 = vunpack.c.l.b16 %v1083
  %v1100 = vunpack.c.h.b16 %v1080
  %v1101 = vunpack.c.h.b16 %v1081
  %v1102 = vunpack.c.h.b16 %v1082
  %v1103 = vunpack.c.h.b16 %v1083
  %v1104 = vunpack.c.l.b16 %v1084
  %v1105 = vunpack.c.l.b16 %v1085
  %v1106 = vunpack.c.l.b16 %v1086
  %v1107 = vunpack.c.l.b16 %v1087
  %v1108 = vunpack.c.h.b16 %v1084
  %v1109 = vunpack.c.h.b16 %v1085
  %v1110 = vunpack.c.h.b16 %v1086
  %v1111 = vunpack.c.h.b16 %v1087
  %v1112 = vpack.c.b16 %v1097, %v1096
  %v1113 = vpack.c.b16 %v1099, %v1098
  %v1114 = vpack.c.b16 %v1101, %v1100
  %v1115 = vpack.c.b16 %v1103, %v1102
  %v1116 = vpack.c.b16 %v1105, %v1104
  %v1117 = vpack.c.b16 %v1107, %v1106
  %v1118 = vpack.c.b16 %v1109, %v1108
  %v1119 = vpack.c.b16 %v1111, %v1110
  %1128 = vst [vmem:[%s3] sm:$0xff] %v1112
  %1129 = vst [vmem:[%s3 + $0x8] sm:$0xff] %v1113
  %1130 = vst [vmem:[%s3 + $0x10] sm:$0xff] %v1114
  %1131 = vst [vmem:[%s3 + $0x18] sm:$0xff] %v1115
  %1132 = vst [vmem:[%s3 + $0x20] sm:$0xff] %v1116
  %1133 = vst [vmem:[%s3 + $0x28] sm:$0xff] %v1117
  %1134 = vst [vmem:[%s3 + $0x30] sm:$0xff] %v1118
  %1135 = vst [vmem:[%s3 + $0x38] sm:$0xff] %v1119
  // Predicated region
  $region14: #{autoencoder_forward.10} parent=0 // pred_check
    _
  $region15: #{autoencoder_forward.10} parent=0 // pred_check_branch
    %1137 = sbr.rel (0) target = $region17
  $region16: #{autoencoder_forward.10} parent=0 // pred_region
    _
  $region17: #{autoencoder_forward.10} parent=0 // pred_fallthru
    _
  // Predicated region
  $region18: #{autoencoder_forward.10} parent=0 // pred_check
    _
  $region19: #{autoencoder_forward.10} parent=0 // pred_check_branch
    %1139 = sbr.rel (0) target = $region21
  $region20: #{autoencoder_forward.10} parent=0 // pred_region
    _
  $region21: #{autoencoder_forward.10} parent=0 // pred_fallthru
    _

// kernel: autoencoder_forward.11
$region0: #{autoencoder_forward.11}
  #allocation0 [shape = 'u32[]', space=smem, size = 0x4, offset = 0x4, fixed_abs, tag = 'smem constant byte address 0x4 - core index']
  #allocation1 [shape = 'u32[144,128]{1,0:T(1,128)}', space=vmem, size = 0x12000, scoped, tag = 'internal scratch']
  %s0 = inlined_call_operand.vmem [shape: bf16[80,512], index: 0, kind: input, shape index: {}]
  %s1 = inlined_call_operand.vmem [shape: bf16[512,256], index: 1, kind: input, shape index: {}]
  %s2 = inlined_call_operand.vmem [shape: f32[1,256], index: 2, kind: input, shape index: {}]
  %s3 = inlined_call_operand.vmem [shape: bf16[80,256], index: 3, kind: output, shape index: {}]
  %s4 = sld [smem:[#allocation0]]
  $region22: #{autoencoder_forward.11} parent=0
    _
  %s6 = ssub.s32 1, %s4
  %s7 = scalar_select 0, %s6, %s4
  // Predicated region
  $region2: #{autoencoder_forward.11} parent=0 // pred_check
    _
  $region3: #{autoencoder_forward.11} parent=0 // pred_check_branch
    %9 = sbr.rel (0) target = $region5
  $region4: #{autoencoder_forward.11} parent=0 // pred_region
    _
  $region5: #{autoencoder_forward.11} parent=0 // pred_fallthru
    _
  // Predicated region
  $region6: #{autoencoder_forward.11} parent=0 // pred_check
    _
  $region7: #{autoencoder_forward.11} parent=0 // pred_check_branch
    %11 = sbr.rel (0) target = $region9
  $region8: #{autoencoder_forward.11} parent=0 // pred_region
    _
  $region9: #{autoencoder_forward.11} parent=0 // pred_fallthru
    _
  // Predicated region
  $region10: #{autoencoder_forward.11} parent=0 // pred_check
    _
  $region11: #{autoencoder_forward.11} parent=0 // pred_check_branch
    %13 = sbr.rel (0) target = $region13
  $region12: #{autoencoder_forward.11} parent=0 // pred_region
    _
  $region13: #{autoencoder_forward.11} parent=0 // pred_fallthru
    _
  %v14 = vld [vmem:[%s1] sm:$0xff]
  %v15 = vld [vmem:[%s1 + $0x8] sm:$0xff]
  %v16 = vld [vmem:[%s1 + $0x10] sm:$0xff]
  %v17 = vld [vmem:[%s1 + $0x18] sm:$0xff]
  %v18 = vld [vmem:[%s1 + $0x20] sm:$0xff]
  %v19 = vld [vmem:[%s1 + $0x28] sm:$0xff]
  %v20 = vld [vmem:[%s1 + $0x30] sm:$0xff]
  %v21 = vld [vmem:[%s1 + $0x38] sm:$0xff]
  %v22 = vld [vmem:[%s1 + $0x40] sm:$0xff]
  %v23 = vld [vmem:[%s1 + $0x48] sm:$0xff]
  %v24 = vld [vmem:[%s1 + $0x50] sm:$0xff]
  %v25 = vld [vmem:[%s1 + $0x58] sm:$0xff]
  %v26 = vld [vmem:[%s1 + $0x60] sm:$0xff]
  %v27 = vld [vmem:[%s1 + $0x68] sm:$0xff]
  %v28 = vld [vmem:[%s1 + $0x70] sm:$0xff]
  %v29 = vld [vmem:[%s1 + $0x78] sm:$0xff]
  %v30 = vld [vmem:[%s1 + $0x80] sm:$0xff]
  %v31 = vld [vmem:[%s1 + $0x88] sm:$0xff]
  %v32 = vld [vmem:[%s1 + $0x90] sm:$0xff]
  %v33 = vld [vmem:[%s1 + $0x98] sm:$0xff]
  %v34 = vld [vmem:[%s1 + $0xa0] sm:$0xff]
  %v35 = vld [vmem:[%s1 + $0xa8] sm:$0xff]
  %v36 = vld [vmem:[%s1 + $0xb0] sm:$0xff]
  %v37 = vld [vmem:[%s1 + $0xb8] sm:$0xff]
  %v38 = vld [vmem:[%s1 + $0xc0] sm:$0xff]
  %v39 = vld [vmem:[%s1 + $0xc8] sm:$0xff]
  %v40 = vld [vmem:[%s1 + $0xd0] sm:$0xff]
  %v41 = vld [vmem:[%s1 + $0xd8] sm:$0xff]
  %v42 = vld [vmem:[%s1 + $0xe0] sm:$0xff]
  %v43 = vld [vmem:[%s1 + $0xe8] sm:$0xff]
  %v44 = vld [vmem:[%s1 + $0xf0] sm:$0xff]
  %v45 = vld [vmem:[%s1 + $0xf8] sm:$0xff]
  %v46 = vld [vmem:[%s1 + $0x100] sm:$0xff]
  %v47 = vld [vmem:[%s1 + $0x108] sm:$0xff]
  %v48 = vld [vmem:[%s1 + $0x110] sm:$0xff]
  %v49 = vld [vmem:[%s1 + $0x118] sm:$0xff]
  %v50 = vld [vmem:[%s1 + $0x120] sm:$0xff]
  %v51 = vld [vmem:[%s1 + $0x128] sm:$0xff]
  %v52 = vld [vmem:[%s1 + $0x130] sm:$0xff]
  %v53 = vld [vmem:[%s1 + $0x138] sm:$0xff]
  %v54 = vld [vmem:[%s1 + $0x140] sm:$0xff]
  %v55 = vld [vmem:[%s1 + $0x148] sm:$0xff]
  %v56 = vld [vmem:[%s1 + $0x150] sm:$0xff]
  %v57 = vld [vmem:[%s1 + $0x158] sm:$0xff]
  %v58 = vld [vmem:[%s1 + $0x160] sm:$0xff]
  %v59 = vld [vmem:[%s1 + $0x168] sm:$0xff]
  %v60 = vld [vmem:[%s1 + $0x170] sm:$0xff]
  %v61 = vld [vmem:[%s1 + $0x178] sm:$0xff]
  %v62 = vld [vmem:[%s1 + $0x180] sm:$0xff]
  %v63 = vld [vmem:[%s1 + $0x188] sm:$0xff]
  %v64 = vld [vmem:[%s1 + $0x190] sm:$0xff]
  %v65 = vld [vmem:[%s1 + $0x198] sm:$0xff]
  %v66 = vld [vmem:[%s1 + $0x1a0] sm:$0xff]
  %v67 = vld [vmem:[%s1 + $0x1a8] sm:$0xff]
  %v68 = vld [vmem:[%s1 + $0x1b0] sm:$0xff]
  %v69 = vld [vmem:[%s1 + $0x1b8] sm:$0xff]
  %v70 = vld [vmem:[%s1 + $0x1c0] sm:$0xff]
  %v71 = vld [vmem:[%s1 + $0x1c8] sm:$0xff]
  %v72 = vld [vmem:[%s1 + $0x1d0] sm:$0xff]
  %v73 = vld [vmem:[%s1 + $0x1d8] sm:$0xff]
  %v74 = vld [vmem:[%s1 + $0x1e0] sm:$0xff]
  %v75 = vld [vmem:[%s1 + $0x1e8] sm:$0xff]
  %v76 = vld [vmem:[%s1 + $0x1f0] sm:$0xff]
  %v77 = vld [vmem:[%s1 + $0x1f8] sm:$0xff]
  %v78 = vld [vmem:[%s0] sm:$0xff]
  %v79 = vld [vmem:[%s0 + $0x8] sm:$0xff]
  %v80 = vld [vmem:[%s0 + $0x10] sm:$0xff]
  %v81 = vld [vmem:[%s0 + $0x18] sm:$0xff]
  %v82 = vld [vmem:[%s0 + $0x20] sm:$0xff]
  %v83 = vld [vmem:[%s0 + $0x28] sm:$0xff]
  %v84 = vld [vmem:[%s0 + $0x30] sm:$0xff]
  %v85 = vld [vmem:[%s0 + $0x38] sm:$0xff]
  %v86 = vld [vmem:[%s0 + $0x40] sm:$0xff]
  %v87 = vld [vmem:[%s0 + $0x48] sm:$0xff]
  %v88 = vld [vmem:[%s0 + $0x50] sm:$0xff]
  %v89 = vld [vmem:[%s0 + $0x58] sm:$0xff]
  %v90 = vld [vmem:[%s0 + $0x60] sm:$0xff]
  %v91 = vld [vmem:[%s0 + $0x68] sm:$0xff]
  %v92 = vld [vmem:[%s0 + $0x70] sm:$0xff]
  %v93 = vld [vmem:[%s0 + $0x78] sm:$0xff]
  %v94 = vld [vmem:[%s0 + $0x80] sm:$0xff]
  %v95 = vld [vmem:[%s0 + $0x88] sm:$0xff]
  %v96 = vld [vmem:[%s0 + $0x90] sm:$0xff]
  %v97 = vld [vmem:[%s0 + $0x98] sm:$0xff]
  %v98 = vld [vmem:[%s2] sm:$0x3]
  %v100 = vlaneseq
  %v101 = vshrl.u32 %v100, 7
  %v102 = vsub.s32 0, %v101
  %v103 = vrot.slane %v98, %v102
  %v104 = vlaneseq
  %v105 = vshrl.u32 %v104, 7
  %v106 = vsub.s32 1, %v105
  %v107 = vrot.slane %v98, %v106
  %v130 = vunpack.c.l.b16 %v78
  %v131 = vunpack.c.h.b16 %v78
  %v132 = vunpack.c.l.b16 %v79
  %v133 = vunpack.c.h.b16 %v79
  %v134 = vunpack.c.l.b16 %v80
  %v135 = vunpack.c.h.b16 %v80
  %v136 = vunpack.c.l.b16 %v81
  %v137 = vunpack.c.h.b16 %v81
  %v138 = vunpack.c.l.b16 %v82
  %v139 = vunpack.c.h.b16 %v82
  %v140 = vunpack.c.l.b16 %v83
  %v141 = vunpack.c.h.b16 %v83
  %v142 = vunpack.c.l.b16 %v84
  %v143 = vunpack.c.h.b16 %v84
  %v144 = vunpack.c.l.b16 %v85
  %v145 = vunpack.c.h.b16 %v85
  %v146 = vunpack.c.l.b16 %v86
  %v147 = vunpack.c.h.b16 %v86
  %v148 = vunpack.c.l.b16 %v87
  %v149 = vunpack.c.h.b16 %v87
  %v150 = vunpack.c.l.b16 %v88
  %v151 = vunpack.c.h.b16 %v88
  %v152 = vunpack.c.l.b16 %v89
  %v153 = vunpack.c.h.b16 %v89
  %v154 = vunpack.c.l.b16 %v90
  %v155 = vunpack.c.h.b16 %v90
  %v156 = vunpack.c.l.b16 %v91
  %v157 = vunpack.c.h.b16 %v91
  %v158 = vunpack.c.l.b16 %v92
  %v159 = vunpack.c.h.b16 %v92
  %v160 = vunpack.c.l.b16 %v93
  %v161 = vunpack.c.h.b16 %v93
  %v162 = vunpack.c.l.b16 %v94
  %v163 = vunpack.c.h.b16 %v94
  %v164 = vunpack.c.l.b16 %v95
  %v165 = vunpack.c.h.b16 %v95
  %v166 = vunpack.c.l.b16 %v96
  %v167 = vunpack.c.h.b16 %v96
  %v168 = vunpack.c.l.b16 %v97
  %v169 = vunpack.c.h.b16 %v97
  %v170 = vpack.c.b16 %v134, %v130
  %v171 = vpack.c.b16 %v135, %v131
  %v172 = vpack.c.b16 %v136, %v132
  %v173 = vpack.c.b16 %v137, %v133
  %v174 = vpack.c.b16 %v142, %v138
  %v175 = vpack.c.b16 %v143, %v139
  %v176 = vpack.c.b16 %v144, %v140
  %v177 = vpack.c.b16 %v145, %v141
  %v178 = vpack.c.b16 %v150, %v146
  %v179 = vpack.c.b16 %v151, %v147
  %v180 = vpack.c.b16 %v152, %v148
  %v181 = vpack.c.b16 %v153, %v149
  %v182 = vpack.c.b16 %v158, %v154
  %v183 = vpack.c.b16 %v159, %v155
  %v184 = vpack.c.b16 %v160, %v156
  %v185 = vpack.c.b16 %v161, %v157
  %v186 = vpack.c.b16 %v166, %v162
  %v187 = vpack.c.b16 %v167, %v163
  %v188 = vpack.c.b16 %v168, %v164
  %v189 = vpack.c.b16 %v169, %v165
  %v274 = vunpack.c.l.b16 %v14
  %v275 = vunpack.c.h.b16 %v14
  %v276 = vunpack.c.l.b16 %v15
  %v277 = vunpack.c.h.b16 %v15
  %v278 = vunpack.c.l.b16 %v16
  %v279 = vunpack.c.h.b16 %v16
  %v280 = vunpack.c.l.b16 %v17
  %v281 = vunpack.c.h.b16 %v17
  %v282 = vunpack.c.l.b16 %v18
  %v283 = vunpack.c.h.b16 %v18
  %v284 = vunpack.c.l.b16 %v19
  %v285 = vunpack.c.h.b16 %v19
  %v286 = vunpack.c.l.b16 %v20
  %v287 = vunpack.c.h.b16 %v20
  %v288 = vunpack.c.l.b16 %v21
  %v289 = vunpack.c.h.b16 %v21
  %v290 = vunpack.c.l.b16 %v22
  %v291 = vunpack.c.h.b16 %v22
  %v292 = vunpack.c.l.b16 %v23
  %v293 = vunpack.c.h.b16 %v23
  %v294 = vunpack.c.l.b16 %v24
  %v295 = vunpack.c.h.b16 %v24
  %v296 = vunpack.c.l.b16 %v25
  %v297 = vunpack.c.h.b16 %v25
  %v298 = vunpack.c.l.b16 %v26
  %v299 = vunpack.c.h.b16 %v26
  %v300 = vunpack.c.l.b16 %v27
  %v301 = vunpack.c.h.b16 %v27
  %v302 = vunpack.c.l.b16 %v28
  %v303 = vunpack.c.h.b16 %v28
  %v304 = vunpack.c.l.b16 %v29
  %v305 = vunpack.c.h.b16 %v29
  %v306 = vunpack.c.l.b16 %v30
  %v307 = vunpack.c.h.b16 %v30
  %v308 = vunpack.c.l.b16 %v31
  %v309 = vunpack.c.h.b16 %v31
  %v310 = vunpack.c.l.b16 %v32
  %v311 = vunpack.c.h.b16 %v32
  %v312 = vunpack.c.l.b16 %v33
  %v313 = vunpack.c.h.b16 %v33
  %v314 = vunpack.c.l.b16 %v34
  %v315 = vunpack.c.h.b16 %v34
  %v316 = vunpack.c.l.b16 %v35
  %v317 = vunpack.c.h.b16 %v35
  %v318 = vunpack.c.l.b16 %v36
  %v319 = vunpack.c.h.b16 %v36
  %v320 = vunpack.c.l.b16 %v37
  %v321 = vunpack.c.h.b16 %v37
  %v322 = vunpack.c.l.b16 %v38
  %v323 = vunpack.c.h.b16 %v38
  %v324 = vunpack.c.l.b16 %v39
  %v325 = vunpack.c.h.b16 %v39
  %v326 = vunpack.c.l.b16 %v40
  %v327 = vunpack.c.h.b16 %v40
  %v328 = vunpack.c.l.b16 %v41
  %v329 = vunpack.c.h.b16 %v41
  %v330 = vunpack.c.l.b16 %v42
  %v331 = vunpack.c.h.b16 %v42
  %v332 = vunpack.c.l.b16 %v43
  %v333 = vunpack.c.h.b16 %v43
  %v334 = vunpack.c.l.b16 %v44
  %v335 = vunpack.c.h.b16 %v44
  %v336 = vunpack.c.l.b16 %v45
  %v337 = vunpack.c.h.b16 %v45
  %v338 = vunpack.c.l.b16 %v46
  %v339 = vunpack.c.h.b16 %v46
  %v340 = vunpack.c.l.b16 %v47
  %v341 = vunpack.c.h.b16 %v47
  %v342 = vunpack.c.l.b16 %v48
  %v343 = vunpack.c.h.b16 %v48
  %v344 = vunpack.c.l.b16 %v49
  %v345 = vunpack.c.h.b16 %v49
  %v346 = vunpack.c.l.b16 %v50
  %v347 = vunpack.c.h.b16 %v50
  %v348 = vunpack.c.l.b16 %v51
  %v349 = vunpack.c.h.b16 %v51
  %v350 = vunpack.c.l.b16 %v52
  %v351 = vunpack.c.h.b16 %v52
  %v352 = vunpack.c.l.b16 %v53
  %v353 = vunpack.c.h.b16 %v53
  %v354 = vunpack.c.l.b16 %v54
  %v355 = vunpack.c.h.b16 %v54
  %v356 = vunpack.c.l.b16 %v55
  %v357 = vunpack.c.h.b16 %v55
  %v358 = vunpack.c.l.b16 %v56
  %v359 = vunpack.c.h.b16 %v56
  %v360 = vunpack.c.l.b16 %v57
  %v361 = vunpack.c.h.b16 %v57
  %v362 = vunpack.c.l.b16 %v58
  %v363 = vunpack.c.h.b16 %v58
  %v364 = vunpack.c.l.b16 %v59
  %v365 = vunpack.c.h.b16 %v59
  %v366 = vunpack.c.l.b16 %v60
  %v367 = vunpack.c.h.b16 %v60
  %v368 = vunpack.c.l.b16 %v61
  %v369 = vunpack.c.h.b16 %v61
  %v370 = vunpack.c.l.b16 %v62
  %v371 = vunpack.c.h.b16 %v62
  %v372 = vunpack.c.l.b16 %v63
  %v373 = vunpack.c.h.b16 %v63
  %v374 = vunpack.c.l.b16 %v64
  %v375 = vunpack.c.h.b16 %v64
  %v376 = vunpack.c.l.b16 %v65
  %v377 = vunpack.c.h.b16 %v65
  %v378 = vunpack.c.l.b16 %v66
  %v379 = vunpack.c.h.b16 %v66
  %v380 = vunpack.c.l.b16 %v67
  %v381 = vunpack.c.h.b16 %v67
  %v382 = vunpack.c.l.b16 %v68
  %v383 = vunpack.c.h.b16 %v68
  %v384 = vunpack.c.l.b16 %v69
  %v385 = vunpack.c.h.b16 %v69
  %v386 = vunpack.c.l.b16 %v70
  %v387 = vunpack.c.h.b16 %v70
  %v388 = vunpack.c.l.b16 %v71
  %v389 = vunpack.c.h.b16 %v71
  %v390 = vunpack.c.l.b16 %v72
  %v391 = vunpack.c.h.b16 %v72
  %v392 = vunpack.c.l.b16 %v73
  %v393 = vunpack.c.h.b16 %v73
  %v394 = vunpack.c.l.b16 %v74
  %v395 = vunpack.c.h.b16 %v74
  %v396 = vunpack.c.l.b16 %v75
  %v397 = vunpack.c.h.b16 %v75
  %v398 = vunpack.c.l.b16 %v76
  %v399 = vunpack.c.h.b16 %v76
  %v400 = vunpack.c.l.b16 %v77
  %v401 = vunpack.c.h.b16 %v77
  %v402 = vpack.c.b16 %v276, %v274
  %v403 = vpack.c.b16 %v277, %v275
  %v404 = vpack.c.b16 %v280, %v278
  %v405 = vpack.c.b16 %v281, %v279
  %v406 = vpack.c.b16 %v284, %v282
  %v407 = vpack.c.b16 %v285, %v283
  %v408 = vpack.c.b16 %v288, %v286
  %v409 = vpack.c.b16 %v289, %v287
  %v410 = vpack.c.b16 %v292, %v290
  %v411 = vpack.c.b16 %v293, %v291
  %v412 = vpack.c.b16 %v296, %v294
  %v413 = vpack.c.b16 %v297, %v295
  %v414 = vpack.c.b16 %v300, %v298
  %v415 = vpack.c.b16 %v301, %v299
  %v416 = vpack.c.b16 %v304, %v302
  %v417 = vpack.c.b16 %v305, %v303
  %v418 = vpack.c.b16 %v308, %v306
  %v419 = vpack.c.b16 %v309, %v307
  %v420 = vpack.c.b16 %v312, %v310
  %v421 = vpack.c.b16 %v313, %v311
  %v422 = vpack.c.b16 %v316, %v314
  %v423 = vpack.c.b16 %v317, %v315
  %v424 = vpack.c.b16 %v320, %v318
  %v425 = vpack.c.b16 %v321, %v319
  %v426 = vpack.c.b16 %v324, %v322
  %v427 = vpack.c.b16 %v325, %v323
  %v428 = vpack.c.b16 %v328, %v326
  %v429 = vpack.c.b16 %v329, %v327
  %v430 = vpack.c.b16 %v332, %v330
  %v431 = vpack.c.b16 %v333, %v331
  %v432 = vpack.c.b16 %v336, %v334
  %v433 = vpack.c.b16 %v337, %v335
  %v434 = vpack.c.b16 %v340, %v338
  %v435 = vpack.c.b16 %v341, %v339
  %v436 = vpack.c.b16 %v344, %v342
  %v437 = vpack.c.b16 %v345, %v343
  %v438 = vpack.c.b16 %v348, %v346
  %v439 = vpack.c.b16 %v349, %v347
  %v440 = vpack.c.b16 %v352, %v350
  %v441 = vpack.c.b16 %v353, %v351
  %v442 = vpack.c.b16 %v356, %v354
  %v443 = vpack.c.b16 %v357, %v355
  %v444 = vpack.c.b16 %v360, %v358
  %v445 = vpack.c.b16 %v361, %v359
  %v446 = vpack.c.b16 %v364, %v362
  %v447 = vpack.c.b16 %v365, %v363
  %v448 = vpack.c.b16 %v368, %v366
  %v449 = vpack.c.b16 %v369, %v367
  %v450 = vpack.c.b16 %v372, %v370
  %v451 = vpack.c.b16 %v373, %v371
  %v452 = vpack.c.b16 %v376, %v374
  %v453 = vpack.c.b16 %v377, %v375
  %v454 = vpack.c.b16 %v380, %v378
  %v455 = vpack.c.b16 %v381, %v379
  %v456 = vpack.c.b16 %v384, %v382
  %v457 = vpack.c.b16 %v385, %v383
  %v458 = vpack.c.b16 %v388, %v386
  %v459 = vpack.c.b16 %v389, %v387
  %v460 = vpack.c.b16 %v392, %v390
  %v461 = vpack.c.b16 %v393, %v391
  %v462 = vpack.c.b16 %v396, %v394
  %v463 = vpack.c.b16 %v397, %v395
  %v464 = vpack.c.b16 %v400, %v398
  %v465 = vpack.c.b16 %v401, %v399
  %530 = vmatprep.subr.bf16.mxu0 %v403
  %531 = vmatpush1.bf16.msra.mxu0 %v402
  %532 = vmatprep.subr.bf16.mxu0 %v405
  %533 = vmatpush1.bf16.msra.mxu0 %v404
  %534 = vmatprep.subr.bf16.mxu0 %v407
  %535 = vmatpush1.bf16.msra.mxu0 %v406
  %536 = vmatprep.subr.bf16.mxu0 %v409
  %537 = vmatpush1.bf16.msra.mxu0 %v408
  %538 = vmatprep.subr.bf16.mxu0 %v411
  %539 = vmatpush1.bf16.msra.mxu0 %v410
  %540 = vmatprep.subr.bf16.mxu0 %v413
  %541 = vmatpush1.bf16.msra.mxu0 %v412
  %542 = vmatprep.subr.bf16.mxu0 %v415
  %543 = vmatpush1.bf16.msra.mxu0 %v414
  %544 = vmatprep.subr.bf16.mxu0 %v417
  %545 = vmatpush1.bf16.msra.mxu0 %v416
  %546 = vmatprep.subr.bf16.mxu0 %v419
  %547 = vmatpush1.bf16.msra.mxu0 %v418
  %548 = vmatprep.subr.bf16.mxu0 %v421
  %549 = vmatpush1.bf16.msra.mxu0 %v420
  %550 = vmatprep.subr.bf16.mxu0 %v423
  %551 = vmatpush1.bf16.msra.mxu0 %v422
  %552 = vmatprep.subr.bf16.mxu0 %v425
  %553 = vmatpush1.bf16.msra.mxu0 %v424
  %554 = vmatprep.subr.bf16.mxu0 %v427
  %555 = vmatpush1.bf16.msra.mxu0 %v426
  %556 = vmatprep.subr.bf16.mxu0 %v429
  %557 = vmatpush1.bf16.msra.mxu0 %v428
  %558 = vmatprep.subr.bf16.mxu0 %v431
  %559 = vmatpush1.bf16.msra.mxu0 %v430
  %560 = vmatprep.subr.bf16.mxu0 %v433
  %561 = vmatpush1.bf16.msra.mxu0 %v432
  %562 = vmatprep.mubr.bf16.mxu0 %v171
  %563 = vmatmul.mubr.bf16.gmra.mrb[0].mxu0 %v170
  %v564 = vpop.f32.mrb[0].mxu0
  %v565 = vadd.f32 %v103, %v564
  %v566 = vpop.f32.mrb[0].mxu0
  %v567 = vadd.f32 %v107, %v566
  %v568 = vpop.f32.mrb[0].mxu0
  %v569 = vadd.f32 %v103, %v568
  %v570 = vpop.f32.mrb[0].mxu0
  %v571 = vadd.f32 %v107, %v570
  %572 = vmatprep.mubr.bf16.mxu0 %v175
  %573 = vmatmul.mubr.bf16.gmra.mrb[0].mxu0 %v174
  %v574 = vpop.f32.mrb[0].mxu0
  %v575 = vadd.f32 %v103, %v574
  %v576 = vpop.f32.mrb[0].mxu0
  %v577 = vadd.f32 %v107, %v576
  %v578 = vpop.f32.mrb[0].mxu0
  %v579 = vadd.f32 %v103, %v578
  %v580 = vpop.f32.mrb[0].mxu0
  %v581 = vadd.f32 %v107, %v580
  %582 = vmatprep.mubr.bf16.mxu0 %v179
  %583 = vmatmul.mubr.bf16.gmra.mrb[0].mxu0 %v178
  %v584 = vpop.f32.mrb[0].mxu0
  %v585 = vadd.f32 %v103, %v584
  %v586 = vpop.f32.mrb[0].mxu0
  %v587 = vadd.f32 %v107, %v586
  %v588 = vpop.f32.mrb[0].mxu0
  %v589 = vadd.f32 %v103, %v588
  %v590 = vpop.f32.mrb[0].mxu0
  %v591 = vadd.f32 %v107, %v590
  %592 = vmatprep.mubr.bf16.mxu0 %v183
  %593 = vmatmul.mubr.bf16.gmra.mrb[0].mxu0 %v182
  %v594 = vpop.f32.mrb[0].mxu0
  %v595 = vadd.f32 %v103, %v594
  %v596 = vpop.f32.mrb[0].mxu0
  %v597 = vadd.f32 %v107, %v596
  %v598 = vpop.f32.mrb[0].mxu0
  %v599 = vadd.f32 %v103, %v598
  %v600 = vpop.f32.mrb[0].mxu0
  %v601 = vadd.f32 %v107, %v600
  %602 = vmatprep.mubr.bf16.mxu0 %v187
  %603 = vmatmul.mubr.bf16.gmra.mrb[0].mxu0 %v186
  %v604 = vpop.f32.mrb[0].mxu0
  %v605 = vadd.f32 %v103, %v604
  %v606 = vpop.f32.mrb[0].mxu0
  %v607 = vadd.f32 %v107, %v606
  %v608 = vpop.f32.mrb[0].mxu0
  %v609 = vadd.f32 %v103, %v608
  %v610 = vpop.f32.mrb[0].mxu0
  %v611 = vadd.f32 %v107, %v610
  %612 = vdwg.mxu0
  %613 = vmatprep.subr.bf16.mxu0 %v435
  %614 = vmatpush1.bf16.msra.mxu0 %v434
  %615 = vmatprep.subr.bf16.mxu0 %v437
  %616 = vmatpush1.bf16.msra.mxu0 %v436
  %617 = vmatprep.subr.bf16.mxu0 %v439
  %618 = vmatpush1.bf16.msra.mxu0 %v438
  %619 = vmatprep.subr.bf16.mxu0 %v441
  %620 = vmatpush1.bf16.msra.mxu0 %v440
  %621 = vmatprep.subr.bf16.mxu0 %v443
  %622 = vmatpush1.bf16.msra.mxu0 %v442
  %623 = vmatprep.subr.bf16.mxu0 %v445
  %624 = vmatpush1.bf16.msra.mxu0 %v444
  %625 = vmatprep.subr.bf16.mxu0 %v447
  %626 = vmatpush1.bf16.msra.mxu0 %v446
  %627 = vmatprep.subr.bf16.mxu0 %v449
  %628 = vmatpush1.bf16.msra.mxu0 %v448
  %629 = vmatprep.subr.bf16.mxu0 %v451
  %630 = vmatpush1.bf16.msra.mxu0 %v450
  %631 = vmatprep.subr.bf16.mxu0 %v453
  %632 = vmatpush1.bf16.msra.mxu0 %v452
  %633 = vmatprep.subr.bf16.mxu0 %v455
  %634 = vmatpush1.bf16.msra.mxu0 %v454
  %635 = vmatprep.subr.bf16.mxu0 %v457
  %636 = vmatpush1.bf16.msra.mxu0 %v456
  %637 = vmatprep.subr.bf16.mxu0 %v459
  %638 = vmatpush1.bf16.msra.mxu0 %v458
  %639 = vmatprep.subr.bf16.mxu0 %v461
  %640 = vmatpush1.bf16.msra.mxu0 %v460
  %641 = vmatprep.subr.bf16.mxu0 %v463
  %642 = vmatpush1.bf16.msra.mxu0 %v462
  %643 = vmatprep.subr.bf16.mxu0 %v465
  %644 = vmatpush1.bf16.msra.mxu0 %v464
  %645 = vmatprep.mubr.bf16.mxu0 %v173
  %646 = vmatmul.mubr.bf16.gmra.mrb[0].mxu0 %v172
  %v647 = vpop.f32.mrb[0].mxu0
  %v648 = vadd.f32 %v565, %v647
  %v649 = vpop.f32.mrb[0].mxu0
  %v650 = vadd.f32 %v567, %v649
  %v651 = vpop.f32.mrb[0].mxu0
  %v652 = vadd.f32 %v569, %v651
  %v653 = vpop.f32.mrb[0].mxu0
  %v654 = vadd.f32 %v571, %v653
  %655 = vmatprep.mubr.bf16.mxu0 %v177
  %656 = vmatmul.mubr.bf16.gmra.mrb[0].mxu0 %v176
  %v657 = vpop.f32.mrb[0].mxu0
  %v658 = vadd.f32 %v575, %v657
  %v659 = vpop.f32.mrb[0].mxu0
  %v660 = vadd.f32 %v577, %v659
  %v661 = vpop.f32.mrb[0].mxu0
  %v662 = vadd.f32 %v579, %v661
  %v663 = vpop.f32.mrb[0].mxu0
  %v664 = vadd.f32 %v581, %v663
  %665 = vmatprep.mubr.bf16.mxu0 %v181
  %666 = vmatmul.mubr.bf16.gmra.mrb[0].mxu0 %v180
  %v667 = vpop.f32.mrb[0].mxu0
  %v668 = vadd.f32 %v585, %v667
  %v669 = vpop.f32.mrb[0].mxu0
  %v670 = vadd.f32 %v587, %v669
  %v671 = vpop.f32.mrb[0].mxu0
  %v672 = vadd.f32 %v589, %v671
  %v673 = vpop.f32.mrb[0].mxu0
  %v674 = vadd.f32 %v591, %v673
  %675 = vmatprep.mubr.bf16.mxu0 %v185
  %676 = vmatmul.mubr.bf16.gmra.mrb[0].mxu0 %v184
  %v677 = vpop.f32.mrb[0].mxu0
  %v678 = vadd.f32 %v595, %v677
  %v679 = vpop.f32.mrb[0].mxu0
  %v680 = vadd.f32 %v597, %v679
  %v681 = vpop.f32.mrb[0].mxu0
  %v682 = vadd.f32 %v599, %v681
  %v683 = vpop.f32.mrb[0].mxu0
  %v684 = vadd.f32 %v601, %v683
  %685 = vmatprep.mubr.bf16.mxu0 %v189
  %686 = vmatmul.mubr.bf16.gmra.mrb[0].mxu0 %v188
  %v687 = vpop.f32.mrb[0].mxu0
  %v688 = vadd.f32 %v605, %v687
  %v689 = vpop.f32.mrb[0].mxu0
  %v690 = vadd.f32 %v607, %v689
  %v691 = vpop.f32.mrb[0].mxu0
  %v692 = vadd.f32 %v609, %v691
  %v693 = vpop.f32.mrb[0].mxu0
  %v694 = vadd.f32 %v611, %v693
  %695 = vdwg.mxu0
  %v696 = vmax.f32 %v648, 0.0
  %v697 = vmax.f32 %v650, 0.0
  %v698 = vmax.f32 %v652, 0.0
  %v699 = vmax.f32 %v654, 0.0
  %v700 = vmax.f32 %v658, 0.0
  %v701 = vmax.f32 %v660, 0.0
  %v702 = vmax.f32 %v662, 0.0
  %v703 = vmax.f32 %v664, 0.0
  %v704 = vmax.f32 %v668, 0.0
  %v705 = vmax.f32 %v670, 0.0
  %v706 = vmax.f32 %v672, 0.0
  %v707 = vmax.f32 %v674, 0.0
  %v708 = vmax.f32 %v678, 0.0
  %v709 = vmax.f32 %v680, 0.0
  %v710 = vmax.f32 %v682, 0.0
  %v711 = vmax.f32 %v684, 0.0
  %v712 = vmax.f32 %v688, 0.0
  %v713 = vmax.f32 %v690, 0.0
  %v714 = vmax.f32 %v692, 0.0
  %v715 = vmax.f32 %v694, 0.0
  %v716 = vpack.c.bf16 %v698, %v696
  %v717 = vpack.c.bf16 %v699, %v697
  %v718 = vpack.c.bf16 %v702, %v700
  %v719 = vpack.c.bf16 %v703, %v701
  %v720 = vpack.c.bf16 %v706, %v704
  %v721 = vpack.c.bf16 %v707, %v705
  %v722 = vpack.c.bf16 %v710, %v708
  %v723 = vpack.c.bf16 %v711, %v709
  %v724 = vpack.c.bf16 %v714, %v712
  %v725 = vpack.c.bf16 %v715, %v713
  %v736 = vunpack.c.l.b16 %v716
  %v737 = vunpack.c.l.b16 %v717
  %v738 = vunpack.c.h.b16 %v716
  %v739 = vunpack.c.h.b16 %v717
  %v740 = vunpack.c.l.b16 %v718
  %v741 = vunpack.c.l.b16 %v719
  %v742 = vunpack.c.h.b16 %v718
  %v743 = vunpack.c.h.b16 %v719
  %v744 = vunpack.c.l.b16 %v720
  %v745 = vunpack.c.l.b16 %v721
  %v746 = vunpack.c.h.b16 %v720
  %v747 = vunpack.c.h.b16 %v721
  %v748 = vunpack.c.l.b16 %v722
  %v749 = vunpack.c.l.b16 %v723
  %v750 = vunpack.c.h.b16 %v722
  %v751 = vunpack.c.h.b16 %v723
  %v752 = vunpack.c.l.b16 %v724
  %v753 = vunpack.c.l.b16 %v725
  %v754 = vunpack.c.h.b16 %v724
  %v755 = vunpack.c.h.b16 %v725
  %v756 = vpack.c.b16 %v737, %v736
  %v757 = vpack.c.b16 %v739, %v738
  %v758 = vpack.c.b16 %v741, %v740
  %v759 = vpack.c.b16 %v743, %v742
  %v760 = vpack.c.b16 %v745, %v744
  %v761 = vpack.c.b16 %v747, %v746
  %v762 = vpack.c.b16 %v749, %v748
  %v763 = vpack.c.b16 %v751, %v750
  %v764 = vpack.c.b16 %v753, %v752
  %v765 = vpack.c.b16 %v755, %v754
  %776 = vst [vmem:[%s3] sm:$0xff] %v756
  %777 = vst [vmem:[%s3 + $0x8] sm:$0xff] %v757
  %778 = vst [vmem:[%s3 + $0x10] sm:$0xff] %v758
  %779 = vst [vmem:[%s3 + $0x18] sm:$0xff] %v759
  %780 = vst [vmem:[%s3 + $0x20] sm:$0xff] %v760
  %781 = vst [vmem:[%s3 + $0x28] sm:$0xff] %v761
  %782 = vst [vmem:[%s3 + $0x30] sm:$0xff] %v762
  %783 = vst [vmem:[%s3 + $0x38] sm:$0xff] %v763
  %784 = vst [vmem:[%s3 + $0x40] sm:$0xff] %v764
  %785 = vst [vmem:[%s3 + $0x48] sm:$0xff] %v765
  // Predicated region
  $region14: #{autoencoder_forward.11} parent=0 // pred_check
    _
  $region15: #{autoencoder_forward.11} parent=0 // pred_check_branch
    %787 = sbr.rel (0) target = $region17
  $region16: #{autoencoder_forward.11} parent=0 // pred_region
    _
  $region17: #{autoencoder_forward.11} parent=0 // pred_fallthru
    _
  // Predicated region
  $region18: #{autoencoder_forward.11} parent=0 // pred_check
    _
  $region19: #{autoencoder_forward.11} parent=0 // pred_check_branch
    %789 = sbr.rel (0) target = $region21
  $region20: #{autoencoder_forward.11} parent=0 // pred_region
    _
  $region21: #{autoencoder_forward.11} parent=0 // pred_fallthru
    _

// kernel: autoencoder_forward.12
$region0: #{autoencoder_forward.12}
  #allocation0 [shape = 'u32[]', space=smem, size = 0x4, offset = 0x4, fixed_abs, tag = 'smem constant byte address 0x4 - core index']
  #allocation1 [shape = 'u32[144,128]{1,0:T(1,128)}', space=vmem, size = 0x12000, scoped, tag = 'internal scratch']
  %s0 = inlined_call_operand.vmem [shape: bf16[288,256], index: 0, kind: input, shape index: {}]
  %s1 = inlined_call_operand.vmem [shape: bf16[256,128], index: 1, kind: input, shape index: {}]
  %s2 = inlined_call_operand.vmem [shape: f32[1,128], index: 2, kind: input, shape index: {}]
  %s3 = inlined_call_operand.vmem [shape: bf16[288,128], index: 3, kind: output, shape index: {}]
  %s4 = sld [smem:[#allocation0]]
  $region22: #{autoencoder_forward.12} parent=0
    _
  %s6 = ssub.s32 1, %s4
  %s7 = scalar_select 0, %s6, %s4
  // Predicated region
  $region2: #{autoencoder_forward.12} parent=0 // pred_check
    _
  $region3: #{autoencoder_forward.12} parent=0 // pred_check_branch
    %9 = sbr.rel (0) target = $region5
  $region4: #{autoencoder_forward.12} parent=0 // pred_region
    _
  $region5: #{autoencoder_forward.12} parent=0 // pred_fallthru
    _
  // Predicated region
  $region6: #{autoencoder_forward.12} parent=0 // pred_check
    _
  $region7: #{autoencoder_forward.12} parent=0 // pred_check_branch
    %11 = sbr.rel (0) target = $region9
  $region8: #{autoencoder_forward.12} parent=0 // pred_region
    _
  $region9: #{autoencoder_forward.12} parent=0 // pred_fallthru
    _
  // Predicated region
  $region10: #{autoencoder_forward.12} parent=0 // pred_check
    _
  $region11: #{autoencoder_forward.12} parent=0 // pred_check_branch
    %13 = sbr.rel (0) target = $region13
  $region12: #{autoencoder_forward.12} parent=0 // pred_region
    _
  $region13: #{autoencoder_forward.12} parent=0 // pred_fallthru
    _
  %v15 = vld [vmem:[%s1] sm:$0xf]
  %v16 = vld [vmem:[%s1 + $0x4] sm:$0xf]
  %v17 = vld [vmem:[%s1 + $0x8] sm:$0xf]
  %v18 = vld [vmem:[%s1 + $0xc] sm:$0xf]
  %v19 = vld [vmem:[%s1 + $0x10] sm:$0xf]
  %v20 = vld [vmem:[%s1 + $0x14] sm:$0xf]
  %v21 = vld [vmem:[%s1 + $0x18] sm:$0xf]
  %v22 = vld [vmem:[%s1 + $0x1c] sm:$0xf]
  %v23 = vld [vmem:[%s1 + $0x20] sm:$0xf]
  %v24 = vld [vmem:[%s1 + $0x24] sm:$0xf]
  %v25 = vld [vmem:[%s1 + $0x28] sm:$0xf]
  %v26 = vld [vmem:[%s1 + $0x2c] sm:$0xf]
  %v27 = vld [vmem:[%s1 + $0x30] sm:$0xf]
  %v28 = vld [vmem:[%s1 + $0x34] sm:$0xf]
  %v29 = vld [vmem:[%s1 + $0x38] sm:$0xf]
  %v30 = vld [vmem:[%s1 + $0x3c] sm:$0xf]
  %v31 = vld [vmem:[%s1 + $0x40] sm:$0xf]
  %v32 = vld [vmem:[%s1 + $0x44] sm:$0xf]
  %v33 = vld [vmem:[%s1 + $0x48] sm:$0xf]
  %v34 = vld [vmem:[%s1 + $0x4c] sm:$0xf]
  %v35 = vld [vmem:[%s1 + $0x50] sm:$0xf]
  %v36 = vld [vmem:[%s1 + $0x54] sm:$0xf]
  %v37 = vld [vmem:[%s1 + $0x58] sm:$0xf]
  %v38 = vld [vmem:[%s1 + $0x5c] sm:$0xf]
  %v39 = vld [vmem:[%s1 + $0x60] sm:$0xf]
  %v40 = vld [vmem:[%s1 + $0x64] sm:$0xf]
  %v41 = vld [vmem:[%s1 + $0x68] sm:$0xf]
  %v42 = vld [vmem:[%s1 + $0x6c] sm:$0xf]
  %v43 = vld [vmem:[%s1 + $0x70] sm:$0xf]
  %v44 = vld [vmem:[%s1 + $0x74] sm:$0xf]
  %v45 = vld [vmem:[%s1 + $0x78] sm:$0xf]
  %v46 = vld [vmem:[%s1 + $0x7c] sm:$0xf]
  %v47 = vld [vmem:[%s0] sm:$0xff]
  %v48 = vld [vmem:[%s0 + $0x8] sm:$0xff]
  %v49 = vld [vmem:[%s0 + $0x10] sm:$0xff]
  %v50 = vld [vmem:[%s0 + $0x18] sm:$0xff]
  %v51 = vld [vmem:[%s0 + $0x20] sm:$0xff]
  %v52 = vld [vmem:[%s0 + $0x28] sm:$0xff]
  %v53 = vld [vmem:[%s0 + $0x30] sm:$0xff]
  %v54 = vld [vmem:[%s0 + $0x38] sm:$0xff]
  %v55 = vld [vmem:[%s0 + $0x40] sm:$0xff]
  %v56 = vld [vmem:[%s0 + $0x48] sm:$0xff]
  %v57 = vld [vmem:[%s0 + $0x50] sm:$0xff]
  %v58 = vld [vmem:[%s0 + $0x58] sm:$0xff]
  %v59 = vld [vmem:[%s0 + $0x60] sm:$0xff]
  %v60 = vld [vmem:[%s0 + $0x68] sm:$0xff]
  %v61 = vld [vmem:[%s0 + $0x70] sm:$0xff]
  %v62 = vld [vmem:[%s0 + $0x78] sm:$0xff]
  %v63 = vld [vmem:[%s0 + $0x80] sm:$0xff]
  %v64 = vld [vmem:[%s0 + $0x88] sm:$0xff]
  %v65 = vld [vmem:[%s0 + $0x90] sm:$0xff]
  %v66 = vld [vmem:[%s0 + $0x98] sm:$0xff]
  %v67 = vld [vmem:[%s0 + $0xa0] sm:$0xff]
  %v68 = vld [vmem:[%s0 + $0xa8] sm:$0xff]
  %v69 = vld [vmem:[%s0 + $0xb0] sm:$0xff]
  %v70 = vld [vmem:[%s0 + $0xb8] sm:$0xff]
  %v71 = vld [vmem:[%s0 + $0xc0] sm:$0xff]
  %v72 = vld [vmem:[%s0 + $0xc8] sm:$0xff]
  %v73 = vld [vmem:[%s0 + $0xd0] sm:$0xff]
  %v74 = vld [vmem:[%s0 + $0xd8] sm:$0xff]
  %v75 = vld [vmem:[%s0 + $0xe0] sm:$0xff]
  %v76 = vld [vmem:[%s0 + $0xe8] sm:$0xff]
  %v77 = vld [vmem:[%s0 + $0xf0] sm:$0xff]
  %v78 = vld [vmem:[%s0 + $0xf8] sm:$0xff]
  %v79 = vld [vmem:[%s0 + $0x100] sm:$0xff]
  %v80 = vld [vmem:[%s0 + $0x108] sm:$0xff]
  %v81 = vld [vmem:[%s0 + $0x110] sm:$0xff]
  %v82 = vld [vmem:[%s0 + $0x118] sm:$0xff]
  %v83 = vld [vmem:[%s2] sm:$0x1]
  %v85 = vlaneseq
  %v86 = vshrl.u32 %v85, 7
  %v87 = vsub.s32 0, %v86
  %v88 = vrot.slane %v83, %v87
  %v126 = vunpack.c.l.b16 %v47
  %v127 = vunpack.c.h.b16 %v47
  %v128 = vunpack.c.l.b16 %v48
  %v129 = vunpack.c.h.b16 %v48
  %v130 = vunpack.c.l.b16 %v49
  %v131 = vunpack.c.h.b16 %v49
  %v132 = vunpack.c.l.b16 %v50
  %v133 = vunpack.c.h.b16 %v50
  %v134 = vunpack.c.l.b16 %v51
  %v135 = vunpack.c.h.b16 %v51
  %v136 = vunpack.c.l.b16 %v52
  %v137 = vunpack.c.h.b16 %v52
  %v138 = vunpack.c.l.b16 %v53
  %v139 = vunpack.c.h.b16 %v53
  %v140 = vunpack.c.l.b16 %v54
  %v141 = vunpack.c.h.b16 %v54
  %v142 = vunpack.c.l.b16 %v55
  %v143 = vunpack.c.h.b16 %v55
  %v144 = vunpack.c.l.b16 %v56
  %v145 = vunpack.c.h.b16 %v56
  %v146 = vunpack.c.l.b16 %v57
  %v147 = vunpack.c.h.b16 %v57
  %v148 = vunpack.c.l.b16 %v58
  %v149 = vunpack.c.h.b16 %v58
  %v150 = vunpack.c.l.b16 %v59
  %v151 = vunpack.c.h.b16 %v59
  %v152 = vunpack.c.l.b16 %v60
  %v153 = vunpack.c.h.b16 %v60
  %v154 = vunpack.c.l.b16 %v61
  %v155 = vunpack.c.h.b16 %v61
  %v156 = vunpack.c.l.b16 %v62
  %v157 = vunpack.c.h.b16 %v62
  %v158 = vunpack.c.l.b16 %v63
  %v159 = vunpack.c.h.b16 %v63
  %v160 = vunpack.c.l.b16 %v64
  %v161 = vunpack.c.h.b16 %v64
  %v162 = vunpack.c.l.b16 %v65
  %v163 = vunpack.c.h.b16 %v65
  %v164 = vunpack.c.l.b16 %v66
  %v165 = vunpack.c.h.b16 %v66
  %v166 = vunpack.c.l.b16 %v67
  %v167 = vunpack.c.h.b16 %v67
  %v168 = vunpack.c.l.b16 %v68
  %v169 = vunpack.c.h.b16 %v68
  %v170 = vunpack.c.l.b16 %v69
  %v171 = vunpack.c.h.b16 %v69
  %v172 = vunpack.c.l.b16 %v70
  %v173 = vunpack.c.h.b16 %v70
  %v174 = vunpack.c.l.b16 %v71
  %v175 = vunpack.c.h.b16 %v71
  %v176 = vunpack.c.l.b16 %v72
  %v177 = vunpack.c.h.b16 %v72
  %v178 = vunpack.c.l.b16 %v73
  %v179 = vunpack.c.h.b16 %v73
  %v180 = vunpack.c.l.b16 %v74
  %v181 = vunpack.c.h.b16 %v74
  %v182 = vunpack.c.l.b16 %v75
  %v183 = vunpack.c.h.b16 %v75
  %v184 = vunpack.c.l.b16 %v76
  %v185 = vunpack.c.h.b16 %v76
  %v186 = vunpack.c.l.b16 %v77
  %v187 = vunpack.c.h.b16 %v77
  %v188 = vunpack.c.l.b16 %v78
  %v189 = vunpack.c.h.b16 %v78
  %v190 = vunpack.c.l.b16 %v79
  %v191 = vunpack.c.h.b16 %v79
  %v192 = vunpack.c.l.b16 %v80
  %v193 = vunpack.c.h.b16 %v80
  %v194 = vunpack.c.l.b16 %v81
  %v195 = vunpack.c.h.b16 %v81
  %v196 = vunpack.c.l.b16 %v82
  %v197 = vunpack.c.h.b16 %v82
  %v198 = vpack.c.b16 %v128, %v126
  %v199 = vpack.c.b16 %v129, %v127
  %v200 = vpack.c.b16 %v132, %v130
  %v201 = vpack.c.b16 %v133, %v131
  %v202 = vpack.c.b16 %v136, %v134
  %v203 = vpack.c.b16 %v137, %v135
  %v204 = vpack.c.b16 %v140, %v138
  %v205 = vpack.c.b16 %v141, %v139
  %v206 = vpack.c.b16 %v144, %v142
  %v207 = vpack.c.b16 %v145, %v143
  %v208 = vpack.c.b16 %v148, %v146
  %v209 = vpack.c.b16 %v149, %v147
  %v210 = vpack.c.b16 %v152, %v150
  %v211 = vpack.c.b16 %v153, %v151
  %v212 = vpack.c.b16 %v156, %v154
  %v213 = vpack.c.b16 %v157, %v155
  %v214 = vpack.c.b16 %v160, %v158
  %v215 = vpack.c.b16 %v161, %v159
  %v216 = vpack.c.b16 %v164, %v162
  %v217 = vpack.c.b16 %v165, %v163
  %v218 = vpack.c.b16 %v168, %v166
  %v219 = vpack.c.b16 %v169, %v167
  %v220 = vpack.c.b16 %v172, %v170
  %v221 = vpack.c.b16 %v173, %v171
  %v222 = vpack.c.b16 %v176, %v174
  %v223 = vpack.c.b16 %v177, %v175
  %v224 = vpack.c.b16 %v180, %v178
  %v225 = vpack.c.b16 %v181, %v179
  %v226 = vpack.c.b16 %v184, %v182
  %v227 = vpack.c.b16 %v185, %v183
  %v228 = vpack.c.b16 %v188, %v186
  %v229 = vpack.c.b16 %v189, %v187
  %v230 = vpack.c.b16 %v192, %v190
  %v231 = vpack.c.b16 %v193, %v191
  %v232 = vpack.c.b16 %v196, %v194
  %v233 = vpack.c.b16 %v197, %v195
  %v302 = vunpack.c.l.b16 %v15
  %v303 = vunpack.c.l.b16 %v16
  %v304 = vunpack.c.l.b16 %v17
  %v305 = vunpack.c.l.b16 %v18
  %v306 = vunpack.c.l.b16 %v19
  %v307 = vunpack.c.l.b16 %v20
  %v308 = vunpack.c.l.b16 %v21
  %v309 = vunpack.c.l.b16 %v22
  %v310 = vunpack.c.l.b16 %v23
  %v311 = vunpack.c.l.b16 %v24
  %v312 = vunpack.c.l.b16 %v25
  %v313 = vunpack.c.l.b16 %v26
  %v314 = vunpack.c.l.b16 %v27
  %v315 = vunpack.c.l.b16 %v28
  %v316 = vunpack.c.l.b16 %v29
  %v317 = vunpack.c.l.b16 %v30
  %v318 = vunpack.c.l.b16 %v31
  %v319 = vunpack.c.l.b16 %v32
  %v320 = vunpack.c.l.b16 %v33
  %v321 = vunpack.c.l.b16 %v34
  %v322 = vunpack.c.l.b16 %v35
  %v323 = vunpack.c.l.b16 %v36
  %v324 = vunpack.c.l.b16 %v37
  %v325 = vunpack.c.l.b16 %v38
  %v326 = vunpack.c.l.b16 %v39
  %v327 = vunpack.c.l.b16 %v40
  %v328 = vunpack.c.l.b16 %v41
  %v329 = vunpack.c.l.b16 %v42
  %v330 = vunpack.c.l.b16 %v43
  %v331 = vunpack.c.l.b16 %v44
  %v332 = vunpack.c.l.b16 %v45
  %v333 = vunpack.c.l.b16 %v46
  %v334 = vpack.c.b16 %v303, %v302
  %v335 = vpack.c.b16 %v305, %v304
  %v336 = vpack.c.b16 %v307, %v306
  %v337 = vpack.c.b16 %v309, %v308
  %v338 = vpack.c.b16 %v311, %v310
  %v339 = vpack.c.b16 %v313, %v312
  %v340 = vpack.c.b16 %v315, %v314
  %v341 = vpack.c.b16 %v317, %v316
  %v342 = vpack.c.b16 %v319, %v318
  %v343 = vpack.c.b16 %v321, %v320
  %v344 = vpack.c.b16 %v323, %v322
  %v345 = vpack.c.b16 %v325, %v324
  %v346 = vpack.c.b16 %v327, %v326
  %v347 = vpack.c.b16 %v329, %v328
  %v348 = vpack.c.b16 %v331, %v330
  %v349 = vpack.c.b16 %v333, %v332
  %366 = vmatprep.subr.bf16.mxu0 0
  %367 = vmatpush1.bf16.msra.mxu0 %v334
  %368 = vmatprep.subr.bf16.mxu0 0
  %369 = vmatpush1.bf16.msra.mxu0 %v335
  %370 = vmatprep.subr.bf16.mxu0 0
  %371 = vmatpush1.bf16.msra.mxu0 %v336
  %372 = vmatprep.subr.bf16.mxu0 0
  %373 = vmatpush1.bf16.msra.mxu0 %v337
  %374 = vmatprep.subr.bf16.mxu0 0
  %375 = vmatpush1.bf16.msra.mxu0 %v338
  %376 = vmatprep.subr.bf16.mxu0 0
  %377 = vmatpush1.bf16.msra.mxu0 %v339
  %378 = vmatprep.subr.bf16.mxu0 0
  %379 = vmatpush1.bf16.msra.mxu0 %v340
  %380 = vmatprep.subr.bf16.mxu0 0
  %381 = vmatpush1.bf16.msra.mxu0 %v341
  %382 = vmatprep.subr.bf16.mxu0 0
  %383 = vmatpush1.bf16.msra.mxu0 %v342
  %384 = vmatprep.subr.bf16.mxu0 0
  %385 = vmatpush1.bf16.msra.mxu0 %v343
  %386 = vmatprep.subr.bf16.mxu0 0
  %387 = vmatpush1.bf16.msra.mxu0 %v344
  %388 = vmatprep.subr.bf16.mxu0 0
  %389 = vmatpush1.bf16.msra.mxu0 %v345
  %390 = vmatprep.subr.bf16.mxu0 0
  %391 = vmatpush1.bf16.msra.mxu0 %v346
  %392 = vmatprep.subr.bf16.mxu0 0
  %393 = vmatpush1.bf16.msra.mxu0 %v347
  %394 = vmatprep.subr.bf16.mxu0 0
  %395 = vmatpush1.bf16.msra.mxu0 %v348
  %396 = vmatprep.subr.bf16.mxu0 0
  %397 = vmatpush1.bf16.msra.mxu0 %v349
  %398 = vmatprep.mubr.bf16.mxu0 %v199
  %399 = vmatmul.mubr.bf16.gmra.mrb[0].mxu0 %v198
  %v400 = vpop.f32.mrb[0].mxu0
  %v401 = vadd.f32 %v88, %v400
  %v402 = vpop.f32.mrb[0].mxu0
  %v403 = vpop.f32.mrb[0].mxu0
  %v404 = vadd.f32 %v88, %v403
  %v405 = vpop.f32.mrb[0].mxu0
  %406 = vmatprep.mubr.bf16.mxu0 %v201
  %407 = vmatmul.mubr.bf16.gmra.mrb[0].mxu0 %v200
  %v408 = vpop.f32.mrb[0].mxu0
  %v409 = vadd.f32 %v88, %v408
  %v410 = vpop.f32.mrb[0].mxu0
  %v411 = vpop.f32.mrb[0].mxu0
  %v412 = vadd.f32 %v88, %v411
  %v413 = vpop.f32.mrb[0].mxu0
  %414 = vmatprep.mubr.bf16.mxu0 %v203
  %415 = vmatmul.mubr.bf16.gmra.mrb[0].mxu0 %v202
  %v416 = vpop.f32.mrb[0].mxu0
  %v417 = vadd.f32 %v88, %v416
  %v418 = vpop.f32.mrb[0].mxu0
  %v419 = vpop.f32.mrb[0].mxu0
  %v420 = vadd.f32 %v88, %v419
  %v421 = vpop.f32.mrb[0].mxu0
  %422 = vmatprep.mubr.bf16.mxu0 %v205
  %423 = vmatmul.mubr.bf16.gmra.mrb[0].mxu0 %v204
  %v424 = vpop.f32.mrb[0].mxu0
  %v425 = vadd.f32 %v88, %v424
  %v426 = vpop.f32.mrb[0].mxu0
  %v427 = vpop.f32.mrb[0].mxu0
  %v428 = vadd.f32 %v88, %v427
  %v429 = vpop.f32.mrb[0].mxu0
  %430 = vmatprep.mubr.bf16.mxu0 %v207
  %431 = vmatmul.mubr.bf16.gmra.mrb[0].mxu0 %v206
  %v432 = vpop.f32.mrb[0].mxu0
  %v433 = vadd.f32 %v88, %v432
  %v434 = vpop.f32.mrb[0].mxu0
  %v435 = vpop.f32.mrb[0].mxu0
  %v436 = vadd.f32 %v88, %v435
  %v437 = vpop.f32.mrb[0].mxu0
  %438 = vmatprep.mubr.bf16.mxu0 %v209
  %439 = vmatmul.mubr.bf16.gmra.mrb[0].mxu0 %v208
  %v440 = vpop.f32.mrb[0].mxu0
  %v441 = vadd.f32 %v88, %v440
  %v442 = vpop.f32.mrb[0].mxu0
  %v443 = vpop.f32.mrb[0].mxu0
  %v444 = vadd.f32 %v88, %v443
  %v445 = vpop.f32.mrb[0].mxu0
  %446 = vmatprep.mubr.bf16.mxu0 %v211
  %447 = vmatmul.mubr.bf16.gmra.mrb[0].mxu0 %v210
  %v448 = vpop.f32.mrb[0].mxu0
  %v449 = vadd.f32 %v88, %v448
  %v450 = vpop.f32.mrb[0].mxu0
  %v451 = vpop.f32.mrb[0].mxu0
  %v452 = vadd.f32 %v88, %v451
  %v453 = vpop.f32.mrb[0].mxu0
  %454 = vmatprep.mubr.bf16.mxu0 %v213
  %455 = vmatmul.mubr.bf16.gmra.mrb[0].mxu0 %v212
  %v456 = vpop.f32.mrb[0].mxu0
  %v457 = vadd.f32 %v88, %v456
  %v458 = vpop.f32.mrb[0].mxu0
  %v459 = vpop.f32.mrb[0].mxu0
  %v460 = vadd.f32 %v88, %v459
  %v461 = vpop.f32.mrb[0].mxu0
  %462 = vmatprep.mubr.bf16.mxu0 %v215
  %463 = vmatmul.mubr.bf16.gmra.mrb[0].mxu0 %v214
  %v464 = vpop.f32.mrb[0].mxu0
  %v465 = vadd.f32 %v88, %v464
  %v466 = vpop.f32.mrb[0].mxu0
  %v467 = vpop.f32.mrb[0].mxu0
  %v468 = vadd.f32 %v88, %v467
  %v469 = vpop.f32.mrb[0].mxu0
  %470 = vmatprep.mubr.bf16.mxu0 %v217
  %471 = vmatmul.mubr.bf16.gmra.mrb[0].mxu0 %v216
  %v472 = vpop.f32.mrb[0].mxu0
  %v473 = vadd.f32 %v88, %v472
  %v474 = vpop.f32.mrb[0].mxu0
  %v475 = vpop.f32.mrb[0].mxu0
  %v476 = vadd.f32 %v88, %v475
  %v477 = vpop.f32.mrb[0].mxu0
  %478 = vmatprep.mubr.bf16.mxu0 %v219
  %479 = vmatmul.mubr.bf16.gmra.mrb[0].mxu0 %v218
  %v480 = vpop.f32.mrb[0].mxu0
  %v481 = vadd.f32 %v88, %v480
  %v482 = vpop.f32.mrb[0].mxu0
  %v483 = vpop.f32.mrb[0].mxu0
  %v484 = vadd.f32 %v88, %v483
  %v485 = vpop.f32.mrb[0].mxu0
  %486 = vmatprep.mubr.bf16.mxu0 %v221
  %487 = vmatmul.mubr.bf16.gmra.mrb[0].mxu0 %v220
  %v488 = vpop.f32.mrb[0].mxu0
  %v489 = vadd.f32 %v88, %v488
  %v490 = vpop.f32.mrb[0].mxu0
  %v491 = vpop.f32.mrb[0].mxu0
  %v492 = vadd.f32 %v88, %v491
  %v493 = vpop.f32.mrb[0].mxu0
  %494 = vmatprep.mubr.bf16.mxu0 %v223
  %495 = vmatmul.mubr.bf16.gmra.mrb[0].mxu0 %v222
  %v496 = vpop.f32.mrb[0].mxu0
  %v497 = vadd.f32 %v88, %v496
  %v498 = vpop.f32.mrb[0].mxu0
  %v499 = vpop.f32.mrb[0].mxu0
  %v500 = vadd.f32 %v88, %v499
  %v501 = vpop.f32.mrb[0].mxu0
  %502 = vmatprep.mubr.bf16.mxu0 %v225
  %503 = vmatmul.mubr.bf16.gmra.mrb[0].mxu0 %v224
  %v504 = vpop.f32.mrb[0].mxu0
  %v505 = vadd.f32 %v88, %v504
  %v506 = vpop.f32.mrb[0].mxu0
  %v507 = vpop.f32.mrb[0].mxu0
  %v508 = vadd.f32 %v88, %v507
  %v509 = vpop.f32.mrb[0].mxu0
  %510 = vmatprep.mubr.bf16.mxu0 %v227
  %511 = vmatmul.mubr.bf16.gmra.mrb[0].mxu0 %v226
  %v512 = vpop.f32.mrb[0].mxu0
  %v513 = vadd.f32 %v88, %v512
  %v514 = vpop.f32.mrb[0].mxu0
  %v515 = vpop.f32.mrb[0].mxu0
  %v516 = vadd.f32 %v88, %v515
  %v517 = vpop.f32.mrb[0].mxu0
  %518 = vmatprep.mubr.bf16.mxu0 %v229
  %519 = vmatmul.mubr.bf16.gmra.mrb[0].mxu0 %v228
  %v520 = vpop.f32.mrb[0].mxu0
  %v521 = vadd.f32 %v88, %v520
  %v522 = vpop.f32.mrb[0].mxu0
  %v523 = vpop.f32.mrb[0].mxu0
  %v524 = vadd.f32 %v88, %v523
  %v525 = vpop.f32.mrb[0].mxu0
  %526 = vmatprep.mubr.bf16.mxu0 %v231
  %527 = vmatmul.mubr.bf16.gmra.mrb[0].mxu0 %v230
  %v528 = vpop.f32.mrb[0].mxu0
  %v529 = vadd.f32 %v88, %v528
  %v530 = vpop.f32.mrb[0].mxu0
  %v531 = vpop.f32.mrb[0].mxu0
  %v532 = vadd.f32 %v88, %v531
  %v533 = vpop.f32.mrb[0].mxu0
  %534 = vmatprep.mubr.bf16.mxu0 %v233
  %535 = vmatmul.mubr.bf16.gmra.mrb[0].mxu0 %v232
  %v536 = vpop.f32.mrb[0].mxu0
  %v537 = vadd.f32 %v88, %v536
  %v538 = vpop.f32.mrb[0].mxu0
  %v539 = vpop.f32.mrb[0].mxu0
  %v540 = vadd.f32 %v88, %v539
  %v541 = vpop.f32.mrb[0].mxu0
  %542 = vdwg.mxu0
  %v543 = vmax.f32 %v401, 0.0
  %v544 = vmax.f32 %v404, 0.0
  %v545 = vmax.f32 %v409, 0.0
  %v546 = vmax.f32 %v412, 0.0
  %v547 = vmax.f32 %v417, 0.0
  %v548 = vmax.f32 %v420, 0.0
  %v549 = vmax.f32 %v425, 0.0
  %v550 = vmax.f32 %v428, 0.0
  %v551 = vmax.f32 %v433, 0.0
  %v552 = vmax.f32 %v436, 0.0
  %v553 = vmax.f32 %v441, 0.0
  %v554 = vmax.f32 %v444, 0.0
  %v555 = vmax.f32 %v449, 0.0
  %v556 = vmax.f32 %v452, 0.0
  %v557 = vmax.f32 %v457, 0.0
  %v558 = vmax.f32 %v460, 0.0
  %v559 = vmax.f32 %v465, 0.0
  %v560 = vmax.f32 %v468, 0.0
  %v561 = vmax.f32 %v473, 0.0
  %v562 = vmax.f32 %v476, 0.0
  %v563 = vmax.f32 %v481, 0.0
  %v564 = vmax.f32 %v484, 0.0
  %v565 = vmax.f32 %v489, 0.0
  %v566 = vmax.f32 %v492, 0.0
  %v567 = vmax.f32 %v497, 0.0
  %v568 = vmax.f32 %v500, 0.0
  %v569 = vmax.f32 %v505, 0.0
  %v570 = vmax.f32 %v508, 0.0
  %v571 = vmax.f32 %v513, 0.0
  %v572 = vmax.f32 %v516, 0.0
  %v573 = vmax.f32 %v521, 0.0
  %v574 = vmax.f32 %v524, 0.0
  %v575 = vmax.f32 %v529, 0.0
  %v576 = vmax.f32 %v532, 0.0
  %v577 = vmax.f32 %v537, 0.0
  %v578 = vmax.f32 %v540, 0.0
  %v579 = vpack.c.bf16 %v544, %v543
  %v580 = vpack.c.bf16 %v546, %v545
  %v581 = vpack.c.bf16 %v548, %v547
  %v582 = vpack.c.bf16 %v550, %v549
  %v583 = vpack.c.bf16 %v552, %v551
  %v584 = vpack.c.bf16 %v554, %v553
  %v585 = vpack.c.bf16 %v556, %v555
  %v586 = vpack.c.bf16 %v558, %v557
  %v587 = vpack.c.bf16 %v560, %v559
  %v588 = vpack.c.bf16 %v562, %v561
  %v589 = vpack.c.bf16 %v564, %v563
  %v590 = vpack.c.bf16 %v566, %v565
  %v591 = vpack.c.bf16 %v568, %v567
  %v592 = vpack.c.bf16 %v570, %v569
  %v593 = vpack.c.bf16 %v572, %v571
  %v594 = vpack.c.bf16 %v574, %v573
  %v595 = vpack.c.bf16 %v576, %v575
  %v596 = vpack.c.bf16 %v578, %v577
  %v615 = vunpack.c.l.b16 %v579
  %v616 = vunpack.c.h.b16 %v579
  %v617 = vunpack.c.l.b16 %v580
  %v618 = vunpack.c.h.b16 %v580
  %v619 = vunpack.c.l.b16 %v581
  %v620 = vunpack.c.h.b16 %v581
  %v621 = vunpack.c.l.b16 %v582
  %v622 = vunpack.c.h.b16 %v582
  %v623 = vunpack.c.l.b16 %v583
  %v624 = vunpack.c.h.b16 %v583
  %v625 = vunpack.c.l.b16 %v584
  %v626 = vunpack.c.h.b16 %v584
  %v627 = vunpack.c.l.b16 %v585
  %v628 = vunpack.c.h.b16 %v585
  %v629 = vunpack.c.l.b16 %v586
  %v630 = vunpack.c.h.b16 %v586
  %v631 = vunpack.c.l.b16 %v587
  %v632 = vunpack.c.h.b16 %v587
  %v633 = vunpack.c.l.b16 %v588
  %v634 = vunpack.c.h.b16 %v588
  %v635 = vunpack.c.l.b16 %v589
  %v636 = vunpack.c.h.b16 %v589
  %v637 = vunpack.c.l.b16 %v590
  %v638 = vunpack.c.h.b16 %v590
  %v639 = vunpack.c.l.b16 %v591
  %v640 = vunpack.c.h.b16 %v591
  %v641 = vunpack.c.l.b16 %v592
  %v642 = vunpack.c.h.b16 %v592
  %v643 = vunpack.c.l.b16 %v593
  %v644 = vunpack.c.h.b16 %v593
  %v645 = vunpack.c.l.b16 %v594
  %v646 = vunpack.c.h.b16 %v594
  %v647 = vunpack.c.l.b16 %v595
  %v648 = vunpack.c.h.b16 %v595
  %v649 = vunpack.c.l.b16 %v596
  %v650 = vunpack.c.h.b16 %v596
  %v651 = vpack.c.b16 %v615, %v615
  %v652 = vpack.c.b16 %v616, %v616
  %v653 = vpack.c.b16 %v617, %v617
  %v654 = vpack.c.b16 %v618, %v618
  %v655 = vpack.c.b16 %v619, %v619
  %v656 = vpack.c.b16 %v620, %v620
  %v657 = vpack.c.b16 %v621, %v621
  %v658 = vpack.c.b16 %v622, %v622
  %v659 = vpack.c.b16 %v623, %v623
  %v660 = vpack.c.b16 %v624, %v624
  %v661 = vpack.c.b16 %v625, %v625
  %v662 = vpack.c.b16 %v626, %v626
  %v663 = vpack.c.b16 %v627, %v627
  %v664 = vpack.c.b16 %v628, %v628
  %v665 = vpack.c.b16 %v629, %v629
  %v666 = vpack.c.b16 %v630, %v630
  %v667 = vpack.c.b16 %v631, %v631
  %v668 = vpack.c.b16 %v632, %v632
  %v669 = vpack.c.b16 %v633, %v633
  %v670 = vpack.c.b16 %v634, %v634
  %v671 = vpack.c.b16 %v635, %v635
  %v672 = vpack.c.b16 %v636, %v636
  %v673 = vpack.c.b16 %v637, %v637
  %v674 = vpack.c.b16 %v638, %v638
  %v675 = vpack.c.b16 %v639, %v639
  %v676 = vpack.c.b16 %v640, %v640
  %v677 = vpack.c.b16 %v641, %v641
  %v678 = vpack.c.b16 %v642, %v642
  %v679 = vpack.c.b16 %v643, %v643
  %v680 = vpack.c.b16 %v644, %v644
  %v681 = vpack.c.b16 %v645, %v645
  %v682 = vpack.c.b16 %v646, %v646
  %v683 = vpack.c.b16 %v647, %v647
  %v684 = vpack.c.b16 %v648, %v648
  %v685 = vpack.c.b16 %v649, %v649
  %v686 = vpack.c.b16 %v650, %v650
  %723 = vst [vmem:[%s3] sm:$0xf] %v651
  %724 = vst [vmem:[%s3 + $0x4] sm:$0xf] %v652
  %725 = vst [vmem:[%s3 + $0x8] sm:$0xf] %v653
  %726 = vst [vmem:[%s3 + $0xc] sm:$0xf] %v654
  %727 = vst [vmem:[%s3 + $0x10] sm:$0xf] %v655
  %728 = vst [vmem:[%s3 + $0x14] sm:$0xf] %v656
  %729 = vst [vmem:[%s3 + $0x18] sm:$0xf] %v657
  %730 = vst [vmem:[%s3 + $0x1c] sm:$0xf] %v658
  %731 = vst [vmem:[%s3 + $0x20] sm:$0xf] %v659
  %732 = vst [vmem:[%s3 + $0x24] sm:$0xf] %v660
  %733 = vst [vmem:[%s3 + $0x28] sm:$0xf] %v661
  %734 = vst [vmem:[%s3 + $0x2c] sm:$0xf] %v662
  %735 = vst [vmem:[%s3 + $0x30] sm:$0xf] %v663
  %736 = vst [vmem:[%s3 + $0x34] sm:$0xf] %v664
  %737 = vst [vmem:[%s3 + $0x38] sm:$0xf] %v665
  %738 = vst [vmem:[%s3 + $0x3c] sm:$0xf] %v666
  %739 = vst [vmem:[%s3 + $0x40] sm:$0xf] %v667
  %740 = vst [vmem:[%s3 + $0x44] sm:$0xf] %v668
  %741 = vst [vmem:[%s3 + $0x48] sm:$0xf] %v669
  %742 = vst [vmem:[%s3 + $0x4c] sm:$0xf] %v670
  %743 = vst [vmem:[%s3 + $0x50] sm:$0xf] %v671
  %744 = vst [vmem:[%s3 + $0x54] sm:$0xf] %v672
  %745 = vst [vmem:[%s3 + $0x58] sm:$0xf] %v673
  %746 = vst [vmem:[%s3 + $0x5c] sm:$0xf] %v674
  %747 = vst [vmem:[%s3 + $0x60] sm:$0xf] %v675
  %748 = vst [vmem:[%s3 + $0x64] sm:$0xf] %v676
  %749 = vst [vmem:[%s3 + $0x68] sm:$0xf] %v677
  %750 = vst [vmem:[%s3 + $0x6c] sm:$0xf] %v678
  %751 = vst [vmem:[%s3 + $0x70] sm:$0xf] %v679
  %752 = vst [vmem:[%s3 + $0x74] sm:$0xf] %v680
  %753 = vst [vmem:[%s3 + $0x78] sm:$0xf] %v681
  %754 = vst [vmem:[%s3 + $0x7c] sm:$0xf] %v682
  %755 = vst [vmem:[%s3 + $0x80] sm:$0xf] %v683
  %756 = vst [vmem:[%s3 + $0x84] sm:$0xf] %v684
  %757 = vst [vmem:[%s3 + $0x88] sm:$0xf] %v685
  %758 = vst [vmem:[%s3 + $0x8c] sm:$0xf] %v686
  // Predicated region
  $region14: #{autoencoder_forward.12} parent=0 // pred_check
    _
  $region15: #{autoencoder_forward.12} parent=0 // pred_check_branch
    %760 = sbr.rel (0) target = $region17
  $region16: #{autoencoder_forward.12} parent=0 // pred_region
    _
  $region17: #{autoencoder_forward.12} parent=0 // pred_fallthru
    _
  // Predicated region
  $region18: #{autoencoder_forward.12} parent=0 // pred_check
    _
  $region19: #{autoencoder_forward.12} parent=0 // pred_check_branch
    %762 = sbr.rel (0) target = $region21
  $region20: #{autoencoder_forward.12} parent=0 // pred_region
    _
  $region21: #{autoencoder_forward.12} parent=0 // pred_fallthru
    _

// kernel: autoencoder_forward.13
$region0: #{autoencoder_forward.13}
  #allocation0 [shape = 'u32[]', space=smem, size = 0x4, offset = 0x4, fixed_abs, tag = 'smem constant byte address 0x4 - core index']
  #allocation1 [shape = 'u32[144,128]{1,0:T(1,128)}', space=vmem, size = 0x12000, scoped, tag = 'internal scratch']
  %s0 = inlined_call_operand.vmem [shape: bf16[1536,384], index: 0, kind: input, shape index: {}]
  %s1 = inlined_call_operand.vmem [shape: bf16[384,128], index: 1, kind: input, shape index: {}]
  %s2 = inlined_call_operand.vmem [shape: f32[1,128], index: 2, kind: input, shape index: {}]
  %s3 = inlined_call_operand.vmem [shape: f32[1536,128], index: 3, kind: output, shape index: {}]
  %s4 = sld [smem:[#allocation0]]
  $region45: #{autoencoder_forward.13} parent=0
    _
  %s6 = ssub.s32 1, %s4
  %s7 = scalar_select 0, %s6, %s4
  loop: start=0, step=1, limit=5
  $region2: #{autoencoder_forward.13} parent=0 // loop_pre_header
    _
  $region3: #{autoencoder_forward.13} parent=0 // loop_header
    %s9 = sphi 0, %s13
    %p10 = scmp.ge.s32.totalorder %s9, 5
    %s19 = sphi 0, %s21
    %s22 = sphi 0, %s19
    %s23 = sphi 0, %s22
    %s39 = sphi 0, %s23
    %s43 = sphi 0, %s43
    %s45 = sphi 0, %s43
    %s46 = sphi 0, %s45
    %s60 = sphi 0, %s46
    %s64 = sphi 0, %s64
    %s66 = sphi 0, %s64
    %s67 = sphi 0, %s66
    %s81 = sphi 0, %s67
    %s87 = sphi 0, %s89
    %s90 = sphi 0, %s87
    %s91 = sphi 0, %s90
    %s107 = sphi 0, %s91
  $region4: #{autoencoder_forward.13} parent=0 // loop_header_branch
    %12 = sbr.rel (%p10) target = $region8
  $region5: #{autoencoder_forward.13} parent=0 // loop_body
    %s14 = ssub.s32 %s9, 1
    %s15 = ssub.s32 %s9, 2
    %s16 = sadd.s32 %s9, 1
    %s17 = ssub.s32 %s9, %s16
    %p18 = scmp.eq.s32.totalorder %s17, 0
    %s20 = sadd.s32 %s19, 1
    %s21 = scalar_select %p18, %s19, %s20
    %p24 = pneg %p18
    %p25 = scmp.eq.s32.totalorder %s9, 2
    %p26 = por %p24, %p25
    %p27 = scmp.ne.s32.totalorder %s19, %s22
    %p28 = scmp.eq.s32.totalorder %s9, 0
    %p29 = por %p27, %p28
    %p30 = scmp.ne.s32.totalorder %s19, %s22
    %p31 = scmp.eq.s32.totalorder %s14, 2
    %p32 = por %p30, %p31
    %p33 = scmp.ne.s32.totalorder %s22, %s23
    %p34 = scmp.eq.s32.totalorder %s14, 0
    %p35 = por %p33, %p34
    %p36 = scmp.ne.s32.totalorder %s22, %s23
    %p37 = scmp.eq.s32.totalorder %s15, 2
    %p38 = por %p36, %p37
    %p40 = scmp.ne.s32.totalorder %s23, %s39
    %p41 = scmp.eq.s32.totalorder %s15, 0
    %p42 = por %p40, %p41
    %s44 = sadd.s32 %s43, 1
    %p47 = scmp.eq.s32.totalorder %s9, 2
    %p48 = scmp.ne.s32.totalorder %s43, %s45
    %p49 = scmp.eq.s32.totalorder %s9, 0
    %p50 = por %p48, %p49
    %p51 = scmp.ne.s32.totalorder %s43, %s45
    %p52 = scmp.eq.s32.totalorder %s14, 2
    %p53 = por %p51, %p52
    %p54 = scmp.ne.s32.totalorder %s45, %s46
    %p55 = scmp.eq.s32.totalorder %s14, 0
    %p56 = por %p54, %p55
    %p57 = scmp.ne.s32.totalorder %s45, %s46
    %p58 = scmp.eq.s32.totalorder %s15, 2
    %p59 = por %p57, %p58
    %p61 = scmp.ne.s32.totalorder %s46, %s60
    %p62 = scmp.eq.s32.totalorder %s15, 0
    %p63 = por %p61, %p62
    %s65 = sadd.s32 %s64, 1
    %p68 = scmp.eq.s32.totalorder %s9, 2
    %p69 = scmp.ne.s32.totalorder %s64, %s66
    %p70 = scmp.eq.s32.totalorder %s9, 0
    %p71 = por %p69, %p70
    %p72 = scmp.ne.s32.totalorder %s64, %s66
    %p73 = scmp.eq.s32.totalorder %s14, 2
    %p74 = por %p72, %p73
    %p75 = scmp.ne.s32.totalorder %s66, %s67
    %p76 = scmp.eq.s32.totalorder %s14, 0
    %p77 = por %p75, %p76
    %p78 = scmp.ne.s32.totalorder %s66, %s67
    %p79 = scmp.eq.s32.totalorder %s15, 2
    %p80 = por %p78, %p79
    %p82 = scmp.ne.s32.totalorder %s67, %s81
    %p83 = scmp.eq.s32.totalorder %s15, 0
    %p84 = por %p82, %p83
    %s85 = ssub.s32 %s9, %s16
    %p86 = scmp.eq.s32.totalorder %s85, 0
    %s88 = sadd.s32 %s87, 1
    %s89 = scalar_select %p86, %s87, %s88
    %p92 = pneg %p86
    %p93 = scmp.eq.s32.totalorder %s9, 2
    %p94 = por %p92, %p93
    %p95 = scmp.ne.s32.totalorder %s87, %s90
    %p96 = scmp.eq.s32.totalorder %s9, 0
    %p97 = por %p95, %p96
    %p98 = scmp.ne.s32.totalorder %s87, %s90
    %p99 = scmp.eq.s32.totalorder %s14, 2
    %p100 = por %p98, %p99
    %p101 = scmp.ne.s32.totalorder %s90, %s91
    %p102 = scmp.eq.s32.totalorder %s14, 0
    %p103 = por %p101, %p102
    %p104 = scmp.ne.s32.totalorder %s90, %s91
    %p105 = scmp.eq.s32.totalorder %s15, 2
    %p106 = por %p104, %p105
    %p108 = scmp.ne.s32.totalorder %s91, %s107
    %p109 = scmp.eq.s32.totalorder %s15, 0
    %p110 = por %p108, %p109
    %p111 = scmp.le.s32.totalorder 1, %s9
    %p112 = scmp.lt.s32.totalorder %s9, 4
    %p113 = pnand %p111, %p112
    %p114 = pneg %p113
    // Predicated region
    $region9: #{autoencoder_forward.13} parent=5 // pred_check
      _
    $region10: #{autoencoder_forward.13} parent=5 // pred_check_branch
      %116 = sbr.rel (%p113) target = $region12
    $region11: #{autoencoder_forward.13} parent=5 // pred_region
      %s117 = ssub.s32 %s9, 1
      // Predicated region
      $region13: #{autoencoder_forward.13} parent=11 // pred_check
        %p118 = pneg %p56
      $region14: #{autoencoder_forward.13} parent=11 // pred_check_branch
        %120 = sbr.rel (%p118) target = $region16
      $region15: #{autoencoder_forward.13} parent=11 // pred_region
        _
      $region16: #{autoencoder_forward.13} parent=11 // pred_fallthru
        _
      // Predicated region
      $region17: #{autoencoder_forward.13} parent=11 // pred_check
        %p121 = pneg %p77
      $region18: #{autoencoder_forward.13} parent=11 // pred_check_branch
        %123 = sbr.rel (%p121) target = $region20
      $region19: #{autoencoder_forward.13} parent=11 // pred_region
        _
      $region20: #{autoencoder_forward.13} parent=11 // pred_fallthru
        _
    $region12: #{autoencoder_forward.13} parent=5 // pred_fallthru
      _
    %p124 = scmp.lt.s32.totalorder %s9, 3
    // Predicated region
    $region21: #{autoencoder_forward.13} parent=5 // pred_check
      %p125 = pneg %p124
    $region22: #{autoencoder_forward.13} parent=5 // pred_check_branch
      %127 = sbr.rel (%p125) target = $region24
    $region23: #{autoencoder_forward.13} parent=5 // pred_region
      // Predicated region
      $region25: #{autoencoder_forward.13} parent=23 // pred_check
        %p128 = pneg %p29
      $region26: #{autoencoder_forward.13} parent=23 // pred_check_branch
        %130 = sbr.rel (%p128) target = $region28
      $region27: #{autoencoder_forward.13} parent=23 // pred_region
        %s131 = smul.u32 64, %s9
        %p132 = scmp.lt.s32.totalorder %s131, 191
        %s133 = scalar_select %p132, %s131, 191
        %s134 = smul.addr %s133, 3
        %s135 = smul.addr %s134, 4
        %s136 = scalar_lea.vmem %s0, %s135
        %s137 = smul.u32 64, %s9
      $region28: #{autoencoder_forward.13} parent=23 // pred_fallthru
        _
    $region24: #{autoencoder_forward.13} parent=5 // pred_fallthru
      _
    %p138 = scmp.le.s32.totalorder 1, %s9
    %p139 = scmp.lt.s32.totalorder %s9, 4
    %p140 = pnand %p138, %p139
    %p141 = pneg %p140
    // Predicated region
    $region29: #{autoencoder_forward.13} parent=5 // pred_check
      _
    $region30: #{autoencoder_forward.13} parent=5 // pred_check_branch
      %143 = sbr.rel (%p140) target = $region32
    $region31: #{autoencoder_forward.13} parent=5 // pred_region
      %s144 = ssub.s32 %s9, 1
      %s145 = smul.u32 64, %s14
      %p146 = scmp.lt.s32.totalorder %s145, 191
      %s147 = scalar_select %p146, %s145, 191
      %s148 = smul.addr %s147, 3
      %s149 = smul.addr %s148, 4
      %s150 = scalar_lea.vmem %s0, %s149
      %p151 = pneg %p35
      %p152 = pneg %p32
      %p153 = pneg %p56
      %p154 = pneg %p53
      %p155 = pneg %p77
      %p156 = pneg %p74
      %p157 = pneg %p103
      %p158 = pneg %p100
      %s159 = smul.u32 64, %s14
      %p160 = scmp.lt.s32.totalorder %s159, 191
      %s161 = scalar_select %p160, %s159, 191
      %s162 = smul.addr %s161, 8
      %s163 = scalar_lea.vmem %s3, %s162
      %s164 = smul.u32 64, %s14
      %p165 = scmp.lt.s32.totalorder %s164, 191
      %s166 = scalar_select %p165, %s164, 191
      %s167 = smul.addr %s166, 3
      %s168 = smul.addr %s167, 4
      %s169 = scalar_lea.vmem %s0, %s168
      %s170 = smul.u32 64, %s14
      %s171 = smul.u32 64, %s14
      %p172 = scmp.lt.s32.totalorder %s171, 191
      %s173 = scalar_select %p172, %s171, 191
      %s174 = smul.addr %s173, 8
      %s175 = scalar_lea.vmem %s3, %s174
      %s176 = smul.u32 64, %s14
      %v178 = vld [vmem:[%s1] sm:$0xf]
      %v179 = vld [vmem:[%s1 + $0x4] sm:$0xf]
      %v180 = vld [vmem:[%s1 + $0x8] sm:$0xf]
      %v181 = vld [vmem:[%s1 + $0xc] sm:$0xf]
      %v182 = vld [vmem:[%s1 + $0x10] sm:$0xf]
      %v183 = vld [vmem:[%s1 + $0x14] sm:$0xf]
      %v184 = vld [vmem:[%s1 + $0x18] sm:$0xf]
      %v185 = vld [vmem:[%s1 + $0x1c] sm:$0xf]
      %v186 = vld [vmem:[%s1 + $0x20] sm:$0xf]
      %v187 = vld [vmem:[%s1 + $0x24] sm:$0xf]
      %v188 = vld [vmem:[%s1 + $0x28] sm:$0xf]
      %v189 = vld [vmem:[%s1 + $0x2c] sm:$0xf]
      %v190 = vld [vmem:[%s1 + $0x30] sm:$0xf]
      %v191 = vld [vmem:[%s1 + $0x34] sm:$0xf]
      %v192 = vld [vmem:[%s1 + $0x38] sm:$0xf]
      %v193 = vld [vmem:[%s1 + $0x3c] sm:$0xf]
      %v194 = vld [vmem:[%s1 + $0x40] sm:$0xf]
      %v195 = vld [vmem:[%s1 + $0x44] sm:$0xf]
      %v196 = vld [vmem:[%s1 + $0x48] sm:$0xf]
      %v197 = vld [vmem:[%s1 + $0x4c] sm:$0xf]
      %v198 = vld [vmem:[%s1 + $0x50] sm:$0xf]
      %v199 = vld [vmem:[%s1 + $0x54] sm:$0xf]
      %v200 = vld [vmem:[%s1 + $0x58] sm:$0xf]
      %v201 = vld [vmem:[%s1 + $0x5c] sm:$0xf]
      %v202 = vld [vmem:[%s1 + $0x60] sm:$0xf]
      %v203 = vld [vmem:[%s1 + $0x64] sm:$0xf]
      %v204 = vld [vmem:[%s1 + $0x68] sm:$0xf]
      %v205 = vld [vmem:[%s1 + $0x6c] sm:$0xf]
      %v206 = vld [vmem:[%s1 + $0x70] sm:$0xf]
      %v207 = vld [vmem:[%s1 + $0x74] sm:$0xf]
      %v208 = vld [vmem:[%s1 + $0x78] sm:$0xf]
      %v209 = vld [vmem:[%s1 + $0x7c] sm:$0xf]
      %v210 = vld [vmem:[%s1 + $0x80] sm:$0xf]
      %v211 = vld [vmem:[%s1 + $0x84] sm:$0xf]
      %v212 = vld [vmem:[%s1 + $0x88] sm:$0xf]
      %v213 = vld [vmem:[%s1 + $0x8c] sm:$0xf]
      %v214 = vld [vmem:[%s1 + $0x90] sm:$0xf]
      %v215 = vld [vmem:[%s1 + $0x94] sm:$0xf]
      %v216 = vld [vmem:[%s1 + $0x98] sm:$0xf]
      %v217 = vld [vmem:[%s1 + $0x9c] sm:$0xf]
      %v218 = vld [vmem:[%s1 + $0xa0] sm:$0xf]
      %v219 = vld [vmem:[%s1 + $0xa4] sm:$0xf]
      %v220 = vld [vmem:[%s1 + $0xa8] sm:$0xf]
      %v221 = vld [vmem:[%s1 + $0xac] sm:$0xf]
      %v222 = vld [vmem:[%s1 + $0xb0] sm:$0xf]
      %v223 = vld [vmem:[%s1 + $0xb4] sm:$0xf]
      %v224 = vld [vmem:[%s1 + $0xb8] sm:$0xf]
      %v225 = vld [vmem:[%s1 + $0xbc] sm:$0xf]
      %v226 = vld [vmem:[%s169] sm:$0xff]
      %v227 = vld [vmem:[%s169 + $0x8] sm:$0xf]
      %v228 = vld [vmem:[%s169 + $0xc] sm:$0xff]
      %v229 = vld [vmem:[%s169 + $0x14] sm:$0xf]
      %v230 = vld [vmem:[%s169 + $0x18] sm:$0xff]
      %v231 = vld [vmem:[%s169 + $0x20] sm:$0xf]
      %v232 = vld [vmem:[%s169 + $0x24] sm:$0xff]
      %v233 = vld [vmem:[%s169 + $0x2c] sm:$0xf]
      %v234 = vld [vmem:[%s169 + $0x30] sm:$0xff]
      %v235 = vld [vmem:[%s169 + $0x38] sm:$0xf]
      %v236 = vld [vmem:[%s169 + $0x3c] sm:$0xff]
      %v237 = vld [vmem:[%s169 + $0x44] sm:$0xf]
      %v238 = vld [vmem:[%s169 + $0x48] sm:$0xff]
      %v239 = vld [vmem:[%s169 + $0x50] sm:$0xf]
      %v240 = vld [vmem:[%s169 + $0x54] sm:$0xff]
      %v241 = vld [vmem:[%s169 + $0x5c] sm:$0xf]
      %v242 = vld [vmem:[%s169 + $0x60] sm:$0xff]
      %v243 = vld [vmem:[%s169 + $0x68] sm:$0xf]
      %v244 = vld [vmem:[%s169 + $0x6c] sm:$0xff]
      %v245 = vld [vmem:[%s169 + $0x74] sm:$0xf]
      %v246 = vld [vmem:[%s169 + $0x78] sm:$0xff]
      %v247 = vld [vmem:[%s169 + $0x80] sm:$0xf]
      %v248 = vld [vmem:[%s169 + $0x84] sm:$0xff]
      %v249 = vld [vmem:[%s169 + $0x8c] sm:$0xf]
      %v250 = vld [vmem:[%s169 + $0x90] sm:$0xff]
      %v251 = vld [vmem:[%s169 + $0x98] sm:$0xf]
      %v252 = vld [vmem:[%s169 + $0x9c] sm:$0xff]
      %v253 = vld [vmem:[%s169 + $0xa4] sm:$0xf]
      %v254 = vld [vmem:[%s169 + $0xa8] sm:$0xff]
      %v255 = vld [vmem:[%s169 + $0xb0] sm:$0xf]
      %v256 = vld [vmem:[%s169 + $0xb4] sm:$0xff]
      %v257 = vld [vmem:[%s169 + $0xbc] sm:$0xf]
      %v258 = vld [vmem:[%s169 + $0xc0] sm:$0xff]
      %v259 = vld [vmem:[%s169 + $0xc8] sm:$0xf]
      %v260 = vld [vmem:[%s169 + $0xcc] sm:$0xff]
      %v261 = vld [vmem:[%s169 + $0xd4] sm:$0xf]
      %v262 = vld [vmem:[%s169 + $0xd8] sm:$0xff]
      %v263 = vld [vmem:[%s169 + $0xe0] sm:$0xf]
      %v264 = vld [vmem:[%s169 + $0xe4] sm:$0xff]
      %v265 = vld [vmem:[%s169 + $0xec] sm:$0xf]
      %v266 = vld [vmem:[%s169 + $0xf0] sm:$0xff]
      %v267 = vld [vmem:[%s169 + $0xf8] sm:$0xf]
      %v268 = vld [vmem:[%s169 + $0xfc] sm:$0xff]
      %v269 = vld [vmem:[%s169 + $0x104] sm:$0xf]
      %v270 = vld [vmem:[%s169 + $0x108] sm:$0xff]
      %v271 = vld [vmem:[%s169 + $0x110] sm:$0xf]
      %v272 = vld [vmem:[%s169 + $0x114] sm:$0xff]
      %v273 = vld [vmem:[%s169 + $0x11c] sm:$0xf]
      %v274 = vld [vmem:[%s169 + $0x120] sm:$0xff]
      %v275 = vld [vmem:[%s169 + $0x128] sm:$0xf]
      %v276 = vld [vmem:[%s169 + $0x12c] sm:$0xff]
      %v277 = vld [vmem:[%s169 + $0x134] sm:$0xf]
      %v278 = vld [vmem:[%s169 + $0x138] sm:$0xff]
      %v279 = vld [vmem:[%s169 + $0x140] sm:$0xf]
      %v280 = vld [vmem:[%s169 + $0x144] sm:$0xff]
      %v281 = vld [vmem:[%s169 + $0x14c] sm:$0xf]
      %v282 = vld [vmem:[%s169 + $0x150] sm:$0xff]
      %v283 = vld [vmem:[%s169 + $0x158] sm:$0xf]
      %v284 = vld [vmem:[%s169 + $0x15c] sm:$0xff]
      %v285 = vld [vmem:[%s169 + $0x164] sm:$0xf]
      %v286 = vld [vmem:[%s169 + $0x168] sm:$0xff]
      %v287 = vld [vmem:[%s169 + $0x170] sm:$0xf]
      %v288 = vld [vmem:[%s169 + $0x174] sm:$0xff]
      %v289 = vld [vmem:[%s169 + $0x17c] sm:$0xf]
      %v290 = vld [vmem:[%s169 + $0x180] sm:$0xff]
      %v291 = vld [vmem:[%s169 + $0x188] sm:$0xf]
      %v292 = vld [vmem:[%s169 + $0x18c] sm:$0xff]
      %v293 = vld [vmem:[%s169 + $0x194] sm:$0xf]
      %v294 = vld [vmem:[%s169 + $0x198] sm:$0xff]
      %v295 = vld [vmem:[%s169 + $0x1a0] sm:$0xf]
      %v296 = vld [vmem:[%s169 + $0x1a4] sm:$0xff]
      %v297 = vld [vmem:[%s169 + $0x1ac] sm:$0xf]
      %v298 = vld [vmem:[%s169 + $0x1b0] sm:$0xff]
      %v299 = vld [vmem:[%s169 + $0x1b8] sm:$0xf]
      %v300 = vld [vmem:[%s169 + $0x1bc] sm:$0xff]
      %v301 = vld [vmem:[%s169 + $0x1c4] sm:$0xf]
      %v302 = vld [vmem:[%s169 + $0x1c8] sm:$0xff]
      %v303 = vld [vmem:[%s169 + $0x1d0] sm:$0xf]
      %v304 = vld [vmem:[%s169 + $0x1d4] sm:$0xff]
      %v305 = vld [vmem:[%s169 + $0x1dc] sm:$0xf]
      %v306 = vld [vmem:[%s169 + $0x1e0] sm:$0xff]
      %v307 = vld [vmem:[%s169 + $0x1e8] sm:$0xf]
      %v308 = vld [vmem:[%s169 + $0x1ec] sm:$0xff]
      %v309 = vld [vmem:[%s169 + $0x1f4] sm:$0xf]
      %v310 = vld [vmem:[%s169 + $0x1f8] sm:$0xff]
      %v311 = vld [vmem:[%s169 + $0x200] sm:$0xf]
      %v312 = vld [vmem:[%s169 + $0x204] sm:$0xff]
      %v313 = vld [vmem:[%s169 + $0x20c] sm:$0xf]
      %v314 = vld [vmem:[%s169 + $0x210] sm:$0xff]
      %v315 = vld [vmem:[%s169 + $0x218] sm:$0xf]
      %v316 = vld [vmem:[%s169 + $0x21c] sm:$0xff]
      %v317 = vld [vmem:[%s169 + $0x224] sm:$0xf]
      %v318 = vld [vmem:[%s169 + $0x228] sm:$0xff]
      %v319 = vld [vmem:[%s169 + $0x230] sm:$0xf]
      %v320 = vld [vmem:[%s169 + $0x234] sm:$0xff]
      %v321 = vld [vmem:[%s169 + $0x23c] sm:$0xf]
      %v322 = vld [vmem:[%s169 + $0x240] sm:$0xff]
      %v323 = vld [vmem:[%s169 + $0x248] sm:$0xf]
      %v324 = vld [vmem:[%s169 + $0x24c] sm:$0xff]
      %v325 = vld [vmem:[%s169 + $0x254] sm:$0xf]
      %v326 = vld [vmem:[%s169 + $0x258] sm:$0xff]
      %v327 = vld [vmem:[%s169 + $0x260] sm:$0xf]
      %v328 = vld [vmem:[%s169 + $0x264] sm:$0xff]
      %v329 = vld [vmem:[%s169 + $0x26c] sm:$0xf]
      %v330 = vld [vmem:[%s169 + $0x270] sm:$0xff]
      %v331 = vld [vmem:[%s169 + $0x278] sm:$0xf]
      %v332 = vld [vmem:[%s169 + $0x27c] sm:$0xff]
      %v333 = vld [vmem:[%s169 + $0x284] sm:$0xf]
      %v334 = vld [vmem:[%s169 + $0x288] sm:$0xff]
      %v335 = vld [vmem:[%s169 + $0x290] sm:$0xf]
      %v336 = vld [vmem:[%s169 + $0x294] sm:$0xff]
      %v337 = vld [vmem:[%s169 + $0x29c] sm:$0xf]
      %v338 = vld [vmem:[%s169 + $0x2a0] sm:$0xff]
      %v339 = vld [vmem:[%s169 + $0x2a8] sm:$0xf]
      %v340 = vld [vmem:[%s169 + $0x2ac] sm:$0xff]
      %v341 = vld [vmem:[%s169 + $0x2b4] sm:$0xf]
      %v342 = vld [vmem:[%s169 + $0x2b8] sm:$0xff]
      %v343 = vld [vmem:[%s169 + $0x2c0] sm:$0xf]
      %v344 = vld [vmem:[%s169 + $0x2c4] sm:$0xff]
      %v345 = vld [vmem:[%s169 + $0x2cc] sm:$0xf]
      %v346 = vld [vmem:[%s169 + $0x2d0] sm:$0xff]
      %v347 = vld [vmem:[%s169 + $0x2d8] sm:$0xf]
      %v348 = vld [vmem:[%s169 + $0x2dc] sm:$0xff]
      %v349 = vld [vmem:[%s169 + $0x2e4] sm:$0xf]
      %v350 = vld [vmem:[%s169 + $0x2e8] sm:$0xff]
      %v351 = vld [vmem:[%s169 + $0x2f0] sm:$0xf]
      %v352 = vld [vmem:[%s169 + $0x2f4] sm:$0xff]
      %v353 = vld [vmem:[%s169 + $0x2fc] sm:$0xf]
      %v354 = vld [vmem:[%s2] sm:$0x1]
      %v356 = vlaneseq
      %v357 = vshrl.u32 %v356, 7
      %v358 = vsub.s32 0, %v357
      %v359 = vrot.slane %v354, %v358
      %v489 = vunpack.c.l.b16 %v226
      %v490 = vunpack.c.h.b16 %v226
      %v491 = vunpack.c.l.b16 %v227
      %v492 = vunpack.c.l.b16 %v228
      %v493 = vunpack.c.h.b16 %v228
      %v494 = vunpack.c.l.b16 %v229
      %v495 = vunpack.c.l.b16 %v230
      %v496 = vunpack.c.h.b16 %v230
      %v497 = vunpack.c.l.b16 %v231
      %v498 = vunpack.c.l.b16 %v232
      %v499 = vunpack.c.h.b16 %v232
      %v500 = vunpack.c.l.b16 %v233
      %v501 = vunpack.c.l.b16 %v234
      %v502 = vunpack.c.h.b16 %v234
      %v503 = vunpack.c.l.b16 %v235
      %v504 = vunpack.c.l.b16 %v236
      %v505 = vunpack.c.h.b16 %v236
      %v506 = vunpack.c.l.b16 %v237
      %v507 = vunpack.c.l.b16 %v238
      %v508 = vunpack.c.h.b16 %v238
      %v509 = vunpack.c.l.b16 %v239
      %v510 = vunpack.c.l.b16 %v240
      %v511 = vunpack.c.h.b16 %v240
      %v512 = vunpack.c.l.b16 %v241
      %v513 = vunpack.c.l.b16 %v242
      %v514 = vunpack.c.h.b16 %v242
      %v515 = vunpack.c.l.b16 %v243
      %v516 = vunpack.c.l.b16 %v244
      %v517 = vunpack.c.h.b16 %v244
      %v518 = vunpack.c.l.b16 %v245
      %v519 = vunpack.c.l.b16 %v246
      %v520 = vunpack.c.h.b16 %v246
      %v521 = vunpack.c.l.b16 %v247
      %v522 = vunpack.c.l.b16 %v248
      %v523 = vunpack.c.h.b16 %v248
      %v524 = vunpack.c.l.b16 %v249
      %v525 = vunpack.c.l.b16 %v250
      %v526 = vunpack.c.h.b16 %v250
      %v527 = vunpack.c.l.b16 %v251
      %v528 = vunpack.c.l.b16 %v252
      %v529 = vunpack.c.h.b16 %v252
      %v530 = vunpack.c.l.b16 %v253
      %v531 = vunpack.c.l.b16 %v254
      %v532 = vunpack.c.h.b16 %v254
      %v533 = vunpack.c.l.b16 %v255
      %v534 = vunpack.c.l.b16 %v256
      %v535 = vunpack.c.h.b16 %v256
      %v536 = vunpack.c.l.b16 %v257
      %v537 = vunpack.c.l.b16 %v258
      %v538 = vunpack.c.h.b16 %v258
      %v539 = vunpack.c.l.b16 %v259
      %v540 = vunpack.c.l.b16 %v260
      %v541 = vunpack.c.h.b16 %v260
      %v542 = vunpack.c.l.b16 %v261
      %v543 = vunpack.c.l.b16 %v262
      %v544 = vunpack.c.h.b16 %v262
      %v545 = vunpack.c.l.b16 %v263
      %v546 = vunpack.c.l.b16 %v264
      %v547 = vunpack.c.h.b16 %v264
      %v548 = vunpack.c.l.b16 %v265
      %v549 = vunpack.c.l.b16 %v266
      %v550 = vunpack.c.h.b16 %v266
      %v551 = vunpack.c.l.b16 %v267
      %v552 = vunpack.c.l.b16 %v268
      %v553 = vunpack.c.h.b16 %v268
      %v554 = vunpack.c.l.b16 %v269
      %v555 = vunpack.c.l.b16 %v270
      %v556 = vunpack.c.h.b16 %v270
      %v557 = vunpack.c.l.b16 %v271
      %v558 = vunpack.c.l.b16 %v272
      %v559 = vunpack.c.h.b16 %v272
      %v560 = vunpack.c.l.b16 %v273
      %v561 = vunpack.c.l.b16 %v274
      %v562 = vunpack.c.h.b16 %v274
      %v563 = vunpack.c.l.b16 %v275
      %v564 = vunpack.c.l.b16 %v276
      %v565 = vunpack.c.h.b16 %v276
      %v566 = vunpack.c.l.b16 %v277
      %v567 = vunpack.c.l.b16 %v278
      %v568 = vunpack.c.h.b16 %v278
      %v569 = vunpack.c.l.b16 %v279
      %v570 = vunpack.c.l.b16 %v280
      %v571 = vunpack.c.h.b16 %v280
      %v572 = vunpack.c.l.b16 %v281
      %v573 = vunpack.c.l.b16 %v282
      %v574 = vunpack.c.h.b16 %v282
      %v575 = vunpack.c.l.b16 %v283
      %v576 = vunpack.c.l.b16 %v284
      %v577 = vunpack.c.h.b16 %v284
      %v578 = vunpack.c.l.b16 %v285
      %v579 = vunpack.c.l.b16 %v286
      %v580 = vunpack.c.h.b16 %v286
      %v581 = vunpack.c.l.b16 %v287
      %v582 = vunpack.c.l.b16 %v288
      %v583 = vunpack.c.h.b16 %v288
      %v584 = vunpack.c.l.b16 %v289
      %v585 = vunpack.c.l.b16 %v290
      %v586 = vunpack.c.h.b16 %v290
      %v587 = vunpack.c.l.b16 %v291
      %v588 = vunpack.c.l.b16 %v292
      %v589 = vunpack.c.h.b16 %v292
      %v590 = vunpack.c.l.b16 %v293
      %v591 = vunpack.c.l.b16 %v294
      %v592 = vunpack.c.h.b16 %v294
      %v593 = vunpack.c.l.b16 %v295
      %v594 = vunpack.c.l.b16 %v296
      %v595 = vunpack.c.h.b16 %v296
      %v596 = vunpack.c.l.b16 %v297
      %v597 = vunpack.c.l.b16 %v298
      %v598 = vunpack.c.h.b16 %v298
      %v599 = vunpack.c.l.b16 %v299
      %v600 = vunpack.c.l.b16 %v300
      %v601 = vunpack.c.h.b16 %v300
      %v602 = vunpack.c.l.b16 %v301
      %v603 = vunpack.c.l.b16 %v302
      %v604 = vunpack.c.h.b16 %v302
      %v605 = vunpack.c.l.b16 %v303
      %v606 = vunpack.c.l.b16 %v304
      %v607 = vunpack.c.h.b16 %v304
      %v608 = vunpack.c.l.b16 %v305
      %v609 = vunpack.c.l.b16 %v306
      %v610 = vunpack.c.h.b16 %v306
      %v611 = vunpack.c.l.b16 %v307
      %v612 = vunpack.c.l.b16 %v308
      %v613 = vunpack.c.h.b16 %v308
      %v614 = vunpack.c.l.b16 %v309
      %v615 = vunpack.c.l.b16 %v310
      %v616 = vunpack.c.h.b16 %v310
      %v617 = vunpack.c.l.b16 %v311
      %v618 = vunpack.c.l.b16 %v312
      %v619 = vunpack.c.h.b16 %v312
      %v620 = vunpack.c.l.b16 %v313
      %v621 = vunpack.c.l.b16 %v314
      %v622 = vunpack.c.h.b16 %v314
      %v623 = vunpack.c.l.b16 %v315
      %v624 = vunpack.c.l.b16 %v316
      %v625 = vunpack.c.h.b16 %v316
      %v626 = vunpack.c.l.b16 %v317
      %v627 = vunpack.c.l.b16 %v318
      %v628 = vunpack.c.h.b16 %v318
      %v629 = vunpack.c.l.b16 %v319
      %v630 = vunpack.c.l.b16 %v320
      %v631 = vunpack.c.h.b16 %v320
      %v632 = vunpack.c.l.b16 %v321
      %v633 = vunpack.c.l.b16 %v322
      %v634 = vunpack.c.h.b16 %v322
      %v635 = vunpack.c.l.b16 %v323
      %v636 = vunpack.c.l.b16 %v324
      %v637 = vunpack.c.h.b16 %v324
      %v638 = vunpack.c.l.b16 %v325
      %v639 = vunpack.c.l.b16 %v326
      %v640 = vunpack.c.h.b16 %v326
      %v641 = vunpack.c.l.b16 %v327
      %v642 = vunpack.c.l.b16 %v328
      %v643 = vunpack.c.h.b16 %v328
      %v644 = vunpack.c.l.b16 %v329
      %v645 = vunpack.c.l.b16 %v330
      %v646 = vunpack.c.h.b16 %v330
      %v647 = vunpack.c.l.b16 %v331
      %v648 = vunpack.c.l.b16 %v332
      %v649 = vunpack.c.h.b16 %v332
      %v650 = vunpack.c.l.b16 %v333
      %v651 = vunpack.c.l.b16 %v334
      %v652 = vunpack.c.h.b16 %v334
      %v653 = vunpack.c.l.b16 %v335
      %v654 = vunpack.c.l.b16 %v336
      %v655 = vunpack.c.h.b16 %v336
      %v656 = vunpack.c.l.b16 %v337
      %v657 = vunpack.c.l.b16 %v338
      %v658 = vunpack.c.h.b16 %v338
      %v659 = vunpack.c.l.b16 %v339
      %v660 = vunpack.c.l.b16 %v340
      %v661 = vunpack.c.h.b16 %v340
      %v662 = vunpack.c.l.b16 %v341
      %v663 = vunpack.c.l.b16 %v342
      %v664 = vunpack.c.h.b16 %v342
      %v665 = vunpack.c.l.b16 %v343
      %v666 = vunpack.c.l.b16 %v344
      %v667 = vunpack.c.h.b16 %v344
      %v668 = vunpack.c.l.b16 %v345
      %v669 = vunpack.c.l.b16 %v346
      %v670 = vunpack.c.h.b16 %v346
      %v671 = vunpack.c.l.b16 %v347
      %v672 = vunpack.c.l.b16 %v348
      %v673 = vunpack.c.h.b16 %v348
      %v674 = vunpack.c.l.b16 %v349
      %v675 = vunpack.c.l.b16 %v350
      %v676 = vunpack.c.h.b16 %v350
      %v677 = vunpack.c.l.b16 %v351
      %v678 = vunpack.c.l.b16 %v352
      %v679 = vunpack.c.h.b16 %v352
      %v680 = vunpack.c.l.b16 %v353
      %v681 = vpack.c.b16 %v492, %v489
      %v682 = vpack.c.b16 %v493, %v490
      %v683 = vpack.c.b16 %v494, %v491
      %v684 = vpack.c.b16 %v498, %v495
      %v685 = vpack.c.b16 %v499, %v496
      %v686 = vpack.c.b16 %v500, %v497
      %v687 = vpack.c.b16 %v504, %v501
      %v688 = vpack.c.b16 %v505, %v502
      %v689 = vpack.c.b16 %v506, %v503
      %v690 = vpack.c.b16 %v510, %v507
      %v691 = vpack.c.b16 %v511, %v508
      %v692 = vpack.c.b16 %v512, %v509
      %v693 = vpack.c.b16 %v516, %v513
      %v694 = vpack.c.b16 %v517, %v514
      %v695 = vpack.c.b16 %v518, %v515
      %v696 = vpack.c.b16 %v522, %v519
      %v697 = vpack.c.b16 %v523, %v520
      %v698 = vpack.c.b16 %v524, %v521
      %v699 = vpack.c.b16 %v528, %v525
      %v700 = vpack.c.b16 %v529, %v526
      %v701 = vpack.c.b16 %v530, %v527
      %v702 = vpack.c.b16 %v534, %v531
      %v703 = vpack.c.b16 %v535, %v532
      %v704 = vpack.c.b16 %v536, %v533
      %v705 = vpack.c.b16 %v540, %v537
      %v706 = vpack.c.b16 %v541, %v538
      %v707 = vpack.c.b16 %v542, %v539
      %v708 = vpack.c.b16 %v546, %v543
      %v709 = vpack.c.b16 %v547, %v544
      %v710 = vpack.c.b16 %v548, %v545
      %v711 = vpack.c.b16 %v552, %v549
      %v712 = vpack.c.b16 %v553, %v550
      %v713 = vpack.c.b16 %v554, %v551
      %v714 = vpack.c.b16 %v558, %v555
      %v715 = vpack.c.b16 %v559, %v556
      %v716 = vpack.c.b16 %v560, %v557
      %v717 = vpack.c.b16 %v564, %v561
      %v718 = vpack.c.b16 %v565, %v562
      %v719 = vpack.c.b16 %v566, %v563
      %v720 = vpack.c.b16 %v570, %v567
      %v721 = vpack.c.b16 %v571, %v568
      %v722 = vpack.c.b16 %v572, %v569
      %v723 = vpack.c.b16 %v576, %v573
      %v724 = vpack.c.b16 %v577, %v574
      %v725 = vpack.c.b16 %v578, %v575
      %v726 = vpack.c.b16 %v582, %v579
      %v727 = vpack.c.b16 %v583, %v580
      %v728 = vpack.c.b16 %v584, %v581
      %v729 = vpack.c.b16 %v588, %v585
      %v730 = vpack.c.b16 %v589, %v586
      %v731 = vpack.c.b16 %v590, %v587
      %v732 = vpack.c.b16 %v594, %v591
      %v733 = vpack.c.b16 %v595, %v592
      %v734 = vpack.c.b16 %v596, %v593
      %v735 = vpack.c.b16 %v600, %v597
      %v736 = vpack.c.b16 %v601, %v598
      %v737 = vpack.c.b16 %v602, %v599
      %v738 = vpack.c.b16 %v606, %v603
      %v739 = vpack.c.b16 %v607, %v604
      %v740 = vpack.c.b16 %v608, %v605
      %v741 = vpack.c.b16 %v612, %v609
      %v742 = vpack.c.b16 %v613, %v610
      %v743 = vpack.c.b16 %v614, %v611
      %v744 = vpack.c.b16 %v618, %v615
      %v745 = vpack.c.b16 %v619, %v616
      %v746 = vpack.c.b16 %v620, %v617
      %v747 = vpack.c.b16 %v624, %v621
      %v748 = vpack.c.b16 %v625, %v622
      %v749 = vpack.c.b16 %v626, %v623
      %v750 = vpack.c.b16 %v630, %v627
      %v751 = vpack.c.b16 %v631, %v628
      %v752 = vpack.c.b16 %v632, %v629
      %v753 = vpack.c.b16 %v636, %v633
      %v754 = vpack.c.b16 %v637, %v634
      %v755 = vpack.c.b16 %v638, %v635
      %v756 = vpack.c.b16 %v642, %v639
      %v757 = vpack.c.b16 %v643, %v640
      %v758 = vpack.c.b16 %v644, %v641
      %v759 = vpack.c.b16 %v648, %v645
      %v760 = vpack.c.b16 %v649, %v646
      %v761 = vpack.c.b16 %v650, %v647
      %v762 = vpack.c.b16 %v654, %v651
      %v763 = vpack.c.b16 %v655, %v652
      %v764 = vpack.c.b16 %v656, %v653
      %v765 = vpack.c.b16 %v660, %v657
      %v766 = vpack.c.b16 %v661, %v658
      %v767 = vpack.c.b16 %v662, %v659
      %v768 = vpack.c.b16 %v666, %v663
      %v769 = vpack.c.b16 %v667, %v664
      %v770 = vpack.c.b16 %v668, %v665
      %v771 = vpack.c.b16 %v672, %v669
      %v772 = vpack.c.b16 %v673, %v670
      %v773 = vpack.c.b16 %v674, %v671
      %v774 = vpack.c.b16 %v678, %v675
      %v775 = vpack.c.b16 %v679, %v676
      %v776 = vpack.c.b16 %v680, %v677
      %v921 = vunpack.c.l.b16 %v178
      %v922 = vunpack.c.l.b16 %v179
      %v923 = vunpack.c.l.b16 %v180
      %v924 = vunpack.c.l.b16 %v181
      %v925 = vunpack.c.l.b16 %v182
      %v926 = vunpack.c.l.b16 %v183
      %v927 = vunpack.c.l.b16 %v184
      %v928 = vunpack.c.l.b16 %v185
      %v929 = vunpack.c.l.b16 %v186
      %v930 = vunpack.c.l.b16 %v187
      %v931 = vunpack.c.l.b16 %v188
      %v932 = vunpack.c.l.b16 %v189
      %v933 = vunpack.c.l.b16 %v190
      %v934 = vunpack.c.l.b16 %v191
      %v935 = vunpack.c.l.b16 %v192
      %v936 = vunpack.c.l.b16 %v193
      %v937 = vunpack.c.l.b16 %v194
      %v938 = vunpack.c.l.b16 %v195
      %v939 = vunpack.c.l.b16 %v196
      %v940 = vunpack.c.l.b16 %v197
      %v941 = vunpack.c.l.b16 %v198
      %v942 = vunpack.c.l.b16 %v199
      %v943 = vunpack.c.l.b16 %v200
      %v944 = vunpack.c.l.b16 %v201
      %v945 = vunpack.c.l.b16 %v202
      %v946 = vunpack.c.l.b16 %v203
      %v947 = vunpack.c.l.b16 %v204
      %v948 = vunpack.c.l.b16 %v205
      %v949 = vunpack.c.l.b16 %v206
      %v950 = vunpack.c.l.b16 %v207
      %v951 = vunpack.c.l.b16 %v208
      %v952 = vunpack.c.l.b16 %v209
      %v953 = vunpack.c.l.b16 %v210
      %v954 = vunpack.c.l.b16 %v211
      %v955 = vunpack.c.l.b16 %v212
      %v956 = vunpack.c.l.b16 %v213
      %v957 = vunpack.c.l.b16 %v214
      %v958 = vunpack.c.l.b16 %v215
      %v959 = vunpack.c.l.b16 %v216
      %v960 = vunpack.c.l.b16 %v217
      %v961 = vunpack.c.l.b16 %v218
      %v962 = vunpack.c.l.b16 %v219
      %v963 = vunpack.c.l.b16 %v220
      %v964 = vunpack.c.l.b16 %v221
      %v965 = vunpack.c.l.b16 %v222
      %v966 = vunpack.c.l.b16 %v223
      %v967 = vunpack.c.l.b16 %v224
      %v968 = vunpack.c.l.b16 %v225
      %v969 = vpack.c.b16 %v922, %v921
      %v970 = vpack.c.b16 %v924, %v923
      %v971 = vpack.c.b16 %v926, %v925
      %v972 = vpack.c.b16 %v928, %v927
      %v973 = vpack.c.b16 %v930, %v929
      %v974 = vpack.c.b16 %v932, %v931
      %v975 = vpack.c.b16 %v934, %v933
      %v976 = vpack.c.b16 %v936, %v935
      %v977 = vpack.c.b16 %v938, %v937
      %v978 = vpack.c.b16 %v940, %v939
      %v979 = vpack.c.b16 %v942, %v941
      %v980 = vpack.c.b16 %v944, %v943
      %v981 = vpack.c.b16 %v946, %v945
      %v982 = vpack.c.b16 %v948, %v947
      %v983 = vpack.c.b16 %v950, %v949
      %v984 = vpack.c.b16 %v952, %v951
      %v985 = vpack.c.b16 %v954, %v953
      %v986 = vpack.c.b16 %v956, %v955
      %v987 = vpack.c.b16 %v958, %v957
      %v988 = vpack.c.b16 %v960, %v959
      %v989 = vpack.c.b16 %v962, %v961
      %v990 = vpack.c.b16 %v964, %v963
      %v991 = vpack.c.b16 %v966, %v965
      %v992 = vpack.c.b16 %v968, %v967
      %1017 = vmatprep.subr.bf16.mxu0 0
      %1018 = vmatpush1.bf16.msra.mxu0 %v969
      %1019 = vmatprep.subr.bf16.mxu0 0
      %1020 = vmatpush1.bf16.msra.mxu0 %v970
      %1021 = vmatprep.subr.bf16.mxu0 0
      %1022 = vmatpush1.bf16.msra.mxu0 %v971
      %1023 = vmatprep.subr.bf16.mxu0 0
      %1024 = vmatpush1.bf16.msra.mxu0 %v972
      %1025 = vmatprep.subr.bf16.mxu0 0
      %1026 = vmatpush1.bf16.msra.mxu0 %v973
      %1027 = vmatprep.subr.bf16.mxu0 0
      %1028 = vmatpush1.bf16.msra.mxu0 %v974
      %1029 = vmatprep.subr.bf16.mxu0 0
      %1030 = vmatpush1.bf16.msra.mxu0 %v975
      %1031 = vmatprep.subr.bf16.mxu0 0
      %1032 = vmatpush1.bf16.msra.mxu0 %v976
      %1033 = vmatprep.subr.bf16.mxu0 0
      %1034 = vmatpush1.bf16.msra.mxu0 %v977
      %1035 = vmatprep.subr.bf16.mxu0 0
      %1036 = vmatpush1.bf16.msra.mxu0 %v978
      %1037 = vmatprep.subr.bf16.mxu0 0
      %1038 = vmatpush1.bf16.msra.mxu0 %v979
      %1039 = vmatprep.subr.bf16.mxu0 0
      %1040 = vmatpush1.bf16.msra.mxu0 %v980
      %1041 = vmatprep.subr.bf16.mxu0 0
      %1042 = vmatpush1.bf16.msra.mxu0 %v981
      %1043 = vmatprep.subr.bf16.mxu0 0
      %1044 = vmatpush1.bf16.msra.mxu0 %v982
      %1045 = vmatprep.subr.bf16.mxu0 0
      %1046 = vmatpush1.bf16.msra.mxu0 %v983
      %1047 = vmatprep.subr.bf16.mxu0 0
      %1048 = vmatpush1.bf16.msra.mxu0 %v984
      %1049 = vmatprep.mubr.bf16.mxu0 %v682
      %1050 = vmatmul.mubr.bf16.gmra.mrb[0].mxu0 %v681
      %v1051 = vpop.f32.mrb[0].mxu0
      %v1052 = vadd.f32 %v359, %v1051
      %v1053 = vpop.f32.mrb[0].mxu0
      %v1054 = vpop.f32.mrb[0].mxu0
      %v1055 = vadd.f32 %v359, %v1054
      %v1056 = vpop.f32.mrb[0].mxu0
      %1057 = vmatprep.mubr.bf16.mxu0 %v685
      %1058 = vmatmul.mubr.bf16.gmra.mrb[0].mxu0 %v684
      %v1059 = vpop.f32.mrb[0].mxu0
      %v1060 = vadd.f32 %v359, %v1059
      %v1061 = vpop.f32.mrb[0].mxu0
      %v1062 = vpop.f32.mrb[0].mxu0
      %v1063 = vadd.f32 %v359, %v1062
      %v1064 = vpop.f32.mrb[0].mxu0
      %1065 = vmatprep.mubr.bf16.mxu0 %v688
      %1066 = vmatmul.mubr.bf16.gmra.mrb[0].mxu0 %v687
      %v1067 = vpop.f32.mrb[0].mxu0
      %v1068 = vadd.f32 %v359, %v1067
      %v1069 = vpop.f32.mrb[0].mxu0
      %v1070 = vpop.f32.mrb[0].mxu0
      %v1071 = vadd.f32 %v359, %v1070
      %v1072 = vpop.f32.mrb[0].mxu0
      %1073 = vmatprep.mubr.bf16.mxu0 %v691
      %1074 = vmatmul.mubr.bf16.gmra.mrb[0].mxu0 %v690
      %v1075 = vpop.f32.mrb[0].mxu0
      %v1076 = vadd.f32 %v359, %v1075
      %v1077 = vpop.f32.mrb[0].mxu0
      %v1078 = vpop.f32.mrb[0].mxu0
      %v1079 = vadd.f32 %v359, %v1078
      %v1080 = vpop.f32.mrb[0].mxu0
      %1081 = vmatprep.mubr.bf16.mxu0 %v694
      %1082 = vmatmul.mubr.bf16.gmra.mrb[0].mxu0 %v693
      %v1083 = vpop.f32.mrb[0].mxu0
      %v1084 = vadd.f32 %v359, %v1083
      %v1085 = vpop.f32.mrb[0].mxu0
      %v1086 = vpop.f32.mrb[0].mxu0
      %v1087 = vadd.f32 %v359, %v1086
      %v1088 = vpop.f32.mrb[0].mxu0
      %1089 = vmatprep.mubr.bf16.mxu0 %v697
      %1090 = vmatmul.mubr.bf16.gmra.mrb[0].mxu0 %v696
      %v1091 = vpop.f32.mrb[0].mxu0
      %v1092 = vadd.f32 %v359, %v1091
      %v1093 = vpop.f32.mrb[0].mxu0
      %v1094 = vpop.f32.mrb[0].mxu0
      %v1095 = vadd.f32 %v359, %v1094
      %v1096 = vpop.f32.mrb[0].mxu0
      %1097 = vmatprep.mubr.bf16.mxu0 %v700
      %1098 = vmatmul.mubr.bf16.gmra.mrb[0].mxu0 %v699
      %v1099 = vpop.f32.mrb[0].mxu0
      %v1100 = vadd.f32 %v359, %v1099
      %v1101 = vpop.f32.mrb[0].mxu0
      %v1102 = vpop.f32.mrb[0].mxu0
      %v1103 = vadd.f32 %v359, %v1102
      %v1104 = vpop.f32.mrb[0].mxu0
      %1105 = vmatprep.mubr.bf16.mxu0 %v703
      %1106 = vmatmul.mubr.bf16.gmra.mrb[0].mxu0 %v702
      %v1107 = vpop.f32.mrb[0].mxu0
      %v1108 = vadd.f32 %v359, %v1107
      %v1109 = vpop.f32.mrb[0].mxu0
      %v1110 = vpop.f32.mrb[0].mxu0
      %v1111 = vadd.f32 %v359, %v1110
      %v1112 = vpop.f32.mrb[0].mxu0
      %1113 = vmatprep.mubr.bf16.mxu0 %v706
      %1114 = vmatmul.mubr.bf16.gmra.mrb[0].mxu0 %v705
      %v1115 = vpop.f32.mrb[0].mxu0
      %v1116 = vadd.f32 %v359, %v1115
      %v1117 = vpop.f32.mrb[0].mxu0
      %v1118 = vpop.f32.mrb[0].mxu0
      %v1119 = vadd.f32 %v359, %v1118
      %v1120 = vpop.f32.mrb[0].mxu0
      %1121 = vmatprep.mubr.bf16.mxu0 %v709
      %1122 = vmatmul.mubr.bf16.gmra.mrb[0].mxu0 %v708
      %v1123 = vpop.f32.mrb[0].mxu0
      %v1124 = vadd.f32 %v359, %v1123
      %v1125 = vpop.f32.mrb[0].mxu0
      %v1126 = vpop.f32.mrb[0].mxu0
      %v1127 = vadd.f32 %v359, %v1126
      %v1128 = vpop.f32.mrb[0].mxu0
      %1129 = vmatprep.mubr.bf16.mxu0 %v712
      %1130 = vmatmul.mubr.bf16.gmra.mrb[0].mxu0 %v711
      %v1131 = vpop.f32.mrb[0].mxu0
      %v1132 = vadd.f32 %v359, %v1131
      %v1133 = vpop.f32.mrb[0].mxu0
      %v1134 = vpop.f32.mrb[0].mxu0
      %v1135 = vadd.f32 %v359, %v1134
      %v1136 = vpop.f32.mrb[0].mxu0
      %1137 = vmatprep.mubr.bf16.mxu0 %v715
      %1138 = vmatmul.mubr.bf16.gmra.mrb[0].mxu0 %v714
      %v1139 = vpop.f32.mrb[0].mxu0
      %v1140 = vadd.f32 %v359, %v1139
      %v1141 = vpop.f32.mrb[0].mxu0
      %v1142 = vpop.f32.mrb[0].mxu0
      %v1143 = vadd.f32 %v359, %v1142
      %v1144 = vpop.f32.mrb[0].mxu0
      %1145 = vmatprep.mubr.bf16.mxu0 %v718
      %1146 = vmatmul.mubr.bf16.gmra.mrb[0].mxu0 %v717
      %v1147 = vpop.f32.mrb[0].mxu0
      %v1148 = vadd.f32 %v359, %v1147
      %v1149 = vpop.f32.mrb[0].mxu0
      %v1150 = vpop.f32.mrb[0].mxu0
      %v1151 = vadd.f32 %v359, %v1150
      %v1152 = vpop.f32.mrb[0].mxu0
      %1153 = vmatprep.mubr.bf16.mxu0 %v721
      %1154 = vmatmul.mubr.bf16.gmra.mrb[0].mxu0 %v720
      %v1155 = vpop.f32.mrb[0].mxu0
      %v1156 = vadd.f32 %v359, %v1155
      %v1157 = vpop.f32.mrb[0].mxu0
      %v1158 = vpop.f32.mrb[0].mxu0
      %v1159 = vadd.f32 %v359, %v1158
      %v1160 = vpop.f32.mrb[0].mxu0
      %1161 = vmatprep.mubr.bf16.mxu0 %v724
      %1162 = vmatmul.mubr.bf16.gmra.mrb[0].mxu0 %v723
      %v1163 = vpop.f32.mrb[0].mxu0
      %v1164 = vadd.f32 %v359, %v1163
      %v1165 = vpop.f32.mrb[0].mxu0
      %v1166 = vpop.f32.mrb[0].mxu0
      %v1167 = vadd.f32 %v359, %v1166
      %v1168 = vpop.f32.mrb[0].mxu0
      %1169 = vmatprep.mubr.bf16.mxu0 %v727
      %1170 = vmatmul.mubr.bf16.gmra.mrb[0].mxu0 %v726
      %v1171 = vpop.f32.mrb[0].mxu0
      %v1172 = vadd.f32 %v359, %v1171
      %v1173 = vpop.f32.mrb[0].mxu0
      %v1174 = vpop.f32.mrb[0].mxu0
      %v1175 = vadd.f32 %v359, %v1174
      %v1176 = vpop.f32.mrb[0].mxu0
      %1177 = vmatprep.mubr.bf16.mxu0 %v730
      %1178 = vmatmul.mubr.bf16.gmra.mrb[0].mxu0 %v729
      %v1179 = vpop.f32.mrb[0].mxu0
      %v1180 = vadd.f32 %v359, %v1179
      %v1181 = vpop.f32.mrb[0].mxu0
      %v1182 = vpop.f32.mrb[0].mxu0
      %v1183 = vadd.f32 %v359, %v1182
      %v1184 = vpop.f32.mrb[0].mxu0
      %1185 = vmatprep.mubr.bf16.mxu0 %v733
      %1186 = vmatmul.mubr.bf16.gmra.mrb[0].mxu0 %v732
      %v1187 = vpop.f32.mrb[0].mxu0
      %v1188 = vadd.f32 %v359, %v1187
      %v1189 = vpop.f32.mrb[0].mxu0
      %v1190 = vpop.f32.mrb[0].mxu0
      %v1191 = vadd.f32 %v359, %v1190
      %v1192 = vpop.f32.mrb[0].mxu0
      %1193 = vmatprep.mubr.bf16.mxu0 %v736
      %1194 = vmatmul.mubr.bf16.gmra.mrb[0].mxu0 %v735
      %v1195 = vpop.f32.mrb[0].mxu0
      %v1196 = vadd.f32 %v359, %v1195
      %v1197 = vpop.f32.mrb[0].mxu0
      %v1198 = vpop.f32.mrb[0].mxu0
      %v1199 = vadd.f32 %v359, %v1198
      %v1200 = vpop.f32.mrb[0].mxu0
      %1201 = vmatprep.mubr.bf16.mxu0 %v739
      %1202 = vmatmul.mubr.bf16.gmra.mrb[0].mxu0 %v738
      %v1203 = vpop.f32.mrb[0].mxu0
      %v1204 = vadd.f32 %v359, %v1203
      %v1205 = vpop.f32.mrb[0].mxu0
      %v1206 = vpop.f32.mrb[0].mxu0
      %v1207 = vadd.f32 %v359, %v1206
      %v1208 = vpop.f32.mrb[0].mxu0
      %1209 = vmatprep.mubr.bf16.mxu0 %v742
      %1210 = vmatmul.mubr.bf16.gmra.mrb[0].mxu0 %v741
      %v1211 = vpop.f32.mrb[0].mxu0
      %v1212 = vadd.f32 %v359, %v1211
      %v1213 = vpop.f32.mrb[0].mxu0
      %v1214 = vpop.f32.mrb[0].mxu0
      %v1215 = vadd.f32 %v359, %v1214
      %v1216 = vpop.f32.mrb[0].mxu0
      %1217 = vmatprep.mubr.bf16.mxu0 %v745
      %1218 = vmatmul.mubr.bf16.gmra.mrb[0].mxu0 %v744
      %v1219 = vpop.f32.mrb[0].mxu0
      %v1220 = vadd.f32 %v359, %v1219
      %v1221 = vpop.f32.mrb[0].mxu0
      %v1222 = vpop.f32.mrb[0].mxu0
      %v1223 = vadd.f32 %v359, %v1222
      %v1224 = vpop.f32.mrb[0].mxu0
      %1225 = vmatprep.mubr.bf16.mxu0 %v748
      %1226 = vmatmul.mubr.bf16.gmra.mrb[0].mxu0 %v747
      %v1227 = vpop.f32.mrb[0].mxu0
      %v1228 = vadd.f32 %v359, %v1227
      %v1229 = vpop.f32.mrb[0].mxu0
      %v1230 = vpop.f32.mrb[0].mxu0
      %v1231 = vadd.f32 %v359, %v1230
      %v1232 = vpop.f32.mrb[0].mxu0
      %1233 = vmatprep.mubr.bf16.mxu0 %v751
      %1234 = vmatmul.mubr.bf16.gmra.mrb[0].mxu0 %v750
      %v1235 = vpop.f32.mrb[0].mxu0
      %v1236 = vadd.f32 %v359, %v1235
      %v1237 = vpop.f32.mrb[0].mxu0
      %v1238 = vpop.f32.mrb[0].mxu0
      %v1239 = vadd.f32 %v359, %v1238
      %v1240 = vpop.f32.mrb[0].mxu0
      %1241 = vmatprep.mubr.bf16.mxu0 %v754
      %1242 = vmatmul.mubr.bf16.gmra.mrb[0].mxu0 %v753
      %v1243 = vpop.f32.mrb[0].mxu0
      %v1244 = vadd.f32 %v359, %v1243
      %v1245 = vpop.f32.mrb[0].mxu0
      %v1246 = vpop.f32.mrb[0].mxu0
      %v1247 = vadd.f32 %v359, %v1246
      %v1248 = vpop.f32.mrb[0].mxu0
      %1249 = vmatprep.mubr.bf16.mxu0 %v757
      %1250 = vmatmul.mubr.bf16.gmra.mrb[0].mxu0 %v756
      %v1251 = vpop.f32.mrb[0].mxu0
      %v1252 = vadd.f32 %v359, %v1251
      %v1253 = vpop.f32.mrb[0].mxu0
      %v1254 = vpop.f32.mrb[0].mxu0
      %v1255 = vadd.f32 %v359, %v1254
      %v1256 = vpop.f32.mrb[0].mxu0
      %1257 = vmatprep.mubr.bf16.mxu0 %v760
      %1258 = vmatmul.mubr.bf16.gmra.mrb[0].mxu0 %v759
      %v1259 = vpop.f32.mrb[0].mxu0
      %v1260 = vadd.f32 %v359, %v1259
      %v1261 = vpop.f32.mrb[0].mxu0
      %v1262 = vpop.f32.mrb[0].mxu0
      %v1263 = vadd.f32 %v359, %v1262
      %v1264 = vpop.f32.mrb[0].mxu0
      %1265 = vmatprep.mubr.bf16.mxu0 %v763
      %1266 = vmatmul.mubr.bf16.gmra.mrb[0].mxu0 %v762
      %v1267 = vpop.f32.mrb[0].mxu0
      %v1268 = vadd.f32 %v359, %v1267
      %v1269 = vpop.f32.mrb[0].mxu0
      %v1270 = vpop.f32.mrb[0].mxu0
      %v1271 = vadd.f32 %v359, %v1270
      %v1272 = vpop.f32.mrb[0].mxu0
      %1273 = vmatprep.mubr.bf16.mxu0 %v766
      %1274 = vmatmul.mubr.bf16.gmra.mrb[0].mxu0 %v765
      %v1275 = vpop.f32.mrb[0].mxu0
      %v1276 = vadd.f32 %v359, %v1275
      %v1277 = vpop.f32.mrb[0].mxu0
      %v1278 = vpop.f32.mrb[0].mxu0
      %v1279 = vadd.f32 %v359, %v1278
      %v1280 = vpop.f32.mrb[0].mxu0
      %1281 = vmatprep.mubr.bf16.mxu0 %v769
      %1282 = vmatmul.mubr.bf16.gmra.mrb[0].mxu0 %v768
      %v1283 = vpop.f32.mrb[0].mxu0
      %v1284 = vadd.f32 %v359, %v1283
      %v1285 = vpop.f32.mrb[0].mxu0
      %v1286 = vpop.f32.mrb[0].mxu0
      %v1287 = vadd.f32 %v359, %v1286
      %v1288 = vpop.f32.mrb[0].mxu0
      %1289 = vmatprep.mubr.bf16.mxu0 %v772
      %1290 = vmatmul.mubr.bf16.gmra.mrb[0].mxu0 %v771
      %v1291 = vpop.f32.mrb[0].mxu0
      %v1292 = vadd.f32 %v359, %v1291
      %v1293 = vpop.f32.mrb[0].mxu0
      %v1294 = vpop.f32.mrb[0].mxu0
      %v1295 = vadd.f32 %v359, %v1294
      %v1296 = vpop.f32.mrb[0].mxu0
      %1297 = vmatprep.mubr.bf16.mxu0 %v775
      %1298 = vmatmul.mubr.bf16.gmra.mrb[0].mxu0 %v774
      %v1299 = vpop.f32.mrb[0].mxu0
      %v1300 = vadd.f32 %v359, %v1299
      %v1301 = vpop.f32.mrb[0].mxu0
      %v1302 = vpop.f32.mrb[0].mxu0
      %v1303 = vadd.f32 %v359, %v1302
      %v1304 = vpop.f32.mrb[0].mxu0
      %1305 = vdwg.mxu0
      %1306 = vmatprep.subr.bf16.mxu0 0
      %1307 = vmatpush1.bf16.msra.mxu0 %v985
      %1308 = vmatprep.subr.bf16.mxu0 0
      %1309 = vmatpush1.bf16.msra.mxu0 %v986
      %1310 = vmatprep.subr.bf16.mxu0 0
      %1311 = vmatpush1.bf16.msra.mxu0 %v987
      %1312 = vmatprep.subr.bf16.mxu0 0
      %1313 = vmatpush1.bf16.msra.mxu0 %v988
      %1314 = vmatprep.subr.bf16.mxu0 0
      %1315 = vmatpush1.bf16.msra.mxu0 %v989
      %1316 = vmatprep.subr.bf16.mxu0 0
      %1317 = vmatpush1.bf16.msra.mxu0 %v990
      %1318 = vmatprep.subr.bf16.mxu0 0
      %1319 = vmatpush1.bf16.msra.mxu0 %v991
      %1320 = vmatprep.subr.bf16.mxu0 0
      %1321 = vmatpush1.bf16.msra.mxu0 %v992
      %1322 = vmatprep.subr.bf16.mxu0 0
      %1323 = vmatpush1.bf16.msra.mxu0 0
      %1324 = vmatprep.subr.bf16.mxu0 0
      %1325 = vmatpush1.bf16.msra.mxu0 0
      %1326 = vmatprep.subr.bf16.mxu0 0
      %1327 = vmatpush1.bf16.msra.mxu0 0
      %1328 = vmatprep.subr.bf16.mxu0 0
      %1329 = vmatpush1.bf16.msra.mxu0 0
      %1330 = vmatprep.subr.bf16.mxu0 0
      %1331 = vmatpush1.bf16.msra.mxu0 0
      %1332 = vmatprep.subr.bf16.mxu0 0
      %1333 = vmatpush1.bf16.msra.mxu0 0
      %1334 = vmatprep.subr.bf16.mxu0 0
      %1335 = vmatpush1.bf16.msra.mxu0 0
      %1336 = vmatprep.subr.bf16.mxu0 0
      %1337 = vmatpush1.bf16.msra.mxu0 0
      %1338 = vmatprep.mubr.bf16.mxu0 0
      %1339 = vmatmul.mubr.bf16.gmra.mrb[0].mxu0 %v683
      %v1340 = vpop.f32.mrb[0].mxu0
      %v1341 = vadd.f32 %v1052, %v1340
      %v1342 = vpop.f32.mrb[0].mxu0
      %v1343 = vpop.f32.mrb[0].mxu0
      %v1344 = vadd.f32 %v1055, %v1343
      %v1345 = vpop.f32.mrb[0].mxu0
      %1346 = vmatprep.mubr.bf16.mxu0 0
      %1347 = vmatmul.mubr.bf16.gmra.mrb[0].mxu0 %v686
      %v1348 = vpop.f32.mrb[0].mxu0
      %v1349 = vadd.f32 %v1060, %v1348
      %v1350 = vpop.f32.mrb[0].mxu0
      %v1351 = vpop.f32.mrb[0].mxu0
      %v1352 = vadd.f32 %v1063, %v1351
      %v1353 = vpop.f32.mrb[0].mxu0
      %1354 = vmatprep.mubr.bf16.mxu0 0
      %1355 = vmatmul.mubr.bf16.gmra.mrb[0].mxu0 %v689
      %v1356 = vpop.f32.mrb[0].mxu0
      %v1357 = vadd.f32 %v1068, %v1356
      %v1358 = vpop.f32.mrb[0].mxu0
      %v1359 = vpop.f32.mrb[0].mxu0
      %v1360 = vadd.f32 %v1071, %v1359
      %v1361 = vpop.f32.mrb[0].mxu0
      %1362 = vmatprep.mubr.bf16.mxu0 0
      %1363 = vmatmul.mubr.bf16.gmra.mrb[0].mxu0 %v692
      %v1364 = vpop.f32.mrb[0].mxu0
      %v1365 = vadd.f32 %v1076, %v1364
      %v1366 = vpop.f32.mrb[0].mxu0
      %v1367 = vpop.f32.mrb[0].mxu0
      %v1368 = vadd.f32 %v1079, %v1367
      %v1369 = vpop.f32.mrb[0].mxu0
      %1370 = vmatprep.mubr.bf16.mxu0 0
      %1371 = vmatmul.mubr.bf16.gmra.mrb[0].mxu0 %v695
      %v1372 = vpop.f32.mrb[0].mxu0
      %v1373 = vadd.f32 %v1084, %v1372
      %v1374 = vpop.f32.mrb[0].mxu0
      %v1375 = vpop.f32.mrb[0].mxu0
      %v1376 = vadd.f32 %v1087, %v1375
      %v1377 = vpop.f32.mrb[0].mxu0
      %1378 = vmatprep.mubr.bf16.mxu0 0
      %1379 = vmatmul.mubr.bf16.gmra.mrb[0].mxu0 %v698
      %v1380 = vpop.f32.mrb[0].mxu0
      %v1381 = vadd.f32 %v1092, %v1380
      %v1382 = vpop.f32.mrb[0].mxu0
      %v1383 = vpop.f32.mrb[0].mxu0
      %v1384 = vadd.f32 %v1095, %v1383
      %v1385 = vpop.f32.mrb[0].mxu0
      %1386 = vmatprep.mubr.bf16.mxu0 0
      %1387 = vmatmul.mubr.bf16.gmra.mrb[0].mxu0 %v701
      %v1388 = vpop.f32.mrb[0].mxu0
      %v1389 = vadd.f32 %v1100, %v1388
      %v1390 = vpop.f32.mrb[0].mxu0
      %v1391 = vpop.f32.mrb[0].mxu0
      %v1392 = vadd.f32 %v1103, %v1391
      %v1393 = vpop.f32.mrb[0].mxu0
      %1394 = vmatprep.mubr.bf16.mxu0 0
      %1395 = vmatmul.mubr.bf16.gmra.mrb[0].mxu0 %v704
      %v1396 = vpop.f32.mrb[0].mxu0
      %v1397 = vadd.f32 %v1108, %v1396
      %v1398 = vpop.f32.mrb[0].mxu0
      %v1399 = vpop.f32.mrb[0].mxu0
      %v1400 = vadd.f32 %v1111, %v1399
      %v1401 = vpop.f32.mrb[0].mxu0
      %1402 = vmatprep.mubr.bf16.mxu0 0
      %1403 = vmatmul.mubr.bf16.gmra.mrb[0].mxu0 %v707
      %v1404 = vpop.f32.mrb[0].mxu0
      %v1405 = vadd.f32 %v1116, %v1404
      %v1406 = vpop.f32.mrb[0].mxu0
      %v1407 = vpop.f32.mrb[0].mxu0
      %v1408 = vadd.f32 %v1119, %v1407
      %v1409 = vpop.f32.mrb[0].mxu0
      %1410 = vmatprep.mubr.bf16.mxu0 0
      %1411 = vmatmul.mubr.bf16.gmra.mrb[0].mxu0 %v710
      %v1412 = vpop.f32.mrb[0].mxu0
      %v1413 = vadd.f32 %v1124, %v1412
      %v1414 = vpop.f32.mrb[0].mxu0
      %v1415 = vpop.f32.mrb[0].mxu0
      %v1416 = vadd.f32 %v1127, %v1415
      %v1417 = vpop.f32.mrb[0].mxu0
      %1418 = vmatprep.mubr.bf16.mxu0 0
      %1419 = vmatmul.mubr.bf16.gmra.mrb[0].mxu0 %v713
      %v1420 = vpop.f32.mrb[0].mxu0
      %v1421 = vadd.f32 %v1132, %v1420
      %v1422 = vpop.f32.mrb[0].mxu0
      %v1423 = vpop.f32.mrb[0].mxu0
      %v1424 = vadd.f32 %v1135, %v1423
      %v1425 = vpop.f32.mrb[0].mxu0
      %1426 = vmatprep.mubr.bf16.mxu0 0
      %1427 = vmatmul.mubr.bf16.gmra.mrb[0].mxu0 %v716
      %v1428 = vpop.f32.mrb[0].mxu0
      %v1429 = vadd.f32 %v1140, %v1428
      %v1430 = vpop.f32.mrb[0].mxu0
      %v1431 = vpop.f32.mrb[0].mxu0
      %v1432 = vadd.f32 %v1143, %v1431
      %v1433 = vpop.f32.mrb[0].mxu0
      %1434 = vmatprep.mubr.bf16.mxu0 0
      %1435 = vmatmul.mubr.bf16.gmra.mrb[0].mxu0 %v719
      %v1436 = vpop.f32.mrb[0].mxu0
      %v1437 = vadd.f32 %v1148, %v1436
      %v1438 = vpop.f32.mrb[0].mxu0
      %v1439 = vpop.f32.mrb[0].mxu0
      %v1440 = vadd.f32 %v1151, %v1439
      %v1441 = vpop.f32.mrb[0].mxu0
      %1442 = vmatprep.mubr.bf16.mxu0 0
      %1443 = vmatmul.mubr.bf16.gmra.mrb[0].mxu0 %v722
      %v1444 = vpop.f32.mrb[0].mxu0
      %v1445 = vadd.f32 %v1156, %v1444
      %v1446 = vpop.f32.mrb[0].mxu0
      %v1447 = vpop.f32.mrb[0].mxu0
      %v1448 = vadd.f32 %v1159, %v1447
      %v1449 = vpop.f32.mrb[0].mxu0
      %1450 = vmatprep.mubr.bf16.mxu0 0
      %1451 = vmatmul.mubr.bf16.gmra.mrb[0].mxu0 %v725
      %v1452 = vpop.f32.mrb[0].mxu0
      %v1453 = vadd.f32 %v1164, %v1452
      %v1454 = vpop.f32.mrb[0].mxu0
      %v1455 = vpop.f32.mrb[0].mxu0
      %v1456 = vadd.f32 %v1167, %v1455
      %v1457 = vpop.f32.mrb[0].mxu0
      %1458 = vmatprep.mubr.bf16.mxu0 0
      %1459 = vmatmul.mubr.bf16.gmra.mrb[0].mxu0 %v728
      %v1460 = vpop.f32.mrb[0].mxu0
      %v1461 = vadd.f32 %v1172, %v1460
      %v1462 = vpop.f32.mrb[0].mxu0
      %v1463 = vpop.f32.mrb[0].mxu0
      %v1464 = vadd.f32 %v1175, %v1463
      %v1465 = vpop.f32.mrb[0].mxu0
      %1466 = vmatprep.mubr.bf16.mxu0 0
      %1467 = vmatmul.mubr.bf16.gmra.mrb[0].mxu0 %v731
      %v1468 = vpop.f32.mrb[0].mxu0
      %v1469 = vadd.f32 %v1180, %v1468
      %v1470 = vpop.f32.mrb[0].mxu0
      %v1471 = vpop.f32.mrb[0].mxu0
      %v1472 = vadd.f32 %v1183, %v1471
      %v1473 = vpop.f32.mrb[0].mxu0
      %1474 = vmatprep.mubr.bf16.mxu0 0
      %1475 = vmatmul.mubr.bf16.gmra.mrb[0].mxu0 %v734
      %v1476 = vpop.f32.mrb[0].mxu0
      %v1477 = vadd.f32 %v1188, %v1476
      %v1478 = vpop.f32.mrb[0].mxu0
      %v1479 = vpop.f32.mrb[0].mxu0
      %v1480 = vadd.f32 %v1191, %v1479
      %v1481 = vpop.f32.mrb[0].mxu0
      %1482 = vmatprep.mubr.bf16.mxu0 0
      %1483 = vmatmul.mubr.bf16.gmra.mrb[0].mxu0 %v737
      %v1484 = vpop.f32.mrb[0].mxu0
      %v1485 = vadd.f32 %v1196, %v1484
      %v1486 = vpop.f32.mrb[0].mxu0
      %v1487 = vpop.f32.mrb[0].mxu0
      %v1488 = vadd.f32 %v1199, %v1487
      %v1489 = vpop.f32.mrb[0].mxu0
      %1490 = vmatprep.mubr.bf16.mxu0 0
      %1491 = vmatmul.mubr.bf16.gmra.mrb[0].mxu0 %v740
      %v1492 = vpop.f32.mrb[0].mxu0
      %v1493 = vadd.f32 %v1204, %v1492
      %v1494 = vpop.f32.mrb[0].mxu0
      %v1495 = vpop.f32.mrb[0].mxu0
      %v1496 = vadd.f32 %v1207, %v1495
      %v1497 = vpop.f32.mrb[0].mxu0
      %1498 = vmatprep.mubr.bf16.mxu0 0
      %1499 = vmatmul.mubr.bf16.gmra.mrb[0].mxu0 %v743
      %v1500 = vpop.f32.mrb[0].mxu0
      %v1501 = vadd.f32 %v1212, %v1500
      %v1502 = vpop.f32.mrb[0].mxu0
      %v1503 = vpop.f32.mrb[0].mxu0
      %v1504 = vadd.f32 %v1215, %v1503
      %v1505 = vpop.f32.mrb[0].mxu0
      %1506 = vmatprep.mubr.bf16.mxu0 0
      %1507 = vmatmul.mubr.bf16.gmra.mrb[0].mxu0 %v746
      %v1508 = vpop.f32.mrb[0].mxu0
      %v1509 = vadd.f32 %v1220, %v1508
      %v1510 = vpop.f32.mrb[0].mxu0
      %v1511 = vpop.f32.mrb[0].mxu0
      %v1512 = vadd.f32 %v1223, %v1511
      %v1513 = vpop.f32.mrb[0].mxu0
      %1514 = vmatprep.mubr.bf16.mxu0 0
      %1515 = vmatmul.mubr.bf16.gmra.mrb[0].mxu0 %v749
      %v1516 = vpop.f32.mrb[0].mxu0
      %v1517 = vadd.f32 %v1228, %v1516
      %v1518 = vpop.f32.mrb[0].mxu0
      %v1519 = vpop.f32.mrb[0].mxu0
      %v1520 = vadd.f32 %v1231, %v1519
      %v1521 = vpop.f32.mrb[0].mxu0
      %1522 = vmatprep.mubr.bf16.mxu0 0
      %1523 = vmatmul.mubr.bf16.gmra.mrb[0].mxu0 %v752
      %v1524 = vpop.f32.mrb[0].mxu0
      %v1525 = vadd.f32 %v1236, %v1524
      %v1526 = vpop.f32.mrb[0].mxu0
      %v1527 = vpop.f32.mrb[0].mxu0
      %v1528 = vadd.f32 %v1239, %v1527
      %v1529 = vpop.f32.mrb[0].mxu0
      %1530 = vmatprep.mubr.bf16.mxu0 0
      %1531 = vmatmul.mubr.bf16.gmra.mrb[0].mxu0 %v755
      %v1532 = vpop.f32.mrb[0].mxu0
      %v1533 = vadd.f32 %v1244, %v1532
      %v1534 = vpop.f32.mrb[0].mxu0
      %v1535 = vpop.f32.mrb[0].mxu0
      %v1536 = vadd.f32 %v1247, %v1535
      %v1537 = vpop.f32.mrb[0].mxu0
      %1538 = vmatprep.mubr.bf16.mxu0 0
      %1539 = vmatmul.mubr.bf16.gmra.mrb[0].mxu0 %v758
      %v1540 = vpop.f32.mrb[0].mxu0
      %v1541 = vadd.f32 %v1252, %v1540
      %v1542 = vpop.f32.mrb[0].mxu0
      %v1543 = vpop.f32.mrb[0].mxu0
      %v1544 = vadd.f32 %v1255, %v1543
      %v1545 = vpop.f32.mrb[0].mxu0
      %1546 = vmatprep.mubr.bf16.mxu0 0
      %1547 = vmatmul.mubr.bf16.gmra.mrb[0].mxu0 %v761
      %v1548 = vpop.f32.mrb[0].mxu0
      %v1549 = vadd.f32 %v1260, %v1548
      %v1550 = vpop.f32.mrb[0].mxu0
      %v1551 = vpop.f32.mrb[0].mxu0
      %v1552 = vadd.f32 %v1263, %v1551
      %v1553 = vpop.f32.mrb[0].mxu0
      %1554 = vmatprep.mubr.bf16.mxu0 0
      %1555 = vmatmul.mubr.bf16.gmra.mrb[0].mxu0 %v764
      %v1556 = vpop.f32.mrb[0].mxu0
      %v1557 = vadd.f32 %v1268, %v1556
      %v1558 = vpop.f32.mrb[0].mxu0
      %v1559 = vpop.f32.mrb[0].mxu0
      %v1560 = vadd.f32 %v1271, %v1559
      %v1561 = vpop.f32.mrb[0].mxu0
      %1562 = vmatprep.mubr.bf16.mxu0 0
      %1563 = vmatmul.mubr.bf16.gmra.mrb[0].mxu0 %v767
      %v1564 = vpop.f32.mrb[0].mxu0
      %v1565 = vadd.f32 %v1276, %v1564
      %v1566 = vpop.f32.mrb[0].mxu0
      %v1567 = vpop.f32.mrb[0].mxu0
      %v1568 = vadd.f32 %v1279, %v1567
      %v1569 = vpop.f32.mrb[0].mxu0
      %1570 = vmatprep.mubr.bf16.mxu0 0
      %1571 = vmatmul.mubr.bf16.gmra.mrb[0].mxu0 %v770
      %v1572 = vpop.f32.mrb[0].mxu0
      %v1573 = vadd.f32 %v1284, %v1572
      %v1574 = vpop.f32.mrb[0].mxu0
      %v1575 = vpop.f32.mrb[0].mxu0
      %v1576 = vadd.f32 %v1287, %v1575
      %v1577 = vpop.f32.mrb[0].mxu0
      %1578 = vmatprep.mubr.bf16.mxu0 0
      %1579 = vmatmul.mubr.bf16.gmra.mrb[0].mxu0 %v773
      %v1580 = vpop.f32.mrb[0].mxu0
      %v1581 = vadd.f32 %v1292, %v1580
      %v1582 = vpop.f32.mrb[0].mxu0
      %v1583 = vpop.f32.mrb[0].mxu0
      %v1584 = vadd.f32 %v1295, %v1583
      %v1585 = vpop.f32.mrb[0].mxu0
      %1586 = vmatprep.mubr.bf16.mxu0 0
      %1587 = vmatmul.mubr.bf16.gmra.mrb[0].mxu0 %v776
      %v1588 = vpop.f32.mrb[0].mxu0
      %v1589 = vadd.f32 %v1300, %v1588
      %v1590 = vpop.f32.mrb[0].mxu0
      %v1591 = vpop.f32.mrb[0].mxu0
      %v1592 = vadd.f32 %v1303, %v1591
      %v1593 = vpop.f32.mrb[0].mxu0
      %1594 = vdwg.mxu0
      %v1595 = vxor.u32 %v1341, 2147483648
      %v1596 = vxor.u32 %v1344, 2147483648
      %v1597 = vxor.u32 %v1349, 2147483648
      %v1598 = vxor.u32 %v1352, 2147483648
      %v1599 = vxor.u32 %v1357, 2147483648
      %v1600 = vxor.u32 %v1360, 2147483648
      %v1601 = vxor.u32 %v1365, 2147483648
      %v1602 = vxor.u32 %v1368, 2147483648
      %v1603 = vxor.u32 %v1373, 2147483648
      %v1604 = vxor.u32 %v1376, 2147483648
      %v1605 = vxor.u32 %v1381, 2147483648
      %v1606 = vxor.u32 %v1384, 2147483648
      %v1607 = vxor.u32 %v1389, 2147483648
      %v1608 = vxor.u32 %v1392, 2147483648
      %v1609 = vxor.u32 %v1397, 2147483648
      %v1610 = vxor.u32 %v1400, 2147483648
      %v1611 = vxor.u32 %v1405, 2147483648
      %v1612 = vxor.u32 %v1408, 2147483648
      %v1613 = vxor.u32 %v1413, 2147483648
      %v1614 = vxor.u32 %v1416, 2147483648
      %v1615 = vxor.u32 %v1421, 2147483648
      %v1616 = vxor.u32 %v1424, 2147483648
      %v1617 = vxor.u32 %v1429, 2147483648
      %v1618 = vxor.u32 %v1432, 2147483648
      %v1619 = vxor.u32 %v1437, 2147483648
      %v1620 = vxor.u32 %v1440, 2147483648
      %v1621 = vxor.u32 %v1445, 2147483648
      %v1622 = vxor.u32 %v1448, 2147483648
      %v1623 = vxor.u32 %v1453, 2147483648
      %v1624 = vxor.u32 %v1456, 2147483648
      %v1625 = vxor.u32 %v1461, 2147483648
      %v1626 = vxor.u32 %v1464, 2147483648
      %v1627 = vxor.u32 %v1469, 2147483648
      %v1628 = vxor.u32 %v1472, 2147483648
      %v1629 = vxor.u32 %v1477, 2147483648
      %v1630 = vxor.u32 %v1480, 2147483648
      %v1631 = vxor.u32 %v1485, 2147483648
      %v1632 = vxor.u32 %v1488, 2147483648
      %v1633 = vxor.u32 %v1493, 2147483648
      %v1634 = vxor.u32 %v1496, 2147483648
      %v1635 = vxor.u32 %v1501, 2147483648
      %v1636 = vxor.u32 %v1504, 2147483648
      %v1637 = vxor.u32 %v1509, 2147483648
      %v1638 = vxor.u32 %v1512, 2147483648
      %v1639 = vxor.u32 %v1517, 2147483648
      %v1640 = vxor.u32 %v1520, 2147483648
      %v1641 = vxor.u32 %v1525, 2147483648
      %v1642 = vxor.u32 %v1528, 2147483648
      %v1643 = vxor.u32 %v1533, 2147483648
      %v1644 = vxor.u32 %v1536, 2147483648
      %v1645 = vxor.u32 %v1541, 2147483648
      %v1646 = vxor.u32 %v1544, 2147483648
      %v1647 = vxor.u32 %v1549, 2147483648
      %v1648 = vxor.u32 %v1552, 2147483648
      %v1649 = vxor.u32 %v1557, 2147483648
      %v1650 = vxor.u32 %v1560, 2147483648
      %v1651 = vxor.u32 %v1565, 2147483648
      %v1652 = vxor.u32 %v1568, 2147483648
      %v1653 = vxor.u32 %v1573, 2147483648
      %v1654 = vxor.u32 %v1576, 2147483648
      %v1655 = vxor.u32 %v1581, 2147483648
      %v1656 = vxor.u32 %v1584, 2147483648
      %v1657 = vxor.u32 %v1589, 2147483648
      %v1658 = vxor.u32 %v1592, 2147483648
      %v1659 = vmul.f32 %v1595, 1.442695
      %v1660 = vpow.pop %v1659
      %v1661 = vmul.f32 %v1596, 1.442695
      %v1662 = vpow.pop %v1661
      %v1663 = vmul.f32 %v1597, 1.442695
      %v1664 = vpow.pop %v1663
      %v1665 = vmul.f32 %v1598, 1.442695
      %v1666 = vpow.pop %v1665
      %v1667 = vmul.f32 %v1599, 1.442695
      %v1668 = vpow.pop %v1667
      %v1669 = vmul.f32 %v1600, 1.442695
      %v1670 = vpow.pop %v1669
      %v1671 = vmul.f32 %v1601, 1.442695
      %v1672 = vpow.pop %v1671
      %v1673 = vmul.f32 %v1602, 1.442695
      %v1674 = vpow.pop %v1673
      %v1675 = vmul.f32 %v1603, 1.442695
      %v1676 = vpow.pop %v1675
      %v1677 = vmul.f32 %v1604, 1.442695
      %v1678 = vpow.pop %v1677
      %v1679 = vmul.f32 %v1605, 1.442695
      %v1680 = vpow.pop %v1679
      %v1681 = vmul.f32 %v1606, 1.442695
      %v1682 = vpow.pop %v1681
      %v1683 = vmul.f32 %v1607, 1.442695
      %v1684 = vpow.pop %v1683
      %v1685 = vmul.f32 %v1608, 1.442695
      %v1686 = vpow.pop %v1685
      %v1687 = vmul.f32 %v1609, 1.442695
      %v1688 = vpow.pop %v1687
      %v1689 = vmul.f32 %v1610, 1.442695
      %v1690 = vpow.pop %v1689
      %v1691 = vmul.f32 %v1611, 1.442695
      %v1692 = vpow.pop %v1691
      %v1693 = vmul.f32 %v1612, 1.442695
      %v1694 = vpow.pop %v1693
      %v1695 = vmul.f32 %v1613, 1.442695
      %v1696 = vpow.pop %v1695
      %v1697 = vmul.f32 %v1614, 1.442695
      %v1698 = vpow.pop %v1697
      %v1699 = vmul.f32 %v1615, 1.442695
      %v1700 = vpow.pop %v1699
      %v1701 = vmul.f32 %v1616, 1.442695
      %v1702 = vpow.pop %v1701
      %v1703 = vmul.f32 %v1617, 1.442695
      %v1704 = vpow.pop %v1703
      %v1705 = vmul.f32 %v1618, 1.442695
      %v1706 = vpow.pop %v1705
      %v1707 = vmul.f32 %v1619, 1.442695
      %v1708 = vpow.pop %v1707
      %v1709 = vmul.f32 %v1620, 1.442695
      %v1710 = vpow.pop %v1709
      %v1711 = vmul.f32 %v1621, 1.442695
      %v1712 = vpow.pop %v1711
      %v1713 = vmul.f32 %v1622, 1.442695
      %v1714 = vpow.pop %v1713
      %v1715 = vmul.f32 %v1623, 1.442695
      %v1716 = vpow.pop %v1715
      %v1717 = vmul.f32 %v1624, 1.442695
      %v1718 = vpow.pop %v1717
      %v1719 = vmul.f32 %v1625, 1.442695
      %v1720 = vpow.pop %v1719
      %v1721 = vmul.f32 %v1626, 1.442695
      %v1722 = vpow.pop %v1721
      %v1723 = vmul.f32 %v1627, 1.442695
      %v1724 = vpow.pop %v1723
      %v1725 = vmul.f32 %v1628, 1.442695
      %v1726 = vpow.pop %v1725
      %v1727 = vmul.f32 %v1629, 1.442695
      %v1728 = vpow.pop %v1727
      %v1729 = vmul.f32 %v1630, 1.442695
      %v1730 = vpow.pop %v1729
      %v1731 = vmul.f32 %v1631, 1.442695
      %v1732 = vpow.pop %v1731
      %v1733 = vmul.f32 %v1632, 1.442695
      %v1734 = vpow.pop %v1733
      %v1735 = vmul.f32 %v1633, 1.442695
      %v1736 = vpow.pop %v1735
      %v1737 = vmul.f32 %v1634, 1.442695
      %v1738 = vpow.pop %v1737
      %v1739 = vmul.f32 %v1635, 1.442695
      %v1740 = vpow.pop %v1739
      %v1741 = vmul.f32 %v1636, 1.442695
      %v1742 = vpow.pop %v1741
      %v1743 = vmul.f32 %v1637, 1.442695
      %v1744 = vpow.pop %v1743
      %v1745 = vmul.f32 %v1638, 1.442695
      %v1746 = vpow.pop %v1745
      %v1747 = vmul.f32 %v1639, 1.442695
      %v1748 = vpow.pop %v1747
      %v1749 = vmul.f32 %v1640, 1.442695
      %v1750 = vpow.pop %v1749
      %v1751 = vmul.f32 %v1641, 1.442695
      %v1752 = vpow.pop %v1751
      %v1753 = vmul.f32 %v1642, 1.442695
      %v1754 = vpow.pop %v1753
      %v1755 = vmul.f32 %v1643, 1.442695
      %v1756 = vpow.pop %v1755
      %v1757 = vmul.f32 %v1644, 1.442695
      %v1758 = vpow.pop %v1757
      %v1759 = vmul.f32 %v1645, 1.442695
      %v1760 = vpow.pop %v1759
      %v1761 = vmul.f32 %v1646, 1.442695
      %v1762 = vpow.pop %v1761
      %v1763 = vmul.f32 %v1647, 1.442695
      %v1764 = vpow.pop %v1763
      %v1765 = vmul.f32 %v1648, 1.442695
      %v1766 = vpow.pop %v1765
      %v1767 = vmul.f32 %v1649, 1.442695
      %v1768 = vpow.pop %v1767
      %v1769 = vmul.f32 %v1650, 1.442695
      %v1770 = vpow.pop %v1769
      %v1771 = vmul.f32 %v1651, 1.442695
      %v1772 = vpow.pop %v1771
      %v1773 = vmul.f32 %v1652, 1.442695
      %v1774 = vpow.pop %v1773
      %v1775 = vmul.f32 %v1653, 1.442695
      %v1776 = vpow.pop %v1775
      %v1777 = vmul.f32 %v1654, 1.442695
      %v1778 = vpow.pop %v1777
      %v1779 = vmul.f32 %v1655, 1.442695
      %v1780 = vpow.pop %v1779
      %v1781 = vmul.f32 %v1656, 1.442695
      %v1782 = vpow.pop %v1781
      %v1783 = vmul.f32 %v1657, 1.442695
      %v1784 = vpow.pop %v1783
      %v1785 = vmul.f32 %v1658, 1.442695
      %v1786 = vpow.pop %v1785
      %v1787 = vadd.f32 %v1660, 1.0
      %v1788 = vadd.f32 %v1662, 1.0
      %v1789 = vadd.f32 %v1664, 1.0
      %v1790 = vadd.f32 %v1666, 1.0
      %v1791 = vadd.f32 %v1668, 1.0
      %v1792 = vadd.f32 %v1670, 1.0
      %v1793 = vadd.f32 %v1672, 1.0
      %v1794 = vadd.f32 %v1674, 1.0
      %v1795 = vadd.f32 %v1676, 1.0
      %v1796 = vadd.f32 %v1678, 1.0
      %v1797 = vadd.f32 %v1680, 1.0
      %v1798 = vadd.f32 %v1682, 1.0
      %v1799 = vadd.f32 %v1684, 1.0
      %v1800 = vadd.f32 %v1686, 1.0
      %v1801 = vadd.f32 %v1688, 1.0
      %v1802 = vadd.f32 %v1690, 1.0
      %v1803 = vadd.f32 %v1692, 1.0
      %v1804 = vadd.f32 %v1694, 1.0
      %v1805 = vadd.f32 %v1696, 1.0
      %v1806 = vadd.f32 %v1698, 1.0
      %v1807 = vadd.f32 %v1700, 1.0
      %v1808 = vadd.f32 %v1702, 1.0
      %v1809 = vadd.f32 %v1704, 1.0
      %v1810 = vadd.f32 %v1706, 1.0
      %v1811 = vadd.f32 %v1708, 1.0
      %v1812 = vadd.f32 %v1710, 1.0
      %v1813 = vadd.f32 %v1712, 1.0
      %v1814 = vadd.f32 %v1714, 1.0
      %v1815 = vadd.f32 %v1716, 1.0
      %v1816 = vadd.f32 %v1718, 1.0
      %v1817 = vadd.f32 %v1720, 1.0
      %v1818 = vadd.f32 %v1722, 1.0
      %v1819 = vadd.f32 %v1724, 1.0
      %v1820 = vadd.f32 %v1726, 1.0
      %v1821 = vadd.f32 %v1728, 1.0
      %v1822 = vadd.f32 %v1730, 1.0
      %v1823 = vadd.f32 %v1732, 1.0
      %v1824 = vadd.f32 %v1734, 1.0
      %v1825 = vadd.f32 %v1736, 1.0
      %v1826 = vadd.f32 %v1738, 1.0
      %v1827 = vadd.f32 %v1740, 1.0
      %v1828 = vadd.f32 %v1742, 1.0
      %v1829 = vadd.f32 %v1744, 1.0
      %v1830 = vadd.f32 %v1746, 1.0
      %v1831 = vadd.f32 %v1748, 1.0
      %v1832 = vadd.f32 %v1750, 1.0
      %v1833 = vadd.f32 %v1752, 1.0
      %v1834 = vadd.f32 %v1754, 1.0
      %v1835 = vadd.f32 %v1756, 1.0
      %v1836 = vadd.f32 %v1758, 1.0
      %v1837 = vadd.f32 %v1760, 1.0
      %v1838 = vadd.f32 %v1762, 1.0
      %v1839 = vadd.f32 %v1764, 1.0
      %v1840 = vadd.f32 %v1766, 1.0
      %v1841 = vadd.f32 %v1768, 1.0
      %v1842 = vadd.f32 %v1770, 1.0
      %v1843 = vadd.f32 %v1772, 1.0
      %v1844 = vadd.f32 %v1774, 1.0
      %v1845 = vadd.f32 %v1776, 1.0
      %v1846 = vadd.f32 %v1778, 1.0
      %v1847 = vadd.f32 %v1780, 1.0
      %v1848 = vadd.f32 %v1782, 1.0
      %v1849 = vadd.f32 %v1784, 1.0
      %v1850 = vadd.f32 %v1786, 1.0
      %v1851 = vrcp.pop %v1787
      %v1852 = vmul.f32 1.0, %v1851
      %v1853 = vrcp.pop %v1788
      %v1854 = vmul.f32 1.0, %v1853
      %v1855 = vrcp.pop %v1789
      %v1856 = vmul.f32 1.0, %v1855
      %v1857 = vrcp.pop %v1790
      %v1858 = vmul.f32 1.0, %v1857
      %v1859 = vrcp.pop %v1791
      %v1860 = vmul.f32 1.0, %v1859
      %v1861 = vrcp.pop %v1792
      %v1862 = vmul.f32 1.0, %v1861
      %v1863 = vrcp.pop %v1793
      %v1864 = vmul.f32 1.0, %v1863
      %v1865 = vrcp.pop %v1794
      %v1866 = vmul.f32 1.0, %v1865
      %v1867 = vrcp.pop %v1795
      %v1868 = vmul.f32 1.0, %v1867
      %v1869 = vrcp.pop %v1796
      %v1870 = vmul.f32 1.0, %v1869
      %v1871 = vrcp.pop %v1797
      %v1872 = vmul.f32 1.0, %v1871
      %v1873 = vrcp.pop %v1798
      %v1874 = vmul.f32 1.0, %v1873
      %v1875 = vrcp.pop %v1799
      %v1876 = vmul.f32 1.0, %v1875
      %v1877 = vrcp.pop %v1800
      %v1878 = vmul.f32 1.0, %v1877
      %v1879 = vrcp.pop %v1801
      %v1880 = vmul.f32 1.0, %v1879
      %v1881 = vrcp.pop %v1802
      %v1882 = vmul.f32 1.0, %v1881
      %v1883 = vrcp.pop %v1803
      %v1884 = vmul.f32 1.0, %v1883
      %v1885 = vrcp.pop %v1804
      %v1886 = vmul.f32 1.0, %v1885
      %v1887 = vrcp.pop %v1805
      %v1888 = vmul.f32 1.0, %v1887
      %v1889 = vrcp.pop %v1806
      %v1890 = vmul.f32 1.0, %v1889
      %v1891 = vrcp.pop %v1807
      %v1892 = vmul.f32 1.0, %v1891
      %v1893 = vrcp.pop %v1808
      %v1894 = vmul.f32 1.0, %v1893
      %v1895 = vrcp.pop %v1809
      %v1896 = vmul.f32 1.0, %v1895
      %v1897 = vrcp.pop %v1810
      %v1898 = vmul.f32 1.0, %v1897
      %v1899 = vrcp.pop %v1811
      %v1900 = vmul.f32 1.0, %v1899
      %v1901 = vrcp.pop %v1812
      %v1902 = vmul.f32 1.0, %v1901
      %v1903 = vrcp.pop %v1813
      %v1904 = vmul.f32 1.0, %v1903
      %v1905 = vrcp.pop %v1814
      %v1906 = vmul.f32 1.0, %v1905
      %v1907 = vrcp.pop %v1815
      %v1908 = vmul.f32 1.0, %v1907
      %v1909 = vrcp.pop %v1816
      %v1910 = vmul.f32 1.0, %v1909
      %v1911 = vrcp.pop %v1817
      %v1912 = vmul.f32 1.0, %v1911
      %v1913 = vrcp.pop %v1818
      %v1914 = vmul.f32 1.0, %v1913
      %v1915 = vrcp.pop %v1819
      %v1916 = vmul.f32 1.0, %v1915
      %v1917 = vrcp.pop %v1820
      %v1918 = vmul.f32 1.0, %v1917
      %v1919 = vrcp.pop %v1821
      %v1920 = vmul.f32 1.0, %v1919
      %v1921 = vrcp.pop %v1822
      %v1922 = vmul.f32 1.0, %v1921
      %v1923 = vrcp.pop %v1823
      %v1924 = vmul.f32 1.0, %v1923
      %v1925 = vrcp.pop %v1824
      %v1926 = vmul.f32 1.0, %v1925
      %v1927 = vrcp.pop %v1825
      %v1928 = vmul.f32 1.0, %v1927
      %v1929 = vrcp.pop %v1826
      %v1930 = vmul.f32 1.0, %v1929
      %v1931 = vrcp.pop %v1827
      %v1932 = vmul.f32 1.0, %v1931
      %v1933 = vrcp.pop %v1828
      %v1934 = vmul.f32 1.0, %v1933
      %v1935 = vrcp.pop %v1829
      %v1936 = vmul.f32 1.0, %v1935
      %v1937 = vrcp.pop %v1830
      %v1938 = vmul.f32 1.0, %v1937
      %v1939 = vrcp.pop %v1831
      %v1940 = vmul.f32 1.0, %v1939
      %v1941 = vrcp.pop %v1832
      %v1942 = vmul.f32 1.0, %v1941
      %v1943 = vrcp.pop %v1833
      %v1944 = vmul.f32 1.0, %v1943
      %v1945 = vrcp.pop %v1834
      %v1946 = vmul.f32 1.0, %v1945
      %v1947 = vrcp.pop %v1835
      %v1948 = vmul.f32 1.0, %v1947
      %v1949 = vrcp.pop %v1836
      %v1950 = vmul.f32 1.0, %v1949
      %v1951 = vrcp.pop %v1837
      %v1952 = vmul.f32 1.0, %v1951
      %v1953 = vrcp.pop %v1838
      %v1954 = vmul.f32 1.0, %v1953
      %v1955 = vrcp.pop %v1839
      %v1956 = vmul.f32 1.0, %v1955
      %v1957 = vrcp.pop %v1840
      %v1958 = vmul.f32 1.0, %v1957
      %v1959 = vrcp.pop %v1841
      %v1960 = vmul.f32 1.0, %v1959
      %v1961 = vrcp.pop %v1842
      %v1962 = vmul.f32 1.0, %v1961
      %v1963 = vrcp.pop %v1843
      %v1964 = vmul.f32 1.0, %v1963
      %v1965 = vrcp.pop %v1844
      %v1966 = vmul.f32 1.0, %v1965
      %v1967 = vrcp.pop %v1845
      %v1968 = vmul.f32 1.0, %v1967
      %v1969 = vrcp.pop %v1846
      %v1970 = vmul.f32 1.0, %v1969
      %v1971 = vrcp.pop %v1847
      %v1972 = vmul.f32 1.0, %v1971
      %v1973 = vrcp.pop %v1848
      %v1974 = vmul.f32 1.0, %v1973
      %v1975 = vrcp.pop %v1849
      %v1976 = vmul.f32 1.0, %v1975
      %v1977 = vrcp.pop %v1850
      %v1978 = vmul.f32 1.0, %v1977
      %1979 = vst [vmem:[%s175] sm:$0xff] %v1852
      %1980 = vst [vmem:[%s175 + $0x8] sm:$0xff] %v1854
      %1981 = vst [vmem:[%s175 + $0x10] sm:$0xff] %v1856
      %1982 = vst [vmem:[%s175 + $0x18] sm:$0xff] %v1858
      %1983 = vst [vmem:[%s175 + $0x20] sm:$0xff] %v1860
      %1984 = vst [vmem:[%s175 + $0x28] sm:$0xff] %v1862
      %1985 = vst [vmem:[%s175 + $0x30] sm:$0xff] %v1864
      %1986 = vst [vmem:[%s175 + $0x38] sm:$0xff] %v1866
      %1987 = vst [vmem:[%s175 + $0x40] sm:$0xff] %v1868
      %1988 = vst [vmem:[%s175 + $0x48] sm:$0xff] %v1870
      %1989 = vst [vmem:[%s175 + $0x50] sm:$0xff] %v1872
      %1990 = vst [vmem:[%s175 + $0x58] sm:$0xff] %v1874
      %1991 = vst [vmem:[%s175 + $0x60] sm:$0xff] %v1876
      %1992 = vst [vmem:[%s175 + $0x68] sm:$0xff] %v1878
      %1993 = vst [vmem:[%s175 + $0x70] sm:$0xff] %v1880
      %1994 = vst [vmem:[%s175 + $0x78] sm:$0xff] %v1882
      %1995 = vst [vmem:[%s175 + $0x80] sm:$0xff] %v1884
      %1996 = vst [vmem:[%s175 + $0x88] sm:$0xff] %v1886
      %1997 = vst [vmem:[%s175 + $0x90] sm:$0xff] %v1888
      %1998 = vst [vmem:[%s175 + $0x98] sm:$0xff] %v1890
      %1999 = vst [vmem:[%s175 + $0xa0] sm:$0xff] %v1892
      %2000 = vst [vmem:[%s175 + $0xa8] sm:$0xff] %v1894
      %2001 = vst [vmem:[%s175 + $0xb0] sm:$0xff] %v1896
      %2002 = vst [vmem:[%s175 + $0xb8] sm:$0xff] %v1898
      %2003 = vst [vmem:[%s175 + $0xc0] sm:$0xff] %v1900
      %2004 = vst [vmem:[%s175 + $0xc8] sm:$0xff] %v1902
      %2005 = vst [vmem:[%s175 + $0xd0] sm:$0xff] %v1904
      %2006 = vst [vmem:[%s175 + $0xd8] sm:$0xff] %v1906
      %2007 = vst [vmem:[%s175 + $0xe0] sm:$0xff] %v1908
      %2008 = vst [vmem:[%s175 + $0xe8] sm:$0xff] %v1910
      %2009 = vst [vmem:[%s175 + $0xf0] sm:$0xff] %v1912
      %2010 = vst [vmem:[%s175 + $0xf8] sm:$0xff] %v1914
      %2011 = vst [vmem:[%s175 + $0x100] sm:$0xff] %v1916
      %2012 = vst [vmem:[%s175 + $0x108] sm:$0xff] %v1918
      %2013 = vst [vmem:[%s175 + $0x110] sm:$0xff] %v1920
      %2014 = vst [vmem:[%s175 + $0x118] sm:$0xff] %v1922
      %2015 = vst [vmem:[%s175 + $0x120] sm:$0xff] %v1924
      %2016 = vst [vmem:[%s175 + $0x128] sm:$0xff] %v1926
      %2017 = vst [vmem:[%s175 + $0x130] sm:$0xff] %v1928
      %2018 = vst [vmem:[%s175 + $0x138] sm:$0xff] %v1930
      %2019 = vst [vmem:[%s175 + $0x140] sm:$0xff] %v1932
      %2020 = vst [vmem:[%s175 + $0x148] sm:$0xff] %v1934
      %2021 = vst [vmem:[%s175 + $0x150] sm:$0xff] %v1936
      %2022 = vst [vmem:[%s175 + $0x158] sm:$0xff] %v1938
      %2023 = vst [vmem:[%s175 + $0x160] sm:$0xff] %v1940
      %2024 = vst [vmem:[%s175 + $0x168] sm:$0xff] %v1942
      %2025 = vst [vmem:[%s175 + $0x170] sm:$0xff] %v1944
      %2026 = vst [vmem:[%s175 + $0x178] sm:$0xff] %v1946
      %2027 = vst [vmem:[%s175 + $0x180] sm:$0xff] %v1948
      %2028 = vst [vmem:[%s175 + $0x188] sm:$0xff] %v1950
      %2029 = vst [vmem:[%s175 + $0x190] sm:$0xff] %v1952
      %2030 = vst [vmem:[%s175 + $0x198] sm:$0xff] %v1954
      %2031 = vst [vmem:[%s175 + $0x1a0] sm:$0xff] %v1956
      %2032 = vst [vmem:[%s175 + $0x1a8] sm:$0xff] %v1958
      %2033 = vst [vmem:[%s175 + $0x1b0] sm:$0xff] %v1960
      %2034 = vst [vmem:[%s175 + $0x1b8] sm:$0xff] %v1962
      %2035 = vst [vmem:[%s175 + $0x1c0] sm:$0xff] %v1964
      %2036 = vst [vmem:[%s175 + $0x1c8] sm:$0xff] %v1966
      %2037 = vst [vmem:[%s175 + $0x1d0] sm:$0xff] %v1968
      %2038 = vst [vmem:[%s175 + $0x1d8] sm:$0xff] %v1970
      %2039 = vst [vmem:[%s175 + $0x1e0] sm:$0xff] %v1972
      %2040 = vst [vmem:[%s175 + $0x1e8] sm:$0xff] %v1974
      %2041 = vst [vmem:[%s175 + $0x1f0] sm:$0xff] %v1976
      %2042 = vst [vmem:[%s175 + $0x1f8] sm:$0xff] %v1978
      %s2043 = smul.u32 64, %s14
      %p2044 = scmp.lt.s32.totalorder %s2043, 191
      %s2045 = scalar_select %p2044, %s2043, 191
      %s2046 = smul.addr %s2045, 8
      %s2047 = scalar_lea.vmem %s3, %s2046
      // Predicated region
      $region33: #{autoencoder_forward.13} parent=31 // pred_check
        %p2048 = pneg %p100
      $region34: #{autoencoder_forward.13} parent=31 // pred_check_branch
        %2050 = sbr.rel (%p2048) target = $region36
      $region35: #{autoencoder_forward.13} parent=31 // pred_region
        %s2051 = smul.u32 64, %s14
      $region36: #{autoencoder_forward.13} parent=31 // pred_fallthru
        _
    $region32: #{autoencoder_forward.13} parent=5 // pred_fallthru
      _
    %p2052 = scmp.le.s32.totalorder 2, %s9
    // Predicated region
    $region37: #{autoencoder_forward.13} parent=5 // pred_check
      %p2053 = pneg %p2052
    $region38: #{autoencoder_forward.13} parent=5 // pred_check_branch
      %2055 = sbr.rel (%p2053) target = $region40
    $region39: #{autoencoder_forward.13} parent=5 // pred_region
      %s2056 = ssub.s32 %s9, 2
      // Predicated region
      $region41: #{autoencoder_forward.13} parent=39 // pred_check
        %p2057 = pneg %p106
      $region42: #{autoencoder_forward.13} parent=39 // pred_check_branch
        %2059 = sbr.rel (%p2057) target = $region44
      $region43: #{autoencoder_forward.13} parent=39 // pred_region
        %s2060 = smul.u32 64, %s15
        %p2061 = scmp.lt.s32.totalorder %s2060, 191
        %s2062 = scalar_select %p2061, %s2060, 191
        %s2063 = smul.addr %s2062, 8
        %s2064 = scalar_lea.vmem %s3, %s2063
      $region44: #{autoencoder_forward.13} parent=39 // pred_fallthru
        _
    $region40: #{autoencoder_forward.13} parent=5 // pred_fallthru
      _
  $region6: #{autoencoder_forward.13} parent=0 // loop_footer
    %s13 = sadd.s32 1, %s9
  $region7: #{autoencoder_forward.13} parent=0 // loop_footer_branch
    %8 = sbr.rel target = $region3
  $region8: #{autoencoder_forward.13} parent=0 // loop_exit
    _

</llo_original>
